<compile_context>
chip_gen: v6e
topology: v6e:2x2x1
jax: 0.10.0
libtpu: 0.0.40
codegen_flags: <defaults>
</compile_context>

<pallas_src>
import functools

import numpy as np
import jax
import jax.numpy as jnp
from jax.experimental import pallas as pl
from jax.experimental.pallas import tpu as pltpu

_LANES = 128  # lane width; >= max channel count (c3 = 128)


# ----------------------------------------------------------------------------
# Host-side structural matrices (spatial operators folded into small matmuls)
# ----------------------------------------------------------------------------

def _interp_matrix(out_size, in_size):
    """PyTorch bilinear (align_corners=False) 1-D interpolation matrix."""
    A = np.zeros((out_size, in_size), np.float32)
    scale = in_size / out_size
    for o in range(out_size):
        src = max((o + 0.5) * scale - 0.5, 0.0)
        i0 = min(int(np.floor(src)), in_size - 1)
        i1 = min(i0 + 1, in_size - 1)
        l1 = src - i0
        A[o, i0] += 1.0 - l1
        A[o, i1] += l1
    return A


def _resize_matrix(out_h, out_w, in_h, in_w):
    """Flattened-map bilinear resize operator: (out_h*out_w, in_h*in_w)."""
    ah = _interp_matrix(out_h, in_h)
    aw = _interp_matrix(out_w, in_w)
    m = np.einsum("ai,bj->abij", ah, aw).reshape(out_h * out_w, in_h * in_w)
    return m.astype(np.float32)


def _avgpool_matrix(h, w, k):
    """AvgPool2d(k, stride=k, pad=k//2, count_include_pad=True) as a matrix."""
    pad = k // 2
    oh = (h + 2 * pad - k) // k + 1
    ow = (w + 2 * pad - k) // k + 1
    P = np.zeros((oh * ow, h * w), np.float32)
    inv = 1.0 / float(k * k)
    for io in range(oh):
        for jo in range(ow):
            for di in range(k):
                for dj in range(k):
                    i, j = io * k - pad + di, jo * k - pad + dj
                    if 0 <= i < h and 0 <= j < w:
                        P[io * ow + jo, i * w + j] += inv
    return P, oh, ow


def _shift_matrix(h, w, dy, dx):
    """out[(i,j)] = in[(i+dy, j+dx)] (zero when out of bounds), flattened."""
    D = np.zeros((h * w, h * w), np.float32)
    for i in range(h):
        for j in range(w):
            ii, jj = i + dy, j + dx
            if 0 <= ii < h and 0 <= jj < w:
                D[i * w + j, ii * w + jj] = 1.0
    return D


# ----------------------------------------------------------------------------
# The fused SINet kernel (one image per grid step)
# ----------------------------------------------------------------------------

def _sinet_kernel(x_ref, w_ref, a_ref, o_ref, pad_ref, *, H, W, meta):
    f32, bf16 = jnp.float32, jnp.bfloat16
    H2, W2, H4, W4 = H // 2, W // 2, H // 4, W // 4
    M, M2, M4 = H * W, H2 * W2, H4 * W4
    offw, offa = meta["off_w"], meta["off_a"]
    n1, n2 = meta["n1"], meta["n2"]

    # Defensive one-time clear: stale VMEM left by a *previous* kernel could be
    # NaN.  Per-image correctness does not depend on it: every staging below
    # writes full 128-lane rows before any read.
    @pl.when(pl.program_id(0) == 0)
    def _():
        pad_ref[...] = jnp.zeros(pad_ref.shape, f32)

    def wblk(name, rows, cols=_LANES):
        r0 = offw[name]
        return w_ref[r0:r0 + rows, 0:cols]            # bf16 value

    def arow(name, rows=1):
        r0 = offa[name]
        return a_ref[r0:r0 + rows, :]                 # f32 value

    def stage(x, width):
        """Stage a flattened (m, C) map into pad_ref with width+1 zero border
        rows on both sides (flat-row zero padding, pitch = width)."""
        m, c = x.shape
        P = width + 1
        zeros = jnp.zeros((P, _LANES), f32)
        pad_ref[0:P, :] = zeros
        pad_ref[P + m:P + m + P, :] = zeros
        if c < _LANES:
            pad_ref[P:P + m, :] = jnp.zeros((m, _LANES), f32)
            pad_ref[P:P + m, 0:c] = x
        else:
            pad_ref[P:P + m, :] = x
        return m, P

    def conv3x3_bn_relu(x, height, width, wname, sname, bname):
        """3x3 conv (pad=1) as one im2col bf16 matmul + folded-BN (f32) + ReLU."""
        m, P = stage(x, width)
        col = jax.lax.broadcasted_iota(jnp.int32, (m, 1), 0) % width
        left_ok = (col >= 1).astype(f32)              # dx = -1 validity
        right_ok = (col <= width - 2).astype(f32)     # dx = +1 validity
        taps = []
        for dy in (-1, 0, 1):
            for dx in (-1, 0, 1):
                s = P + dy * width + dx
                t = pad_ref[s:s + m, :]               # (m, 128) f32
                if dx < 0:
                    t = t * left_ok
                elif dx > 0:
                    t = t * right_ok
                taps.append(t.astype(bf16))
        patch = jnp.concatenate(taps, axis=-1)        # (m, 9*128) bf16
        z = jnp.dot(patch, wblk(wname, 9 * _LANES),
                    preferred_element_type=f32)       # (m, 128) f32
        z = z * arow(sname) + arow(bname)
        return jnp.maximum(z, 0.0)

    def maxpool2(x, height, width):
        """MaxPool2d(2): elementwise max of 4 strided sublane reads."""
        m = x.shape[0]
        pad_ref[0:m, :] = x
        pieces = []
        for i in range(height // 2):
            base = 2 * i * width
            a = pad_ref[pl.ds(base, width // 2, 2), :]
            b = pad_ref[pl.ds(base + 1, width // 2, 2), :]
            c = pad_ref[pl.ds(base + width, width // 2, 2), :]
            d = pad_ref[pl.ds(base + width + 1, width // 2, 2), :]
            pieces.append(jnp.maximum(jnp.maximum(a, b), jnp.maximum(c, d)))
        return jnp.concatenate(pieces, axis=0)        # (m // 4, 128)

    # ---------------- encoder ----------------
    h = conv3x3_bn_relu(x_ref[0], H, W, "enc1_w", "enc1_s", "enc1_b")   # (M, 128)
    h = maxpool2(h, H, W)                                               # (M2, 128)
    h = conv3x3_bn_relu(h, H2, W2, "enc2_w", "enc2_s", "enc2_b")        # (M2, 128)
    h = maxpool2(h, H2, W2)                                             # (M4, 128)
    h = conv3x3_bn_relu(h, H4, W4, "enc3_w", "enc3_s", "enc3_b")        # (M4, 128)

    # ---------------- SIUnit ----------------
    identity = h
    r = jnp.dot(h.astype(bf16), wblk("red_w", _LANES), preferred_element_type=f32)
    r = r * arow("red_s") + arow("red_b")   # 1x1 reduce + BN (+ChannelShuffle in cols)
    r16 = r.astype(bf16)

    def s2_branch(gname, npool, upname, dwname, sname, bname):
        g = wblk(gname, 9 * npool, M4)                # avgpool + 9 dw-conv shifts
        gr = jnp.dot(g, r16, preferred_element_type=f32)          # (9*npool, 128)
        wdw = arow(dwname, 9)                                     # (9, 128) dw taps
        acc = gr[0:npool, :] * wdw[0:1, :]
        for t in range(1, 9):
            acc = acc + gr[t * npool:(t + 1) * npool, :] * wdw[t:t + 1, :]
        acc = jnp.maximum(acc * arow(sname) + arow(bname), 0.0)   # BN + ReLU
        up = wblk(upname, M4, npool)                              # bilinear resize
        return jnp.dot(up, acc.astype(bf16), preferred_element_type=f32)

    b1 = s2_branch("s2b1_g", n1, "s2b1_up", "s2b1_w", "s2b1_s", "s2b1_b")  # (M4,128)
    b2 = s2_branch("s2b2_g", n2, "s2b2_up", "s2b2_w", "s2b2_s", "s2b2_b")  # (M4,128)

    z = (jnp.dot(b1.astype(bf16), wblk("merge_wa", _LANES), preferred_element_type=f32)
         + jnp.dot(b2.astype(bf16), wblk("merge_wb", _LANES), preferred_element_type=f32))
    z = z * arow("merge_s") + arow("merge_b") + identity
    z = jnp.where(z >= 0.0, z, z * arow("prelu_a"))               # PReLU (shared alpha)

    # ---------------- decoder ----------------
    u = jnp.dot(wblk("up1", M2, M4), z.astype(bf16), preferred_element_type=f32)   # (M2,128)
    u = conv3x3_bn_relu(u, H2, W2, "dec1_w", "dec1_s", "dec1_b")
    u = jnp.dot(wblk("up2", M, M2), u.astype(bf16), preferred_element_type=f32)    # (M, 128)
    u = conv3x3_bn_relu(u, H, W, "dec2_w", "dec2_s", "dec2_b")

    y = jnp.dot(u.astype(bf16), wblk("cls_w", _LANES), preferred_element_type=f32)
    o_ref[0] = y + arow("cls_b")                                   # lane-dense store


# ----------------------------------------------------------------------------
# Parameter construction: pack everything into two slabs (bf16 + f32)
# ----------------------------------------------------------------------------

def _pack_rows(entries, *, dtype, align):
    """Stack (rows, cols<=128) matrices into one (R, 128) slab; return offsets."""
    offs, parts, cur = {}, [], 0
    for name, arr in entries:
        a = np.asarray(arr, np.float32)
        r, c = a.shape
        rp = -(-r // align) * align
        buf = np.zeros((rp, _LANES), np.float32)
        buf[:r, :c] = a
        offs[name] = cur
        parts.append(buf)
        cur += rp
    slab = np.concatenate(parts, axis=0)
    return jnp.asarray(slab, dtype), offs


def init_params(key, in_channels, num_classes, H, W):
    c1, c2, c3 = 32, 64, 128          # int(64*0.5), int(128*0.5), int(256*0.5)
    mid = c3 // 2
    H2, W2, H4, W4 = H // 2, W // 2, H // 4, W // 4

    keys = iter(jax.random.split(key, 32))
    nxt = lambda: next(keys)

    def embed(a, rows=_LANES, cols=_LANES):
        out = np.zeros((rows, cols), np.float32)
        a = np.asarray(a, np.float32)
        out[:a.shape[0], :a.shape[1]] = a
        return out

    def w3x3_p(cin, cout):
        w = np.asarray(jax.random.normal(nxt(), (3, 3, cin, cout), jnp.float32))
        w = w / np.sqrt(9 * cin)
        wp = np.zeros((9, _LANES, _LANES), np.float32)
        wp[:, :cin, :cout] = w.reshape(9, cin, cout)
        return wp.reshape(9 * _LANES, _LANES)

    def w1x1(cin, cout):
        w = np.asarray(jax.random.normal(nxt(), (cin, cout), jnp.float32))
        return w / np.sqrt(cin)

    def folded_bn(c):
        # Inference-mode BN folding with synthetic, deterministic running stats.
        k1, k2, k3, k4 = jax.random.split(nxt(), 4)
        gamma = 1.0 + 0.1 * np.asarray(jax.random.normal(k1, (c,), jnp.float32))
        beta = 0.1 * np.asarray(jax.random.normal(k2, (c,), jnp.float32))
        mean = 0.1 * np.asarray(jax.random.normal(k3, (c,), jnp.float32))
        var = 1.0 + 0.1 * np.asarray(jax.random.uniform(k4, (c,), jnp.float32))
        scale = gamma / np.sqrt(var + 1e-5)
        bias = beta - mean * scale
        return embed(scale.reshape(1, c), 1), embed(bias.reshape(1, c), 1)

    wE, aE = [], []   # weight-slab (bf16) and affine-slab (f32) entries

    # encoder
    wE.append(("enc1_w", w3x3_p(in_channels, c1)))
    s, b = folded_bn(c1); aE += [("enc1_s", s), ("enc1_b", b)]
    wE.append(("enc2_w", w3x3_p(c1, c2)))
    s, b = folded_bn(c2); aE += [("enc2_s", s), ("enc2_b", b)]
    wE.append(("enc3_w", w3x3_p(c2, c3)))
    s, b = folded_bn(c3); aE += [("enc3_s", s), ("enc3_b", b)]

    # SIUnit: 1x1 reduce + BN, with ChannelShuffle(groups=2) folded into columns
    red_w = w1x1(c3, mid)
    s, b = folded_bn(mid)
    perm = np.array([(k % 2) * (mid // 2) + (k // 2) for k in range(mid)], np.int64)
    red_w = red_w[:, perm]
    s[0, :mid] = s[0, perm]
    b[0, :mid] = b[0, perm]
    wE.append(("red_w", embed(red_w)))
    aE += [("red_s", s), ("red_b", b)]

    # S2 blocks: avg-pool + depthwise-3x3 spatial shifts folded into G,
    # bilinear resize back to (H4, W4) folded into R (tiny at 4x4 maps).
    def s2_structs(k):
        P, oh, ow = _avgpool_matrix(H4, W4, k)
        G = np.concatenate([_shift_matrix(oh, ow, dy, dx) @ P
                            for dy in (-1, 0, 1) for dx in (-1, 0, 1)], axis=0)
        R = _resize_matrix(H4, W4, oh, ow)
        return G, R, oh * ow

    G1, R1, n1 = s2_structs(3)
    G2, R2, n2 = s2_structs(5)
    wE += [("s2b1_g", G1), ("s2b1_up", R1), ("s2b2_g", G2), ("s2b2_up", R2)]
    for name in ("s2b1", "s2b2"):
        dw = np.asarray(jax.random.normal(nxt(), (9, mid), jnp.float32)) / 3.0
        s, b = folded_bn(mid)
        aE += [(name + "_w", embed(dw, 9)), (name + "_s", s), (name + "_b", b)]

    # merge 1x1 + BN + PReLU
    merge = w1x1(2 * mid, c3)
    wE += [("merge_wa", embed(merge[:mid])), ("merge_wb", embed(merge[mid:]))]
    s, b = folded_bn(c3); aE += [("merge_s", s), ("merge_b", b)]
    aE.append(("prelu_a", np.full((1, _LANES), 0.25, np.float32)))  # nn.PReLU() init

    # decoder
    wE.append(("dec1_w", w3x3_p(c3, c2)))
    s, b = folded_bn(c2); aE += [("dec1_s", s), ("dec1_b", b)]
    wE.append(("dec2_w", w3x3_p(c2, c1)))
    s, b = folded_bn(c1); aE += [("dec2_s", s), ("dec2_b", b)]

    # classifier (1x1 conv + bias), output columns zero-padded to 128 lanes
    wE.append(("cls_w", embed(w1x1(c1, num_classes))))
    cls_b = 0.1 * np.asarray(jax.random.normal(nxt(), (num_classes,), jnp.float32))
    aE.append(("cls_b", embed(cls_b.reshape(1, -1), 1)))

    # decoder bilinear 2x upsample operators (dense; tiny at these map sizes)
    wE += [("up1", _resize_matrix(H2, W2, H4, W4)),
           ("up2", _resize_matrix(H, W, H2, W2))]

    w_slab, off_w = _pack_rows(wE, dtype=jnp.bfloat16, align=16)
    a_slab, off_a = _pack_rows(aE, dtype=jnp.float32, align=8)
    meta = dict(off_w=off_w, off_a=off_a, n1=int(n1), n2=int(n2),
                num_classes=int(num_classes))
    return dict(w_slab=w_slab, a_slab=a_slab, meta=meta)


# ----------------------------------------------------------------------------
# Wrapper
# ----------------------------------------------------------------------------

def sinet_forward(x_nchw, params):
    """NCHW float input -> NCHW logits; whole SINet forward in one pallas_call."""
    N, Cin, H, W = x_nchw.shape
    assert H % 4 == 0 and W % 4 == 0
    meta = params["meta"]
    w_slab, a_slab = params["w_slab"], params["a_slab"]
    num_classes = meta["num_classes"]

    x = jnp.transpose(x_nchw, (0, 2, 3, 1)).astype(jnp.float32).reshape(N, H * W, Cin)
    pad_rows = -(-(H * W + 2 * (W + 1)) // 8) * 8

    out = pl.pallas_call(
        functools.partial(_sinet_kernel, H=H, W=W, meta=meta),
        out_shape=jax.ShapeDtypeStruct((N, H * W, _LANES), jnp.float32),
        grid=(N,),
        in_specs=[pl.BlockSpec((1, H * W, Cin), lambda n: (n, 0, 0)),
                  pl.BlockSpec(w_slab.shape, lambda n: (0, 0)),
                  pl.BlockSpec(a_slab.shape, lambda n: (0, 0))],
        out_specs=pl.BlockSpec((1, H * W, _LANES), lambda n: (n, 0, 0)),
        scratch_shapes=[pltpu.VMEM((pad_rows, _LANES), jnp.float32)],
        compiler_params=pltpu.CompilerParams(
            dimension_semantics=("parallel",),
            vmem_limit_bytes=32 * 1024 * 1024),
    )(x, w_slab, a_slab)

    y = out[:, :, :num_classes].reshape(N, H, W, num_classes)
    return jnp.transpose(y, (0, 3, 1, 2))


if __name__ == "__main__":
    key = jax.random.PRNGKey(0)
    k_x, k_p = jax.random.split(key)
    in_channels, num_classes = 3, 4
    N, H, W = 2, 16, 16
    x = jax.random.normal(k_x, (N, in_channels, H, W), jnp.float32)   # NCHW like PyTorch
    params = init_params(k_p, in_channels, num_classes, H, W)
    fwd = jax.jit(functools.partial(sinet_forward, params=params))
    out = jax.block_until_ready(fwd(x))
    assert out.shape == (N, num_classes, H, W), out.shape
    assert bool(jnp.all(jnp.isfinite(out)))
    print("KERNEL_OK")
</pallas_src>

<mosaic_0001>
module attributes {stable_mosaic.version = 11 : i64} {
  func.func @_sinet_kernel(%arg0: i32, %arg1: memref<1x256x3xf32, #tpu.memory_space<vmem>>, %arg2: memref<6688x128xbf16, #tpu.memory_space<vmem>>, %arg3: memref<192x128xf32, #tpu.memory_space<vmem>>, %arg4: memref<1x256x128xf32, #tpu.memory_space<vmem>>, %arg5: memref<296x128xf32, #tpu.memory_space<vmem>>) attributes {dimension_semantics = [#tpu.dimension_semantics<parallel>], iteration_bounds = array<i64: 2>, scalar_prefetch = 0 : i64, scratch_operands = 1 : i64, tpu.core_type = #tpu.core_type<tc>, window_params = [{transform_indices = @transform_0, window_bounds = array<i64: 1, 256, 3>}, {pipeline_mode = #tpu.pipeline_mode<synchronous>, transform_indices = @transform_1, window_bounds = array<i64: 6688, 128>}, {pipeline_mode = #tpu.pipeline_mode<synchronous>, transform_indices = @transform_2, window_bounds = array<i64: 192, 128>}, {transform_indices = @transform_3, window_bounds = array<i64: 1, 256, 128>}]} {
    %c0_i32 = arith.constant 0 : i32
    %0 = arith.cmpi eq, %arg0, %c0_i32 : i32
    %1 = arith.extui %0 : i1 to i32
    %c0_i32_0 = arith.constant 0 : i32
    %2 = arith.cmpi ne, %1, %c0_i32_0 : i32
    scf.if %2 {
      %cst_294 = arith.constant 0.000000e+00 : f32
      %595 = vector.broadcast %cst_294 : f32 to vector<296x128xf32>
      %c0_295 = arith.constant 0 : index
      %c0_296 = arith.constant 0 : index
      %596 = vector.load %arg5[%c0_295, %c0_296] : memref<296x128xf32, #tpu.memory_space<vmem>>, vector<296x128xf32>
      tpu.vector_store %arg5[%c0_295, %c0_296], %595 {strides = array<i32>} : memref<296x128xf32, #tpu.memory_space<vmem>>, vector<296x128xf32>,
    } else {
    }
    %c0 = arith.constant 0 : index
    %c0_1 = arith.constant 0 : index
    %c0_2 = arith.constant 0 : index
    %3 = vector.load %arg1[%c0, %c0_1, %c0_2] : memref<1x256x3xf32, #tpu.memory_space<vmem>>, vector<1x256x3xf32>
    %4 = vector.shape_cast %3 : vector<1x256x3xf32> to vector<256x3xf32>
    %cst = arith.constant 0.000000e+00 : f32
    %5 = vector.broadcast %cst : f32 to vector<17x128xf32>
    %c0_3 = arith.constant 0 : index
    %c0_4 = arith.constant 0 : index
    %6 = vector.load %arg5[%c0_3, %c0_4] : memref<296x128xf32, #tpu.memory_space<vmem>>, vector<17x128xf32>
    tpu.vector_store %arg5[%c0_3, %c0_4], %5 {strides = array<i32>} : memref<296x128xf32, #tpu.memory_space<vmem>>, vector<17x128xf32>,
    %c273 = arith.constant 273 : index
    %c0_5 = arith.constant 0 : index
    %7 = vector.load %arg5[%c273, %c0_5] : memref<296x128xf32, #tpu.memory_space<vmem>>, vector<17x128xf32>
    tpu.vector_store %arg5[%c273, %c0_5], %5 {strides = array<i32>} : memref<296x128xf32, #tpu.memory_space<vmem>>, vector<17x128xf32>,
    %cst_6 = arith.constant 0.000000e+00 : f32
    %8 = vector.broadcast %cst_6 : f32 to vector<256x128xf32>
    %c17 = arith.constant 17 : index
    %c0_7 = arith.constant 0 : index
    %9 = vector.load %arg5[%c17, %c0_7] : memref<296x128xf32, #tpu.memory_space<vmem>>, vector<256x128xf32>
    tpu.vector_store %arg5[%c17, %c0_7], %8 {strides = array<i32>} : memref<296x128xf32, #tpu.memory_space<vmem>>, vector<256x128xf32>,
    %c17_8 = arith.constant 17 : index
    %c0_9 = arith.constant 0 : index
    %10 = vector.load %arg5[%c17_8, %c0_9] : memref<296x128xf32, #tpu.memory_space<vmem>>, vector<256x3xf32>
    tpu.vector_store %arg5[%c17_8, %c0_9], %4 {strides = array<i32>} : memref<296x128xf32, #tpu.memory_space<vmem>>, vector<256x3xf32>,
    %11 = tpu.iota {dimensions = array<i32: 0>} : vector<256x1xi32>
    %c16_i32 = arith.constant 16 : i32
    %c0_i32_10 = arith.constant 0 : i32
    %12 = arith.cmpi eq, %c16_i32, %c0_i32_10 : i32
    %c1_i32 = arith.constant 1 : i32
    %13 = arith.select %12, %c1_i32, %c16_i32 : i32
    %14 = vector.broadcast %13 : i32 to vector<256x1xi32>
    %15 = arith.remsi %11, %14 : vector<256x1xi32>
    %c0_i32_11 = arith.constant 0 : i32
    %16 = vector.broadcast %c0_i32_11 : i32 to vector<256x1xi32>
    %17 = arith.cmpi ne, %15, %16 : vector<256x1xi32>
    %c0_i32_12 = arith.constant 0 : i32
    %18 = vector.broadcast %c0_i32_12 : i32 to vector<256x1xi32>
    %19 = arith.cmpi slt, %15, %18 : vector<256x1xi32>
    %c0_i32_13 = arith.constant 0 : i32
    %20 = arith.cmpi slt, %13, %c0_i32_13 : i32
    %21 = vector.broadcast %20 : i1 to vector<256x1xi1>
    %22 = vector.broadcast %21 : vector<256x1xi1> to vector<256x1xi1>
    %23 = arith.xori %19, %22 : vector<256x1xi1>
    %24 = arith.andi %23, %17 : vector<256x1xi1>
    %25 = vector.broadcast %13 : i32 to vector<256x1xi32>
    %26 = arith.addi %15, %25 : vector<256x1xi32>
    %27 = arith.select %24, %26, %15 : vector<256x1xi1>, vector<256x1xi32>
    %c1_i32_14 = arith.constant 1 : i32
    %28 = vector.broadcast %c1_i32_14 : i32 to vector<256x1xi32>
    %29 = arith.cmpi sge, %27, %28 : vector<256x1xi32>
    %30 = arith.extui %29 : vector<256x1xi1> to vector<256x1xi32>
    %31 = arith.sitofp %30 : vector<256x1xi32> to vector<256x1xf32>
    %c14_i32 = arith.constant 14 : i32
    %32 = vector.broadcast %c14_i32 : i32 to vector<256x1xi32>
    %33 = arith.cmpi sle, %27, %32 : vector<256x1xi32>
    %34 = arith.extui %33 : vector<256x1xi1> to vector<256x1xi32>
    %35 = arith.sitofp %34 : vector<256x1xi32> to vector<256x1xf32>
    %c0_15 = arith.constant 0 : index
    %c0_16 = arith.constant 0 : index
    %36 = vector.load %arg5[%c0_15, %c0_16] : memref<296x128xf32, #tpu.memory_space<vmem>>, vector<256x128xf32>
    %37 = vector.broadcast %31 : vector<256x1xf32> to vector<256x128xf32>
    %38 = arith.mulf %36, %37 : vector<256x128xf32>
    %39 = arith.truncf %38 : vector<256x128xf32> to vector<256x128xbf16>
    %c1 = arith.constant 1 : index
    %c0_17 = arith.constant 0 : index
    %40 = vector.load %arg5[%c1, %c0_17] : memref<296x128xf32, #tpu.memory_space<vmem>>, vector<256x128xf32>
    %41 = arith.truncf %40 : vector<256x128xf32> to vector<256x128xbf16>
    %c2 = arith.constant 2 : index
    %c0_18 = arith.constant 0 : index
    %42 = vector.load %arg5[%c2, %c0_18] : memref<296x128xf32, #tpu.memory_space<vmem>>, vector<256x128xf32>
    %43 = vector.broadcast %35 : vector<256x1xf32> to vector<256x128xf32>
    %44 = arith.mulf %42, %43 : vector<256x128xf32>
    %45 = arith.truncf %44 : vector<256x128xf32> to vector<256x128xbf16>
    %c16 = arith.constant 16 : index
    %c0_19 = arith.constant 0 : index
    %46 = vector.load %arg5[%c16, %c0_19] : memref<296x128xf32, #tpu.memory_space<vmem>>, vector<256x128xf32>
    %47 = vector.broadcast %31 : vector<256x1xf32> to vector<256x128xf32>
    %48 = arith.mulf %46, %47 : vector<256x128xf32>
    %49 = arith.truncf %48 : vector<256x128xf32> to vector<256x128xbf16>
    %c17_20 = arith.constant 17 : index
    %c0_21 = arith.constant 0 : index
    %50 = vector.load %arg5[%c17_20, %c0_21] : memref<296x128xf32, #tpu.memory_space<vmem>>, vector<256x128xf32>
    %51 = arith.truncf %50 : vector<256x128xf32> to vector<256x128xbf16>
    %c18 = arith.constant 18 : index
    %c0_22 = arith.constant 0 : index
    %52 = vector.load %arg5[%c18, %c0_22] : memref<296x128xf32, #tpu.memory_space<vmem>>, vector<256x128xf32>
    %53 = vector.broadcast %35 : vector<256x1xf32> to vector<256x128xf32>
    %54 = arith.mulf %52, %53 : vector<256x128xf32>
    %55 = arith.truncf %54 : vector<256x128xf32> to vector<256x128xbf16>
    %c32 = arith.constant 32 : index
    %c0_23 = arith.constant 0 : index
    %56 = vector.load %arg5[%c32, %c0_23] : memref<296x128xf32, #tpu.memory_space<vmem>>, vector<256x128xf32>
    %57 = vector.broadcast %31 : vector<256x1xf32> to vector<256x128xf32>
    %58 = arith.mulf %56, %57 : vector<256x128xf32>
    %59 = arith.truncf %58 : vector<256x128xf32> to vector<256x128xbf16>
    %c33 = arith.constant 33 : index
    %c0_24 = arith.constant 0 : index
    %60 = vector.load %arg5[%c33, %c0_24] : memref<296x128xf32, #tpu.memory_space<vmem>>, vector<256x128xf32>
    %61 = arith.truncf %60 : vector<256x128xf32> to vector<256x128xbf16>
    %c34 = arith.constant 34 : index
    %c0_25 = arith.constant 0 : index
    %62 = vector.load %arg5[%c34, %c0_25] : memref<296x128xf32, #tpu.memory_space<vmem>>, vector<256x128xf32>
    %63 = vector.broadcast %35 : vector<256x1xf32> to vector<256x128xf32>
    %64 = arith.mulf %62, %63 : vector<256x128xf32>
    %65 = arith.truncf %64 : vector<256x128xf32> to vector<256x128xbf16>
    %66 = tpu.concatenate %39, %41, %45, %49, %51, %55, %59, %61, %65 in 1 : vector<256x128xbf16>, vector<256x128xbf16>, vector<256x128xbf16>, vector<256x128xbf16>, vector<256x128xbf16>, vector<256x128xbf16>, vector<256x128xbf16>, vector<256x128xbf16>, vector<256x128xbf16> -> vector<256x1152xbf16>
    %c0_26 = arith.constant 0 : index
    %c0_27 = arith.constant 0 : index
    %67 = vector.load %arg2[%c0_26, %c0_27] : memref<6688x128xbf16, #tpu.memory_space<vmem>>, vector<1152x128xbf16>
    %cst_28 = arith.constant dense<0.000000e+00> : vector<256x128xf32>
    %68 = tpu.matmul %66, %67, %cst_28 {dimension_numbers = #tpu.dot_dimension_numbers<[1], [0], [0], [1], [0, 0, 1, 1], [], []>} : vector<256x1152xbf16>, vector<1152x128xbf16>, vector<256x128xf32> -> vector<256x128xf32>
    %c0_29 = arith.constant 0 : index
    %c0_30 = arith.constant 0 : index
    %69 = vector.load %arg3[%c0_29, %c0_30] : memref<192x128xf32, #tpu.memory_space<vmem>>, vector<1x128xf32>
    %70 = vector.broadcast %69 : vector<1x128xf32> to vector<256x128xf32>
    %71 = arith.mulf %68, %70 : vector<256x128xf32>
    %c8 = arith.constant 8 : index
    %c0_31 = arith.constant 0 : index
    %72 = vector.load %arg3[%c8, %c0_31] : memref<192x128xf32, #tpu.memory_space<vmem>>, vector<1x128xf32>
    %73 = vector.broadcast %72 : vector<1x128xf32> to vector<256x128xf32>
    %74 = arith.addf %71, %73 : vector<256x128xf32>
    %cst_32 = arith.constant 0.000000e+00 : f32
    %75 = vector.broadcast %cst_32 : f32 to vector<256x128xf32>
    %76 = arith.maximumf %74, %75 : vector<256x128xf32>
    %c0_33 = arith.constant 0 : index
    %c0_34 = arith.constant 0 : index
    %77 = vector.load %arg5[%c0_33, %c0_34] : memref<296x128xf32, #tpu.memory_space<vmem>>, vector<256x128xf32>
    tpu.vector_store %arg5[%c0_33, %c0_34], %76 {strides = array<i32>} : memref<296x128xf32, #tpu.memory_space<vmem>>, vector<256x128xf32>,
    %c0_35 = arith.constant 0 : index
    %c0_36 = arith.constant 0 : index
    %78 = tpu.strided_load %arg5[%c0_35, %c0_36] {strides = array<i32: 2, 1>} : memref<296x128xf32, #tpu.memory_space<vmem>>, vector<8x128xf32>
    %c1_37 = arith.constant 1 : index
    %c0_38 = arith.constant 0 : index
    %79 = tpu.strided_load %arg5[%c1_37, %c0_38] {strides = array<i32: 2, 1>} : memref<296x128xf32, #tpu.memory_space<vmem>>, vector<8x128xf32>
    %c16_39 = arith.constant 16 : index
    %c0_40 = arith.constant 0 : index
    %80 = tpu.strided_load %arg5[%c16_39, %c0_40] {strides = array<i32: 2, 1>} : memref<296x128xf32, #tpu.memory_space<vmem>>, vector<8x128xf32>
    %c17_41 = arith.constant 17 : index
    %c0_42 = arith.constant 0 : index
    %81 = tpu.strided_load %arg5[%c17_41, %c0_42] {strides = array<i32: 2, 1>} : memref<296x128xf32, #tpu.memory_space<vmem>>, vector<8x128xf32>
    %82 = arith.maximumf %78, %79 : vector<8x128xf32>
    %83 = arith.maximumf %80, %81 : vector<8x128xf32>
    %84 = arith.maximumf %82, %83 : vector<8x128xf32>
    %c32_43 = arith.constant 32 : index
    %c0_44 = arith.constant 0 : index
    %85 = tpu.strided_load %arg5[%c32_43, %c0_44] {strides = array<i32: 2, 1>} : memref<296x128xf32, #tpu.memory_space<vmem>>, vector<8x128xf32>
    %c33_45 = arith.constant 33 : index
    %c0_46 = arith.constant 0 : index
    %86 = tpu.strided_load %arg5[%c33_45, %c0_46] {strides = array<i32: 2, 1>} : memref<296x128xf32, #tpu.memory_space<vmem>>, vector<8x128xf32>
    %c48 = arith.constant 48 : index
    %c0_47 = arith.constant 0 : index
    %87 = tpu.strided_load %arg5[%c48, %c0_47] {strides = array<i32: 2, 1>} : memref<296x128xf32, #tpu.memory_space<vmem>>, vector<8x128xf32>
    %c49 = arith.constant 49 : index
    %c0_48 = arith.constant 0 : index
    %88 = tpu.strided_load %arg5[%c49, %c0_48] {strides = array<i32: 2, 1>} : memref<296x128xf32, #tpu.memory_space<vmem>>, vector<8x128xf32>
    %89 = arith.maximumf %85, %86 : vector<8x128xf32>
    %90 = arith.maximumf %87, %88 : vector<8x128xf32>
    %91 = arith.maximumf %89, %90 : vector<8x128xf32>
    %c64 = arith.constant 64 : index
    %c0_49 = arith.constant 0 : index
    %92 = tpu.strided_load %arg5[%c64, %c0_49] {strides = array<i32: 2, 1>} : memref<296x128xf32, #tpu.memory_space<vmem>>, vector<8x128xf32>
    %c65 = arith.constant 65 : index
    %c0_50 = arith.constant 0 : index
    %93 = tpu.strided_load %arg5[%c65, %c0_50] {strides = array<i32: 2, 1>} : memref<296x128xf32, #tpu.memory_space<vmem>>, vector<8x128xf32>
    %c80 = arith.constant 80 : index
    %c0_51 = arith.constant 0 : index
    %94 = tpu.strided_load %arg5[%c80, %c0_51] {strides = array<i32: 2, 1>} : memref<296x128xf32, #tpu.memory_space<vmem>>, vector<8x128xf32>
    %c81 = arith.constant 81 : index
    %c0_52 = arith.constant 0 : index
    %95 = tpu.strided_load %arg5[%c81, %c0_52] {strides = array<i32: 2, 1>} : memref<296x128xf32, #tpu.memory_space<vmem>>, vector<8x128xf32>
    %96 = arith.maximumf %92, %93 : vector<8x128xf32>
    %97 = arith.maximumf %94, %95 : vector<8x128xf32>
    %98 = arith.maximumf %96, %97 : vector<8x128xf32>
    %c96 = arith.constant 96 : index
    %c0_53 = arith.constant 0 : index
    %99 = tpu.strided_load %arg5[%c96, %c0_53] {strides = array<i32: 2, 1>} : memref<296x128xf32, #tpu.memory_space<vmem>>, vector<8x128xf32>
    %c97 = arith.constant 97 : index
    %c0_54 = arith.constant 0 : index
    %100 = tpu.strided_load %arg5[%c97, %c0_54] {strides = array<i32: 2, 1>} : memref<296x128xf32, #tpu.memory_space<vmem>>, vector<8x128xf32>
    %c112 = arith.constant 112 : index
    %c0_55 = arith.constant 0 : index
    %101 = tpu.strided_load %arg5[%c112, %c0_55] {strides = array<i32: 2, 1>} : memref<296x128xf32, #tpu.memory_space<vmem>>, vector<8x128xf32>
    %c113 = arith.constant 113 : index
    %c0_56 = arith.constant 0 : index
    %102 = tpu.strided_load %arg5[%c113, %c0_56] {strides = array<i32: 2, 1>} : memref<296x128xf32, #tpu.memory_space<vmem>>, vector<8x128xf32>
    %103 = arith.maximumf %99, %100 : vector<8x128xf32>
    %104 = arith.maximumf %101, %102 : vector<8x128xf32>
    %105 = arith.maximumf %103, %104 : vector<8x128xf32>
    %c128 = arith.constant 128 : index
    %c0_57 = arith.constant 0 : index
    %106 = tpu.strided_load %arg5[%c128, %c0_57] {strides = array<i32: 2, 1>} : memref<296x128xf32, #tpu.memory_space<vmem>>, vector<8x128xf32>
    %c129 = arith.constant 129 : index
    %c0_58 = arith.constant 0 : index
    %107 = tpu.strided_load %arg5[%c129, %c0_58] {strides = array<i32: 2, 1>} : memref<296x128xf32, #tpu.memory_space<vmem>>, vector<8x128xf32>
    %c144 = arith.constant 144 : index
    %c0_59 = arith.constant 0 : index
    %108 = tpu.strided_load %arg5[%c144, %c0_59] {strides = array<i32: 2, 1>} : memref<296x128xf32, #tpu.memory_space<vmem>>, vector<8x128xf32>
    %c145 = arith.constant 145 : index
    %c0_60 = arith.constant 0 : index
    %109 = tpu.strided_load %arg5[%c145, %c0_60] {strides = array<i32: 2, 1>} : memref<296x128xf32, #tpu.memory_space<vmem>>, vector<8x128xf32>
    %110 = arith.maximumf %106, %107 : vector<8x128xf32>
    %111 = arith.maximumf %108, %109 : vector<8x128xf32>
    %112 = arith.maximumf %110, %111 : vector<8x128xf32>
    %c160 = arith.constant 160 : index
    %c0_61 = arith.constant 0 : index
    %113 = tpu.strided_load %arg5[%c160, %c0_61] {strides = array<i32: 2, 1>} : memref<296x128xf32, #tpu.memory_space<vmem>>, vector<8x128xf32>
    %c161 = arith.constant 161 : index
    %c0_62 = arith.constant 0 : index
    %114 = tpu.strided_load %arg5[%c161, %c0_62] {strides = array<i32: 2, 1>} : memref<296x128xf32, #tpu.memory_space<vmem>>, vector<8x128xf32>
    %c176 = arith.constant 176 : index
    %c0_63 = arith.constant 0 : index
    %115 = tpu.strided_load %arg5[%c176, %c0_63] {strides = array<i32: 2, 1>} : memref<296x128xf32, #tpu.memory_space<vmem>>, vector<8x128xf32>
    %c177 = arith.constant 177 : index
    %c0_64 = arith.constant 0 : index
    %116 = tpu.strided_load %arg5[%c177, %c0_64] {strides = array<i32: 2, 1>} : memref<296x128xf32, #tpu.memory_space<vmem>>, vector<8x128xf32>
    %117 = arith.maximumf %113, %114 : vector<8x128xf32>
    %118 = arith.maximumf %115, %116 : vector<8x128xf32>
    %119 = arith.maximumf %117, %118 : vector<8x128xf32>
    %c192 = arith.constant 192 : index
    %c0_65 = arith.constant 0 : index
    %120 = tpu.strided_load %arg5[%c192, %c0_65] {strides = array<i32: 2, 1>} : memref<296x128xf32, #tpu.memory_space<vmem>>, vector<8x128xf32>
    %c193 = arith.constant 193 : index
    %c0_66 = arith.constant 0 : index
    %121 = tpu.strided_load %arg5[%c193, %c0_66] {strides = array<i32: 2, 1>} : memref<296x128xf32, #tpu.memory_space<vmem>>, vector<8x128xf32>
    %c208 = arith.constant 208 : index
    %c0_67 = arith.constant 0 : index
    %122 = tpu.strided_load %arg5[%c208, %c0_67] {strides = array<i32: 2, 1>} : memref<296x128xf32, #tpu.memory_space<vmem>>, vector<8x128xf32>
    %c209 = arith.constant 209 : index
    %c0_68 = arith.constant 0 : index
    %123 = tpu.strided_load %arg5[%c209, %c0_68] {strides = array<i32: 2, 1>} : memref<296x128xf32, #tpu.memory_space<vmem>>, vector<8x128xf32>
    %124 = arith.maximumf %120, %121 : vector<8x128xf32>
    %125 = arith.maximumf %122, %123 : vector<8x128xf32>
    %126 = arith.maximumf %124, %125 : vector<8x128xf32>
    %c224 = arith.constant 224 : index
    %c0_69 = arith.constant 0 : index
    %127 = tpu.strided_load %arg5[%c224, %c0_69] {strides = array<i32: 2, 1>} : memref<296x128xf32, #tpu.memory_space<vmem>>, vector<8x128xf32>
    %c225 = arith.constant 225 : index
    %c0_70 = arith.constant 0 : index
    %128 = tpu.strided_load %arg5[%c225, %c0_70] {strides = array<i32: 2, 1>} : memref<296x128xf32, #tpu.memory_space<vmem>>, vector<8x128xf32>
    %c240 = arith.constant 240 : index
    %c0_71 = arith.constant 0 : index
    %129 = tpu.strided_load %arg5[%c240, %c0_71] {strides = array<i32: 2, 1>} : memref<296x128xf32, #tpu.memory_space<vmem>>, vector<8x128xf32>
    %c241 = arith.constant 241 : index
    %c0_72 = arith.constant 0 : index
    %130 = tpu.strided_load %arg5[%c241, %c0_72] {strides = array<i32: 2, 1>} : memref<296x128xf32, #tpu.memory_space<vmem>>, vector<8x128xf32>
    %131 = arith.maximumf %127, %128 : vector<8x128xf32>
    %132 = arith.maximumf %129, %130 : vector<8x128xf32>
    %133 = arith.maximumf %131, %132 : vector<8x128xf32>
    %134 = tpu.concatenate %84, %91, %98, %105, %112, %119, %126, %133 in 0 : vector<8x128xf32>, vector<8x128xf32>, vector<8x128xf32>, vector<8x128xf32>, vector<8x128xf32>, vector<8x128xf32>, vector<8x128xf32>, vector<8x128xf32> -> vector<64x128xf32>
    %cst_73 = arith.constant 0.000000e+00 : f32
    %135 = vector.broadcast %cst_73 : f32 to vector<9x128xf32>
    %c0_74 = arith.constant 0 : index
    %c0_75 = arith.constant 0 : index
    %136 = vector.load %arg5[%c0_74, %c0_75] : memref<296x128xf32, #tpu.memory_space<vmem>>, vector<9x128xf32>
    tpu.vector_store %arg5[%c0_74, %c0_75], %135 {strides = array<i32>} : memref<296x128xf32, #tpu.memory_space<vmem>>, vector<9x128xf32>,
    %c73 = arith.constant 73 : index
    %c0_76 = arith.constant 0 : index
    %137 = vector.load %arg5[%c73, %c0_76] : memref<296x128xf32, #tpu.memory_space<vmem>>, vector<9x128xf32>
    tpu.vector_store %arg5[%c73, %c0_76], %135 {strides = array<i32>} : memref<296x128xf32, #tpu.memory_space<vmem>>, vector<9x128xf32>,
    %c9 = arith.constant 9 : index
    %c0_77 = arith.constant 0 : index
    %138 = vector.load %arg5[%c9, %c0_77] : memref<296x128xf32, #tpu.memory_space<vmem>>, vector<64x128xf32>
    tpu.vector_store %arg5[%c9, %c0_77], %134 {strides = array<i32>} : memref<296x128xf32, #tpu.memory_space<vmem>>, vector<64x128xf32>,
    %139 = tpu.iota {dimensions = array<i32: 0>} : vector<64x1xi32>
    %c8_i32 = arith.constant 8 : i32
    %c0_i32_78 = arith.constant 0 : i32
    %140 = arith.cmpi eq, %c8_i32, %c0_i32_78 : i32
    %c1_i32_79 = arith.constant 1 : i32
    %141 = arith.select %140, %c1_i32_79, %c8_i32 : i32
    %142 = vector.broadcast %141 : i32 to vector<64x1xi32>
    %143 = arith.remsi %139, %142 : vector<64x1xi32>
    %c0_i32_80 = arith.constant 0 : i32
    %144 = vector.broadcast %c0_i32_80 : i32 to vector<64x1xi32>
    %145 = arith.cmpi ne, %143, %144 : vector<64x1xi32>
    %c0_i32_81 = arith.constant 0 : i32
    %146 = vector.broadcast %c0_i32_81 : i32 to vector<64x1xi32>
    %147 = arith.cmpi slt, %143, %146 : vector<64x1xi32>
    %c0_i32_82 = arith.constant 0 : i32
    %148 = arith.cmpi slt, %141, %c0_i32_82 : i32
    %149 = vector.broadcast %148 : i1 to vector<64x1xi1>
    %150 = vector.broadcast %149 : vector<64x1xi1> to vector<64x1xi1>
    %151 = arith.xori %147, %150 : vector<64x1xi1>
    %152 = arith.andi %151, %145 : vector<64x1xi1>
    %153 = vector.broadcast %141 : i32 to vector<64x1xi32>
    %154 = arith.addi %143, %153 : vector<64x1xi32>
    %155 = arith.select %152, %154, %143 : vector<64x1xi1>, vector<64x1xi32>
    %c1_i32_83 = arith.constant 1 : i32
    %156 = vector.broadcast %c1_i32_83 : i32 to vector<64x1xi32>
    %157 = arith.cmpi sge, %155, %156 : vector<64x1xi32>
    %158 = arith.extui %157 : vector<64x1xi1> to vector<64x1xi32>
    %159 = arith.sitofp %158 : vector<64x1xi32> to vector<64x1xf32>
    %c6_i32 = arith.constant 6 : i32
    %160 = vector.broadcast %c6_i32 : i32 to vector<64x1xi32>
    %161 = arith.cmpi sle, %155, %160 : vector<64x1xi32>
    %162 = arith.extui %161 : vector<64x1xi1> to vector<64x1xi32>
    %163 = arith.sitofp %162 : vector<64x1xi32> to vector<64x1xf32>
    %c0_84 = arith.constant 0 : index
    %c0_85 = arith.constant 0 : index
    %164 = vector.load %arg5[%c0_84, %c0_85] : memref<296x128xf32, #tpu.memory_space<vmem>>, vector<64x128xf32>
    %165 = vector.broadcast %159 : vector<64x1xf32> to vector<64x128xf32>
    %166 = arith.mulf %164, %165 : vector<64x128xf32>
    %167 = arith.truncf %166 : vector<64x128xf32> to vector<64x128xbf16>
    %c1_86 = arith.constant 1 : index
    %c0_87 = arith.constant 0 : index
    %168 = vector.load %arg5[%c1_86, %c0_87] : memref<296x128xf32, #tpu.memory_space<vmem>>, vector<64x128xf32>
    %169 = arith.truncf %168 : vector<64x128xf32> to vector<64x128xbf16>
    %c2_88 = arith.constant 2 : index
    %c0_89 = arith.constant 0 : index
    %170 = vector.load %arg5[%c2_88, %c0_89] : memref<296x128xf32, #tpu.memory_space<vmem>>, vector<64x128xf32>
    %171 = vector.broadcast %163 : vector<64x1xf32> to vector<64x128xf32>
    %172 = arith.mulf %170, %171 : vector<64x128xf32>
    %173 = arith.truncf %172 : vector<64x128xf32> to vector<64x128xbf16>
    %c8_90 = arith.constant 8 : index
    %c0_91 = arith.constant 0 : index
    %174 = vector.load %arg5[%c8_90, %c0_91] : memref<296x128xf32, #tpu.memory_space<vmem>>, vector<64x128xf32>
    %175 = vector.broadcast %159 : vector<64x1xf32> to vector<64x128xf32>
    %176 = arith.mulf %174, %175 : vector<64x128xf32>
    %177 = arith.truncf %176 : vector<64x128xf32> to vector<64x128xbf16>
    %c9_92 = arith.constant 9 : index
    %c0_93 = arith.constant 0 : index
    %178 = vector.load %arg5[%c9_92, %c0_93] : memref<296x128xf32, #tpu.memory_space<vmem>>, vector<64x128xf32>
    %179 = arith.truncf %178 : vector<64x128xf32> to vector<64x128xbf16>
    %c10 = arith.constant 10 : index
    %c0_94 = arith.constant 0 : index
    %180 = vector.load %arg5[%c10, %c0_94] : memref<296x128xf32, #tpu.memory_space<vmem>>, vector<64x128xf32>
    %181 = vector.broadcast %163 : vector<64x1xf32> to vector<64x128xf32>
    %182 = arith.mulf %180, %181 : vector<64x128xf32>
    %183 = arith.truncf %182 : vector<64x128xf32> to vector<64x128xbf16>
    %c16_95 = arith.constant 16 : index
    %c0_96 = arith.constant 0 : index
    %184 = vector.load %arg5[%c16_95, %c0_96] : memref<296x128xf32, #tpu.memory_space<vmem>>, vector<64x128xf32>
    %185 = vector.broadcast %159 : vector<64x1xf32> to vector<64x128xf32>
    %186 = arith.mulf %184, %185 : vector<64x128xf32>
    %187 = arith.truncf %186 : vector<64x128xf32> to vector<64x128xbf16>
    %c17_97 = arith.constant 17 : index
    %c0_98 = arith.constant 0 : index
    %188 = vector.load %arg5[%c17_97, %c0_98] : memref<296x128xf32, #tpu.memory_space<vmem>>, vector<64x128xf32>
    %189 = arith.truncf %188 : vector<64x128xf32> to vector<64x128xbf16>
    %c18_99 = arith.constant 18 : index
    %c0_100 = arith.constant 0 : index
    %190 = vector.load %arg5[%c18_99, %c0_100] : memref<296x128xf32, #tpu.memory_space<vmem>>, vector<64x128xf32>
    %191 = vector.broadcast %163 : vector<64x1xf32> to vector<64x128xf32>
    %192 = arith.mulf %190, %191 : vector<64x128xf32>
    %193 = arith.truncf %192 : vector<64x128xf32> to vector<64x128xbf16>
    %194 = tpu.concatenate %167, %169, %173, %177, %179, %183, %187, %189, %193 in 1 : vector<64x128xbf16>, vector<64x128xbf16>, vector<64x128xbf16>, vector<64x128xbf16>, vector<64x128xbf16>, vector<64x128xbf16>, vector<64x128xbf16>, vector<64x128xbf16>, vector<64x128xbf16> -> vector<64x1152xbf16>
    %c1152 = arith.constant 1152 : index
    %c0_101 = arith.constant 0 : index
    %195 = vector.load %arg2[%c1152, %c0_101] : memref<6688x128xbf16, #tpu.memory_space<vmem>>, vector<1152x128xbf16>
    %cst_102 = arith.constant dense<0.000000e+00> : vector<64x128xf32>
    %196 = tpu.matmul %194, %195, %cst_102 {dimension_numbers = #tpu.dot_dimension_numbers<[1], [0], [0], [1], [0, 0, 1, 1], [], []>} : vector<64x1152xbf16>, vector<1152x128xbf16>, vector<64x128xf32> -> vector<64x128xf32>
    %c16_103 = arith.constant 16 : index
    %c0_104 = arith.constant 0 : index
    %197 = vector.load %arg3[%c16_103, %c0_104] : memref<192x128xf32, #tpu.memory_space<vmem>>, vector<1x128xf32>
    %198 = vector.broadcast %197 : vector<1x128xf32> to vector<64x128xf32>
    %199 = arith.mulf %196, %198 : vector<64x128xf32>
    %c24 = arith.constant 24 : index
    %c0_105 = arith.constant 0 : index
    %200 = vector.load %arg3[%c24, %c0_105] : memref<192x128xf32, #tpu.memory_space<vmem>>, vector<1x128xf32>
    %201 = vector.broadcast %200 : vector<1x128xf32> to vector<64x128xf32>
    %202 = arith.addf %199, %201 : vector<64x128xf32>
    %cst_106 = arith.constant 0.000000e+00 : f32
    %203 = vector.broadcast %cst_106 : f32 to vector<64x128xf32>
    %204 = arith.maximumf %202, %203 : vector<64x128xf32>
    %c0_107 = arith.constant 0 : index
    %c0_108 = arith.constant 0 : index
    %205 = vector.load %arg5[%c0_107, %c0_108] : memref<296x128xf32, #tpu.memory_space<vmem>>, vector<64x128xf32>
    tpu.vector_store %arg5[%c0_107, %c0_108], %204 {strides = array<i32>} : memref<296x128xf32, #tpu.memory_space<vmem>>, vector<64x128xf32>,
    %c0_109 = arith.constant 0 : index
    %c0_110 = arith.constant 0 : index
    %206 = tpu.strided_load %arg5[%c0_109, %c0_110] {strides = array<i32: 2, 1>} : memref<296x128xf32, #tpu.memory_space<vmem>>, vector<4x128xf32>
    %c1_111 = arith.constant 1 : index
    %c0_112 = arith.constant 0 : index
    %207 = tpu.strided_load %arg5[%c1_111, %c0_112] {strides = array<i32: 2, 1>} : memref<296x128xf32, #tpu.memory_space<vmem>>, vector<4x128xf32>
    %c8_113 = arith.constant 8 : index
    %c0_114 = arith.constant 0 : index
    %208 = tpu.strided_load %arg5[%c8_113, %c0_114] {strides = array<i32: 2, 1>} : memref<296x128xf32, #tpu.memory_space<vmem>>, vector<4x128xf32>
    %c9_115 = arith.constant 9 : index
    %c0_116 = arith.constant 0 : index
    %209 = tpu.strided_load %arg5[%c9_115, %c0_116] {strides = array<i32: 2, 1>} : memref<296x128xf32, #tpu.memory_space<vmem>>, vector<4x128xf32>
    %210 = arith.maximumf %206, %207 : vector<4x128xf32>
    %211 = arith.maximumf %208, %209 : vector<4x128xf32>
    %212 = arith.maximumf %210, %211 : vector<4x128xf32>
    %c16_117 = arith.constant 16 : index
    %c0_118 = arith.constant 0 : index
    %213 = tpu.strided_load %arg5[%c16_117, %c0_118] {strides = array<i32: 2, 1>} : memref<296x128xf32, #tpu.memory_space<vmem>>, vector<4x128xf32>
    %c17_119 = arith.constant 17 : index
    %c0_120 = arith.constant 0 : index
    %214 = tpu.strided_load %arg5[%c17_119, %c0_120] {strides = array<i32: 2, 1>} : memref<296x128xf32, #tpu.memory_space<vmem>>, vector<4x128xf32>
    %c24_121 = arith.constant 24 : index
    %c0_122 = arith.constant 0 : index
    %215 = tpu.strided_load %arg5[%c24_121, %c0_122] {strides = array<i32: 2, 1>} : memref<296x128xf32, #tpu.memory_space<vmem>>, vector<4x128xf32>
    %c25 = arith.constant 25 : index
    %c0_123 = arith.constant 0 : index
    %216 = tpu.strided_load %arg5[%c25, %c0_123] {strides = array<i32: 2, 1>} : memref<296x128xf32, #tpu.memory_space<vmem>>, vector<4x128xf32>
    %217 = arith.maximumf %213, %214 : vector<4x128xf32>
    %218 = arith.maximumf %215, %216 : vector<4x128xf32>
    %219 = arith.maximumf %217, %218 : vector<4x128xf32>
    %c32_124 = arith.constant 32 : index
    %c0_125 = arith.constant 0 : index
    %220 = tpu.strided_load %arg5[%c32_124, %c0_125] {strides = array<i32: 2, 1>} : memref<296x128xf32, #tpu.memory_space<vmem>>, vector<4x128xf32>
    %c33_126 = arith.constant 33 : index
    %c0_127 = arith.constant 0 : index
    %221 = tpu.strided_load %arg5[%c33_126, %c0_127] {strides = array<i32: 2, 1>} : memref<296x128xf32, #tpu.memory_space<vmem>>, vector<4x128xf32>
    %c40 = arith.constant 40 : index
    %c0_128 = arith.constant 0 : index
    %222 = tpu.strided_load %arg5[%c40, %c0_128] {strides = array<i32: 2, 1>} : memref<296x128xf32, #tpu.memory_space<vmem>>, vector<4x128xf32>
    %c41 = arith.constant 41 : index
    %c0_129 = arith.constant 0 : index
    %223 = tpu.strided_load %arg5[%c41, %c0_129] {strides = array<i32: 2, 1>} : memref<296x128xf32, #tpu.memory_space<vmem>>, vector<4x128xf32>
    %224 = arith.maximumf %220, %221 : vector<4x128xf32>
    %225 = arith.maximumf %222, %223 : vector<4x128xf32>
    %226 = arith.maximumf %224, %225 : vector<4x128xf32>
    %c48_130 = arith.constant 48 : index
    %c0_131 = arith.constant 0 : index
    %227 = tpu.strided_load %arg5[%c48_130, %c0_131] {strides = array<i32: 2, 1>} : memref<296x128xf32, #tpu.memory_space<vmem>>, vector<4x128xf32>
    %c49_132 = arith.constant 49 : index
    %c0_133 = arith.constant 0 : index
    %228 = tpu.strided_load %arg5[%c49_132, %c0_133] {strides = array<i32: 2, 1>} : memref<296x128xf32, #tpu.memory_space<vmem>>, vector<4x128xf32>
    %c56 = arith.constant 56 : index
    %c0_134 = arith.constant 0 : index
    %229 = tpu.strided_load %arg5[%c56, %c0_134] {strides = array<i32: 2, 1>} : memref<296x128xf32, #tpu.memory_space<vmem>>, vector<4x128xf32>
    %c57 = arith.constant 57 : index
    %c0_135 = arith.constant 0 : index
    %230 = tpu.strided_load %arg5[%c57, %c0_135] {strides = array<i32: 2, 1>} : memref<296x128xf32, #tpu.memory_space<vmem>>, vector<4x128xf32>
    %231 = arith.maximumf %227, %228 : vector<4x128xf32>
    %232 = arith.maximumf %229, %230 : vector<4x128xf32>
    %233 = arith.maximumf %231, %232 : vector<4x128xf32>
    %234 = tpu.concatenate %212, %219, %226, %233 in 0 : vector<4x128xf32>, vector<4x128xf32>, vector<4x128xf32>, vector<4x128xf32> -> vector<16x128xf32>
    %cst_136 = arith.constant 0.000000e+00 : f32
    %235 = vector.broadcast %cst_136 : f32 to vector<5x128xf32>
    %c0_137 = arith.constant 0 : index
    %c0_138 = arith.constant 0 : index
    %236 = vector.load %arg5[%c0_137, %c0_138] : memref<296x128xf32, #tpu.memory_space<vmem>>, vector<5x128xf32>
    tpu.vector_store %arg5[%c0_137, %c0_138], %235 {strides = array<i32>} : memref<296x128xf32, #tpu.memory_space<vmem>>, vector<5x128xf32>,
    %c21 = arith.constant 21 : index
    %c0_139 = arith.constant 0 : index
    %237 = vector.load %arg5[%c21, %c0_139] : memref<296x128xf32, #tpu.memory_space<vmem>>, vector<5x128xf32>
    tpu.vector_store %arg5[%c21, %c0_139], %235 {strides = array<i32>} : memref<296x128xf32, #tpu.memory_space<vmem>>, vector<5x128xf32>,
    %c5 = arith.constant 5 : index
    %c0_140 = arith.constant 0 : index
    %238 = vector.load %arg5[%c5, %c0_140] : memref<296x128xf32, #tpu.memory_space<vmem>>, vector<16x128xf32>
    tpu.vector_store %arg5[%c5, %c0_140], %234 {strides = array<i32>} : memref<296x128xf32, #tpu.memory_space<vmem>>, vector<16x128xf32>,
    %239 = tpu.iota {dimensions = array<i32: 0>} : vector<16x1xi32>
    %c4_i32 = arith.constant 4 : i32
    %c0_i32_141 = arith.constant 0 : i32
    %240 = arith.cmpi eq, %c4_i32, %c0_i32_141 : i32
    %c1_i32_142 = arith.constant 1 : i32
    %241 = arith.select %240, %c1_i32_142, %c4_i32 : i32
    %242 = vector.broadcast %241 : i32 to vector<16x1xi32>
    %243 = arith.remsi %239, %242 : vector<16x1xi32>
    %c0_i32_143 = arith.constant 0 : i32
    %244 = vector.broadcast %c0_i32_143 : i32 to vector<16x1xi32>
    %245 = arith.cmpi ne, %243, %244 : vector<16x1xi32>
    %c0_i32_144 = arith.constant 0 : i32
    %246 = vector.broadcast %c0_i32_144 : i32 to vector<16x1xi32>
    %247 = arith.cmpi slt, %243, %246 : vector<16x1xi32>
    %c0_i32_145 = arith.constant 0 : i32
    %248 = arith.cmpi slt, %241, %c0_i32_145 : i32
    %249 = vector.broadcast %248 : i1 to vector<16x1xi1>
    %250 = vector.broadcast %249 : vector<16x1xi1> to vector<16x1xi1>
    %251 = arith.xori %247, %250 : vector<16x1xi1>
    %252 = arith.andi %251, %245 : vector<16x1xi1>
    %253 = vector.broadcast %241 : i32 to vector<16x1xi32>
    %254 = arith.addi %243, %253 : vector<16x1xi32>
    %255 = arith.select %252, %254, %243 : vector<16x1xi1>, vector<16x1xi32>
    %c1_i32_146 = arith.constant 1 : i32
    %256 = vector.broadcast %c1_i32_146 : i32 to vector<16x1xi32>
    %257 = arith.cmpi sge, %255, %256 : vector<16x1xi32>
    %258 = arith.extui %257 : vector<16x1xi1> to vector<16x1xi32>
    %259 = arith.sitofp %258 : vector<16x1xi32> to vector<16x1xf32>
    %c2_i32 = arith.constant 2 : i32
    %260 = vector.broadcast %c2_i32 : i32 to vector<16x1xi32>
    %261 = arith.cmpi sle, %255, %260 : vector<16x1xi32>
    %262 = arith.extui %261 : vector<16x1xi1> to vector<16x1xi32>
    %263 = arith.sitofp %262 : vector<16x1xi32> to vector<16x1xf32>
    %c0_147 = arith.constant 0 : index
    %c0_148 = arith.constant 0 : index
    %264 = vector.load %arg5[%c0_147, %c0_148] : memref<296x128xf32, #tpu.memory_space<vmem>>, vector<16x128xf32>
    %265 = vector.broadcast %259 : vector<16x1xf32> to vector<16x128xf32>
    %266 = arith.mulf %264, %265 : vector<16x128xf32>
    %267 = arith.truncf %266 : vector<16x128xf32> to vector<16x128xbf16>
    %c1_149 = arith.constant 1 : index
    %c0_150 = arith.constant 0 : index
    %268 = vector.load %arg5[%c1_149, %c0_150] : memref<296x128xf32, #tpu.memory_space<vmem>>, vector<16x128xf32>
    %269 = arith.truncf %268 : vector<16x128xf32> to vector<16x128xbf16>
    %c2_151 = arith.constant 2 : index
    %c0_152 = arith.constant 0 : index
    %270 = vector.load %arg5[%c2_151, %c0_152] : memref<296x128xf32, #tpu.memory_space<vmem>>, vector<16x128xf32>
    %271 = vector.broadcast %263 : vector<16x1xf32> to vector<16x128xf32>
    %272 = arith.mulf %270, %271 : vector<16x128xf32>
    %273 = arith.truncf %272 : vector<16x128xf32> to vector<16x128xbf16>
    %c4 = arith.constant 4 : index
    %c0_153 = arith.constant 0 : index
    %274 = vector.load %arg5[%c4, %c0_153] : memref<296x128xf32, #tpu.memory_space<vmem>>, vector<16x128xf32>
    %275 = vector.broadcast %259 : vector<16x1xf32> to vector<16x128xf32>
    %276 = arith.mulf %274, %275 : vector<16x128xf32>
    %277 = arith.truncf %276 : vector<16x128xf32> to vector<16x128xbf16>
    %c5_154 = arith.constant 5 : index
    %c0_155 = arith.constant 0 : index
    %278 = vector.load %arg5[%c5_154, %c0_155] : memref<296x128xf32, #tpu.memory_space<vmem>>, vector<16x128xf32>
    %279 = arith.truncf %278 : vector<16x128xf32> to vector<16x128xbf16>
    %c6 = arith.constant 6 : index
    %c0_156 = arith.constant 0 : index
    %280 = vector.load %arg5[%c6, %c0_156] : memref<296x128xf32, #tpu.memory_space<vmem>>, vector<16x128xf32>
    %281 = vector.broadcast %263 : vector<16x1xf32> to vector<16x128xf32>
    %282 = arith.mulf %280, %281 : vector<16x128xf32>
    %283 = arith.truncf %282 : vector<16x128xf32> to vector<16x128xbf16>
    %c8_157 = arith.constant 8 : index
    %c0_158 = arith.constant 0 : index
    %284 = vector.load %arg5[%c8_157, %c0_158] : memref<296x128xf32, #tpu.memory_space<vmem>>, vector<16x128xf32>
    %285 = vector.broadcast %259 : vector<16x1xf32> to vector<16x128xf32>
    %286 = arith.mulf %284, %285 : vector<16x128xf32>
    %287 = arith.truncf %286 : vector<16x128xf32> to vector<16x128xbf16>
    %c9_159 = arith.constant 9 : index
    %c0_160 = arith.constant 0 : index
    %288 = vector.load %arg5[%c9_159, %c0_160] : memref<296x128xf32, #tpu.memory_space<vmem>>, vector<16x128xf32>
    %289 = arith.truncf %288 : vector<16x128xf32> to vector<16x128xbf16>
    %c10_161 = arith.constant 10 : index
    %c0_162 = arith.constant 0 : index
    %290 = vector.load %arg5[%c10_161, %c0_162] : memref<296x128xf32, #tpu.memory_space<vmem>>, vector<16x128xf32>
    %291 = vector.broadcast %263 : vector<16x1xf32> to vector<16x128xf32>
    %292 = arith.mulf %290, %291 : vector<16x128xf32>
    %293 = arith.truncf %292 : vector<16x128xf32> to vector<16x128xbf16>
    %294 = tpu.concatenate %267, %269, %273, %277, %279, %283, %287, %289, %293 in 1 : vector<16x128xbf16>, vector<16x128xbf16>, vector<16x128xbf16>, vector<16x128xbf16>, vector<16x128xbf16>, vector<16x128xbf16>, vector<16x128xbf16>, vector<16x128xbf16>, vector<16x128xbf16> -> vector<16x1152xbf16>
    %c2304 = arith.constant 2304 : index
    %c0_163 = arith.constant 0 : index
    %295 = vector.load %arg2[%c2304, %c0_163] : memref<6688x128xbf16, #tpu.memory_space<vmem>>, vector<1152x128xbf16>
    %cst_164 = arith.constant dense<0.000000e+00> : vector<16x128xf32>
    %296 = tpu.matmul %294, %295, %cst_164 {dimension_numbers = #tpu.dot_dimension_numbers<[1], [0], [0], [1], [0, 0, 1, 1], [], []>} : vector<16x1152xbf16>, vector<1152x128xbf16>, vector<16x128xf32> -> vector<16x128xf32>
    %c32_165 = arith.constant 32 : index
    %c0_166 = arith.constant 0 : index
    %297 = vector.load %arg3[%c32_165, %c0_166] : memref<192x128xf32, #tpu.memory_space<vmem>>, vector<1x128xf32>
    %298 = vector.broadcast %297 : vector<1x128xf32> to vector<16x128xf32>
    %299 = arith.mulf %296, %298 : vector<16x128xf32>
    %c40_167 = arith.constant 40 : index
    %c0_168 = arith.constant 0 : index
    %300 = vector.load %arg3[%c40_167, %c0_168] : memref<192x128xf32, #tpu.memory_space<vmem>>, vector<1x128xf32>
    %301 = vector.broadcast %300 : vector<1x128xf32> to vector<16x128xf32>
    %302 = arith.addf %299, %301 : vector<16x128xf32>
    %cst_169 = arith.constant 0.000000e+00 : f32
    %303 = vector.broadcast %cst_169 : f32 to vector<16x128xf32>
    %304 = arith.maximumf %302, %303 : vector<16x128xf32>
    %305 = arith.truncf %304 : vector<16x128xf32> to vector<16x128xbf16>
    %c3456 = arith.constant 3456 : index
    %c0_170 = arith.constant 0 : index
    %306 = vector.load %arg2[%c3456, %c0_170] : memref<6688x128xbf16, #tpu.memory_space<vmem>>, vector<128x128xbf16>
    %cst_171 = arith.constant dense<0.000000e+00> : vector<16x128xf32>
    %307 = tpu.matmul %305, %306, %cst_171 {dimension_numbers = #tpu.dot_dimension_numbers<[1], [0], [0], [1], [0, 0, 1, 1], [], []>} : vector<16x128xbf16>, vector<128x128xbf16>, vector<16x128xf32> -> vector<16x128xf32>
    %c48_172 = arith.constant 48 : index
    %c0_173 = arith.constant 0 : index
    %308 = vector.load %arg3[%c48_172, %c0_173] : memref<192x128xf32, #tpu.memory_space<vmem>>, vector<1x128xf32>
    %309 = vector.broadcast %308 : vector<1x128xf32> to vector<16x128xf32>
    %310 = arith.mulf %307, %309 : vector<16x128xf32>
    %c56_174 = arith.constant 56 : index
    %c0_175 = arith.constant 0 : index
    %311 = vector.load %arg3[%c56_174, %c0_175] : memref<192x128xf32, #tpu.memory_space<vmem>>, vector<1x128xf32>
    %312 = vector.broadcast %311 : vector<1x128xf32> to vector<16x128xf32>
    %313 = arith.addf %310, %312 : vector<16x128xf32>
    %314 = arith.truncf %313 : vector<16x128xf32> to vector<16x128xbf16>
    %c3584 = arith.constant 3584 : index
    %c0_176 = arith.constant 0 : index
    %315 = vector.load %arg2[%c3584, %c0_176] : memref<6688x128xbf16, #tpu.memory_space<vmem>>, vector<36x16xbf16>
    %cst_177 = arith.constant dense<0.000000e+00> : vector<36x128xf32>
    %316 = tpu.matmul %315, %314, %cst_177 {dimension_numbers = #tpu.dot_dimension_numbers<[1], [0], [0], [1], [0, 0, 1, 1], [], []>} : vector<36x16xbf16>, vector<16x128xbf16>, vector<36x128xf32> -> vector<36x128xf32>
    %c64_178 = arith.constant 64 : index
    %c0_179 = arith.constant 0 : index
    %317 = vector.load %arg3[%c64_178, %c0_179] : memref<192x128xf32, #tpu.memory_space<vmem>>, vector<9x128xf32>
    %318 = vector.extract_strided_slice %316 {offsets = [0, 0], sizes = [4, 128], strides = [1, 1]} : vector<36x128xf32> to vector<4x128xf32>
    %319 = vector.extract_strided_slice %317 {offsets = [0, 0], sizes = [1, 128], strides = [1, 1]} : vector<9x128xf32> to vector<1x128xf32>
    %320 = vector.broadcast %319 : vector<1x128xf32> to vector<4x128xf32>
    %321 = arith.mulf %318, %320 : vector<4x128xf32>
    %322 = vector.extract_strided_slice %316 {offsets = [4, 0], sizes = [4, 128], strides = [1, 1]} : vector<36x128xf32> to vector<4x128xf32>
    %323 = vector.extract_strided_slice %317 {offsets = [1, 0], sizes = [1, 128], strides = [1, 1]} : vector<9x128xf32> to vector<1x128xf32>
    %324 = vector.broadcast %323 : vector<1x128xf32> to vector<4x128xf32>
    %325 = arith.mulf %322, %324 : vector<4x128xf32>
    %326 = arith.addf %321, %325 : vector<4x128xf32>
    %327 = vector.extract_strided_slice %316 {offsets = [8, 0], sizes = [4, 128], strides = [1, 1]} : vector<36x128xf32> to vector<4x128xf32>
    %328 = vector.extract_strided_slice %317 {offsets = [2, 0], sizes = [1, 128], strides = [1, 1]} : vector<9x128xf32> to vector<1x128xf32>
    %329 = vector.broadcast %328 : vector<1x128xf32> to vector<4x128xf32>
    %330 = arith.mulf %327, %329 : vector<4x128xf32>
    %331 = arith.addf %326, %330 : vector<4x128xf32>
    %332 = vector.extract_strided_slice %316 {offsets = [12, 0], sizes = [4, 128], strides = [1, 1]} : vector<36x128xf32> to vector<4x128xf32>
    %333 = vector.extract_strided_slice %317 {offsets = [3, 0], sizes = [1, 128], strides = [1, 1]} : vector<9x128xf32> to vector<1x128xf32>
    %334 = vector.broadcast %333 : vector<1x128xf32> to vector<4x128xf32>
    %335 = arith.mulf %332, %334 : vector<4x128xf32>
    %336 = arith.addf %331, %335 : vector<4x128xf32>
    %337 = vector.extract_strided_slice %316 {offsets = [16, 0], sizes = [4, 128], strides = [1, 1]} : vector<36x128xf32> to vector<4x128xf32>
    %338 = vector.extract_strided_slice %317 {offsets = [4, 0], sizes = [1, 128], strides = [1, 1]} : vector<9x128xf32> to vector<1x128xf32>
    %339 = vector.broadcast %338 : vector<1x128xf32> to vector<4x128xf32>
    %340 = arith.mulf %337, %339 : vector<4x128xf32>
    %341 = arith.addf %336, %340 : vector<4x128xf32>
    %342 = vector.extract_strided_slice %316 {offsets = [20, 0], sizes = [4, 128], strides = [1, 1]} : vector<36x128xf32> to vector<4x128xf32>
    %343 = vector.extract_strided_slice %317 {offsets = [5, 0], sizes = [1, 128], strides = [1, 1]} : vector<9x128xf32> to vector<1x128xf32>
    %344 = vector.broadcast %343 : vector<1x128xf32> to vector<4x128xf32>
    %345 = arith.mulf %342, %344 : vector<4x128xf32>
    %346 = arith.addf %341, %345 : vector<4x128xf32>
    %347 = vector.extract_strided_slice %316 {offsets = [24, 0], sizes = [4, 128], strides = [1, 1]} : vector<36x128xf32> to vector<4x128xf32>
    %348 = vector.extract_strided_slice %317 {offsets = [6, 0], sizes = [1, 128], strides = [1, 1]} : vector<9x128xf32> to vector<1x128xf32>
    %349 = vector.broadcast %348 : vector<1x128xf32> to vector<4x128xf32>
    %350 = arith.mulf %347, %349 : vector<4x128xf32>
    %351 = arith.addf %346, %350 : vector<4x128xf32>
    %352 = vector.extract_strided_slice %316 {offsets = [28, 0], sizes = [4, 128], strides = [1, 1]} : vector<36x128xf32> to vector<4x128xf32>
    %353 = vector.extract_strided_slice %317 {offsets = [7, 0], sizes = [1, 128], strides = [1, 1]} : vector<9x128xf32> to vector<1x128xf32>
    %354 = vector.broadcast %353 : vector<1x128xf32> to vector<4x128xf32>
    %355 = arith.mulf %352, %354 : vector<4x128xf32>
    %356 = arith.addf %351, %355 : vector<4x128xf32>
    %357 = vector.extract_strided_slice %316 {offsets = [32, 0], sizes = [4, 128], strides = [1, 1]} : vector<36x128xf32> to vector<4x128xf32>
    %358 = vector.extract_strided_slice %317 {offsets = [8, 0], sizes = [1, 128], strides = [1, 1]} : vector<9x128xf32> to vector<1x128xf32>
    %359 = vector.broadcast %358 : vector<1x128xf32> to vector<4x128xf32>
    %360 = arith.mulf %357, %359 : vector<4x128xf32>
    %361 = arith.addf %356, %360 : vector<4x128xf32>
    %c80_180 = arith.constant 80 : index
    %c0_181 = arith.constant 0 : index
    %362 = vector.load %arg3[%c80_180, %c0_181] : memref<192x128xf32, #tpu.memory_space<vmem>>, vector<1x128xf32>
    %363 = vector.broadcast %362 : vector<1x128xf32> to vector<4x128xf32>
    %364 = arith.mulf %361, %363 : vector<4x128xf32>
    %c88 = arith.constant 88 : index
    %c0_182 = arith.constant 0 : index
    %365 = vector.load %arg3[%c88, %c0_182] : memref<192x128xf32, #tpu.memory_space<vmem>>, vector<1x128xf32>
    %366 = vector.broadcast %365 : vector<1x128xf32> to vector<4x128xf32>
    %367 = arith.addf %364, %366 : vector<4x128xf32>
    %cst_183 = arith.constant 0.000000e+00 : f32
    %368 = vector.broadcast %cst_183 : f32 to vector<4x128xf32>
    %369 = arith.maximumf %367, %368 : vector<4x128xf32>
    %c3632 = arith.constant 3632 : index
    %c0_184 = arith.constant 0 : index
    %370 = vector.load %arg2[%c3632, %c0_184] : memref<6688x128xbf16, #tpu.memory_space<vmem>>, vector<16x4xbf16>
    %371 = arith.truncf %369 : vector<4x128xf32> to vector<4x128xbf16>
    %cst_185 = arith.constant dense<0.000000e+00> : vector<16x128xf32>
    %372 = tpu.matmul %370, %371, %cst_185 {dimension_numbers = #tpu.dot_dimension_numbers<[1], [0], [0], [1], [0, 0, 1, 1], [], []>} : vector<16x4xbf16>, vector<4x128xbf16>, vector<16x128xf32> -> vector<16x128xf32>
    %c3648 = arith.constant 3648 : index
    %c0_186 = arith.constant 0 : index
    %373 = vector.load %arg2[%c3648, %c0_186] : memref<6688x128xbf16, #tpu.memory_space<vmem>>, vector<9x16xbf16>
    %cst_187 = arith.constant dense<0.000000e+00> : vector<9x128xf32>
    %374 = tpu.matmul %373, %314, %cst_187 {dimension_numbers = #tpu.dot_dimension_numbers<[1], [0], [0], [1], [0, 0, 1, 1], [], []>} : vector<9x16xbf16>, vector<16x128xbf16>, vector<9x128xf32> -> vector<9x128xf32>
    %c96_188 = arith.constant 96 : index
    %c0_189 = arith.constant 0 : index
    %375 = vector.load %arg3[%c96_188, %c0_189] : memref<192x128xf32, #tpu.memory_space<vmem>>, vector<9x128xf32>
    %376 = vector.extract_strided_slice %374 {offsets = [0, 0], sizes = [1, 128], strides = [1, 1]} : vector<9x128xf32> to vector<1x128xf32>
    %377 = vector.extract_strided_slice %375 {offsets = [0, 0], sizes = [1, 128], strides = [1, 1]} : vector<9x128xf32> to vector<1x128xf32>
    %378 = arith.mulf %376, %377 : vector<1x128xf32>
    %379 = vector.extract_strided_slice %374 {offsets = [1, 0], sizes = [1, 128], strides = [1, 1]} : vector<9x128xf32> to vector<1x128xf32>
    %380 = vector.extract_strided_slice %375 {offsets = [1, 0], sizes = [1, 128], strides = [1, 1]} : vector<9x128xf32> to vector<1x128xf32>
    %381 = arith.mulf %379, %380 : vector<1x128xf32>
    %382 = arith.addf %378, %381 : vector<1x128xf32>
    %383 = vector.extract_strided_slice %374 {offsets = [2, 0], sizes = [1, 128], strides = [1, 1]} : vector<9x128xf32> to vector<1x128xf32>
    %384 = vector.extract_strided_slice %375 {offsets = [2, 0], sizes = [1, 128], strides = [1, 1]} : vector<9x128xf32> to vector<1x128xf32>
    %385 = arith.mulf %383, %384 : vector<1x128xf32>
    %386 = arith.addf %382, %385 : vector<1x128xf32>
    %387 = vector.extract_strided_slice %374 {offsets = [3, 0], sizes = [1, 128], strides = [1, 1]} : vector<9x128xf32> to vector<1x128xf32>
    %388 = vector.extract_strided_slice %375 {offsets = [3, 0], sizes = [1, 128], strides = [1, 1]} : vector<9x128xf32> to vector<1x128xf32>
    %389 = arith.mulf %387, %388 : vector<1x128xf32>
    %390 = arith.addf %386, %389 : vector<1x128xf32>
    %391 = vector.extract_strided_slice %374 {offsets = [4, 0], sizes = [1, 128], strides = [1, 1]} : vector<9x128xf32> to vector<1x128xf32>
    %392 = vector.extract_strided_slice %375 {offsets = [4, 0], sizes = [1, 128], strides = [1, 1]} : vector<9x128xf32> to vector<1x128xf32>
    %393 = arith.mulf %391, %392 : vector<1x128xf32>
    %394 = arith.addf %390, %393 : vector<1x128xf32>
    %395 = vector.extract_strided_slice %374 {offsets = [5, 0], sizes = [1, 128], strides = [1, 1]} : vector<9x128xf32> to vector<1x128xf32>
    %396 = vector.extract_strided_slice %375 {offsets = [5, 0], sizes = [1, 128], strides = [1, 1]} : vector<9x128xf32> to vector<1x128xf32>
    %397 = arith.mulf %395, %396 : vector<1x128xf32>
    %398 = arith.addf %394, %397 : vector<1x128xf32>
    %399 = vector.extract_strided_slice %374 {offsets = [6, 0], sizes = [1, 128], strides = [1, 1]} : vector<9x128xf32> to vector<1x128xf32>
    %400 = vector.extract_strided_slice %375 {offsets = [6, 0], sizes = [1, 128], strides = [1, 1]} : vector<9x128xf32> to vector<1x128xf32>
    %401 = arith.mulf %399, %400 : vector<1x128xf32>
    %402 = arith.addf %398, %401 : vector<1x128xf32>
    %403 = vector.extract_strided_slice %374 {offsets = [7, 0], sizes = [1, 128], strides = [1, 1]} : vector<9x128xf32> to vector<1x128xf32>
    %404 = vector.extract_strided_slice %375 {offsets = [7, 0], sizes = [1, 128], strides = [1, 1]} : vector<9x128xf32> to vector<1x128xf32>
    %405 = arith.mulf %403, %404 : vector<1x128xf32>
    %406 = arith.addf %402, %405 : vector<1x128xf32>
    %407 = vector.extract_strided_slice %374 {offsets = [8, 0], sizes = [1, 128], strides = [1, 1]} : vector<9x128xf32> to vector<1x128xf32>
    %408 = vector.extract_strided_slice %375 {offsets = [8, 0], sizes = [1, 128], strides = [1, 1]} : vector<9x128xf32> to vector<1x128xf32>
    %409 = arith.mulf %407, %408 : vector<1x128xf32>
    %410 = arith.addf %406, %409 : vector<1x128xf32>
    %c112_190 = arith.constant 112 : index
    %c0_191 = arith.constant 0 : index
    %411 = vector.load %arg3[%c112_190, %c0_191] : memref<192x128xf32, #tpu.memory_space<vmem>>, vector<1x128xf32>
    %412 = arith.mulf %410, %411 : vector<1x128xf32>
    %c120 = arith.constant 120 : index
    %c0_192 = arith.constant 0 : index
    %413 = vector.load %arg3[%c120, %c0_192] : memref<192x128xf32, #tpu.memory_space<vmem>>, vector<1x128xf32>
    %414 = arith.addf %412, %413 : vector<1x128xf32>
    %cst_193 = arith.constant 0.000000e+00 : f32
    %415 = vector.broadcast %cst_193 : f32 to vector<1x128xf32>
    %416 = arith.maximumf %414, %415 : vector<1x128xf32>
    %c3664 = arith.constant 3664 : index
    %c0_194 = arith.constant 0 : index
    %417 = vector.load %arg2[%c3664, %c0_194] : memref<6688x128xbf16, #tpu.memory_space<vmem>>, vector<16x1xbf16>
    %418 = arith.truncf %416 : vector<1x128xf32> to vector<1x128xbf16>
    %cst_195 = arith.constant dense<0.000000e+00> : vector<16x128xf32>
    %419 = tpu.matmul %417, %418, %cst_195 {dimension_numbers = #tpu.dot_dimension_numbers<[1], [0], [0], [1], [0, 0, 1, 1], [], []>} : vector<16x1xbf16>, vector<1x128xbf16>, vector<16x128xf32> -> vector<16x128xf32>
    %420 = arith.truncf %372 : vector<16x128xf32> to vector<16x128xbf16>
    %c3680 = arith.constant 3680 : index
    %c0_196 = arith.constant 0 : index
    %421 = vector.load %arg2[%c3680, %c0_196] : memref<6688x128xbf16, #tpu.memory_space<vmem>>, vector<128x128xbf16>
    %cst_197 = arith.constant dense<0.000000e+00> : vector<16x128xf32>
    %422 = tpu.matmul %420, %421, %cst_197 {dimension_numbers = #tpu.dot_dimension_numbers<[1], [0], [0], [1], [0, 0, 1, 1], [], []>} : vector<16x128xbf16>, vector<128x128xbf16>, vector<16x128xf32> -> vector<16x128xf32>
    %423 = arith.truncf %419 : vector<16x128xf32> to vector<16x128xbf16>
    %c3808 = arith.constant 3808 : index
    %c0_198 = arith.constant 0 : index
    %424 = vector.load %arg2[%c3808, %c0_198] : memref<6688x128xbf16, #tpu.memory_space<vmem>>, vector<128x128xbf16>
    %cst_199 = arith.constant dense<0.000000e+00> : vector<16x128xf32>
    %425 = tpu.matmul %423, %424, %cst_199 {dimension_numbers = #tpu.dot_dimension_numbers<[1], [0], [0], [1], [0, 0, 1, 1], [], []>} : vector<16x128xbf16>, vector<128x128xbf16>, vector<16x128xf32> -> vector<16x128xf32>
    %426 = arith.addf %422, %425 : vector<16x128xf32>
    %c128_200 = arith.constant 128 : index
    %c0_201 = arith.constant 0 : index
    %427 = vector.load %arg3[%c128_200, %c0_201] : memref<192x128xf32, #tpu.memory_space<vmem>>, vector<1x128xf32>
    %428 = vector.broadcast %427 : vector<1x128xf32> to vector<16x128xf32>
    %429 = arith.mulf %426, %428 : vector<16x128xf32>
    %c136 = arith.constant 136 : index
    %c0_202 = arith.constant 0 : index
    %430 = vector.load %arg3[%c136, %c0_202] : memref<192x128xf32, #tpu.memory_space<vmem>>, vector<1x128xf32>
    %431 = vector.broadcast %430 : vector<1x128xf32> to vector<16x128xf32>
    %432 = arith.addf %429, %431 : vector<16x128xf32>
    %433 = arith.addf %432, %304 : vector<16x128xf32>
    %cst_203 = arith.constant 0.000000e+00 : f32
    %434 = vector.broadcast %cst_203 : f32 to vector<16x128xf32>
    %435 = arith.cmpf oge, %433, %434 : vector<16x128xf32>
    %c144_204 = arith.constant 144 : index
    %c0_205 = arith.constant 0 : index
    %436 = vector.load %arg3[%c144_204, %c0_205] : memref<192x128xf32, #tpu.memory_space<vmem>>, vector<1x128xf32>
    %437 = vector.broadcast %436 : vector<1x128xf32> to vector<16x128xf32>
    %438 = arith.mulf %433, %437 : vector<16x128xf32>
    %439 = arith.select %435, %433, %438 : vector<16x128xi1>, vector<16x128xf32>
    %c6368 = arith.constant 6368 : index
    %c0_206 = arith.constant 0 : index
    %440 = vector.load %arg2[%c6368, %c0_206] : memref<6688x128xbf16, #tpu.memory_space<vmem>>, vector<64x16xbf16>
    %441 = arith.truncf %439 : vector<16x128xf32> to vector<16x128xbf16>
    %cst_207 = arith.constant dense<0.000000e+00> : vector<64x128xf32>
    %442 = tpu.matmul %440, %441, %cst_207 {dimension_numbers = #tpu.dot_dimension_numbers<[1], [0], [0], [1], [0, 0, 1, 1], [], []>} : vector<64x16xbf16>, vector<16x128xbf16>, vector<64x128xf32> -> vector<64x128xf32>
    %cst_208 = arith.constant 0.000000e+00 : f32
    %443 = vector.broadcast %cst_208 : f32 to vector<9x128xf32>
    %c0_209 = arith.constant 0 : index
    %c0_210 = arith.constant 0 : index
    %444 = vector.load %arg5[%c0_209, %c0_210] : memref<296x128xf32, #tpu.memory_space<vmem>>, vector<9x128xf32>
    tpu.vector_store %arg5[%c0_209, %c0_210], %443 {strides = array<i32>} : memref<296x128xf32, #tpu.memory_space<vmem>>, vector<9x128xf32>,
    %c73_211 = arith.constant 73 : index
    %c0_212 = arith.constant 0 : index
    %445 = vector.load %arg5[%c73_211, %c0_212] : memref<296x128xf32, #tpu.memory_space<vmem>>, vector<9x128xf32>
    tpu.vector_store %arg5[%c73_211, %c0_212], %443 {strides = array<i32>} : memref<296x128xf32, #tpu.memory_space<vmem>>, vector<9x128xf32>,
    %c9_213 = arith.constant 9 : index
    %c0_214 = arith.constant 0 : index
    %446 = vector.load %arg5[%c9_213, %c0_214] : memref<296x128xf32, #tpu.memory_space<vmem>>, vector<64x128xf32>
    tpu.vector_store %arg5[%c9_213, %c0_214], %442 {strides = array<i32>} : memref<296x128xf32, #tpu.memory_space<vmem>>, vector<64x128xf32>,
    %447 = tpu.iota {dimensions = array<i32: 0>} : vector<64x1xi32>
    %c8_i32_215 = arith.constant 8 : i32
    %c0_i32_216 = arith.constant 0 : i32
    %448 = arith.cmpi eq, %c8_i32_215, %c0_i32_216 : i32
    %c1_i32_217 = arith.constant 1 : i32
    %449 = arith.select %448, %c1_i32_217, %c8_i32_215 : i32
    %450 = vector.broadcast %449 : i32 to vector<64x1xi32>
    %451 = arith.remsi %447, %450 : vector<64x1xi32>
    %c0_i32_218 = arith.constant 0 : i32
    %452 = vector.broadcast %c0_i32_218 : i32 to vector<64x1xi32>
    %453 = arith.cmpi ne, %451, %452 : vector<64x1xi32>
    %c0_i32_219 = arith.constant 0 : i32
    %454 = vector.broadcast %c0_i32_219 : i32 to vector<64x1xi32>
    %455 = arith.cmpi slt, %451, %454 : vector<64x1xi32>
    %c0_i32_220 = arith.constant 0 : i32
    %456 = arith.cmpi slt, %449, %c0_i32_220 : i32
    %457 = vector.broadcast %456 : i1 to vector<64x1xi1>
    %458 = vector.broadcast %457 : vector<64x1xi1> to vector<64x1xi1>
    %459 = arith.xori %455, %458 : vector<64x1xi1>
    %460 = arith.andi %459, %453 : vector<64x1xi1>
    %461 = vector.broadcast %449 : i32 to vector<64x1xi32>
    %462 = arith.addi %451, %461 : vector<64x1xi32>
    %463 = arith.select %460, %462, %451 : vector<64x1xi1>, vector<64x1xi32>
    %c1_i32_221 = arith.constant 1 : i32
    %464 = vector.broadcast %c1_i32_221 : i32 to vector<64x1xi32>
    %465 = arith.cmpi sge, %463, %464 : vector<64x1xi32>
    %466 = arith.extui %465 : vector<64x1xi1> to vector<64x1xi32>
    %467 = arith.sitofp %466 : vector<64x1xi32> to vector<64x1xf32>
    %c6_i32_222 = arith.constant 6 : i32
    %468 = vector.broadcast %c6_i32_222 : i32 to vector<64x1xi32>
    %469 = arith.cmpi sle, %463, %468 : vector<64x1xi32>
    %470 = arith.extui %469 : vector<64x1xi1> to vector<64x1xi32>
    %471 = arith.sitofp %470 : vector<64x1xi32> to vector<64x1xf32>
    %c0_223 = arith.constant 0 : index
    %c0_224 = arith.constant 0 : index
    %472 = vector.load %arg5[%c0_223, %c0_224] : memref<296x128xf32, #tpu.memory_space<vmem>>, vector<64x128xf32>
    %473 = vector.broadcast %467 : vector<64x1xf32> to vector<64x128xf32>
    %474 = arith.mulf %472, %473 : vector<64x128xf32>
    %475 = arith.truncf %474 : vector<64x128xf32> to vector<64x128xbf16>
    %c1_225 = arith.constant 1 : index
    %c0_226 = arith.constant 0 : index
    %476 = vector.load %arg5[%c1_225, %c0_226] : memref<296x128xf32, #tpu.memory_space<vmem>>, vector<64x128xf32>
    %477 = arith.truncf %476 : vector<64x128xf32> to vector<64x128xbf16>
    %c2_227 = arith.constant 2 : index
    %c0_228 = arith.constant 0 : index
    %478 = vector.load %arg5[%c2_227, %c0_228] : memref<296x128xf32, #tpu.memory_space<vmem>>, vector<64x128xf32>
    %479 = vector.broadcast %471 : vector<64x1xf32> to vector<64x128xf32>
    %480 = arith.mulf %478, %479 : vector<64x128xf32>
    %481 = arith.truncf %480 : vector<64x128xf32> to vector<64x128xbf16>
    %c8_229 = arith.constant 8 : index
    %c0_230 = arith.constant 0 : index
    %482 = vector.load %arg5[%c8_229, %c0_230] : memref<296x128xf32, #tpu.memory_space<vmem>>, vector<64x128xf32>
    %483 = vector.broadcast %467 : vector<64x1xf32> to vector<64x128xf32>
    %484 = arith.mulf %482, %483 : vector<64x128xf32>
    %485 = arith.truncf %484 : vector<64x128xf32> to vector<64x128xbf16>
    %c9_231 = arith.constant 9 : index
    %c0_232 = arith.constant 0 : index
    %486 = vector.load %arg5[%c9_231, %c0_232] : memref<296x128xf32, #tpu.memory_space<vmem>>, vector<64x128xf32>
    %487 = arith.truncf %486 : vector<64x128xf32> to vector<64x128xbf16>
    %c10_233 = arith.constant 10 : index
    %c0_234 = arith.constant 0 : index
    %488 = vector.load %arg5[%c10_233, %c0_234] : memref<296x128xf32, #tpu.memory_space<vmem>>, vector<64x128xf32>
    %489 = vector.broadcast %471 : vector<64x1xf32> to vector<64x128xf32>
    %490 = arith.mulf %488, %489 : vector<64x128xf32>
    %491 = arith.truncf %490 : vector<64x128xf32> to vector<64x128xbf16>
    %c16_235 = arith.constant 16 : index
    %c0_236 = arith.constant 0 : index
    %492 = vector.load %arg5[%c16_235, %c0_236] : memref<296x128xf32, #tpu.memory_space<vmem>>, vector<64x128xf32>
    %493 = vector.broadcast %467 : vector<64x1xf32> to vector<64x128xf32>
    %494 = arith.mulf %492, %493 : vector<64x128xf32>
    %495 = arith.truncf %494 : vector<64x128xf32> to vector<64x128xbf16>
    %c17_237 = arith.constant 17 : index
    %c0_238 = arith.constant 0 : index
    %496 = vector.load %arg5[%c17_237, %c0_238] : memref<296x128xf32, #tpu.memory_space<vmem>>, vector<64x128xf32>
    %497 = arith.truncf %496 : vector<64x128xf32> to vector<64x128xbf16>
    %c18_239 = arith.constant 18 : index
    %c0_240 = arith.constant 0 : index
    %498 = vector.load %arg5[%c18_239, %c0_240] : memref<296x128xf32, #tpu.memory_space<vmem>>, vector<64x128xf32>
    %499 = vector.broadcast %471 : vector<64x1xf32> to vector<64x128xf32>
    %500 = arith.mulf %498, %499 : vector<64x128xf32>
    %501 = arith.truncf %500 : vector<64x128xf32> to vector<64x128xbf16>
    %502 = tpu.concatenate %475, %477, %481, %485, %487, %491, %495, %497, %501 in 1 : vector<64x128xbf16>, vector<64x128xbf16>, vector<64x128xbf16>, vector<64x128xbf16>, vector<64x128xbf16>, vector<64x128xbf16>, vector<64x128xbf16>, vector<64x128xbf16>, vector<64x128xbf16> -> vector<64x1152xbf16>
    %c3936 = arith.constant 3936 : index
    %c0_241 = arith.constant 0 : index
    %503 = vector.load %arg2[%c3936, %c0_241] : memref<6688x128xbf16, #tpu.memory_space<vmem>>, vector<1152x128xbf16>
    %cst_242 = arith.constant dense<0.000000e+00> : vector<64x128xf32>
    %504 = tpu.matmul %502, %503, %cst_242 {dimension_numbers = #tpu.dot_dimension_numbers<[1], [0], [0], [1], [0, 0, 1, 1], [], []>} : vector<64x1152xbf16>, vector<1152x128xbf16>, vector<64x128xf32> -> vector<64x128xf32>
    %c152 = arith.constant 152 : index
    %c0_243 = arith.constant 0 : index
    %505 = vector.load %arg3[%c152, %c0_243] : memref<192x128xf32, #tpu.memory_space<vmem>>, vector<1x128xf32>
    %506 = vector.broadcast %505 : vector<1x128xf32> to vector<64x128xf32>
    %507 = arith.mulf %504, %506 : vector<64x128xf32>
    %c160_244 = arith.constant 160 : index
    %c0_245 = arith.constant 0 : index
    %508 = vector.load %arg3[%c160_244, %c0_245] : memref<192x128xf32, #tpu.memory_space<vmem>>, vector<1x128xf32>
    %509 = vector.broadcast %508 : vector<1x128xf32> to vector<64x128xf32>
    %510 = arith.addf %507, %509 : vector<64x128xf32>
    %cst_246 = arith.constant 0.000000e+00 : f32
    %511 = vector.broadcast %cst_246 : f32 to vector<64x128xf32>
    %512 = arith.maximumf %510, %511 : vector<64x128xf32>
    %c6432 = arith.constant 6432 : index
    %c0_247 = arith.constant 0 : index
    %513 = vector.load %arg2[%c6432, %c0_247] : memref<6688x128xbf16, #tpu.memory_space<vmem>>, vector<256x64xbf16>
    %514 = arith.truncf %512 : vector<64x128xf32> to vector<64x128xbf16>
    %cst_248 = arith.constant dense<0.000000e+00> : vector<256x128xf32>
    %515 = tpu.matmul %513, %514, %cst_248 {dimension_numbers = #tpu.dot_dimension_numbers<[1], [0], [0], [1], [0, 0, 1, 1], [], []>} : vector<256x64xbf16>, vector<64x128xbf16>, vector<256x128xf32> -> vector<256x128xf32>
    %cst_249 = arith.constant 0.000000e+00 : f32
    %516 = vector.broadcast %cst_249 : f32 to vector<17x128xf32>
    %c0_250 = arith.constant 0 : index
    %c0_251 = arith.constant 0 : index
    %517 = vector.load %arg5[%c0_250, %c0_251] : memref<296x128xf32, #tpu.memory_space<vmem>>, vector<17x128xf32>
    tpu.vector_store %arg5[%c0_250, %c0_251], %516 {strides = array<i32>} : memref<296x128xf32, #tpu.memory_space<vmem>>, vector<17x128xf32>,
    %c273_252 = arith.constant 273 : index
    %c0_253 = arith.constant 0 : index
    %518 = vector.load %arg5[%c273_252, %c0_253] : memref<296x128xf32, #tpu.memory_space<vmem>>, vector<17x128xf32>
    tpu.vector_store %arg5[%c273_252, %c0_253], %516 {strides = array<i32>} : memref<296x128xf32, #tpu.memory_space<vmem>>, vector<17x128xf32>,
    %c17_254 = arith.constant 17 : index
    %c0_255 = arith.constant 0 : index
    %519 = vector.load %arg5[%c17_254, %c0_255] : memref<296x128xf32, #tpu.memory_space<vmem>>, vector<256x128xf32>
    tpu.vector_store %arg5[%c17_254, %c0_255], %515 {strides = array<i32>} : memref<296x128xf32, #tpu.memory_space<vmem>>, vector<256x128xf32>,
    %520 = tpu.iota {dimensions = array<i32: 0>} : vector<256x1xi32>
    %c16_i32_256 = arith.constant 16 : i32
    %c0_i32_257 = arith.constant 0 : i32
    %521 = arith.cmpi eq, %c16_i32_256, %c0_i32_257 : i32
    %c1_i32_258 = arith.constant 1 : i32
    %522 = arith.select %521, %c1_i32_258, %c16_i32_256 : i32
    %523 = vector.broadcast %522 : i32 to vector<256x1xi32>
    %524 = arith.remsi %520, %523 : vector<256x1xi32>
    %c0_i32_259 = arith.constant 0 : i32
    %525 = vector.broadcast %c0_i32_259 : i32 to vector<256x1xi32>
    %526 = arith.cmpi ne, %524, %525 : vector<256x1xi32>
    %c0_i32_260 = arith.constant 0 : i32
    %527 = vector.broadcast %c0_i32_260 : i32 to vector<256x1xi32>
    %528 = arith.cmpi slt, %524, %527 : vector<256x1xi32>
    %c0_i32_261 = arith.constant 0 : i32
    %529 = arith.cmpi slt, %522, %c0_i32_261 : i32
    %530 = vector.broadcast %529 : i1 to vector<256x1xi1>
    %531 = vector.broadcast %530 : vector<256x1xi1> to vector<256x1xi1>
    %532 = arith.xori %528, %531 : vector<256x1xi1>
    %533 = arith.andi %532, %526 : vector<256x1xi1>
    %534 = vector.broadcast %522 : i32 to vector<256x1xi32>
    %535 = arith.addi %524, %534 : vector<256x1xi32>
    %536 = arith.select %533, %535, %524 : vector<256x1xi1>, vector<256x1xi32>
    %c1_i32_262 = arith.constant 1 : i32
    %537 = vector.broadcast %c1_i32_262 : i32 to vector<256x1xi32>
    %538 = arith.cmpi sge, %536, %537 : vector<256x1xi32>
    %539 = arith.extui %538 : vector<256x1xi1> to vector<256x1xi32>
    %540 = arith.sitofp %539 : vector<256x1xi32> to vector<256x1xf32>
    %c14_i32_263 = arith.constant 14 : i32
    %541 = vector.broadcast %c14_i32_263 : i32 to vector<256x1xi32>
    %542 = arith.cmpi sle, %536, %541 : vector<256x1xi32>
    %543 = arith.extui %542 : vector<256x1xi1> to vector<256x1xi32>
    %544 = arith.sitofp %543 : vector<256x1xi32> to vector<256x1xf32>
    %c0_264 = arith.constant 0 : index
    %c0_265 = arith.constant 0 : index
    %545 = vector.load %arg5[%c0_264, %c0_265] : memref<296x128xf32, #tpu.memory_space<vmem>>, vector<256x128xf32>
    %546 = vector.broadcast %540 : vector<256x1xf32> to vector<256x128xf32>
    %547 = arith.mulf %545, %546 : vector<256x128xf32>
    %548 = arith.truncf %547 : vector<256x128xf32> to vector<256x128xbf16>
    %c1_266 = arith.constant 1 : index
    %c0_267 = arith.constant 0 : index
    %549 = vector.load %arg5[%c1_266, %c0_267] : memref<296x128xf32, #tpu.memory_space<vmem>>, vector<256x128xf32>
    %550 = arith.truncf %549 : vector<256x128xf32> to vector<256x128xbf16>
    %c2_268 = arith.constant 2 : index
    %c0_269 = arith.constant 0 : index
    %551 = vector.load %arg5[%c2_268, %c0_269] : memref<296x128xf32, #tpu.memory_space<vmem>>, vector<256x128xf32>
    %552 = vector.broadcast %544 : vector<256x1xf32> to vector<256x128xf32>
    %553 = arith.mulf %551, %552 : vector<256x128xf32>
    %554 = arith.truncf %553 : vector<256x128xf32> to vector<256x128xbf16>
    %c16_270 = arith.constant 16 : index
    %c0_271 = arith.constant 0 : index
    %555 = vector.load %arg5[%c16_270, %c0_271] : memref<296x128xf32, #tpu.memory_space<vmem>>, vector<256x128xf32>
    %556 = vector.broadcast %540 : vector<256x1xf32> to vector<256x128xf32>
    %557 = arith.mulf %555, %556 : vector<256x128xf32>
    %558 = arith.truncf %557 : vector<256x128xf32> to vector<256x128xbf16>
    %c17_272 = arith.constant 17 : index
    %c0_273 = arith.constant 0 : index
    %559 = vector.load %arg5[%c17_272, %c0_273] : memref<296x128xf32, #tpu.memory_space<vmem>>, vector<256x128xf32>
    %560 = arith.truncf %559 : vector<256x128xf32> to vector<256x128xbf16>
    %c18_274 = arith.constant 18 : index
    %c0_275 = arith.constant 0 : index
    %561 = vector.load %arg5[%c18_274, %c0_275] : memref<296x128xf32, #tpu.memory_space<vmem>>, vector<256x128xf32>
    %562 = vector.broadcast %544 : vector<256x1xf32> to vector<256x128xf32>
    %563 = arith.mulf %561, %562 : vector<256x128xf32>
    %564 = arith.truncf %563 : vector<256x128xf32> to vector<256x128xbf16>
    %c32_276 = arith.constant 32 : index
    %c0_277 = arith.constant 0 : index
    %565 = vector.load %arg5[%c32_276, %c0_277] : memref<296x128xf32, #tpu.memory_space<vmem>>, vector<256x128xf32>
    %566 = vector.broadcast %540 : vector<256x1xf32> to vector<256x128xf32>
    %567 = arith.mulf %565, %566 : vector<256x128xf32>
    %568 = arith.truncf %567 : vector<256x128xf32> to vector<256x128xbf16>
    %c33_278 = arith.constant 33 : index
    %c0_279 = arith.constant 0 : index
    %569 = vector.load %arg5[%c33_278, %c0_279] : memref<296x128xf32, #tpu.memory_space<vmem>>, vector<256x128xf32>
    %570 = arith.truncf %569 : vector<256x128xf32> to vector<256x128xbf16>
    %c34_280 = arith.constant 34 : index
    %c0_281 = arith.constant 0 : index
    %571 = vector.load %arg5[%c34_280, %c0_281] : memref<296x128xf32, #tpu.memory_space<vmem>>, vector<256x128xf32>
    %572 = vector.broadcast %544 : vector<256x1xf32> to vector<256x128xf32>
    %573 = arith.mulf %571, %572 : vector<256x128xf32>
    %574 = arith.truncf %573 : vector<256x128xf32> to vector<256x128xbf16>
    %575 = tpu.concatenate %548, %550, %554, %558, %560, %564, %568, %570, %574 in 1 : vector<256x128xbf16>, vector<256x128xbf16>, vector<256x128xbf16>, vector<256x128xbf16>, vector<256x128xbf16>, vector<256x128xbf16>, vector<256x128xbf16>, vector<256x128xbf16>, vector<256x128xbf16> -> vector<256x1152xbf16>
    %c5088 = arith.constant 5088 : index
    %c0_282 = arith.constant 0 : index
    %576 = vector.load %arg2[%c5088, %c0_282] : memref<6688x128xbf16, #tpu.memory_space<vmem>>, vector<1152x128xbf16>
    %cst_283 = arith.constant dense<0.000000e+00> : vector<256x128xf32>
    %577 = tpu.matmul %575, %576, %cst_283 {dimension_numbers = #tpu.dot_dimension_numbers<[1], [0], [0], [1], [0, 0, 1, 1], [], []>} : vector<256x1152xbf16>, vector<1152x128xbf16>, vector<256x128xf32> -> vector<256x128xf32>
    %c168 = arith.constant 168 : index
    %c0_284 = arith.constant 0 : index
    %578 = vector.load %arg3[%c168, %c0_284] : memref<192x128xf32, #tpu.memory_space<vmem>>, vector<1x128xf32>
    %579 = vector.broadcast %578 : vector<1x128xf32> to vector<256x128xf32>
    %580 = arith.mulf %577, %579 : vector<256x128xf32>
    %c176_285 = arith.constant 176 : index
    %c0_286 = arith.constant 0 : index
    %581 = vector.load %arg3[%c176_285, %c0_286] : memref<192x128xf32, #tpu.memory_space<vmem>>, vector<1x128xf32>
    %582 = vector.broadcast %581 : vector<1x128xf32> to vector<256x128xf32>
    %583 = arith.addf %580, %582 : vector<256x128xf32>
    %cst_287 = arith.constant 0.000000e+00 : f32
    %584 = vector.broadcast %cst_287 : f32 to vector<256x128xf32>
    %585 = arith.maximumf %583, %584 : vector<256x128xf32>
    %586 = arith.truncf %585 : vector<256x128xf32> to vector<256x128xbf16>
    %c6240 = arith.constant 6240 : index
    %c0_288 = arith.constant 0 : index
    %587 = vector.load %arg2[%c6240, %c0_288] : memref<6688x128xbf16, #tpu.memory_space<vmem>>, vector<128x128xbf16>
    %cst_289 = arith.constant dense<0.000000e+00> : vector<256x128xf32>
    %588 = tpu.matmul %586, %587, %cst_289 {dimension_numbers = #tpu.dot_dimension_numbers<[1], [0], [0], [1], [0, 0, 1, 1], [], []>} : vector<256x128xbf16>, vector<128x128xbf16>, vector<256x128xf32> -> vector<256x128xf32>
    %c184 = arith.constant 184 : index
    %c0_290 = arith.constant 0 : index
    %589 = vector.load %arg3[%c184, %c0_290] : memref<192x128xf32, #tpu.memory_space<vmem>>, vector<1x128xf32>
    %590 = vector.broadcast %589 : vector<1x128xf32> to vector<256x128xf32>
    %591 = arith.addf %588, %590 : vector<256x128xf32>
    %c0_291 = arith.constant 0 : index
    %c0_292 = arith.constant 0 : index
    %c0_293 = arith.constant 0 : index
    %592 = vector.load %arg4[%c0_291, %c0_292, %c0_293] : memref<1x256x128xf32, #tpu.memory_space<vmem>>, vector<1x256x128xf32>
    %593 = vector.shape_cast %592 : vector<1x256x128xf32> to vector<256x128xf32>
    %594 = vector.shape_cast %591 : vector<256x128xf32> to vector<1x256x128xf32>
    tpu.vector_store %arg4[%c0_291, %c0_292, %c0_293], %594 {strides = array<i32>} : memref<1x256x128xf32, #tpu.memory_space<vmem>>, vector<1x256x128xf32>,
    return
  }
  func.func @transform_0(%arg0: i32) -> (i32, i32, i32) {
    %c0_i32 = arith.constant 0 : i32
    %c0_i32_0 = arith.constant 0 : i32
    %c0_i32_1 = arith.constant 0 : i32
    return %arg0, %c0_i32, %c0_i32_0 : i32, i32, i32
  }
  func.func @transform_1(%arg0: i32) -> (i32, i32) {
    %c0_i32 = arith.constant 0 : i32
    %c0_i32_0 = arith.constant 0 : i32
    %c0_i32_1 = arith.constant 0 : i32
    return %c0_i32, %c0_i32_0 : i32, i32
  }
  func.func @transform_2(%arg0: i32) -> (i32, i32) {
    %c0_i32 = arith.constant 0 : i32
    %c0_i32_0 = arith.constant 0 : i32
    %c0_i32_1 = arith.constant 0 : i32
    return %c0_i32, %c0_i32_0 : i32, i32
  }
  func.func @transform_3(%arg0: i32) -> (i32, i32, i32) {
    %c0_i32 = arith.constant 0 : i32
    %c0_i32_0 = arith.constant 0 : i32
    %c0_i32_1 = arith.constant 0 : i32
    return %arg0, %c0_i32, %c0_i32_0 : i32, i32, i32
  }
}

</mosaic_0001>

<llo_original>
// kernel: sinet_forward.1
$region0: #{sinet_forward.1}
  #allocation0 [shape = 'u32[]', space=smem, size = 0x4, offset = 0x4, fixed_abs, tag = 'smem constant byte address 0x4 - core index']
  #allocation1 [shape = 'u32[144,128]{1,0:T(1,128)}', space=vmem, size = 0x12000, scoped, tag = 'internal scratch']
  #allocation2 [shape = 'f32[296,128]{1,0:T(8,128)}', space=vmem, size = 0x25000, scoped, tag = 'scratch operand']
  %s0 = inlined_call_operand.vmem [shape: f32[2,256,3], index: 0, kind: input, shape index: {}]
  %s1 = inlined_call_operand.hbm [shape: bf16[6688,128], index: 1, kind: input, shape index: {}]
  %s2 = inlined_call_operand.hbm [shape: f32[192,128], index: 2, kind: input, shape index: {}]
  %s3 = inlined_call_operand.vmem [shape: f32[2,256,128], index: 3, kind: output, shape index: {}]
  %s4 = sld [smem:[#allocation0]]
  $region57: #{sinet_forward.1} parent=0
    _
  %s6 = ssub.s32 1, %s4
  %s7 = scalar_select 0, %s6, %s4
  $region1: #{sinet_forward.1} parent=0
    #allocation3 [shape = 'u8[1712128]{0}', space=vmem, size = 0x1a2000, scoped, tag = 'input window, operand 1, single buffered']
    #allocation4 [shape = 's32[2]{0}', space=sflag, size = 0x8, scoped, tag = 'scoped memory for sinet_forward.1']
    #allocation5 [shape = 'u8[98304]{0}', space=vmem, size = 0x18000, scoped, tag = 'input window, operand 2, single buffered']
    #allocation6 [shape = 's32[1]{0}', space=sflag, size = 0x4, scoped, tag = 'scoped memory for sinet_forward.1']
    %8 = vsyncpa [#allocation4], 0
    %9 = vsyncpa [#allocation6], 0
    loop: start=0, step=1, limit=4
    $region2: #{sinet_forward.1} parent=1 // loop_pre_header
      _
    $region3: #{sinet_forward.1} parent=1 // loop_header
      %s11 = sphi 0, %s15
      %p12 = scmp.ge.s32.totalorder %s11, 4
      %s21 = sphi 0, %s23
      %s24 = sphi 0, %s21
      %s25 = sphi 0, %s24
      %s41 = sphi 0, %s25
      %s45 = sphi 0, %s45
      %s47 = sphi 0, %s45
      %s48 = sphi 0, %s47
      %s62 = sphi 0, %s48
      %s66 = sphi 0, %s66
      %s68 = sphi 0, %s66
      %s69 = sphi 0, %s68
      %s83 = sphi 0, %s69
      %s89 = sphi 0, %s91
      %s92 = sphi 0, %s89
      %s93 = sphi 0, %s92
      %s109 = sphi 0, %s93
    $region4: #{sinet_forward.1} parent=1 // loop_header_branch
      %14 = sbr.rel (%p12) target = $region8
    $region5: #{sinet_forward.1} parent=1 // loop_body
      %s16 = ssub.s32 %s11, 1
      %s17 = ssub.s32 %s11, 2
      %s18 = sadd.s32 %s11, 1
      %s19 = ssub.s32 %s11, %s18
      %p20 = scmp.eq.s32.totalorder %s19, 0
      %s22 = sadd.s32 %s21, 1
      %s23 = scalar_select %p20, %s21, %s22
      %p26 = pneg %p20
      %p27 = scmp.eq.s32.totalorder %s11, 1
      %p28 = por %p26, %p27
      %p29 = scmp.ne.s32.totalorder %s21, %s24
      %p30 = scmp.eq.s32.totalorder %s11, 0
      %p31 = por %p29, %p30
      %p32 = scmp.ne.s32.totalorder %s21, %s24
      %p33 = scmp.eq.s32.totalorder %s16, 1
      %p34 = por %p32, %p33
      %p35 = scmp.ne.s32.totalorder %s24, %s25
      %p36 = scmp.eq.s32.totalorder %s16, 0
      %p37 = por %p35, %p36
      %p38 = scmp.ne.s32.totalorder %s24, %s25
      %p39 = scmp.eq.s32.totalorder %s17, 1
      %p40 = por %p38, %p39
      %p42 = scmp.ne.s32.totalorder %s25, %s41
      %p43 = scmp.eq.s32.totalorder %s17, 0
      %p44 = por %p42, %p43
      %s46 = sadd.s32 %s45, 1
      %p49 = scmp.eq.s32.totalorder %s11, 1
      %p50 = scmp.ne.s32.totalorder %s45, %s47
      %p51 = scmp.eq.s32.totalorder %s11, 0
      %p52 = por %p50, %p51
      %p53 = scmp.ne.s32.totalorder %s45, %s47
      %p54 = scmp.eq.s32.totalorder %s16, 1
      %p55 = por %p53, %p54
      %p56 = scmp.ne.s32.totalorder %s47, %s48
      %p57 = scmp.eq.s32.totalorder %s16, 0
      %p58 = por %p56, %p57
      %p59 = scmp.ne.s32.totalorder %s47, %s48
      %p60 = scmp.eq.s32.totalorder %s17, 1
      %p61 = por %p59, %p60
      %p63 = scmp.ne.s32.totalorder %s48, %s62
      %p64 = scmp.eq.s32.totalorder %s17, 0
      %p65 = por %p63, %p64
      %s67 = sadd.s32 %s66, 1
      %p70 = scmp.eq.s32.totalorder %s11, 1
      %p71 = scmp.ne.s32.totalorder %s66, %s68
      %p72 = scmp.eq.s32.totalorder %s11, 0
      %p73 = por %p71, %p72
      %p74 = scmp.ne.s32.totalorder %s66, %s68
      %p75 = scmp.eq.s32.totalorder %s16, 1
      %p76 = por %p74, %p75
      %p77 = scmp.ne.s32.totalorder %s68, %s69
      %p78 = scmp.eq.s32.totalorder %s16, 0
      %p79 = por %p77, %p78
      %p80 = scmp.ne.s32.totalorder %s68, %s69
      %p81 = scmp.eq.s32.totalorder %s17, 1
      %p82 = por %p80, %p81
      %p84 = scmp.ne.s32.totalorder %s69, %s83
      %p85 = scmp.eq.s32.totalorder %s17, 0
      %p86 = por %p84, %p85
      %s87 = ssub.s32 %s11, %s18
      %p88 = scmp.eq.s32.totalorder %s87, 0
      %s90 = sadd.s32 %s89, 1
      %s91 = scalar_select %p88, %s89, %s90
      %p94 = pneg %p88
      %p95 = scmp.eq.s32.totalorder %s11, 1
      %p96 = por %p94, %p95
      %p97 = scmp.ne.s32.totalorder %s89, %s92
      %p98 = scmp.eq.s32.totalorder %s11, 0
      %p99 = por %p97, %p98
      %p100 = scmp.ne.s32.totalorder %s89, %s92
      %p101 = scmp.eq.s32.totalorder %s16, 1
      %p102 = por %p100, %p101
      %p103 = scmp.ne.s32.totalorder %s92, %s93
      %p104 = scmp.eq.s32.totalorder %s16, 0
      %p105 = por %p103, %p104
      %p106 = scmp.ne.s32.totalorder %s92, %s93
      %p107 = scmp.eq.s32.totalorder %s17, 1
      %p108 = por %p106, %p107
      %p110 = scmp.ne.s32.totalorder %s93, %s109
      %p111 = scmp.eq.s32.totalorder %s17, 0
      %p112 = por %p110, %p111
      %p113 = scmp.le.s32.totalorder 1, %s11
      %p114 = scmp.lt.s32.totalorder %s11, 3
      %p115 = pnand %p113, %p114
      %p116 = pneg %p115
      // Predicated region
      $region9: #{sinet_forward.1} parent=5 // pred_check
        _
      $region10: #{sinet_forward.1} parent=5 // pred_check_branch
        %118 = sbr.rel (%p115) target = $region12
      $region11: #{sinet_forward.1} parent=5 // pred_region
        %s119 = ssub.s32 %s11, 1
        // Predicated region
        $region13: #{sinet_forward.1} parent=11 // pred_check
          %p120 = pneg %p58
        $region14: #{sinet_forward.1} parent=11 // pred_check_branch
          %122 = sbr.rel (%p120) target = $region16
        $region15: #{sinet_forward.1} parent=11 // pred_region
          %s124 = ssub.s32 53504, 53504
          %125 = vsyncadd [#allocation4], %s124
          %s126 = sshll.u32 [#allocation3], 4
          %s127 = int_to_ptr.vmem [resolvable:$true] %s126
          %132 = dma.hbm_to_vmem [thread:$0]  %s1, 53504, %s127, [#allocation4], 64, 64, 4
        $region16: #{sinet_forward.1} parent=11 // pred_fallthru
          _
        // Predicated region
        $region17: #{sinet_forward.1} parent=11 // pred_check
          %p133 = pneg %p79
        $region18: #{sinet_forward.1} parent=11 // pred_check_branch
          %135 = sbr.rel (%p133) target = $region20
        $region19: #{sinet_forward.1} parent=11 // pred_region
          %s137 = ssub.s32 3072, 3072
          %138 = vsyncadd [#allocation6], %s137
          %s139 = sshll.u32 [#allocation5], 4
          %s140 = int_to_ptr.vmem [resolvable:$true] %s139
          %145 = dma.hbm_to_vmem [thread:$0]  %s2, 3072, %s140, [#allocation6], 128, 128, 8
        $region20: #{sinet_forward.1} parent=11 // pred_fallthru
          _
      $region12: #{sinet_forward.1} parent=5 // pred_fallthru
        _
      %p146 = scmp.lt.s32.totalorder %s11, 2
      // Predicated region
      $region21: #{sinet_forward.1} parent=5 // pred_check
        %p147 = pneg %p146
      $region22: #{sinet_forward.1} parent=5 // pred_check_branch
        %149 = sbr.rel (%p147) target = $region24
      $region23: #{sinet_forward.1} parent=5 // pred_region
        // Predicated region
        $region25: #{sinet_forward.1} parent=23 // pred_check
          %p150 = pneg %p31
        $region26: #{sinet_forward.1} parent=23 // pred_check_branch
          %152 = sbr.rel (%p150) target = $region28
        $region27: #{sinet_forward.1} parent=23 // pred_region
          %p153 = scmp.lt.s32.totalorder %s11, 1
          %s154 = scalar_select %p153, %s11, 1
          %s155 = smul.addr %s154, 32
          %s156 = smul.addr %s155, 8
          %s157 = scalar_lea.vmem %s0, %s156
        $region28: #{sinet_forward.1} parent=23 // pred_fallthru
          _
      $region24: #{sinet_forward.1} parent=5 // pred_fallthru
        _
      %p158 = scmp.le.s32.totalorder 1, %s11
      %p159 = scmp.lt.s32.totalorder %s11, 3
      %p160 = pnand %p158, %p159
      %p161 = pneg %p160
      // Predicated region
      $region29: #{sinet_forward.1} parent=5 // pred_check
        _
      $region30: #{sinet_forward.1} parent=5 // pred_check_branch
        %163 = sbr.rel (%p160) target = $region32
      $region31: #{sinet_forward.1} parent=5 // pred_region
        %s164 = ssub.s32 %s11, 1
        // Predicated region
        $region33: #{sinet_forward.1} parent=31 // pred_check
          %p165 = pneg %p58
        $region34: #{sinet_forward.1} parent=31 // pred_check_branch
          %167 = sbr.rel (%p165) target = $region36
        $region35: #{sinet_forward.1} parent=31 // pred_region
          %168 = dma.done [#allocation4], 53504
        $region36: #{sinet_forward.1} parent=31 // pred_fallthru
          _
        // Predicated region
        $region37: #{sinet_forward.1} parent=31 // pred_check
          %p169 = pneg %p79
        $region38: #{sinet_forward.1} parent=31 // pred_check_branch
          %171 = sbr.rel (%p169) target = $region40
        $region39: #{sinet_forward.1} parent=31 // pred_region
          %172 = dma.done [#allocation6], 3072
        $region40: #{sinet_forward.1} parent=31 // pred_fallthru
          _
        %p173 = scmp.lt.s32.totalorder %s16, 1
        %s174 = scalar_select %p173, %s16, 1
        %s175 = smul.addr %s174, 32
        %s176 = smul.addr %s175, 8
        %s177 = scalar_lea.vmem %s0, %s176
        %p178 = pneg %p37
        %p179 = pneg %p34
        %p180 = pneg %p58
        %p181 = pneg %p55
        %p182 = pneg %p79
        %p183 = pneg %p76
        %p184 = pneg %p105
        %p185 = pneg %p102
        %p186 = scmp.lt.s32.totalorder %s16, 1
        %s187 = scalar_select %p186, %s16, 1
        %s188 = smul.addr %s187, 32
        %s189 = smul.addr %s188, 8
        %s190 = scalar_lea.vmem %s3, %s189
        %p191 = scmp.lt.s32.totalorder %s16, 1
        %s192 = scalar_select %p191, %s16, 1
        %s193 = smul.addr %s192, 32
        %s194 = smul.addr %s193, 8
        %s195 = scalar_lea.vmem %s0, %s194
        %p196 = scmp.lt.s32.totalorder %s16, 1
        %s197 = scalar_select %p196, %s16, 1
        %s198 = smul.addr %s197, 32
        %s199 = smul.addr %s198, 8
        %s200 = scalar_lea.vmem %s3, %s199
        %p202 = scmp.eq.s32.totalorder %s16, 0
        // Predicated region
        $region41: #{sinet_forward.1} parent=31 // pred_check
          %p203 = pneg %p202
        $region42: #{sinet_forward.1} parent=31 // pred_check_branch
          %205 = sbr.rel (%p203) target = $region44
        $region43: #{sinet_forward.1} parent=31 // pred_region
          %206 = vst [vmem:[#allocation2] sm:$0xff] 0.0
          %207 = vst [vmem:[#allocation2 + $0x8] sm:$0xff] 0.0
          %208 = vst [vmem:[#allocation2 + $0x10] sm:$0xff] 0.0
          %209 = vst [vmem:[#allocation2 + $0x18] sm:$0xff] 0.0
          %210 = vst [vmem:[#allocation2 + $0x20] sm:$0xff] 0.0
          %211 = vst [vmem:[#allocation2 + $0x28] sm:$0xff] 0.0
          %212 = vst [vmem:[#allocation2 + $0x30] sm:$0xff] 0.0
          %213 = vst [vmem:[#allocation2 + $0x38] sm:$0xff] 0.0
          %214 = vst [vmem:[#allocation2 + $0x40] sm:$0xff] 0.0
          %215 = vst [vmem:[#allocation2 + $0x48] sm:$0xff] 0.0
          %216 = vst [vmem:[#allocation2 + $0x50] sm:$0xff] 0.0
          %217 = vst [vmem:[#allocation2 + $0x58] sm:$0xff] 0.0
          %218 = vst [vmem:[#allocation2 + $0x60] sm:$0xff] 0.0
          %219 = vst [vmem:[#allocation2 + $0x68] sm:$0xff] 0.0
          %220 = vst [vmem:[#allocation2 + $0x70] sm:$0xff] 0.0
          %221 = vst [vmem:[#allocation2 + $0x78] sm:$0xff] 0.0
          %222 = vst [vmem:[#allocation2 + $0x80] sm:$0xff] 0.0
          %223 = vst [vmem:[#allocation2 + $0x88] sm:$0xff] 0.0
          %224 = vst [vmem:[#allocation2 + $0x90] sm:$0xff] 0.0
          %225 = vst [vmem:[#allocation2 + $0x98] sm:$0xff] 0.0
          %226 = vst [vmem:[#allocation2 + $0xa0] sm:$0xff] 0.0
          %227 = vst [vmem:[#allocation2 + $0xa8] sm:$0xff] 0.0
          %228 = vst [vmem:[#allocation2 + $0xb0] sm:$0xff] 0.0
          %229 = vst [vmem:[#allocation2 + $0xb8] sm:$0xff] 0.0
          %230 = vst [vmem:[#allocation2 + $0xc0] sm:$0xff] 0.0
          %231 = vst [vmem:[#allocation2 + $0xc8] sm:$0xff] 0.0
          %232 = vst [vmem:[#allocation2 + $0xd0] sm:$0xff] 0.0
          %233 = vst [vmem:[#allocation2 + $0xd8] sm:$0xff] 0.0
          %234 = vst [vmem:[#allocation2 + $0xe0] sm:$0xff] 0.0
          %235 = vst [vmem:[#allocation2 + $0xe8] sm:$0xff] 0.0
          %236 = vst [vmem:[#allocation2 + $0xf0] sm:$0xff] 0.0
          %237 = vst [vmem:[#allocation2 + $0xf8] sm:$0xff] 0.0
          %238 = vst [vmem:[#allocation2 + $0x100] sm:$0xff] 0.0
          %239 = vst [vmem:[#allocation2 + $0x108] sm:$0xff] 0.0
          %240 = vst [vmem:[#allocation2 + $0x110] sm:$0xff] 0.0
          %241 = vst [vmem:[#allocation2 + $0x118] sm:$0xff] 0.0
          %242 = vst [vmem:[#allocation2 + $0x120] sm:$0xff] 0.0
        $region44: #{sinet_forward.1} parent=31 // pred_fallthru
          _
        %v243 = vld [vmem:[%s195] sm:$0xff]
        %v244 = vld [vmem:[%s195 + $0x8] sm:$0xff]
        %v245 = vld [vmem:[%s195 + $0x10] sm:$0xff]
        %v246 = vld [vmem:[%s195 + $0x18] sm:$0xff]
        %v247 = vld [vmem:[%s195 + $0x20] sm:$0xff]
        %v248 = vld [vmem:[%s195 + $0x28] sm:$0xff]
        %v249 = vld [vmem:[%s195 + $0x30] sm:$0xff]
        %v250 = vld [vmem:[%s195 + $0x38] sm:$0xff]
        %v251 = vld [vmem:[%s195 + $0x40] sm:$0xff]
        %v252 = vld [vmem:[%s195 + $0x48] sm:$0xff]
        %v253 = vld [vmem:[%s195 + $0x50] sm:$0xff]
        %v254 = vld [vmem:[%s195 + $0x58] sm:$0xff]
        %v255 = vld [vmem:[%s195 + $0x60] sm:$0xff]
        %v256 = vld [vmem:[%s195 + $0x68] sm:$0xff]
        %v257 = vld [vmem:[%s195 + $0x70] sm:$0xff]
        %v258 = vld [vmem:[%s195 + $0x78] sm:$0xff]
        %v259 = vld [vmem:[%s195 + $0x80] sm:$0xff]
        %v260 = vld [vmem:[%s195 + $0x88] sm:$0xff]
        %v261 = vld [vmem:[%s195 + $0x90] sm:$0xff]
        %v262 = vld [vmem:[%s195 + $0x98] sm:$0xff]
        %v263 = vld [vmem:[%s195 + $0xa0] sm:$0xff]
        %v264 = vld [vmem:[%s195 + $0xa8] sm:$0xff]
        %v265 = vld [vmem:[%s195 + $0xb0] sm:$0xff]
        %v266 = vld [vmem:[%s195 + $0xb8] sm:$0xff]
        %v267 = vld [vmem:[%s195 + $0xc0] sm:$0xff]
        %v268 = vld [vmem:[%s195 + $0xc8] sm:$0xff]
        %v269 = vld [vmem:[%s195 + $0xd0] sm:$0xff]
        %v270 = vld [vmem:[%s195 + $0xd8] sm:$0xff]
        %v271 = vld [vmem:[%s195 + $0xe0] sm:$0xff]
        %v272 = vld [vmem:[%s195 + $0xe8] sm:$0xff]
        %v273 = vld [vmem:[%s195 + $0xf0] sm:$0xff]
        %v274 = vld [vmem:[%s195 + $0xf8] sm:$0xff]
        %275 = vst [vmem:[#allocation2] sm:$0xff] 0.0
        %276 = vst [vmem:[#allocation2 + $0x8] sm:$0xff] 0.0
        %277 = vst [vmem:[#allocation2 + $0x10] sm:$0x1] 0.0
        %278 = vst [vmem:[#allocation2 + $0x111] sm:$0xff] 0.0
        %279 = vst [vmem:[#allocation2 + $0x119] sm:$0xff] 0.0
        %280 = vst [vmem:[#allocation2 + $0x121] sm:$0x1] 0.0
        %281 = vst [vmem:[#allocation2 + $0x11] sm:$0xff] 0.0
        %282 = vst [vmem:[#allocation2 + $0x19] sm:$0xff] 0.0
        %283 = vst [vmem:[#allocation2 + $0x21] sm:$0xff] 0.0
        %284 = vst [vmem:[#allocation2 + $0x29] sm:$0xff] 0.0
        %285 = vst [vmem:[#allocation2 + $0x31] sm:$0xff] 0.0
        %286 = vst [vmem:[#allocation2 + $0x39] sm:$0xff] 0.0
        %287 = vst [vmem:[#allocation2 + $0x41] sm:$0xff] 0.0
        %288 = vst [vmem:[#allocation2 + $0x49] sm:$0xff] 0.0
        %289 = vst [vmem:[#allocation2 + $0x51] sm:$0xff] 0.0
        %290 = vst [vmem:[#allocation2 + $0x59] sm:$0xff] 0.0
        %291 = vst [vmem:[#allocation2 + $0x61] sm:$0xff] 0.0
        %292 = vst [vmem:[#allocation2 + $0x69] sm:$0xff] 0.0
        %293 = vst [vmem:[#allocation2 + $0x71] sm:$0xff] 0.0
        %294 = vst [vmem:[#allocation2 + $0x79] sm:$0xff] 0.0
        %295 = vst [vmem:[#allocation2 + $0x81] sm:$0xff] 0.0
        %296 = vst [vmem:[#allocation2 + $0x89] sm:$0xff] 0.0
        %297 = vst [vmem:[#allocation2 + $0x91] sm:$0xff] 0.0
        %298 = vst [vmem:[#allocation2 + $0x99] sm:$0xff] 0.0
        %299 = vst [vmem:[#allocation2 + $0xa1] sm:$0xff] 0.0
        %300 = vst [vmem:[#allocation2 + $0xa9] sm:$0xff] 0.0
        %301 = vst [vmem:[#allocation2 + $0xb1] sm:$0xff] 0.0
        %302 = vst [vmem:[#allocation2 + $0xb9] sm:$0xff] 0.0
        %303 = vst [vmem:[#allocation2 + $0xc1] sm:$0xff] 0.0
        %304 = vst [vmem:[#allocation2 + $0xc9] sm:$0xff] 0.0
        %305 = vst [vmem:[#allocation2 + $0xd1] sm:$0xff] 0.0
        %306 = vst [vmem:[#allocation2 + $0xd9] sm:$0xff] 0.0
        %307 = vst [vmem:[#allocation2 + $0xe1] sm:$0xff] 0.0
        %308 = vst [vmem:[#allocation2 + $0xe9] sm:$0xff] 0.0
        %309 = vst [vmem:[#allocation2 + $0xf1] sm:$0xff] 0.0
        %310 = vst [vmem:[#allocation2 + $0xf9] sm:$0xff] 0.0
        %311 = vst [vmem:[#allocation2 + $0x101] sm:$0xff] 0.0
        %312 = vst [vmem:[#allocation2 + $0x109] sm:$0xff] 0.0
        %vm313 = vcmask 23552
        %314 = vst.msk [vmem:[#allocation2 + $0x11] sm:$0xff] %vm313, %v243
        %315 = vst.msk [vmem:[#allocation2 + $0x19] sm:$0xff] %vm313, %v244
        %316 = vst.msk [vmem:[#allocation2 + $0x21] sm:$0xff] %vm313, %v245
        %317 = vst.msk [vmem:[#allocation2 + $0x29] sm:$0xff] %vm313, %v246
        %318 = vst.msk [vmem:[#allocation2 + $0x31] sm:$0xff] %vm313, %v247
        %319 = vst.msk [vmem:[#allocation2 + $0x39] sm:$0xff] %vm313, %v248
        %320 = vst.msk [vmem:[#allocation2 + $0x41] sm:$0xff] %vm313, %v249
        %321 = vst.msk [vmem:[#allocation2 + $0x49] sm:$0xff] %vm313, %v250
        %322 = vst.msk [vmem:[#allocation2 + $0x51] sm:$0xff] %vm313, %v251
        %323 = vst.msk [vmem:[#allocation2 + $0x59] sm:$0xff] %vm313, %v252
        %324 = vst.msk [vmem:[#allocation2 + $0x61] sm:$0xff] %vm313, %v253
        %325 = vst.msk [vmem:[#allocation2 + $0x69] sm:$0xff] %vm313, %v254
        %326 = vst.msk [vmem:[#allocation2 + $0x71] sm:$0xff] %vm313, %v255
        %327 = vst.msk [vmem:[#allocation2 + $0x79] sm:$0xff] %vm313, %v256
        %328 = vst.msk [vmem:[#allocation2 + $0x81] sm:$0xff] %vm313, %v257
        %329 = vst.msk [vmem:[#allocation2 + $0x89] sm:$0xff] %vm313, %v258
        %330 = vst.msk [vmem:[#allocation2 + $0x91] sm:$0xff] %vm313, %v259
        %331 = vst.msk [vmem:[#allocation2 + $0x99] sm:$0xff] %vm313, %v260
        %332 = vst.msk [vmem:[#allocation2 + $0xa1] sm:$0xff] %vm313, %v261
        %333 = vst.msk [vmem:[#allocation2 + $0xa9] sm:$0xff] %vm313, %v262
        %334 = vst.msk [vmem:[#allocation2 + $0xb1] sm:$0xff] %vm313, %v263
        %335 = vst.msk [vmem:[#allocation2 + $0xb9] sm:$0xff] %vm313, %v264
        %336 = vst.msk [vmem:[#allocation2 + $0xc1] sm:$0xff] %vm313, %v265
        %337 = vst.msk [vmem:[#allocation2 + $0xc9] sm:$0xff] %vm313, %v266
        %338 = vst.msk [vmem:[#allocation2 + $0xd1] sm:$0xff] %vm313, %v267
        %339 = vst.msk [vmem:[#allocation2 + $0xd9] sm:$0xff] %vm313, %v268
        %340 = vst.msk [vmem:[#allocation2 + $0xe1] sm:$0xff] %vm313, %v269
        %341 = vst.msk [vmem:[#allocation2 + $0xe9] sm:$0xff] %vm313, %v270
        %342 = vst.msk [vmem:[#allocation2 + $0xf1] sm:$0xff] %vm313, %v271
        %343 = vst.msk [vmem:[#allocation2 + $0xf9] sm:$0xff] %vm313, %v272
        %344 = vst.msk [vmem:[#allocation2 + $0x101] sm:$0xff] %vm313, %v273
        %345 = vst.msk [vmem:[#allocation2 + $0x109] sm:$0xff] %vm313, %v274
        %v346 = vlaneseq
        %v347 = vshrl.u32 %v346, 7
        %v348 = vadd.s32 %v347, 8
        %v349 = vadd.s32 %v347, 16
        %v350 = vadd.s32 %v347, 24
        %v351 = vadd.s32 %v347, 32
        %v352 = vadd.s32 %v347, 40
        %v353 = vadd.s32 %v347, 48
        %v354 = vadd.s32 %v347, 56
        %v355 = vadd.s32 %v347, 64
        %v356 = vadd.s32 %v347, 72
        %v357 = vadd.s32 %v347, 80
        %v358 = vadd.s32 %v347, 88
        %v359 = vadd.s32 %v347, 96
        %v360 = vadd.s32 %v347, 104
        %v361 = vadd.s32 %v347, 112
        %v362 = vadd.s32 %v347, 120
        %v363 = vadd.s32 %v347, 128
        %v364 = vadd.s32 %v347, 136
        %v365 = vadd.s32 %v347, 144
        %v366 = vadd.s32 %v347, 152
        %v367 = vadd.s32 %v347, 160
        %v368 = vadd.s32 %v347, 168
        %v369 = vadd.s32 %v347, 176
        %v370 = vadd.s32 %v347, 184
        %v371 = vadd.s32 %v347, 192
        %v372 = vadd.s32 %v347, 200
        %v373 = vadd.s32 %v347, 208
        %v374 = vadd.s32 %v347, 216
        %v375 = vadd.s32 %v347, 224
        %v376 = vadd.s32 %v347, 232
        %v377 = vadd.s32 %v347, 240
        %v378 = vadd.s32 %v347, 248
        %vm379 = vcmp.lt.s32.totalorder %v347, 0
        %v380 = vsub.s32 0, %v347
        %v381 = vsel %vm379, %v380, %v347
        %v382 = vshrl.u32 %v381, 4
        %v383 = vand.u32 %v381, 15
        %v384 = vsub.s32 0, %v383
        %v385 = vsel %vm379, %v384, %v383
        %vm386 = vcmp.lt.s32.totalorder %v348, 0
        %v387 = vsub.s32 0, %v348
        %v388 = vsel %vm386, %v387, %v348
        %v389 = vshrl.u32 %v388, 4
        %v390 = vand.u32 %v388, 15
        %v391 = vsub.s32 0, %v390
        %v392 = vsel %vm386, %v391, %v390
        %vm393 = vcmp.lt.s32.totalorder %v349, 0
        %v394 = vsub.s32 0, %v349
        %v395 = vsel %vm393, %v394, %v349
        %v396 = vshrl.u32 %v395, 4
        %v397 = vand.u32 %v395, 15
        %v398 = vsub.s32 0, %v397
        %v399 = vsel %vm393, %v398, %v397
        %vm400 = vcmp.lt.s32.totalorder %v350, 0
        %v401 = vsub.s32 0, %v350
        %v402 = vsel %vm400, %v401, %v350
        %v403 = vshrl.u32 %v402, 4
        %v404 = vand.u32 %v402, 15
        %v405 = vsub.s32 0, %v404
        %v406 = vsel %vm400, %v405, %v404
        %vm407 = vcmp.lt.s32.totalorder %v351, 0
        %v408 = vsub.s32 0, %v351
        %v409 = vsel %vm407, %v408, %v351
        %v410 = vshrl.u32 %v409, 4
        %v411 = vand.u32 %v409, 15
        %v412 = vsub.s32 0, %v411
        %v413 = vsel %vm407, %v412, %v411
        %vm414 = vcmp.lt.s32.totalorder %v352, 0
        %v415 = vsub.s32 0, %v352
        %v416 = vsel %vm414, %v415, %v352
        %v417 = vshrl.u32 %v416, 4
        %v418 = vand.u32 %v416, 15
        %v419 = vsub.s32 0, %v418
        %v420 = vsel %vm414, %v419, %v418
        %vm421 = vcmp.lt.s32.totalorder %v353, 0
        %v422 = vsub.s32 0, %v353
        %v423 = vsel %vm421, %v422, %v353
        %v424 = vshrl.u32 %v423, 4
        %v425 = vand.u32 %v423, 15
        %v426 = vsub.s32 0, %v425
        %v427 = vsel %vm421, %v426, %v425
        %vm428 = vcmp.lt.s32.totalorder %v354, 0
        %v429 = vsub.s32 0, %v354
        %v430 = vsel %vm428, %v429, %v354
        %v431 = vshrl.u32 %v430, 4
        %v432 = vand.u32 %v430, 15
        %v433 = vsub.s32 0, %v432
        %v434 = vsel %vm428, %v433, %v432
        %vm435 = vcmp.lt.s32.totalorder %v355, 0
        %v436 = vsub.s32 0, %v355
        %v437 = vsel %vm435, %v436, %v355
        %v438 = vshrl.u32 %v437, 4
        %v439 = vand.u32 %v437, 15
        %v440 = vsub.s32 0, %v439
        %v441 = vsel %vm435, %v440, %v439
        %vm442 = vcmp.lt.s32.totalorder %v356, 0
        %v443 = vsub.s32 0, %v356
        %v444 = vsel %vm442, %v443, %v356
        %v445 = vshrl.u32 %v444, 4
        %v446 = vand.u32 %v444, 15
        %v447 = vsub.s32 0, %v446
        %v448 = vsel %vm442, %v447, %v446
        %vm449 = vcmp.lt.s32.totalorder %v357, 0
        %v450 = vsub.s32 0, %v357
        %v451 = vsel %vm449, %v450, %v357
        %v452 = vshrl.u32 %v451, 4
        %v453 = vand.u32 %v451, 15
        %v454 = vsub.s32 0, %v453
        %v455 = vsel %vm449, %v454, %v453
        %vm456 = vcmp.lt.s32.totalorder %v358, 0
        %v457 = vsub.s32 0, %v358
        %v458 = vsel %vm456, %v457, %v358
        %v459 = vshrl.u32 %v458, 4
        %v460 = vand.u32 %v458, 15
        %v461 = vsub.s32 0, %v460
        %v462 = vsel %vm456, %v461, %v460
        %vm463 = vcmp.lt.s32.totalorder %v359, 0
        %v464 = vsub.s32 0, %v359
        %v465 = vsel %vm463, %v464, %v359
        %v466 = vshrl.u32 %v465, 4
        %v467 = vand.u32 %v465, 15
        %v468 = vsub.s32 0, %v467
        %v469 = vsel %vm463, %v468, %v467
        %vm470 = vcmp.lt.s32.totalorder %v360, 0
        %v471 = vsub.s32 0, %v360
        %v472 = vsel %vm470, %v471, %v360
        %v473 = vshrl.u32 %v472, 4
        %v474 = vand.u32 %v472, 15
        %v475 = vsub.s32 0, %v474
        %v476 = vsel %vm470, %v475, %v474
        %vm477 = vcmp.lt.s32.totalorder %v361, 0
        %v478 = vsub.s32 0, %v361
        %v479 = vsel %vm477, %v478, %v361
        %v480 = vshrl.u32 %v479, 4
        %v481 = vand.u32 %v479, 15
        %v482 = vsub.s32 0, %v481
        %v483 = vsel %vm477, %v482, %v481
        %vm484 = vcmp.lt.s32.totalorder %v362, 0
        %v485 = vsub.s32 0, %v362
        %v486 = vsel %vm484, %v485, %v362
        %v487 = vshrl.u32 %v486, 4
        %v488 = vand.u32 %v486, 15
        %v489 = vsub.s32 0, %v488
        %v490 = vsel %vm484, %v489, %v488
        %vm491 = vcmp.lt.s32.totalorder %v363, 0
        %v492 = vsub.s32 0, %v363
        %v493 = vsel %vm491, %v492, %v363
        %v494 = vshrl.u32 %v493, 4
        %v495 = vand.u32 %v493, 15
        %v496 = vsub.s32 0, %v495
        %v497 = vsel %vm491, %v496, %v495
        %vm498 = vcmp.lt.s32.totalorder %v364, 0
        %v499 = vsub.s32 0, %v364
        %v500 = vsel %vm498, %v499, %v364
        %v501 = vshrl.u32 %v500, 4
        %v502 = vand.u32 %v500, 15
        %v503 = vsub.s32 0, %v502
        %v504 = vsel %vm498, %v503, %v502
        %vm505 = vcmp.lt.s32.totalorder %v365, 0
        %v506 = vsub.s32 0, %v365
        %v507 = vsel %vm505, %v506, %v365
        %v508 = vshrl.u32 %v507, 4
        %v509 = vand.u32 %v507, 15
        %v510 = vsub.s32 0, %v509
        %v511 = vsel %vm505, %v510, %v509
        %vm512 = vcmp.lt.s32.totalorder %v366, 0
        %v513 = vsub.s32 0, %v366
        %v514 = vsel %vm512, %v513, %v366
        %v515 = vshrl.u32 %v514, 4
        %v516 = vand.u32 %v514, 15
        %v517 = vsub.s32 0, %v516
        %v518 = vsel %vm512, %v517, %v516
        %vm519 = vcmp.lt.s32.totalorder %v367, 0
        %v520 = vsub.s32 0, %v367
        %v521 = vsel %vm519, %v520, %v367
        %v522 = vshrl.u32 %v521, 4
        %v523 = vand.u32 %v521, 15
        %v524 = vsub.s32 0, %v523
        %v525 = vsel %vm519, %v524, %v523
        %vm526 = vcmp.lt.s32.totalorder %v368, 0
        %v527 = vsub.s32 0, %v368
        %v528 = vsel %vm526, %v527, %v368
        %v529 = vshrl.u32 %v528, 4
        %v530 = vand.u32 %v528, 15
        %v531 = vsub.s32 0, %v530
        %v532 = vsel %vm526, %v531, %v530
        %vm533 = vcmp.lt.s32.totalorder %v369, 0
        %v534 = vsub.s32 0, %v369
        %v535 = vsel %vm533, %v534, %v369
        %v536 = vshrl.u32 %v535, 4
        %v537 = vand.u32 %v535, 15
        %v538 = vsub.s32 0, %v537
        %v539 = vsel %vm533, %v538, %v537
        %vm540 = vcmp.lt.s32.totalorder %v370, 0
        %v541 = vsub.s32 0, %v370
        %v542 = vsel %vm540, %v541, %v370
        %v543 = vshrl.u32 %v542, 4
        %v544 = vand.u32 %v542, 15
        %v545 = vsub.s32 0, %v544
        %v546 = vsel %vm540, %v545, %v544
        %vm547 = vcmp.lt.s32.totalorder %v371, 0
        %v548 = vsub.s32 0, %v371
        %v549 = vsel %vm547, %v548, %v371
        %v550 = vshrl.u32 %v549, 4
        %v551 = vand.u32 %v549, 15
        %v552 = vsub.s32 0, %v551
        %v553 = vsel %vm547, %v552, %v551
        %vm554 = vcmp.lt.s32.totalorder %v372, 0
        %v555 = vsub.s32 0, %v372
        %v556 = vsel %vm554, %v555, %v372
        %v557 = vshrl.u32 %v556, 4
        %v558 = vand.u32 %v556, 15
        %v559 = vsub.s32 0, %v558
        %v560 = vsel %vm554, %v559, %v558
        %vm561 = vcmp.lt.s32.totalorder %v373, 0
        %v562 = vsub.s32 0, %v373
        %v563 = vsel %vm561, %v562, %v373
        %v564 = vshrl.u32 %v563, 4
        %v565 = vand.u32 %v563, 15
        %v566 = vsub.s32 0, %v565
        %v567 = vsel %vm561, %v566, %v565
        %vm568 = vcmp.lt.s32.totalorder %v374, 0
        %v569 = vsub.s32 0, %v374
        %v570 = vsel %vm568, %v569, %v374
        %v571 = vshrl.u32 %v570, 4
        %v572 = vand.u32 %v570, 15
        %v573 = vsub.s32 0, %v572
        %v574 = vsel %vm568, %v573, %v572
        %vm575 = vcmp.lt.s32.totalorder %v375, 0
        %v576 = vsub.s32 0, %v375
        %v577 = vsel %vm575, %v576, %v375
        %v578 = vshrl.u32 %v577, 4
        %v579 = vand.u32 %v577, 15
        %v580 = vsub.s32 0, %v579
        %v581 = vsel %vm575, %v580, %v579
        %vm582 = vcmp.lt.s32.totalorder %v376, 0
        %v583 = vsub.s32 0, %v376
        %v584 = vsel %vm582, %v583, %v376
        %v585 = vshrl.u32 %v584, 4
        %v586 = vand.u32 %v584, 15
        %v587 = vsub.s32 0, %v586
        %v588 = vsel %vm582, %v587, %v586
        %vm589 = vcmp.lt.s32.totalorder %v377, 0
        %v590 = vsub.s32 0, %v377
        %v591 = vsel %vm589, %v590, %v377
        %v592 = vshrl.u32 %v591, 4
        %v593 = vand.u32 %v591, 15
        %v594 = vsub.s32 0, %v593
        %v595 = vsel %vm589, %v594, %v593
        %vm596 = vcmp.lt.s32.totalorder %v378, 0
        %v597 = vsub.s32 0, %v378
        %v598 = vsel %vm596, %v597, %v378
        %v599 = vshrl.u32 %v598, 4
        %v600 = vand.u32 %v598, 15
        %v601 = vsub.s32 0, %v600
        %v602 = vsel %vm596, %v601, %v600
        %vm603 = vcmp.ne.s32.totalorder %v385, 0
        %vm604 = vcmp.ne.s32.totalorder %v392, 0
        %vm605 = vcmp.ne.s32.totalorder %v399, 0
        %vm606 = vcmp.ne.s32.totalorder %v406, 0
        %vm607 = vcmp.ne.s32.totalorder %v413, 0
        %vm608 = vcmp.ne.s32.totalorder %v420, 0
        %vm609 = vcmp.ne.s32.totalorder %v427, 0
        %vm610 = vcmp.ne.s32.totalorder %v434, 0
        %vm611 = vcmp.ne.s32.totalorder %v441, 0
        %vm612 = vcmp.ne.s32.totalorder %v448, 0
        %vm613 = vcmp.ne.s32.totalorder %v455, 0
        %vm614 = vcmp.ne.s32.totalorder %v462, 0
        %vm615 = vcmp.ne.s32.totalorder %v469, 0
        %vm616 = vcmp.ne.s32.totalorder %v476, 0
        %vm617 = vcmp.ne.s32.totalorder %v483, 0
        %vm618 = vcmp.ne.s32.totalorder %v490, 0
        %vm619 = vcmp.ne.s32.totalorder %v497, 0
        %vm620 = vcmp.ne.s32.totalorder %v504, 0
        %vm621 = vcmp.ne.s32.totalorder %v511, 0
        %vm622 = vcmp.ne.s32.totalorder %v518, 0
        %vm623 = vcmp.ne.s32.totalorder %v525, 0
        %vm624 = vcmp.ne.s32.totalorder %v532, 0
        %vm625 = vcmp.ne.s32.totalorder %v539, 0
        %vm626 = vcmp.ne.s32.totalorder %v546, 0
        %vm627 = vcmp.ne.s32.totalorder %v553, 0
        %vm628 = vcmp.ne.s32.totalorder %v560, 0
        %vm629 = vcmp.ne.s32.totalorder %v567, 0
        %vm630 = vcmp.ne.s32.totalorder %v574, 0
        %vm631 = vcmp.ne.s32.totalorder %v581, 0
        %vm632 = vcmp.ne.s32.totalorder %v588, 0
        %vm633 = vcmp.ne.s32.totalorder %v595, 0
        %vm634 = vcmp.ne.s32.totalorder %v602, 0
        %vm635 = vcmp.lt.s32.totalorder %v385, 0
        %vm636 = vcmp.lt.s32.totalorder %v392, 0
        %vm637 = vcmp.lt.s32.totalorder %v399, 0
        %vm638 = vcmp.lt.s32.totalorder %v406, 0
        %vm639 = vcmp.lt.s32.totalorder %v413, 0
        %vm640 = vcmp.lt.s32.totalorder %v420, 0
        %vm641 = vcmp.lt.s32.totalorder %v427, 0
        %vm642 = vcmp.lt.s32.totalorder %v434, 0
        %vm643 = vcmp.lt.s32.totalorder %v441, 0
        %vm644 = vcmp.lt.s32.totalorder %v448, 0
        %vm645 = vcmp.lt.s32.totalorder %v455, 0
        %vm646 = vcmp.lt.s32.totalorder %v462, 0
        %vm647 = vcmp.lt.s32.totalorder %v469, 0
        %vm648 = vcmp.lt.s32.totalorder %v476, 0
        %vm649 = vcmp.lt.s32.totalorder %v483, 0
        %vm650 = vcmp.lt.s32.totalorder %v490, 0
        %vm651 = vcmp.lt.s32.totalorder %v497, 0
        %vm652 = vcmp.lt.s32.totalorder %v504, 0
        %vm653 = vcmp.lt.s32.totalorder %v511, 0
        %vm654 = vcmp.lt.s32.totalorder %v518, 0
        %vm655 = vcmp.lt.s32.totalorder %v525, 0
        %vm656 = vcmp.lt.s32.totalorder %v532, 0
        %vm657 = vcmp.lt.s32.totalorder %v539, 0
        %vm658 = vcmp.lt.s32.totalorder %v546, 0
        %vm659 = vcmp.lt.s32.totalorder %v553, 0
        %vm660 = vcmp.lt.s32.totalorder %v560, 0
        %vm661 = vcmp.lt.s32.totalorder %v567, 0
        %vm662 = vcmp.lt.s32.totalorder %v574, 0
        %vm663 = vcmp.lt.s32.totalorder %v581, 0
        %vm664 = vcmp.lt.s32.totalorder %v588, 0
        %vm665 = vcmp.lt.s32.totalorder %v595, 0
        %vm666 = vcmp.lt.s32.totalorder %v602, 0
        %vm667 = vmand %vm635, %vm603
        %vm668 = vmand %vm636, %vm604
        %vm669 = vmand %vm637, %vm605
        %vm670 = vmand %vm638, %vm606
        %vm671 = vmand %vm639, %vm607
        %vm672 = vmand %vm640, %vm608
        %vm673 = vmand %vm641, %vm609
        %vm674 = vmand %vm642, %vm610
        %vm675 = vmand %vm643, %vm611
        %vm676 = vmand %vm644, %vm612
        %vm677 = vmand %vm645, %vm613
        %vm678 = vmand %vm646, %vm614
        %vm679 = vmand %vm647, %vm615
        %vm680 = vmand %vm648, %vm616
        %vm681 = vmand %vm649, %vm617
        %vm682 = vmand %vm650, %vm618
        %vm683 = vmand %vm651, %vm619
        %vm684 = vmand %vm652, %vm620
        %vm685 = vmand %vm653, %vm621
        %vm686 = vmand %vm654, %vm622
        %vm687 = vmand %vm655, %vm623
        %vm688 = vmand %vm656, %vm624
        %vm689 = vmand %vm657, %vm625
        %vm690 = vmand %vm658, %vm626
        %vm691 = vmand %vm659, %vm627
        %vm692 = vmand %vm660, %vm628
        %vm693 = vmand %vm661, %vm629
        %vm694 = vmand %vm662, %vm630
        %vm695 = vmand %vm663, %vm631
        %vm696 = vmand %vm664, %vm632
        %vm697 = vmand %vm665, %vm633
        %vm698 = vmand %vm666, %vm634
        %v699 = vadd.s32 %v385, 16
        %v700 = vadd.s32 %v392, 16
        %v701 = vadd.s32 %v399, 16
        %v702 = vadd.s32 %v406, 16
        %v703 = vadd.s32 %v413, 16
        %v704 = vadd.s32 %v420, 16
        %v705 = vadd.s32 %v427, 16
        %v706 = vadd.s32 %v434, 16
        %v707 = vadd.s32 %v441, 16
        %v708 = vadd.s32 %v448, 16
        %v709 = vadd.s32 %v455, 16
        %v710 = vadd.s32 %v462, 16
        %v711 = vadd.s32 %v469, 16
        %v712 = vadd.s32 %v476, 16
        %v713 = vadd.s32 %v483, 16
        %v714 = vadd.s32 %v490, 16
        %v715 = vadd.s32 %v497, 16
        %v716 = vadd.s32 %v504, 16
        %v717 = vadd.s32 %v511, 16
        %v718 = vadd.s32 %v518, 16
        %v719 = vadd.s32 %v525, 16
        %v720 = vadd.s32 %v532, 16
        %v721 = vadd.s32 %v539, 16
        %v722 = vadd.s32 %v546, 16
        %v723 = vadd.s32 %v553, 16
        %v724 = vadd.s32 %v560, 16
        %v725 = vadd.s32 %v567, 16
        %v726 = vadd.s32 %v574, 16
        %v727 = vadd.s32 %v581, 16
        %v728 = vadd.s32 %v588, 16
        %v729 = vadd.s32 %v595, 16
        %v730 = vadd.s32 %v602, 16
        %v731 = vsel %vm667, %v699, %v385
        %v732 = vsel %vm668, %v700, %v392
        %v733 = vsel %vm669, %v701, %v399
        %v734 = vsel %vm670, %v702, %v406
        %v735 = vsel %vm671, %v703, %v413
        %v736 = vsel %vm672, %v704, %v420
        %v737 = vsel %vm673, %v705, %v427
        %v738 = vsel %vm674, %v706, %v434
        %v739 = vsel %vm675, %v707, %v441
        %v740 = vsel %vm676, %v708, %v448
        %v741 = vsel %vm677, %v709, %v455
        %v742 = vsel %vm678, %v710, %v462
        %v743 = vsel %vm679, %v711, %v469
        %v744 = vsel %vm680, %v712, %v476
        %v745 = vsel %vm681, %v713, %v483
        %v746 = vsel %vm682, %v714, %v490
        %v747 = vsel %vm683, %v715, %v497
        %v748 = vsel %vm684, %v716, %v504
        %v749 = vsel %vm685, %v717, %v511
        %v750 = vsel %vm686, %v718, %v518
        %v751 = vsel %vm687, %v719, %v525
        %v752 = vsel %vm688, %v720, %v532
        %v753 = vsel %vm689, %v721, %v539
        %v754 = vsel %vm690, %v722, %v546
        %v755 = vsel %vm691, %v723, %v553
        %v756 = vsel %vm692, %v724, %v560
        %v757 = vsel %vm693, %v725, %v567
        %v758 = vsel %vm694, %v726, %v574
        %v759 = vsel %vm695, %v727, %v581
        %v760 = vsel %vm696, %v728, %v588
        %v761 = vsel %vm697, %v729, %v595
        %v762 = vsel %vm698, %v730, %v602
        %vm763 = vcmp.ge.s32.totalorder %v731, 1
        %vm764 = vcmp.ge.s32.totalorder %v732, 1
        %vm765 = vcmp.ge.s32.totalorder %v733, 1
        %vm766 = vcmp.ge.s32.totalorder %v734, 1
        %vm767 = vcmp.ge.s32.totalorder %v735, 1
        %vm768 = vcmp.ge.s32.totalorder %v736, 1
        %vm769 = vcmp.ge.s32.totalorder %v737, 1
        %vm770 = vcmp.ge.s32.totalorder %v738, 1
        %vm771 = vcmp.ge.s32.totalorder %v739, 1
        %vm772 = vcmp.ge.s32.totalorder %v740, 1
        %vm773 = vcmp.ge.s32.totalorder %v741, 1
        %vm774 = vcmp.ge.s32.totalorder %v742, 1
        %vm775 = vcmp.ge.s32.totalorder %v743, 1
        %vm776 = vcmp.ge.s32.totalorder %v744, 1
        %vm777 = vcmp.ge.s32.totalorder %v745, 1
        %vm778 = vcmp.ge.s32.totalorder %v746, 1
        %vm779 = vcmp.ge.s32.totalorder %v747, 1
        %vm780 = vcmp.ge.s32.totalorder %v748, 1
        %vm781 = vcmp.ge.s32.totalorder %v749, 1
        %vm782 = vcmp.ge.s32.totalorder %v750, 1
        %vm783 = vcmp.ge.s32.totalorder %v751, 1
        %vm784 = vcmp.ge.s32.totalorder %v752, 1
        %vm785 = vcmp.ge.s32.totalorder %v753, 1
        %vm786 = vcmp.ge.s32.totalorder %v754, 1
        %vm787 = vcmp.ge.s32.totalorder %v755, 1
        %vm788 = vcmp.ge.s32.totalorder %v756, 1
        %vm789 = vcmp.ge.s32.totalorder %v757, 1
        %vm790 = vcmp.ge.s32.totalorder %v758, 1
        %vm791 = vcmp.ge.s32.totalorder %v759, 1
        %vm792 = vcmp.ge.s32.totalorder %v760, 1
        %vm793 = vcmp.ge.s32.totalorder %v761, 1
        %vm794 = vcmp.ge.s32.totalorder %v762, 1
        %v795 = vsel %vm763, 1, 0
        %v796 = vsel %vm764, 1, 0
        %v797 = vsel %vm765, 1, 0
        %v798 = vsel %vm766, 1, 0
        %v799 = vsel %vm767, 1, 0
        %v800 = vsel %vm768, 1, 0
        %v801 = vsel %vm769, 1, 0
        %v802 = vsel %vm770, 1, 0
        %v803 = vsel %vm771, 1, 0
        %v804 = vsel %vm772, 1, 0
        %v805 = vsel %vm773, 1, 0
        %v806 = vsel %vm774, 1, 0
        %v807 = vsel %vm775, 1, 0
        %v808 = vsel %vm776, 1, 0
        %v809 = vsel %vm777, 1, 0
        %v810 = vsel %vm778, 1, 0
        %v811 = vsel %vm779, 1, 0
        %v812 = vsel %vm780, 1, 0
        %v813 = vsel %vm781, 1, 0
        %v814 = vsel %vm782, 1, 0
        %v815 = vsel %vm783, 1, 0
        %v816 = vsel %vm784, 1, 0
        %v817 = vsel %vm785, 1, 0
        %v818 = vsel %vm786, 1, 0
        %v819 = vsel %vm787, 1, 0
        %v820 = vsel %vm788, 1, 0
        %v821 = vsel %vm789, 1, 0
        %v822 = vsel %vm790, 1, 0
        %v823 = vsel %vm791, 1, 0
        %v824 = vsel %vm792, 1, 0
        %v825 = vsel %vm793, 1, 0
        %v826 = vsel %vm794, 1, 0
        %v827 = vcvt.s32.f32 %v795
        %v828 = vcvt.s32.f32 %v796
        %v829 = vcvt.s32.f32 %v797
        %v830 = vcvt.s32.f32 %v798
        %v831 = vcvt.s32.f32 %v799
        %v832 = vcvt.s32.f32 %v800
        %v833 = vcvt.s32.f32 %v801
        %v834 = vcvt.s32.f32 %v802
        %v835 = vcvt.s32.f32 %v803
        %v836 = vcvt.s32.f32 %v804
        %v837 = vcvt.s32.f32 %v805
        %v838 = vcvt.s32.f32 %v806
        %v839 = vcvt.s32.f32 %v807
        %v840 = vcvt.s32.f32 %v808
        %v841 = vcvt.s32.f32 %v809
        %v842 = vcvt.s32.f32 %v810
        %v843 = vcvt.s32.f32 %v811
        %v844 = vcvt.s32.f32 %v812
        %v845 = vcvt.s32.f32 %v813
        %v846 = vcvt.s32.f32 %v814
        %v847 = vcvt.s32.f32 %v815
        %v848 = vcvt.s32.f32 %v816
        %v849 = vcvt.s32.f32 %v817
        %v850 = vcvt.s32.f32 %v818
        %v851 = vcvt.s32.f32 %v819
        %v852 = vcvt.s32.f32 %v820
        %v853 = vcvt.s32.f32 %v821
        %v854 = vcvt.s32.f32 %v822
        %v855 = vcvt.s32.f32 %v823
        %v856 = vcvt.s32.f32 %v824
        %v857 = vcvt.s32.f32 %v825
        %v858 = vcvt.s32.f32 %v826
        %vm859 = vcmp.le.s32.totalorder %v731, 14
        %vm860 = vcmp.le.s32.totalorder %v732, 14
        %vm861 = vcmp.le.s32.totalorder %v733, 14
        %vm862 = vcmp.le.s32.totalorder %v734, 14
        %vm863 = vcmp.le.s32.totalorder %v735, 14
        %vm864 = vcmp.le.s32.totalorder %v736, 14
        %vm865 = vcmp.le.s32.totalorder %v737, 14
        %vm866 = vcmp.le.s32.totalorder %v738, 14
        %vm867 = vcmp.le.s32.totalorder %v739, 14
        %vm868 = vcmp.le.s32.totalorder %v740, 14
        %vm869 = vcmp.le.s32.totalorder %v741, 14
        %vm870 = vcmp.le.s32.totalorder %v742, 14
        %vm871 = vcmp.le.s32.totalorder %v743, 14
        %vm872 = vcmp.le.s32.totalorder %v744, 14
        %vm873 = vcmp.le.s32.totalorder %v745, 14
        %vm874 = vcmp.le.s32.totalorder %v746, 14
        %vm875 = vcmp.le.s32.totalorder %v747, 14
        %vm876 = vcmp.le.s32.totalorder %v748, 14
        %vm877 = vcmp.le.s32.totalorder %v749, 14
        %vm878 = vcmp.le.s32.totalorder %v750, 14
        %vm879 = vcmp.le.s32.totalorder %v751, 14
        %vm880 = vcmp.le.s32.totalorder %v752, 14
        %vm881 = vcmp.le.s32.totalorder %v753, 14
        %vm882 = vcmp.le.s32.totalorder %v754, 14
        %vm883 = vcmp.le.s32.totalorder %v755, 14
        %vm884 = vcmp.le.s32.totalorder %v756, 14
        %vm885 = vcmp.le.s32.totalorder %v757, 14
        %vm886 = vcmp.le.s32.totalorder %v758, 14
        %vm887 = vcmp.le.s32.totalorder %v759, 14
        %vm888 = vcmp.le.s32.totalorder %v760, 14
        %vm889 = vcmp.le.s32.totalorder %v761, 14
        %vm890 = vcmp.le.s32.totalorder %v762, 14
        %v891 = vsel %vm859, 1, 0
        %v892 = vsel %vm860, 1, 0
        %v893 = vsel %vm861, 1, 0
        %v894 = vsel %vm862, 1, 0
        %v895 = vsel %vm863, 1, 0
        %v896 = vsel %vm864, 1, 0
        %v897 = vsel %vm865, 1, 0
        %v898 = vsel %vm866, 1, 0
        %v899 = vsel %vm867, 1, 0
        %v900 = vsel %vm868, 1, 0
        %v901 = vsel %vm869, 1, 0
        %v902 = vsel %vm870, 1, 0
        %v903 = vsel %vm871, 1, 0
        %v904 = vsel %vm872, 1, 0
        %v905 = vsel %vm873, 1, 0
        %v906 = vsel %vm874, 1, 0
        %v907 = vsel %vm875, 1, 0
        %v908 = vsel %vm876, 1, 0
        %v909 = vsel %vm877, 1, 0
        %v910 = vsel %vm878, 1, 0
        %v911 = vsel %vm879, 1, 0
        %v912 = vsel %vm880, 1, 0
        %v913 = vsel %vm881, 1, 0
        %v914 = vsel %vm882, 1, 0
        %v915 = vsel %vm883, 1, 0
        %v916 = vsel %vm884, 1, 0
        %v917 = vsel %vm885, 1, 0
        %v918 = vsel %vm886, 1, 0
        %v919 = vsel %vm887, 1, 0
        %v920 = vsel %vm888, 1, 0
        %v921 = vsel %vm889, 1, 0
        %v922 = vsel %vm890, 1, 0
        %v923 = vcvt.s32.f32 %v891
        %v924 = vcvt.s32.f32 %v892
        %v925 = vcvt.s32.f32 %v893
        %v926 = vcvt.s32.f32 %v894
        %v927 = vcvt.s32.f32 %v895
        %v928 = vcvt.s32.f32 %v896
        %v929 = vcvt.s32.f32 %v897
        %v930 = vcvt.s32.f32 %v898
        %v931 = vcvt.s32.f32 %v899
        %v932 = vcvt.s32.f32 %v900
        %v933 = vcvt.s32.f32 %v901
        %v934 = vcvt.s32.f32 %v902
        %v935 = vcvt.s32.f32 %v903
        %v936 = vcvt.s32.f32 %v904
        %v937 = vcvt.s32.f32 %v905
        %v938 = vcvt.s32.f32 %v906
        %v939 = vcvt.s32.f32 %v907
        %v940 = vcvt.s32.f32 %v908
        %v941 = vcvt.s32.f32 %v909
        %v942 = vcvt.s32.f32 %v910
        %v943 = vcvt.s32.f32 %v911
        %v944 = vcvt.s32.f32 %v912
        %v945 = vcvt.s32.f32 %v913
        %v946 = vcvt.s32.f32 %v914
        %v947 = vcvt.s32.f32 %v915
        %v948 = vcvt.s32.f32 %v916
        %v949 = vcvt.s32.f32 %v917
        %v950 = vcvt.s32.f32 %v918
        %v951 = vcvt.s32.f32 %v919
        %v952 = vcvt.s32.f32 %v920
        %v953 = vcvt.s32.f32 %v921
        %v954 = vcvt.s32.f32 %v922
        %v955 = vld [vmem:[#allocation2] sm:$0xff]
        %v956 = vld [vmem:[#allocation2 + $0x8] sm:$0xff]
        %v957 = vld [vmem:[#allocation2 + $0x10] sm:$0xff]
        %v958 = vld [vmem:[#allocation2 + $0x18] sm:$0xff]
        %v959 = vld [vmem:[#allocation2 + $0x20] sm:$0xff]
        %v960 = vld [vmem:[#allocation2 + $0x28] sm:$0xff]
        %v961 = vld [vmem:[#allocation2 + $0x30] sm:$0xff]
        %v962 = vld [vmem:[#allocation2 + $0x38] sm:$0xff]
        %v963 = vld [vmem:[#allocation2 + $0x40] sm:$0xff]
        %v964 = vld [vmem:[#allocation2 + $0x48] sm:$0xff]
        %v965 = vld [vmem:[#allocation2 + $0x50] sm:$0xff]
        %v966 = vld [vmem:[#allocation2 + $0x58] sm:$0xff]
        %v967 = vld [vmem:[#allocation2 + $0x60] sm:$0xff]
        %v968 = vld [vmem:[#allocation2 + $0x68] sm:$0xff]
        %v969 = vld [vmem:[#allocation2 + $0x70] sm:$0xff]
        %v970 = vld [vmem:[#allocation2 + $0x78] sm:$0xff]
        %v971 = vld [vmem:[#allocation2 + $0x80] sm:$0xff]
        %v972 = vld [vmem:[#allocation2 + $0x88] sm:$0xff]
        %v973 = vld [vmem:[#allocation2 + $0x90] sm:$0xff]
        %v974 = vld [vmem:[#allocation2 + $0x98] sm:$0xff]
        %v975 = vld [vmem:[#allocation2 + $0xa0] sm:$0xff]
        %v976 = vld [vmem:[#allocation2 + $0xa8] sm:$0xff]
        %v977 = vld [vmem:[#allocation2 + $0xb0] sm:$0xff]
        %v978 = vld [vmem:[#allocation2 + $0xb8] sm:$0xff]
        %v979 = vld [vmem:[#allocation2 + $0xc0] sm:$0xff]
        %v980 = vld [vmem:[#allocation2 + $0xc8] sm:$0xff]
        %v981 = vld [vmem:[#allocation2 + $0xd0] sm:$0xff]
        %v982 = vld [vmem:[#allocation2 + $0xd8] sm:$0xff]
        %v983 = vld [vmem:[#allocation2 + $0xe0] sm:$0xff]
        %v984 = vld [vmem:[#allocation2 + $0xe8] sm:$0xff]
        %v985 = vld [vmem:[#allocation2 + $0xf0] sm:$0xff]
        %v986 = vld [vmem:[#allocation2 + $0xf8] sm:$0xff]
        %v987 = vmul.f32 %v955, %v827
        %v988 = vmul.f32 %v956, %v828
        %v989 = vmul.f32 %v957, %v829
        %v990 = vmul.f32 %v958, %v830
        %v991 = vmul.f32 %v959, %v831
        %v992 = vmul.f32 %v960, %v832
        %v993 = vmul.f32 %v961, %v833
        %v994 = vmul.f32 %v962, %v834
        %v995 = vmul.f32 %v963, %v835
        %v996 = vmul.f32 %v964, %v836
        %v997 = vmul.f32 %v965, %v837
        %v998 = vmul.f32 %v966, %v838
        %v999 = vmul.f32 %v967, %v839
        %v1000 = vmul.f32 %v968, %v840
        %v1001 = vmul.f32 %v969, %v841
        %v1002 = vmul.f32 %v970, %v842
        %v1003 = vmul.f32 %v971, %v843
        %v1004 = vmul.f32 %v972, %v844
        %v1005 = vmul.f32 %v973, %v845
        %v1006 = vmul.f32 %v974, %v846
        %v1007 = vmul.f32 %v975, %v847
        %v1008 = vmul.f32 %v976, %v848
        %v1009 = vmul.f32 %v977, %v849
        %v1010 = vmul.f32 %v978, %v850
        %v1011 = vmul.f32 %v979, %v851
        %v1012 = vmul.f32 %v980, %v852
        %v1013 = vmul.f32 %v981, %v853
        %v1014 = vmul.f32 %v982, %v854
        %v1015 = vmul.f32 %v983, %v855
        %v1016 = vmul.f32 %v984, %v856
        %v1017 = vmul.f32 %v985, %v857
        %v1018 = vmul.f32 %v986, %v858
        %v1019 = vpack.c.bf16 %v988, %v987
        %v1020 = vpack.c.bf16 %v990, %v989
        %v1021 = vpack.c.bf16 %v992, %v991
        %v1022 = vpack.c.bf16 %v994, %v993
        %v1023 = vpack.c.bf16 %v996, %v995
        %v1024 = vpack.c.bf16 %v998, %v997
        %v1025 = vpack.c.bf16 %v1000, %v999
        %v1026 = vpack.c.bf16 %v1002, %v1001
        %v1027 = vpack.c.bf16 %v1004, %v1003
        %v1028 = vpack.c.bf16 %v1006, %v1005
        %v1029 = vpack.c.bf16 %v1008, %v1007
        %v1030 = vpack.c.bf16 %v1010, %v1009
        %v1031 = vpack.c.bf16 %v1012, %v1011
        %v1032 = vpack.c.bf16 %v1014, %v1013
        %v1033 = vpack.c.bf16 %v1016, %v1015
        %v1034 = vpack.c.bf16 %v1018, %v1017
        %v1035 = vld [vmem:[#allocation2 + $0x1] sm:$0xff]
        %v1036 = vld [vmem:[#allocation2 + $0x9] sm:$0xff]
        %v1037 = vld [vmem:[#allocation2 + $0x11] sm:$0xff]
        %v1038 = vld [vmem:[#allocation2 + $0x19] sm:$0xff]
        %v1039 = vld [vmem:[#allocation2 + $0x21] sm:$0xff]
        %v1040 = vld [vmem:[#allocation2 + $0x29] sm:$0xff]
        %v1041 = vld [vmem:[#allocation2 + $0x31] sm:$0xff]
        %v1042 = vld [vmem:[#allocation2 + $0x39] sm:$0xff]
        %v1043 = vld [vmem:[#allocation2 + $0x41] sm:$0xff]
        %v1044 = vld [vmem:[#allocation2 + $0x49] sm:$0xff]
        %v1045 = vld [vmem:[#allocation2 + $0x51] sm:$0xff]
        %v1046 = vld [vmem:[#allocation2 + $0x59] sm:$0xff]
        %v1047 = vld [vmem:[#allocation2 + $0x61] sm:$0xff]
        %v1048 = vld [vmem:[#allocation2 + $0x69] sm:$0xff]
        %v1049 = vld [vmem:[#allocation2 + $0x71] sm:$0xff]
        %v1050 = vld [vmem:[#allocation2 + $0x79] sm:$0xff]
        %v1051 = vld [vmem:[#allocation2 + $0x81] sm:$0xff]
        %v1052 = vld [vmem:[#allocation2 + $0x89] sm:$0xff]
        %v1053 = vld [vmem:[#allocation2 + $0x91] sm:$0xff]
        %v1054 = vld [vmem:[#allocation2 + $0x99] sm:$0xff]
        %v1055 = vld [vmem:[#allocation2 + $0xa1] sm:$0xff]
        %v1056 = vld [vmem:[#allocation2 + $0xa9] sm:$0xff]
        %v1057 = vld [vmem:[#allocation2 + $0xb1] sm:$0xff]
        %v1058 = vld [vmem:[#allocation2 + $0xb9] sm:$0xff]
        %v1059 = vld [vmem:[#allocation2 + $0xc1] sm:$0xff]
        %v1060 = vld [vmem:[#allocation2 + $0xc9] sm:$0xff]
        %v1061 = vld [vmem:[#allocation2 + $0xd1] sm:$0xff]
        %v1062 = vld [vmem:[#allocation2 + $0xd9] sm:$0xff]
        %v1063 = vld [vmem:[#allocation2 + $0xe1] sm:$0xff]
        %v1064 = vld [vmem:[#allocation2 + $0xe9] sm:$0xff]
        %v1065 = vld [vmem:[#allocation2 + $0xf1] sm:$0xff]
        %v1066 = vld [vmem:[#allocation2 + $0xf9] sm:$0xff]
        %v1067 = vpack.c.bf16 %v1036, %v1035
        %v1068 = vpack.c.bf16 %v1038, %v1037
        %v1069 = vpack.c.bf16 %v1040, %v1039
        %v1070 = vpack.c.bf16 %v1042, %v1041
        %v1071 = vpack.c.bf16 %v1044, %v1043
        %v1072 = vpack.c.bf16 %v1046, %v1045
        %v1073 = vpack.c.bf16 %v1048, %v1047
        %v1074 = vpack.c.bf16 %v1050, %v1049
        %v1075 = vpack.c.bf16 %v1052, %v1051
        %v1076 = vpack.c.bf16 %v1054, %v1053
        %v1077 = vpack.c.bf16 %v1056, %v1055
        %v1078 = vpack.c.bf16 %v1058, %v1057
        %v1079 = vpack.c.bf16 %v1060, %v1059
        %v1080 = vpack.c.bf16 %v1062, %v1061
        %v1081 = vpack.c.bf16 %v1064, %v1063
        %v1082 = vpack.c.bf16 %v1066, %v1065
        %v1083 = vld [vmem:[#allocation2 + $0x2] sm:$0xff]
        %v1084 = vld [vmem:[#allocation2 + $0xa] sm:$0xff]
        %v1085 = vld [vmem:[#allocation2 + $0x12] sm:$0xff]
        %v1086 = vld [vmem:[#allocation2 + $0x1a] sm:$0xff]
        %v1087 = vld [vmem:[#allocation2 + $0x22] sm:$0xff]
        %v1088 = vld [vmem:[#allocation2 + $0x2a] sm:$0xff]
        %v1089 = vld [vmem:[#allocation2 + $0x32] sm:$0xff]
        %v1090 = vld [vmem:[#allocation2 + $0x3a] sm:$0xff]
        %v1091 = vld [vmem:[#allocation2 + $0x42] sm:$0xff]
        %v1092 = vld [vmem:[#allocation2 + $0x4a] sm:$0xff]
        %v1093 = vld [vmem:[#allocation2 + $0x52] sm:$0xff]
        %v1094 = vld [vmem:[#allocation2 + $0x5a] sm:$0xff]
        %v1095 = vld [vmem:[#allocation2 + $0x62] sm:$0xff]
        %v1096 = vld [vmem:[#allocation2 + $0x6a] sm:$0xff]
        %v1097 = vld [vmem:[#allocation2 + $0x72] sm:$0xff]
        %v1098 = vld [vmem:[#allocation2 + $0x7a] sm:$0xff]
        %v1099 = vld [vmem:[#allocation2 + $0x82] sm:$0xff]
        %v1100 = vld [vmem:[#allocation2 + $0x8a] sm:$0xff]
        %v1101 = vld [vmem:[#allocation2 + $0x92] sm:$0xff]
        %v1102 = vld [vmem:[#allocation2 + $0x9a] sm:$0xff]
        %v1103 = vld [vmem:[#allocation2 + $0xa2] sm:$0xff]
        %v1104 = vld [vmem:[#allocation2 + $0xaa] sm:$0xff]
        %v1105 = vld [vmem:[#allocation2 + $0xb2] sm:$0xff]
        %v1106 = vld [vmem:[#allocation2 + $0xba] sm:$0xff]
        %v1107 = vld [vmem:[#allocation2 + $0xc2] sm:$0xff]
        %v1108 = vld [vmem:[#allocation2 + $0xca] sm:$0xff]
        %v1109 = vld [vmem:[#allocation2 + $0xd2] sm:$0xff]
        %v1110 = vld [vmem:[#allocation2 + $0xda] sm:$0xff]
        %v1111 = vld [vmem:[#allocation2 + $0xe2] sm:$0xff]
        %v1112 = vld [vmem:[#allocation2 + $0xea] sm:$0xff]
        %v1113 = vld [vmem:[#allocation2 + $0xf2] sm:$0xff]
        %v1114 = vld [vmem:[#allocation2 + $0xfa] sm:$0xff]
        %v1115 = vmul.f32 %v1083, %v923
        %v1116 = vmul.f32 %v1084, %v924
        %v1117 = vmul.f32 %v1085, %v925
        %v1118 = vmul.f32 %v1086, %v926
        %v1119 = vmul.f32 %v1087, %v927
        %v1120 = vmul.f32 %v1088, %v928
        %v1121 = vmul.f32 %v1089, %v929
        %v1122 = vmul.f32 %v1090, %v930
        %v1123 = vmul.f32 %v1091, %v931
        %v1124 = vmul.f32 %v1092, %v932
        %v1125 = vmul.f32 %v1093, %v933
        %v1126 = vmul.f32 %v1094, %v934
        %v1127 = vmul.f32 %v1095, %v935
        %v1128 = vmul.f32 %v1096, %v936
        %v1129 = vmul.f32 %v1097, %v937
        %v1130 = vmul.f32 %v1098, %v938
        %v1131 = vmul.f32 %v1099, %v939
        %v1132 = vmul.f32 %v1100, %v940
        %v1133 = vmul.f32 %v1101, %v941
        %v1134 = vmul.f32 %v1102, %v942
        %v1135 = vmul.f32 %v1103, %v943
        %v1136 = vmul.f32 %v1104, %v944
        %v1137 = vmul.f32 %v1105, %v945
        %v1138 = vmul.f32 %v1106, %v946
        %v1139 = vmul.f32 %v1107, %v947
        %v1140 = vmul.f32 %v1108, %v948
        %v1141 = vmul.f32 %v1109, %v949
        %v1142 = vmul.f32 %v1110, %v950
        %v1143 = vmul.f32 %v1111, %v951
        %v1144 = vmul.f32 %v1112, %v952
        %v1145 = vmul.f32 %v1113, %v953
        %v1146 = vmul.f32 %v1114, %v954
        %v1147 = vpack.c.bf16 %v1116, %v1115
        %v1148 = vpack.c.bf16 %v1118, %v1117
        %v1149 = vpack.c.bf16 %v1120, %v1119
        %v1150 = vpack.c.bf16 %v1122, %v1121
        %v1151 = vpack.c.bf16 %v1124, %v1123
        %v1152 = vpack.c.bf16 %v1126, %v1125
        %v1153 = vpack.c.bf16 %v1128, %v1127
        %v1154 = vpack.c.bf16 %v1130, %v1129
        %v1155 = vpack.c.bf16 %v1132, %v1131
        %v1156 = vpack.c.bf16 %v1134, %v1133
        %v1157 = vpack.c.bf16 %v1136, %v1135
        %v1158 = vpack.c.bf16 %v1138, %v1137
        %v1159 = vpack.c.bf16 %v1140, %v1139
        %v1160 = vpack.c.bf16 %v1142, %v1141
        %v1161 = vpack.c.bf16 %v1144, %v1143
        %v1162 = vpack.c.bf16 %v1146, %v1145
        %v1163 = vld [vmem:[#allocation2 + $0x100] sm:$0xff]
        %v1164 = vld [vmem:[#allocation2 + $0x108] sm:$0xff]
        %v1165 = vmul.f32 %v957, %v827
        %v1166 = vmul.f32 %v958, %v828
        %v1167 = vmul.f32 %v959, %v829
        %v1168 = vmul.f32 %v960, %v830
        %v1169 = vmul.f32 %v961, %v831
        %v1170 = vmul.f32 %v962, %v832
        %v1171 = vmul.f32 %v963, %v833
        %v1172 = vmul.f32 %v964, %v834
        %v1173 = vmul.f32 %v965, %v835
        %v1174 = vmul.f32 %v966, %v836
        %v1175 = vmul.f32 %v967, %v837
        %v1176 = vmul.f32 %v968, %v838
        %v1177 = vmul.f32 %v969, %v839
        %v1178 = vmul.f32 %v970, %v840
        %v1179 = vmul.f32 %v971, %v841
        %v1180 = vmul.f32 %v972, %v842
        %v1181 = vmul.f32 %v973, %v843
        %v1182 = vmul.f32 %v974, %v844
        %v1183 = vmul.f32 %v975, %v845
        %v1184 = vmul.f32 %v976, %v846
        %v1185 = vmul.f32 %v977, %v847
        %v1186 = vmul.f32 %v978, %v848
        %v1187 = vmul.f32 %v979, %v849
        %v1188 = vmul.f32 %v980, %v850
        %v1189 = vmul.f32 %v981, %v851
        %v1190 = vmul.f32 %v982, %v852
        %v1191 = vmul.f32 %v983, %v853
        %v1192 = vmul.f32 %v984, %v854
        %v1193 = vmul.f32 %v985, %v855
        %v1194 = vmul.f32 %v986, %v856
        %v1195 = vmul.f32 %v1163, %v857
        %v1196 = vmul.f32 %v1164, %v858
        %v1197 = vpack.c.bf16 %v1166, %v1165
        %v1198 = vpack.c.bf16 %v1168, %v1167
        %v1199 = vpack.c.bf16 %v1170, %v1169
        %v1200 = vpack.c.bf16 %v1172, %v1171
        %v1201 = vpack.c.bf16 %v1174, %v1173
        %v1202 = vpack.c.bf16 %v1176, %v1175
        %v1203 = vpack.c.bf16 %v1178, %v1177
        %v1204 = vpack.c.bf16 %v1180, %v1179
        %v1205 = vpack.c.bf16 %v1182, %v1181
        %v1206 = vpack.c.bf16 %v1184, %v1183
        %v1207 = vpack.c.bf16 %v1186, %v1185
        %v1208 = vpack.c.bf16 %v1188, %v1187
        %v1209 = vpack.c.bf16 %v1190, %v1189
        %v1210 = vpack.c.bf16 %v1192, %v1191
        %v1211 = vpack.c.bf16 %v1194, %v1193
        %v1212 = vpack.c.bf16 %v1196, %v1195
        %v1213 = vld [vmem:[#allocation2 + $0x101] sm:$0xff]
        %v1214 = vld [vmem:[#allocation2 + $0x109] sm:$0xff]
        %v1215 = vpack.c.bf16 %v1214, %v1213
        %v1216 = vld [vmem:[#allocation2 + $0x102] sm:$0xff]
        %v1217 = vld [vmem:[#allocation2 + $0x10a] sm:$0xff]
        %v1218 = vmul.f32 %v1085, %v923
        %v1219 = vmul.f32 %v1086, %v924
        %v1220 = vmul.f32 %v1087, %v925
        %v1221 = vmul.f32 %v1088, %v926
        %v1222 = vmul.f32 %v1089, %v927
        %v1223 = vmul.f32 %v1090, %v928
        %v1224 = vmul.f32 %v1091, %v929
        %v1225 = vmul.f32 %v1092, %v930
        %v1226 = vmul.f32 %v1093, %v931
        %v1227 = vmul.f32 %v1094, %v932
        %v1228 = vmul.f32 %v1095, %v933
        %v1229 = vmul.f32 %v1096, %v934
        %v1230 = vmul.f32 %v1097, %v935
        %v1231 = vmul.f32 %v1098, %v936
        %v1232 = vmul.f32 %v1099, %v937
        %v1233 = vmul.f32 %v1100, %v938
        %v1234 = vmul.f32 %v1101, %v939
        %v1235 = vmul.f32 %v1102, %v940
        %v1236 = vmul.f32 %v1103, %v941
        %v1237 = vmul.f32 %v1104, %v942
        %v1238 = vmul.f32 %v1105, %v943
        %v1239 = vmul.f32 %v1106, %v944
        %v1240 = vmul.f32 %v1107, %v945
        %v1241 = vmul.f32 %v1108, %v946
        %v1242 = vmul.f32 %v1109, %v947
        %v1243 = vmul.f32 %v1110, %v948
        %v1244 = vmul.f32 %v1111, %v949
        %v1245 = vmul.f32 %v1112, %v950
        %v1246 = vmul.f32 %v1113, %v951
        %v1247 = vmul.f32 %v1114, %v952
        %v1248 = vmul.f32 %v1216, %v953
        %v1249 = vmul.f32 %v1217, %v954
        %v1250 = vpack.c.bf16 %v1219, %v1218
        %v1251 = vpack.c.bf16 %v1221, %v1220
        %v1252 = vpack.c.bf16 %v1223, %v1222
        %v1253 = vpack.c.bf16 %v1225, %v1224
        %v1254 = vpack.c.bf16 %v1227, %v1226
        %v1255 = vpack.c.bf16 %v1229, %v1228
        %v1256 = vpack.c.bf16 %v1231, %v1230
        %v1257 = vpack.c.bf16 %v1233, %v1232
        %v1258 = vpack.c.bf16 %v1235, %v1234
        %v1259 = vpack.c.bf16 %v1237, %v1236
        %v1260 = vpack.c.bf16 %v1239, %v1238
        %v1261 = vpack.c.bf16 %v1241, %v1240
        %v1262 = vpack.c.bf16 %v1243, %v1242
        %v1263 = vpack.c.bf16 %v1245, %v1244
        %v1264 = vpack.c.bf16 %v1247, %v1246
        %v1265 = vpack.c.bf16 %v1249, %v1248
        %v1266 = vld [vmem:[#allocation2 + $0x110] sm:$0xff]
        %v1267 = vld [vmem:[#allocation2 + $0x118] sm:$0xff]
        %v1268 = vmul.f32 %v959, %v827
        %v1269 = vmul.f32 %v960, %v828
        %v1270 = vmul.f32 %v961, %v829
        %v1271 = vmul.f32 %v962, %v830
        %v1272 = vmul.f32 %v963, %v831
        %v1273 = vmul.f32 %v964, %v832
        %v1274 = vmul.f32 %v965, %v833
        %v1275 = vmul.f32 %v966, %v834
        %v1276 = vmul.f32 %v967, %v835
        %v1277 = vmul.f32 %v968, %v836
        %v1278 = vmul.f32 %v969, %v837
        %v1279 = vmul.f32 %v970, %v838
        %v1280 = vmul.f32 %v971, %v839
        %v1281 = vmul.f32 %v972, %v840
        %v1282 = vmul.f32 %v973, %v841
        %v1283 = vmul.f32 %v974, %v842
        %v1284 = vmul.f32 %v975, %v843
        %v1285 = vmul.f32 %v976, %v844
        %v1286 = vmul.f32 %v977, %v845
        %v1287 = vmul.f32 %v978, %v846
        %v1288 = vmul.f32 %v979, %v847
        %v1289 = vmul.f32 %v980, %v848
        %v1290 = vmul.f32 %v981, %v849
        %v1291 = vmul.f32 %v982, %v850
        %v1292 = vmul.f32 %v983, %v851
        %v1293 = vmul.f32 %v984, %v852
        %v1294 = vmul.f32 %v985, %v853
        %v1295 = vmul.f32 %v986, %v854
        %v1296 = vmul.f32 %v1163, %v855
        %v1297 = vmul.f32 %v1164, %v856
        %v1298 = vmul.f32 %v1266, %v857
        %v1299 = vmul.f32 %v1267, %v858
        %v1300 = vpack.c.bf16 %v1269, %v1268
        %v1301 = vpack.c.bf16 %v1271, %v1270
        %v1302 = vpack.c.bf16 %v1273, %v1272
        %v1303 = vpack.c.bf16 %v1275, %v1274
        %v1304 = vpack.c.bf16 %v1277, %v1276
        %v1305 = vpack.c.bf16 %v1279, %v1278
        %v1306 = vpack.c.bf16 %v1281, %v1280
        %v1307 = vpack.c.bf16 %v1283, %v1282
        %v1308 = vpack.c.bf16 %v1285, %v1284
        %v1309 = vpack.c.bf16 %v1287, %v1286
        %v1310 = vpack.c.bf16 %v1289, %v1288
        %v1311 = vpack.c.bf16 %v1291, %v1290
        %v1312 = vpack.c.bf16 %v1293, %v1292
        %v1313 = vpack.c.bf16 %v1295, %v1294
        %v1314 = vpack.c.bf16 %v1297, %v1296
        %v1315 = vpack.c.bf16 %v1299, %v1298
        %v1316 = vld [vmem:[#allocation2 + $0x111] sm:$0xff]
        %v1317 = vld [vmem:[#allocation2 + $0x119] sm:$0xff]
        %v1318 = vpack.c.bf16 %v1317, %v1316
        %v1319 = vld [vmem:[#allocation2 + $0x112] sm:$0xff]
        %v1320 = vld [vmem:[#allocation2 + $0x11a] sm:$0xff]
        %v1321 = vmul.f32 %v1087, %v923
        %v1322 = vmul.f32 %v1088, %v924
        %v1323 = vmul.f32 %v1089, %v925
        %v1324 = vmul.f32 %v1090, %v926
        %v1325 = vmul.f32 %v1091, %v927
        %v1326 = vmul.f32 %v1092, %v928
        %v1327 = vmul.f32 %v1093, %v929
        %v1328 = vmul.f32 %v1094, %v930
        %v1329 = vmul.f32 %v1095, %v931
        %v1330 = vmul.f32 %v1096, %v932
        %v1331 = vmul.f32 %v1097, %v933
        %v1332 = vmul.f32 %v1098, %v934
        %v1333 = vmul.f32 %v1099, %v935
        %v1334 = vmul.f32 %v1100, %v936
        %v1335 = vmul.f32 %v1101, %v937
        %v1336 = vmul.f32 %v1102, %v938
        %v1337 = vmul.f32 %v1103, %v939
        %v1338 = vmul.f32 %v1104, %v940
        %v1339 = vmul.f32 %v1105, %v941
        %v1340 = vmul.f32 %v1106, %v942
        %v1341 = vmul.f32 %v1107, %v943
        %v1342 = vmul.f32 %v1108, %v944
        %v1343 = vmul.f32 %v1109, %v945
        %v1344 = vmul.f32 %v1110, %v946
        %v1345 = vmul.f32 %v1111, %v947
        %v1346 = vmul.f32 %v1112, %v948
        %v1347 = vmul.f32 %v1113, %v949
        %v1348 = vmul.f32 %v1114, %v950
        %v1349 = vmul.f32 %v1216, %v951
        %v1350 = vmul.f32 %v1217, %v952
        %v1351 = vmul.f32 %v1319, %v953
        %v1352 = vmul.f32 %v1320, %v954
        %v1353 = vpack.c.bf16 %v1322, %v1321
        %v1354 = vpack.c.bf16 %v1324, %v1323
        %v1355 = vpack.c.bf16 %v1326, %v1325
        %v1356 = vpack.c.bf16 %v1328, %v1327
        %v1357 = vpack.c.bf16 %v1330, %v1329
        %v1358 = vpack.c.bf16 %v1332, %v1331
        %v1359 = vpack.c.bf16 %v1334, %v1333
        %v1360 = vpack.c.bf16 %v1336, %v1335
        %v1361 = vpack.c.bf16 %v1338, %v1337
        %v1362 = vpack.c.bf16 %v1340, %v1339
        %v1363 = vpack.c.bf16 %v1342, %v1341
        %v1364 = vpack.c.bf16 %v1344, %v1343
        %v1365 = vpack.c.bf16 %v1346, %v1345
        %v1366 = vpack.c.bf16 %v1348, %v1347
        %v1367 = vpack.c.bf16 %v1350, %v1349
        %v1368 = vpack.c.bf16 %v1352, %v1351
        %v1369 = vld [vmem:[#allocation3] sm:$0xf]
        %v1370 = vld [vmem:[#allocation3 + $0x4] sm:$0xf]
        %v1371 = vld [vmem:[#allocation3 + $0x8] sm:$0xf]
        %v1372 = vld [vmem:[#allocation3 + $0xc] sm:$0xf]
        %v1373 = vld [vmem:[#allocation3 + $0x10] sm:$0xf]
        %v1374 = vld [vmem:[#allocation3 + $0x14] sm:$0xf]
        %v1375 = vld [vmem:[#allocation3 + $0x18] sm:$0xf]
        %v1376 = vld [vmem:[#allocation3 + $0x1c] sm:$0xf]
        %v1377 = vld [vmem:[#allocation3 + $0x20] sm:$0xf]
        %v1378 = vld [vmem:[#allocation3 + $0x24] sm:$0xf]
        %v1379 = vld [vmem:[#allocation3 + $0x28] sm:$0xf]
        %v1380 = vld [vmem:[#allocation3 + $0x2c] sm:$0xf]
        %v1381 = vld [vmem:[#allocation3 + $0x30] sm:$0xf]
        %v1382 = vld [vmem:[#allocation3 + $0x34] sm:$0xf]
        %v1383 = vld [vmem:[#allocation3 + $0x38] sm:$0xf]
        %v1384 = vld [vmem:[#allocation3 + $0x3c] sm:$0xf]
        %v1385 = vld [vmem:[#allocation3 + $0x40] sm:$0xf]
        %v1386 = vld [vmem:[#allocation3 + $0x44] sm:$0xf]
        %v1387 = vld [vmem:[#allocation3 + $0x48] sm:$0xf]
        %v1388 = vld [vmem:[#allocation3 + $0x4c] sm:$0xf]
        %v1389 = vld [vmem:[#allocation3 + $0x50] sm:$0xf]
        %v1390 = vld [vmem:[#allocation3 + $0x54] sm:$0xf]
        %v1391 = vld [vmem:[#allocation3 + $0x58] sm:$0xf]
        %v1392 = vld [vmem:[#allocation3 + $0x5c] sm:$0xf]
        %v1393 = vld [vmem:[#allocation3 + $0x60] sm:$0xf]
        %v1394 = vld [vmem:[#allocation3 + $0x64] sm:$0xf]
        %v1395 = vld [vmem:[#allocation3 + $0x68] sm:$0xf]
        %v1396 = vld [vmem:[#allocation3 + $0x6c] sm:$0xf]
        %v1397 = vld [vmem:[#allocation3 + $0x70] sm:$0xf]
        %v1398 = vld [vmem:[#allocation3 + $0x74] sm:$0xf]
        %v1399 = vld [vmem:[#allocation3 + $0x78] sm:$0xf]
        %v1400 = vld [vmem:[#allocation3 + $0x7c] sm:$0xf]
        %v1401 = vld [vmem:[#allocation3 + $0x80] sm:$0xf]
        %v1402 = vld [vmem:[#allocation3 + $0x84] sm:$0xf]
        %v1403 = vld [vmem:[#allocation3 + $0x88] sm:$0xf]
        %v1404 = vld [vmem:[#allocation3 + $0x8c] sm:$0xf]
        %v1405 = vld [vmem:[#allocation3 + $0x90] sm:$0xf]
        %v1406 = vld [vmem:[#allocation3 + $0x94] sm:$0xf]
        %v1407 = vld [vmem:[#allocation3 + $0x98] sm:$0xf]
        %v1408 = vld [vmem:[#allocation3 + $0x9c] sm:$0xf]
        %v1409 = vld [vmem:[#allocation3 + $0xa0] sm:$0xf]
        %v1410 = vld [vmem:[#allocation3 + $0xa4] sm:$0xf]
        %v1411 = vld [vmem:[#allocation3 + $0xa8] sm:$0xf]
        %v1412 = vld [vmem:[#allocation3 + $0xac] sm:$0xf]
        %v1413 = vld [vmem:[#allocation3 + $0xb0] sm:$0xf]
        %v1414 = vld [vmem:[#allocation3 + $0xb4] sm:$0xf]
        %v1415 = vld [vmem:[#allocation3 + $0xb8] sm:$0xf]
        %v1416 = vld [vmem:[#allocation3 + $0xbc] sm:$0xf]
        %v1417 = vld [vmem:[#allocation3 + $0xc0] sm:$0xf]
        %v1418 = vld [vmem:[#allocation3 + $0xc4] sm:$0xf]
        %v1419 = vld [vmem:[#allocation3 + $0xc8] sm:$0xf]
        %v1420 = vld [vmem:[#allocation3 + $0xcc] sm:$0xf]
        %v1421 = vld [vmem:[#allocation3 + $0xd0] sm:$0xf]
        %v1422 = vld [vmem:[#allocation3 + $0xd4] sm:$0xf]
        %v1423 = vld [vmem:[#allocation3 + $0xd8] sm:$0xf]
        %v1424 = vld [vmem:[#allocation3 + $0xdc] sm:$0xf]
        %v1425 = vld [vmem:[#allocation3 + $0xe0] sm:$0xf]
        %v1426 = vld [vmem:[#allocation3 + $0xe4] sm:$0xf]
        %v1427 = vld [vmem:[#allocation3 + $0xe8] sm:$0xf]
        %v1428 = vld [vmem:[#allocation3 + $0xec] sm:$0xf]
        %v1429 = vld [vmem:[#allocation3 + $0xf0] sm:$0xf]
        %v1430 = vld [vmem:[#allocation3 + $0xf4] sm:$0xf]
        %v1431 = vld [vmem:[#allocation3 + $0xf8] sm:$0xf]
        %v1432 = vld [vmem:[#allocation3 + $0xfc] sm:$0xf]
        %v1433 = vld [vmem:[#allocation3 + $0x100] sm:$0xf]
        %v1434 = vld [vmem:[#allocation3 + $0x104] sm:$0xf]
        %v1435 = vld [vmem:[#allocation3 + $0x108] sm:$0xf]
        %v1436 = vld [vmem:[#allocation3 + $0x10c] sm:$0xf]
        %v1437 = vld [vmem:[#allocation3 + $0x110] sm:$0xf]
        %v1438 = vld [vmem:[#allocation3 + $0x114] sm:$0xf]
        %v1439 = vld [vmem:[#allocation3 + $0x118] sm:$0xf]
        %v1440 = vld [vmem:[#allocation3 + $0x11c] sm:$0xf]
        %v1441 = vld [vmem:[#allocation3 + $0x120] sm:$0xf]
        %v1442 = vld [vmem:[#allocation3 + $0x124] sm:$0xf]
        %v1443 = vld [vmem:[#allocation3 + $0x128] sm:$0xf]
        %v1444 = vld [vmem:[#allocation3 + $0x12c] sm:$0xf]
        %v1445 = vld [vmem:[#allocation3 + $0x130] sm:$0xf]
        %v1446 = vld [vmem:[#allocation3 + $0x134] sm:$0xf]
        %v1447 = vld [vmem:[#allocation3 + $0x138] sm:$0xf]
        %v1448 = vld [vmem:[#allocation3 + $0x13c] sm:$0xf]
        %v1449 = vld [vmem:[#allocation3 + $0x140] sm:$0xf]
        %v1450 = vld [vmem:[#allocation3 + $0x144] sm:$0xf]
        %v1451 = vld [vmem:[#allocation3 + $0x148] sm:$0xf]
        %v1452 = vld [vmem:[#allocation3 + $0x14c] sm:$0xf]
        %v1453 = vld [vmem:[#allocation3 + $0x150] sm:$0xf]
        %v1454 = vld [vmem:[#allocation3 + $0x154] sm:$0xf]
        %v1455 = vld [vmem:[#allocation3 + $0x158] sm:$0xf]
        %v1456 = vld [vmem:[#allocation3 + $0x15c] sm:$0xf]
        %v1457 = vld [vmem:[#allocation3 + $0x160] sm:$0xf]
        %v1458 = vld [vmem:[#allocation3 + $0x164] sm:$0xf]
        %v1459 = vld [vmem:[#allocation3 + $0x168] sm:$0xf]
        %v1460 = vld [vmem:[#allocation3 + $0x16c] sm:$0xf]
        %v1461 = vld [vmem:[#allocation3 + $0x170] sm:$0xf]
        %v1462 = vld [vmem:[#allocation3 + $0x174] sm:$0xf]
        %v1463 = vld [vmem:[#allocation3 + $0x178] sm:$0xf]
        %v1464 = vld [vmem:[#allocation3 + $0x17c] sm:$0xf]
        %v1465 = vld [vmem:[#allocation3 + $0x180] sm:$0xf]
        %v1466 = vld [vmem:[#allocation3 + $0x184] sm:$0xf]
        %v1467 = vld [vmem:[#allocation3 + $0x188] sm:$0xf]
        %v1468 = vld [vmem:[#allocation3 + $0x18c] sm:$0xf]
        %v1469 = vld [vmem:[#allocation3 + $0x190] sm:$0xf]
        %v1470 = vld [vmem:[#allocation3 + $0x194] sm:$0xf]
        %v1471 = vld [vmem:[#allocation3 + $0x198] sm:$0xf]
        %v1472 = vld [vmem:[#allocation3 + $0x19c] sm:$0xf]
        %v1473 = vld [vmem:[#allocation3 + $0x1a0] sm:$0xf]
        %v1474 = vld [vmem:[#allocation3 + $0x1a4] sm:$0xf]
        %v1475 = vld [vmem:[#allocation3 + $0x1a8] sm:$0xf]
        %v1476 = vld [vmem:[#allocation3 + $0x1ac] sm:$0xf]
        %v1477 = vld [vmem:[#allocation3 + $0x1b0] sm:$0xf]
        %v1478 = vld [vmem:[#allocation3 + $0x1b4] sm:$0xf]
        %v1479 = vld [vmem:[#allocation3 + $0x1b8] sm:$0xf]
        %v1480 = vld [vmem:[#allocation3 + $0x1bc] sm:$0xf]
        %v1481 = vld [vmem:[#allocation3 + $0x1c0] sm:$0xf]
        %v1482 = vld [vmem:[#allocation3 + $0x1c4] sm:$0xf]
        %v1483 = vld [vmem:[#allocation3 + $0x1c8] sm:$0xf]
        %v1484 = vld [vmem:[#allocation3 + $0x1cc] sm:$0xf]
        %v1485 = vld [vmem:[#allocation3 + $0x1d0] sm:$0xf]
        %v1486 = vld [vmem:[#allocation3 + $0x1d4] sm:$0xf]
        %v1487 = vld [vmem:[#allocation3 + $0x1d8] sm:$0xf]
        %v1488 = vld [vmem:[#allocation3 + $0x1dc] sm:$0xf]
        %v1489 = vld [vmem:[#allocation3 + $0x1e0] sm:$0xf]
        %v1490 = vld [vmem:[#allocation3 + $0x1e4] sm:$0xf]
        %v1491 = vld [vmem:[#allocation3 + $0x1e8] sm:$0xf]
        %v1492 = vld [vmem:[#allocation3 + $0x1ec] sm:$0xf]
        %v1493 = vld [vmem:[#allocation3 + $0x1f0] sm:$0xf]
        %v1494 = vld [vmem:[#allocation3 + $0x1f4] sm:$0xf]
        %v1495 = vld [vmem:[#allocation3 + $0x1f8] sm:$0xf]
        %v1496 = vld [vmem:[#allocation3 + $0x1fc] sm:$0xf]
        %v1497 = vld [vmem:[#allocation3 + $0x200] sm:$0xf]
        %v1498 = vld [vmem:[#allocation3 + $0x204] sm:$0xf]
        %v1499 = vld [vmem:[#allocation3 + $0x208] sm:$0xf]
        %v1500 = vld [vmem:[#allocation3 + $0x20c] sm:$0xf]
        %v1501 = vld [vmem:[#allocation3 + $0x210] sm:$0xf]
        %v1502 = vld [vmem:[#allocation3 + $0x214] sm:$0xf]
        %v1503 = vld [vmem:[#allocation3 + $0x218] sm:$0xf]
        %v1504 = vld [vmem:[#allocation3 + $0x21c] sm:$0xf]
        %v1505 = vld [vmem:[#allocation3 + $0x220] sm:$0xf]
        %v1506 = vld [vmem:[#allocation3 + $0x224] sm:$0xf]
        %v1507 = vld [vmem:[#allocation3 + $0x228] sm:$0xf]
        %v1508 = vld [vmem:[#allocation3 + $0x22c] sm:$0xf]
        %v1509 = vld [vmem:[#allocation3 + $0x230] sm:$0xf]
        %v1510 = vld [vmem:[#allocation3 + $0x234] sm:$0xf]
        %v1511 = vld [vmem:[#allocation3 + $0x238] sm:$0xf]
        %v1512 = vld [vmem:[#allocation3 + $0x23c] sm:$0xf]
        %v1657 = vunpack.c.l.b16 %v1369
        %v1658 = vunpack.c.l.b16 %v1370
        %v1659 = vunpack.c.l.b16 %v1371
        %v1660 = vunpack.c.l.b16 %v1372
        %v1661 = vunpack.c.l.b16 %v1373
        %v1662 = vunpack.c.l.b16 %v1374
        %v1663 = vunpack.c.l.b16 %v1375
        %v1664 = vunpack.c.l.b16 %v1376
        %v1665 = vunpack.c.l.b16 %v1377
        %v1666 = vunpack.c.l.b16 %v1378
        %v1667 = vunpack.c.l.b16 %v1379
        %v1668 = vunpack.c.l.b16 %v1380
        %v1669 = vunpack.c.l.b16 %v1381
        %v1670 = vunpack.c.l.b16 %v1382
        %v1671 = vunpack.c.l.b16 %v1383
        %v1672 = vunpack.c.l.b16 %v1384
        %v1673 = vunpack.c.l.b16 %v1385
        %v1674 = vunpack.c.l.b16 %v1386
        %v1675 = vunpack.c.l.b16 %v1387
        %v1676 = vunpack.c.l.b16 %v1388
        %v1677 = vunpack.c.l.b16 %v1389
        %v1678 = vunpack.c.l.b16 %v1390
        %v1679 = vunpack.c.l.b16 %v1391
        %v1680 = vunpack.c.l.b16 %v1392
        %v1681 = vunpack.c.l.b16 %v1393
        %v1682 = vunpack.c.l.b16 %v1394
        %v1683 = vunpack.c.l.b16 %v1395
        %v1684 = vunpack.c.l.b16 %v1396
        %v1685 = vunpack.c.l.b16 %v1397
        %v1686 = vunpack.c.l.b16 %v1398
        %v1687 = vunpack.c.l.b16 %v1399
        %v1688 = vunpack.c.l.b16 %v1400
        %v1689 = vunpack.c.l.b16 %v1401
        %v1690 = vunpack.c.l.b16 %v1402
        %v1691 = vunpack.c.l.b16 %v1403
        %v1692 = vunpack.c.l.b16 %v1404
        %v1693 = vunpack.c.l.b16 %v1405
        %v1694 = vunpack.c.l.b16 %v1406
        %v1695 = vunpack.c.l.b16 %v1407
        %v1696 = vunpack.c.l.b16 %v1408
        %v1697 = vunpack.c.l.b16 %v1409
        %v1698 = vunpack.c.l.b16 %v1410
        %v1699 = vunpack.c.l.b16 %v1411
        %v1700 = vunpack.c.l.b16 %v1412
        %v1701 = vunpack.c.l.b16 %v1413
        %v1702 = vunpack.c.l.b16 %v1414
        %v1703 = vunpack.c.l.b16 %v1415
        %v1704 = vunpack.c.l.b16 %v1416
        %v1705 = vunpack.c.l.b16 %v1417
        %v1706 = vunpack.c.l.b16 %v1418
        %v1707 = vunpack.c.l.b16 %v1419
        %v1708 = vunpack.c.l.b16 %v1420
        %v1709 = vunpack.c.l.b16 %v1421
        %v1710 = vunpack.c.l.b16 %v1422
        %v1711 = vunpack.c.l.b16 %v1423
        %v1712 = vunpack.c.l.b16 %v1424
        %v1713 = vunpack.c.l.b16 %v1425
        %v1714 = vunpack.c.l.b16 %v1426
        %v1715 = vunpack.c.l.b16 %v1427
        %v1716 = vunpack.c.l.b16 %v1428
        %v1717 = vunpack.c.l.b16 %v1429
        %v1718 = vunpack.c.l.b16 %v1430
        %v1719 = vunpack.c.l.b16 %v1431
        %v1720 = vunpack.c.l.b16 %v1432
        %v1721 = vunpack.c.l.b16 %v1433
        %v1722 = vunpack.c.l.b16 %v1434
        %v1723 = vunpack.c.l.b16 %v1435
        %v1724 = vunpack.c.l.b16 %v1436
        %v1725 = vunpack.c.l.b16 %v1437
        %v1726 = vunpack.c.l.b16 %v1438
        %v1727 = vunpack.c.l.b16 %v1439
        %v1728 = vunpack.c.l.b16 %v1440
        %v1729 = vunpack.c.l.b16 %v1441
        %v1730 = vunpack.c.l.b16 %v1442
        %v1731 = vunpack.c.l.b16 %v1443
        %v1732 = vunpack.c.l.b16 %v1444
        %v1733 = vunpack.c.l.b16 %v1445
        %v1734 = vunpack.c.l.b16 %v1446
        %v1735 = vunpack.c.l.b16 %v1447
        %v1736 = vunpack.c.l.b16 %v1448
        %v1737 = vunpack.c.l.b16 %v1449
        %v1738 = vunpack.c.l.b16 %v1450
        %v1739 = vunpack.c.l.b16 %v1451
        %v1740 = vunpack.c.l.b16 %v1452
        %v1741 = vunpack.c.l.b16 %v1453
        %v1742 = vunpack.c.l.b16 %v1454
        %v1743 = vunpack.c.l.b16 %v1455
        %v1744 = vunpack.c.l.b16 %v1456
        %v1745 = vunpack.c.l.b16 %v1457
        %v1746 = vunpack.c.l.b16 %v1458
        %v1747 = vunpack.c.l.b16 %v1459
        %v1748 = vunpack.c.l.b16 %v1460
        %v1749 = vunpack.c.l.b16 %v1461
        %v1750 = vunpack.c.l.b16 %v1462
        %v1751 = vunpack.c.l.b16 %v1463
        %v1752 = vunpack.c.l.b16 %v1464
        %v1753 = vunpack.c.l.b16 %v1465
        %v1754 = vunpack.c.l.b16 %v1466
        %v1755 = vunpack.c.l.b16 %v1467
        %v1756 = vunpack.c.l.b16 %v1468
        %v1757 = vunpack.c.l.b16 %v1469
        %v1758 = vunpack.c.l.b16 %v1470
        %v1759 = vunpack.c.l.b16 %v1471
        %v1760 = vunpack.c.l.b16 %v1472
        %v1761 = vunpack.c.l.b16 %v1473
        %v1762 = vunpack.c.l.b16 %v1474
        %v1763 = vunpack.c.l.b16 %v1475
        %v1764 = vunpack.c.l.b16 %v1476
        %v1765 = vunpack.c.l.b16 %v1477
        %v1766 = vunpack.c.l.b16 %v1478
        %v1767 = vunpack.c.l.b16 %v1479
        %v1768 = vunpack.c.l.b16 %v1480
        %v1769 = vunpack.c.l.b16 %v1481
        %v1770 = vunpack.c.l.b16 %v1482
        %v1771 = vunpack.c.l.b16 %v1483
        %v1772 = vunpack.c.l.b16 %v1484
        %v1773 = vunpack.c.l.b16 %v1485
        %v1774 = vunpack.c.l.b16 %v1486
        %v1775 = vunpack.c.l.b16 %v1487
        %v1776 = vunpack.c.l.b16 %v1488
        %v1777 = vunpack.c.l.b16 %v1489
        %v1778 = vunpack.c.l.b16 %v1490
        %v1779 = vunpack.c.l.b16 %v1491
        %v1780 = vunpack.c.l.b16 %v1492
        %v1781 = vunpack.c.l.b16 %v1493
        %v1782 = vunpack.c.l.b16 %v1494
        %v1783 = vunpack.c.l.b16 %v1495
        %v1784 = vunpack.c.l.b16 %v1496
        %v1785 = vunpack.c.l.b16 %v1497
        %v1786 = vunpack.c.l.b16 %v1498
        %v1787 = vunpack.c.l.b16 %v1499
        %v1788 = vunpack.c.l.b16 %v1500
        %v1789 = vunpack.c.l.b16 %v1501
        %v1790 = vunpack.c.l.b16 %v1502
        %v1791 = vunpack.c.l.b16 %v1503
        %v1792 = vunpack.c.l.b16 %v1504
        %v1793 = vunpack.c.l.b16 %v1505
        %v1794 = vunpack.c.l.b16 %v1506
        %v1795 = vunpack.c.l.b16 %v1507
        %v1796 = vunpack.c.l.b16 %v1508
        %v1797 = vunpack.c.l.b16 %v1509
        %v1798 = vunpack.c.l.b16 %v1510
        %v1799 = vunpack.c.l.b16 %v1511
        %v1800 = vunpack.c.l.b16 %v1512
        %v1801 = vpack.c.b16 %v1658, %v1657
        %v1802 = vpack.c.b16 %v1660, %v1659
        %v1803 = vpack.c.b16 %v1662, %v1661
        %v1804 = vpack.c.b16 %v1664, %v1663
        %v1805 = vpack.c.b16 %v1666, %v1665
        %v1806 = vpack.c.b16 %v1668, %v1667
        %v1807 = vpack.c.b16 %v1670, %v1669
        %v1808 = vpack.c.b16 %v1672, %v1671
        %v1809 = vpack.c.b16 %v1674, %v1673
        %v1810 = vpack.c.b16 %v1676, %v1675
        %v1811 = vpack.c.b16 %v1678, %v1677
        %v1812 = vpack.c.b16 %v1680, %v1679
        %v1813 = vpack.c.b16 %v1682, %v1681
        %v1814 = vpack.c.b16 %v1684, %v1683
        %v1815 = vpack.c.b16 %v1686, %v1685
        %v1816 = vpack.c.b16 %v1688, %v1687
        %v1817 = vpack.c.b16 %v1690, %v1689
        %v1818 = vpack.c.b16 %v1692, %v1691
        %v1819 = vpack.c.b16 %v1694, %v1693
        %v1820 = vpack.c.b16 %v1696, %v1695
        %v1821 = vpack.c.b16 %v1698, %v1697
        %v1822 = vpack.c.b16 %v1700, %v1699
        %v1823 = vpack.c.b16 %v1702, %v1701
        %v1824 = vpack.c.b16 %v1704, %v1703
        %v1825 = vpack.c.b16 %v1706, %v1705
        %v1826 = vpack.c.b16 %v1708, %v1707
        %v1827 = vpack.c.b16 %v1710, %v1709
        %v1828 = vpack.c.b16 %v1712, %v1711
        %v1829 = vpack.c.b16 %v1714, %v1713
        %v1830 = vpack.c.b16 %v1716, %v1715
        %v1831 = vpack.c.b16 %v1718, %v1717
        %v1832 = vpack.c.b16 %v1720, %v1719
        %v1833 = vpack.c.b16 %v1722, %v1721
        %v1834 = vpack.c.b16 %v1724, %v1723
        %v1835 = vpack.c.b16 %v1726, %v1725
        %v1836 = vpack.c.b16 %v1728, %v1727
        %v1837 = vpack.c.b16 %v1730, %v1729
        %v1838 = vpack.c.b16 %v1732, %v1731
        %v1839 = vpack.c.b16 %v1734, %v1733
        %v1840 = vpack.c.b16 %v1736, %v1735
        %v1841 = vpack.c.b16 %v1738, %v1737
        %v1842 = vpack.c.b16 %v1740, %v1739
        %v1843 = vpack.c.b16 %v1742, %v1741
        %v1844 = vpack.c.b16 %v1744, %v1743
        %v1845 = vpack.c.b16 %v1746, %v1745
        %v1846 = vpack.c.b16 %v1748, %v1747
        %v1847 = vpack.c.b16 %v1750, %v1749
        %v1848 = vpack.c.b16 %v1752, %v1751
        %v1849 = vpack.c.b16 %v1754, %v1753
        %v1850 = vpack.c.b16 %v1756, %v1755
        %v1851 = vpack.c.b16 %v1758, %v1757
        %v1852 = vpack.c.b16 %v1760, %v1759
        %v1853 = vpack.c.b16 %v1762, %v1761
        %v1854 = vpack.c.b16 %v1764, %v1763
        %v1855 = vpack.c.b16 %v1766, %v1765
        %v1856 = vpack.c.b16 %v1768, %v1767
        %v1857 = vpack.c.b16 %v1770, %v1769
        %v1858 = vpack.c.b16 %v1772, %v1771
        %v1859 = vpack.c.b16 %v1774, %v1773
        %v1860 = vpack.c.b16 %v1776, %v1775
        %v1861 = vpack.c.b16 %v1778, %v1777
        %v1862 = vpack.c.b16 %v1780, %v1779
        %v1863 = vpack.c.b16 %v1782, %v1781
        %v1864 = vpack.c.b16 %v1784, %v1783
        %v1865 = vpack.c.b16 %v1786, %v1785
        %v1866 = vpack.c.b16 %v1788, %v1787
        %v1867 = vpack.c.b16 %v1790, %v1789
        %v1868 = vpack.c.b16 %v1792, %v1791
        %v1869 = vpack.c.b16 %v1794, %v1793
        %v1870 = vpack.c.b16 %v1796, %v1795
        %v1871 = vpack.c.b16 %v1798, %v1797
        %v1872 = vpack.c.b16 %v1800, %v1799
        %1945 = vmatprep.subr.bf16.mxu0 0
        %1946 = vmatpush1.bf16.msra.mxu0 %v1808
        %1947 = vmatprep.subr.bf16.mxu0 0
        %1948 = vmatpush1.bf16.msra.mxu0 %v1807
        %1949 = vmatprep.subr.bf16.mxu0 0
        %1950 = vmatpush1.bf16.msra.mxu0 %v1806
        %1951 = vmatprep.subr.bf16.mxu0 0
        %1952 = vmatpush1.bf16.msra.mxu0 %v1805
        %1953 = vmatprep.subr.bf16.mxu0 0
        %1954 = vmatpush1.bf16.msra.mxu0 %v1804
        %1955 = vmatprep.subr.bf16.mxu0 0
        %1956 = vmatpush1.bf16.msra.mxu0 %v1803
        %1957 = vmatprep.subr.bf16.mxu0 0
        %1958 = vmatpush1.bf16.msra.mxu0 %v1802
        %1959 = vmatprep.subr.bf16.mxu0 0
        %1960 = vmatpush1.bf16.msra.mxu0 %v1801
        %1961 = vmatprep.subr.bf16.mxu0 0
        %1962 = vmatpush2.bf16.msra.mxu0 %v1816
        %1963 = vmatprep.subr.bf16.mxu0 0
        %1964 = vmatpush2.bf16.msra.mxu0 %v1815
        %1965 = vmatprep.subr.bf16.mxu0 0
        %1966 = vmatpush2.bf16.msra.mxu0 %v1814
        %1967 = vmatprep.subr.bf16.mxu0 0
        %1968 = vmatpush2.bf16.msra.mxu0 %v1813
        %1969 = vmatprep.subr.bf16.mxu0 0
        %1970 = vmatpush2.bf16.msra.mxu0 %v1812
        %1971 = vmatprep.subr.bf16.mxu0 0
        %1972 = vmatpush2.bf16.msra.mxu0 %v1811
        %1973 = vmatprep.subr.bf16.mxu0 0
        %1974 = vmatpush2.bf16.msra.mxu0 %v1810
        %1975 = vmatprep.subr.bf16.mxu0 0
        %1976 = vmatpush2.bf16.msra.mxu0 %v1809
        %1977 = vmatprep.mubr.bf16.mxu0 %v1067
        %1978 = vmatmul.mubr.bf16.gmra.mxu0 %v1019
        %v1979 = vpop.f32.mrf.mxu0
        %v1980 = vadd.f32 0.0, %v1979
        %v1981 = vpop.f32.mrf.mxu0
        %v1982 = vpop.f32.mrf.mxu0
        %v1983 = vadd.f32 0.0, %v1982
        %v1984 = vpop.f32.mrf.mxu0
        %1985 = vmatprep.mubr.bf16.mxu0 %v1068
        %1986 = vmatmul.mubr.bf16.gmra.mxu0 %v1020
        %v1987 = vpop.f32.mrf.mxu0
        %v1988 = vadd.f32 0.0, %v1987
        %v1989 = vpop.f32.mrf.mxu0
        %v1990 = vpop.f32.mrf.mxu0
        %v1991 = vadd.f32 0.0, %v1990
        %v1992 = vpop.f32.mrf.mxu0
        %1993 = vmatprep.mubr.bf16.mxu0 %v1069
        %1994 = vmatmul.mubr.bf16.gmra.mxu0 %v1021
        %v1995 = vpop.f32.mrf.mxu0
        %v1996 = vadd.f32 0.0, %v1995
        %v1997 = vpop.f32.mrf.mxu0
        %v1998 = vpop.f32.mrf.mxu0
        %v1999 = vadd.f32 0.0, %v1998
        %v2000 = vpop.f32.mrf.mxu0
        %2001 = vmatprep.mubr.bf16.mxu0 %v1070
        %2002 = vmatmul.mubr.bf16.gmra.mxu0 %v1022
        %v2003 = vpop.f32.mrf.mxu0
        %v2004 = vadd.f32 0.0, %v2003
        %v2005 = vpop.f32.mrf.mxu0
        %v2006 = vpop.f32.mrf.mxu0
        %v2007 = vadd.f32 0.0, %v2006
        %v2008 = vpop.f32.mrf.mxu0
        %2009 = vmatprep.mubr.bf16.mxu0 %v1071
        %2010 = vmatmul.mubr.bf16.gmra.mxu0 %v1023
        %v2011 = vpop.f32.mrf.mxu0
        %v2012 = vadd.f32 0.0, %v2011
        %v2013 = vpop.f32.mrf.mxu0
        %v2014 = vpop.f32.mrf.mxu0
        %v2015 = vadd.f32 0.0, %v2014
        %v2016 = vpop.f32.mrf.mxu0
        %2017 = vmatprep.mubr.bf16.mxu0 %v1072
        %2018 = vmatmul.mubr.bf16.gmra.mxu0 %v1024
        %v2019 = vpop.f32.mrf.mxu0
        %v2020 = vadd.f32 0.0, %v2019
        %v2021 = vpop.f32.mrf.mxu0
        %v2022 = vpop.f32.mrf.mxu0
        %v2023 = vadd.f32 0.0, %v2022
        %v2024 = vpop.f32.mrf.mxu0
        %2025 = vmatprep.mubr.bf16.mxu0 %v1073
        %2026 = vmatmul.mubr.bf16.gmra.mxu0 %v1025
        %v2027 = vpop.f32.mrf.mxu0
        %v2028 = vadd.f32 0.0, %v2027
        %v2029 = vpop.f32.mrf.mxu0
        %v2030 = vpop.f32.mrf.mxu0
        %v2031 = vadd.f32 0.0, %v2030
        %v2032 = vpop.f32.mrf.mxu0
        %2033 = vmatprep.mubr.bf16.mxu0 %v1074
        %2034 = vmatmul.mubr.bf16.gmra.mxu0 %v1026
        %v2035 = vpop.f32.mrf.mxu0
        %v2036 = vadd.f32 0.0, %v2035
        %v2037 = vpop.f32.mrf.mxu0
        %v2038 = vpop.f32.mrf.mxu0
        %v2039 = vadd.f32 0.0, %v2038
        %v2040 = vpop.f32.mrf.mxu0
        %2041 = vmatprep.mubr.bf16.mxu0 %v1075
        %2042 = vmatmul.mubr.bf16.gmra.mxu0 %v1027
        %v2043 = vpop.f32.mrf.mxu0
        %v2044 = vadd.f32 0.0, %v2043
        %v2045 = vpop.f32.mrf.mxu0
        %v2046 = vpop.f32.mrf.mxu0
        %v2047 = vadd.f32 0.0, %v2046
        %v2048 = vpop.f32.mrf.mxu0
        %2049 = vmatprep.mubr.bf16.mxu0 %v1076
        %2050 = vmatmul.mubr.bf16.gmra.mxu0 %v1028
        %v2051 = vpop.f32.mrf.mxu0
        %v2052 = vadd.f32 0.0, %v2051
        %v2053 = vpop.f32.mrf.mxu0
        %v2054 = vpop.f32.mrf.mxu0
        %v2055 = vadd.f32 0.0, %v2054
        %v2056 = vpop.f32.mrf.mxu0
        %2057 = vmatprep.mubr.bf16.mxu0 %v1077
        %2058 = vmatmul.mubr.bf16.gmra.mxu0 %v1029
        %v2059 = vpop.f32.mrf.mxu0
        %v2060 = vadd.f32 0.0, %v2059
        %v2061 = vpop.f32.mrf.mxu0
        %v2062 = vpop.f32.mrf.mxu0
        %v2063 = vadd.f32 0.0, %v2062
        %v2064 = vpop.f32.mrf.mxu0
        %2065 = vmatprep.mubr.bf16.mxu0 %v1078
        %2066 = vmatmul.mubr.bf16.gmra.mxu0 %v1030
        %v2067 = vpop.f32.mrf.mxu0
        %v2068 = vadd.f32 0.0, %v2067
        %v2069 = vpop.f32.mrf.mxu0
        %v2070 = vpop.f32.mrf.mxu0
        %v2071 = vadd.f32 0.0, %v2070
        %v2072 = vpop.f32.mrf.mxu0
        %2073 = vmatprep.mubr.bf16.mxu0 %v1079
        %2074 = vmatmul.mubr.bf16.gmra.mxu0 %v1031
        %v2075 = vpop.f32.mrf.mxu0
        %v2076 = vadd.f32 0.0, %v2075
        %v2077 = vpop.f32.mrf.mxu0
        %v2078 = vpop.f32.mrf.mxu0
        %v2079 = vadd.f32 0.0, %v2078
        %v2080 = vpop.f32.mrf.mxu0
        %2081 = vmatprep.mubr.bf16.mxu0 %v1080
        %2082 = vmatmul.mubr.bf16.gmra.mxu0 %v1032
        %v2083 = vpop.f32.mrf.mxu0
        %v2084 = vadd.f32 0.0, %v2083
        %v2085 = vpop.f32.mrf.mxu0
        %v2086 = vpop.f32.mrf.mxu0
        %v2087 = vadd.f32 0.0, %v2086
        %v2088 = vpop.f32.mrf.mxu0
        %2089 = vmatprep.mubr.bf16.mxu0 %v1081
        %2090 = vmatmul.mubr.bf16.gmra.mxu0 %v1033
        %v2091 = vpop.f32.mrf.mxu0
        %v2092 = vadd.f32 0.0, %v2091
        %v2093 = vpop.f32.mrf.mxu0
        %v2094 = vpop.f32.mrf.mxu0
        %v2095 = vadd.f32 0.0, %v2094
        %v2096 = vpop.f32.mrf.mxu0
        %2097 = vmatprep.mubr.bf16.mxu0 %v1082
        %2098 = vmatmul.mubr.bf16.gmra.mxu0 %v1034
        %v2099 = vpop.f32.mrf.mxu0
        %v2100 = vadd.f32 0.0, %v2099
        %v2101 = vpop.f32.mrf.mxu0
        %v2102 = vpop.f32.mrf.mxu0
        %v2103 = vadd.f32 0.0, %v2102
        %v2104 = vpop.f32.mrf.mxu0
        %2105 = vdwg.mxu0
        %2106 = vmatprep.subr.bf16.mxu0 0
        %2107 = vmatpush1.bf16.msra.mxu0 %v1824
        %2108 = vmatprep.subr.bf16.mxu0 0
        %2109 = vmatpush1.bf16.msra.mxu0 %v1823
        %2110 = vmatprep.subr.bf16.mxu0 0
        %2111 = vmatpush1.bf16.msra.mxu0 %v1822
        %2112 = vmatprep.subr.bf16.mxu0 0
        %2113 = vmatpush1.bf16.msra.mxu0 %v1821
        %2114 = vmatprep.subr.bf16.mxu0 0
        %2115 = vmatpush1.bf16.msra.mxu0 %v1820
        %2116 = vmatprep.subr.bf16.mxu0 0
        %2117 = vmatpush1.bf16.msra.mxu0 %v1819
        %2118 = vmatprep.subr.bf16.mxu0 0
        %2119 = vmatpush1.bf16.msra.mxu0 %v1818
        %2120 = vmatprep.subr.bf16.mxu0 0
        %2121 = vmatpush1.bf16.msra.mxu0 %v1817
        %2122 = vmatprep.subr.bf16.mxu0 0
        %2123 = vmatpush2.bf16.msra.mxu0 %v1832
        %2124 = vmatprep.subr.bf16.mxu0 0
        %2125 = vmatpush2.bf16.msra.mxu0 %v1831
        %2126 = vmatprep.subr.bf16.mxu0 0
        %2127 = vmatpush2.bf16.msra.mxu0 %v1830
        %2128 = vmatprep.subr.bf16.mxu0 0
        %2129 = vmatpush2.bf16.msra.mxu0 %v1829
        %2130 = vmatprep.subr.bf16.mxu0 0
        %2131 = vmatpush2.bf16.msra.mxu0 %v1828
        %2132 = vmatprep.subr.bf16.mxu0 0
        %2133 = vmatpush2.bf16.msra.mxu0 %v1827
        %2134 = vmatprep.subr.bf16.mxu0 0
        %2135 = vmatpush2.bf16.msra.mxu0 %v1826
        %2136 = vmatprep.subr.bf16.mxu0 0
        %2137 = vmatpush2.bf16.msra.mxu0 %v1825
        %2138 = vmatprep.mubr.bf16.mxu0 %v1197
        %2139 = vmatmul.mubr.bf16.gmra.mxu0 %v1147
        %v2140 = vpop.f32.mrf.mxu0
        %v2141 = vadd.f32 %v1980, %v2140
        %v2142 = vpop.f32.mrf.mxu0
        %v2143 = vpop.f32.mrf.mxu0
        %v2144 = vadd.f32 %v1983, %v2143
        %v2145 = vpop.f32.mrf.mxu0
        %2146 = vmatprep.mubr.bf16.mxu0 %v1198
        %2147 = vmatmul.mubr.bf16.gmra.mxu0 %v1148
        %v2148 = vpop.f32.mrf.mxu0
        %v2149 = vadd.f32 %v1988, %v2148
        %v2150 = vpop.f32.mrf.mxu0
        %v2151 = vpop.f32.mrf.mxu0
        %v2152 = vadd.f32 %v1991, %v2151
        %v2153 = vpop.f32.mrf.mxu0
        %2154 = vmatprep.mubr.bf16.mxu0 %v1199
        %2155 = vmatmul.mubr.bf16.gmra.mxu0 %v1149
        %v2156 = vpop.f32.mrf.mxu0
        %v2157 = vadd.f32 %v1996, %v2156
        %v2158 = vpop.f32.mrf.mxu0
        %v2159 = vpop.f32.mrf.mxu0
        %v2160 = vadd.f32 %v1999, %v2159
        %v2161 = vpop.f32.mrf.mxu0
        %2162 = vmatprep.mubr.bf16.mxu0 %v1200
        %2163 = vmatmul.mubr.bf16.gmra.mxu0 %v1150
        %v2164 = vpop.f32.mrf.mxu0
        %v2165 = vadd.f32 %v2004, %v2164
        %v2166 = vpop.f32.mrf.mxu0
        %v2167 = vpop.f32.mrf.mxu0
        %v2168 = vadd.f32 %v2007, %v2167
        %v2169 = vpop.f32.mrf.mxu0
        %2170 = vmatprep.mubr.bf16.mxu0 %v1201
        %2171 = vmatmul.mubr.bf16.gmra.mxu0 %v1151
        %v2172 = vpop.f32.mrf.mxu0
        %v2173 = vadd.f32 %v2012, %v2172
        %v2174 = vpop.f32.mrf.mxu0
        %v2175 = vpop.f32.mrf.mxu0
        %v2176 = vadd.f32 %v2015, %v2175
        %v2177 = vpop.f32.mrf.mxu0
        %2178 = vmatprep.mubr.bf16.mxu0 %v1202
        %2179 = vmatmul.mubr.bf16.gmra.mxu0 %v1152
        %v2180 = vpop.f32.mrf.mxu0
        %v2181 = vadd.f32 %v2020, %v2180
        %v2182 = vpop.f32.mrf.mxu0
        %v2183 = vpop.f32.mrf.mxu0
        %v2184 = vadd.f32 %v2023, %v2183
        %v2185 = vpop.f32.mrf.mxu0
        %2186 = vmatprep.mubr.bf16.mxu0 %v1203
        %2187 = vmatmul.mubr.bf16.gmra.mxu0 %v1153
        %v2188 = vpop.f32.mrf.mxu0
        %v2189 = vadd.f32 %v2028, %v2188
        %v2190 = vpop.f32.mrf.mxu0
        %v2191 = vpop.f32.mrf.mxu0
        %v2192 = vadd.f32 %v2031, %v2191
        %v2193 = vpop.f32.mrf.mxu0
        %2194 = vmatprep.mubr.bf16.mxu0 %v1204
        %2195 = vmatmul.mubr.bf16.gmra.mxu0 %v1154
        %v2196 = vpop.f32.mrf.mxu0
        %v2197 = vadd.f32 %v2036, %v2196
        %v2198 = vpop.f32.mrf.mxu0
        %v2199 = vpop.f32.mrf.mxu0
        %v2200 = vadd.f32 %v2039, %v2199
        %v2201 = vpop.f32.mrf.mxu0
        %2202 = vmatprep.mubr.bf16.mxu0 %v1205
        %2203 = vmatmul.mubr.bf16.gmra.mxu0 %v1155
        %v2204 = vpop.f32.mrf.mxu0
        %v2205 = vadd.f32 %v2044, %v2204
        %v2206 = vpop.f32.mrf.mxu0
        %v2207 = vpop.f32.mrf.mxu0
        %v2208 = vadd.f32 %v2047, %v2207
        %v2209 = vpop.f32.mrf.mxu0
        %2210 = vmatprep.mubr.bf16.mxu0 %v1206
        %2211 = vmatmul.mubr.bf16.gmra.mxu0 %v1156
        %v2212 = vpop.f32.mrf.mxu0
        %v2213 = vadd.f32 %v2052, %v2212
        %v2214 = vpop.f32.mrf.mxu0
        %v2215 = vpop.f32.mrf.mxu0
        %v2216 = vadd.f32 %v2055, %v2215
        %v2217 = vpop.f32.mrf.mxu0
        %2218 = vmatprep.mubr.bf16.mxu0 %v1207
        %2219 = vmatmul.mubr.bf16.gmra.mxu0 %v1157
        %v2220 = vpop.f32.mrf.mxu0
        %v2221 = vadd.f32 %v2060, %v2220
        %v2222 = vpop.f32.mrf.mxu0
        %v2223 = vpop.f32.mrf.mxu0
        %v2224 = vadd.f32 %v2063, %v2223
        %v2225 = vpop.f32.mrf.mxu0
        %2226 = vmatprep.mubr.bf16.mxu0 %v1208
        %2227 = vmatmul.mubr.bf16.gmra.mxu0 %v1158
        %v2228 = vpop.f32.mrf.mxu0
        %v2229 = vadd.f32 %v2068, %v2228
        %v2230 = vpop.f32.mrf.mxu0
        %v2231 = vpop.f32.mrf.mxu0
        %v2232 = vadd.f32 %v2071, %v2231
        %v2233 = vpop.f32.mrf.mxu0
        %2234 = vmatprep.mubr.bf16.mxu0 %v1209
        %2235 = vmatmul.mubr.bf16.gmra.mxu0 %v1159
        %v2236 = vpop.f32.mrf.mxu0
        %v2237 = vadd.f32 %v2076, %v2236
        %v2238 = vpop.f32.mrf.mxu0
        %v2239 = vpop.f32.mrf.mxu0
        %v2240 = vadd.f32 %v2079, %v2239
        %v2241 = vpop.f32.mrf.mxu0
        %2242 = vmatprep.mubr.bf16.mxu0 %v1210
        %2243 = vmatmul.mubr.bf16.gmra.mxu0 %v1160
        %v2244 = vpop.f32.mrf.mxu0
        %v2245 = vadd.f32 %v2084, %v2244
        %v2246 = vpop.f32.mrf.mxu0
        %v2247 = vpop.f32.mrf.mxu0
        %v2248 = vadd.f32 %v2087, %v2247
        %v2249 = vpop.f32.mrf.mxu0
        %2250 = vmatprep.mubr.bf16.mxu0 %v1211
        %2251 = vmatmul.mubr.bf16.gmra.mxu0 %v1161
        %v2252 = vpop.f32.mrf.mxu0
        %v2253 = vadd.f32 %v2092, %v2252
        %v2254 = vpop.f32.mrf.mxu0
        %v2255 = vpop.f32.mrf.mxu0
        %v2256 = vadd.f32 %v2095, %v2255
        %v2257 = vpop.f32.mrf.mxu0
        %2258 = vmatprep.mubr.bf16.mxu0 %v1212
        %2259 = vmatmul.mubr.bf16.gmra.mxu0 %v1162
        %v2260 = vpop.f32.mrf.mxu0
        %v2261 = vadd.f32 %v2100, %v2260
        %v2262 = vpop.f32.mrf.mxu0
        %v2263 = vpop.f32.mrf.mxu0
        %v2264 = vadd.f32 %v2103, %v2263
        %v2265 = vpop.f32.mrf.mxu0
        %2266 = vdwg.mxu0
        %2267 = vmatprep.subr.bf16.mxu0 0
        %2268 = vmatpush1.bf16.msra.mxu0 %v1840
        %2269 = vmatprep.subr.bf16.mxu0 0
        %2270 = vmatpush1.bf16.msra.mxu0 %v1839
        %2271 = vmatprep.subr.bf16.mxu0 0
        %2272 = vmatpush1.bf16.msra.mxu0 %v1838
        %2273 = vmatprep.subr.bf16.mxu0 0
        %2274 = vmatpush1.bf16.msra.mxu0 %v1837
        %2275 = vmatprep.subr.bf16.mxu0 0
        %2276 = vmatpush1.bf16.msra.mxu0 %v1836
        %2277 = vmatprep.subr.bf16.mxu0 0
        %2278 = vmatpush1.bf16.msra.mxu0 %v1835
        %2279 = vmatprep.subr.bf16.mxu0 0
        %2280 = vmatpush1.bf16.msra.mxu0 %v1834
        %2281 = vmatprep.subr.bf16.mxu0 0
        %2282 = vmatpush1.bf16.msra.mxu0 %v1833
        %2283 = vmatprep.subr.bf16.mxu0 0
        %2284 = vmatpush2.bf16.msra.mxu0 %v1848
        %2285 = vmatprep.subr.bf16.mxu0 0
        %2286 = vmatpush2.bf16.msra.mxu0 %v1847
        %2287 = vmatprep.subr.bf16.mxu0 0
        %2288 = vmatpush2.bf16.msra.mxu0 %v1846
        %2289 = vmatprep.subr.bf16.mxu0 0
        %2290 = vmatpush2.bf16.msra.mxu0 %v1845
        %2291 = vmatprep.subr.bf16.mxu0 0
        %2292 = vmatpush2.bf16.msra.mxu0 %v1844
        %2293 = vmatprep.subr.bf16.mxu0 0
        %2294 = vmatpush2.bf16.msra.mxu0 %v1843
        %2295 = vmatprep.subr.bf16.mxu0 0
        %2296 = vmatpush2.bf16.msra.mxu0 %v1842
        %2297 = vmatprep.subr.bf16.mxu0 0
        %2298 = vmatpush2.bf16.msra.mxu0 %v1841
        %2299 = vmatprep.mubr.bf16.mxu0 %v1250
        %2300 = vmatmul.mubr.bf16.gmra.mxu0 %v1068
        %v2301 = vpop.f32.mrf.mxu0
        %v2302 = vadd.f32 %v2141, %v2301
        %v2303 = vpop.f32.mrf.mxu0
        %v2304 = vpop.f32.mrf.mxu0
        %v2305 = vadd.f32 %v2144, %v2304
        %v2306 = vpop.f32.mrf.mxu0
        %2307 = vmatprep.mubr.bf16.mxu0 %v1251
        %2308 = vmatmul.mubr.bf16.gmra.mxu0 %v1069
        %v2309 = vpop.f32.mrf.mxu0
        %v2310 = vadd.f32 %v2149, %v2309
        %v2311 = vpop.f32.mrf.mxu0
        %v2312 = vpop.f32.mrf.mxu0
        %v2313 = vadd.f32 %v2152, %v2312
        %v2314 = vpop.f32.mrf.mxu0
        %2315 = vmatprep.mubr.bf16.mxu0 %v1252
        %2316 = vmatmul.mubr.bf16.gmra.mxu0 %v1070
        %v2317 = vpop.f32.mrf.mxu0
        %v2318 = vadd.f32 %v2157, %v2317
        %v2319 = vpop.f32.mrf.mxu0
        %v2320 = vpop.f32.mrf.mxu0
        %v2321 = vadd.f32 %v2160, %v2320
        %v2322 = vpop.f32.mrf.mxu0
        %2323 = vmatprep.mubr.bf16.mxu0 %v1253
        %2324 = vmatmul.mubr.bf16.gmra.mxu0 %v1071
        %v2325 = vpop.f32.mrf.mxu0
        %v2326 = vadd.f32 %v2165, %v2325
        %v2327 = vpop.f32.mrf.mxu0
        %v2328 = vpop.f32.mrf.mxu0
        %v2329 = vadd.f32 %v2168, %v2328
        %v2330 = vpop.f32.mrf.mxu0
        %2331 = vmatprep.mubr.bf16.mxu0 %v1254
        %2332 = vmatmul.mubr.bf16.gmra.mxu0 %v1072
        %v2333 = vpop.f32.mrf.mxu0
        %v2334 = vadd.f32 %v2173, %v2333
        %v2335 = vpop.f32.mrf.mxu0
        %v2336 = vpop.f32.mrf.mxu0
        %v2337 = vadd.f32 %v2176, %v2336
        %v2338 = vpop.f32.mrf.mxu0
        %2339 = vmatprep.mubr.bf16.mxu0 %v1255
        %2340 = vmatmul.mubr.bf16.gmra.mxu0 %v1073
        %v2341 = vpop.f32.mrf.mxu0
        %v2342 = vadd.f32 %v2181, %v2341
        %v2343 = vpop.f32.mrf.mxu0
        %v2344 = vpop.f32.mrf.mxu0
        %v2345 = vadd.f32 %v2184, %v2344
        %v2346 = vpop.f32.mrf.mxu0
        %2347 = vmatprep.mubr.bf16.mxu0 %v1256
        %2348 = vmatmul.mubr.bf16.gmra.mxu0 %v1074
        %v2349 = vpop.f32.mrf.mxu0
        %v2350 = vadd.f32 %v2189, %v2349
        %v2351 = vpop.f32.mrf.mxu0
        %v2352 = vpop.f32.mrf.mxu0
        %v2353 = vadd.f32 %v2192, %v2352
        %v2354 = vpop.f32.mrf.mxu0
        %2355 = vmatprep.mubr.bf16.mxu0 %v1257
        %2356 = vmatmul.mubr.bf16.gmra.mxu0 %v1075
        %v2357 = vpop.f32.mrf.mxu0
        %v2358 = vadd.f32 %v2197, %v2357
        %v2359 = vpop.f32.mrf.mxu0
        %v2360 = vpop.f32.mrf.mxu0
        %v2361 = vadd.f32 %v2200, %v2360
        %v2362 = vpop.f32.mrf.mxu0
        %2363 = vmatprep.mubr.bf16.mxu0 %v1258
        %2364 = vmatmul.mubr.bf16.gmra.mxu0 %v1076
        %v2365 = vpop.f32.mrf.mxu0
        %v2366 = vadd.f32 %v2205, %v2365
        %v2367 = vpop.f32.mrf.mxu0
        %v2368 = vpop.f32.mrf.mxu0
        %v2369 = vadd.f32 %v2208, %v2368
        %v2370 = vpop.f32.mrf.mxu0
        %2371 = vmatprep.mubr.bf16.mxu0 %v1259
        %2372 = vmatmul.mubr.bf16.gmra.mxu0 %v1077
        %v2373 = vpop.f32.mrf.mxu0
        %v2374 = vadd.f32 %v2213, %v2373
        %v2375 = vpop.f32.mrf.mxu0
        %v2376 = vpop.f32.mrf.mxu0
        %v2377 = vadd.f32 %v2216, %v2376
        %v2378 = vpop.f32.mrf.mxu0
        %2379 = vmatprep.mubr.bf16.mxu0 %v1260
        %2380 = vmatmul.mubr.bf16.gmra.mxu0 %v1078
        %v2381 = vpop.f32.mrf.mxu0
        %v2382 = vadd.f32 %v2221, %v2381
        %v2383 = vpop.f32.mrf.mxu0
        %v2384 = vpop.f32.mrf.mxu0
        %v2385 = vadd.f32 %v2224, %v2384
        %v2386 = vpop.f32.mrf.mxu0
        %2387 = vmatprep.mubr.bf16.mxu0 %v1261
        %2388 = vmatmul.mubr.bf16.gmra.mxu0 %v1079
        %v2389 = vpop.f32.mrf.mxu0
        %v2390 = vadd.f32 %v2229, %v2389
        %v2391 = vpop.f32.mrf.mxu0
        %v2392 = vpop.f32.mrf.mxu0
        %v2393 = vadd.f32 %v2232, %v2392
        %v2394 = vpop.f32.mrf.mxu0
        %2395 = vmatprep.mubr.bf16.mxu0 %v1262
        %2396 = vmatmul.mubr.bf16.gmra.mxu0 %v1080
        %v2397 = vpop.f32.mrf.mxu0
        %v2398 = vadd.f32 %v2237, %v2397
        %v2399 = vpop.f32.mrf.mxu0
        %v2400 = vpop.f32.mrf.mxu0
        %v2401 = vadd.f32 %v2240, %v2400
        %v2402 = vpop.f32.mrf.mxu0
        %2403 = vmatprep.mubr.bf16.mxu0 %v1263
        %2404 = vmatmul.mubr.bf16.gmra.mxu0 %v1081
        %v2405 = vpop.f32.mrf.mxu0
        %v2406 = vadd.f32 %v2245, %v2405
        %v2407 = vpop.f32.mrf.mxu0
        %v2408 = vpop.f32.mrf.mxu0
        %v2409 = vadd.f32 %v2248, %v2408
        %v2410 = vpop.f32.mrf.mxu0
        %2411 = vmatprep.mubr.bf16.mxu0 %v1264
        %2412 = vmatmul.mubr.bf16.gmra.mxu0 %v1082
        %v2413 = vpop.f32.mrf.mxu0
        %v2414 = vadd.f32 %v2253, %v2413
        %v2415 = vpop.f32.mrf.mxu0
        %v2416 = vpop.f32.mrf.mxu0
        %v2417 = vadd.f32 %v2256, %v2416
        %v2418 = vpop.f32.mrf.mxu0
        %2419 = vmatprep.mubr.bf16.mxu0 %v1265
        %2420 = vmatmul.mubr.bf16.gmra.mxu0 %v1215
        %v2421 = vpop.f32.mrf.mxu0
        %v2422 = vadd.f32 %v2261, %v2421
        %v2423 = vpop.f32.mrf.mxu0
        %v2424 = vpop.f32.mrf.mxu0
        %v2425 = vadd.f32 %v2264, %v2424
        %v2426 = vpop.f32.mrf.mxu0
        %2427 = vdwg.mxu0
        %2428 = vmatprep.subr.bf16.mxu0 0
        %2429 = vmatpush1.bf16.msra.mxu0 %v1856
        %2430 = vmatprep.subr.bf16.mxu0 0
        %2431 = vmatpush1.bf16.msra.mxu0 %v1855
        %2432 = vmatprep.subr.bf16.mxu0 0
        %2433 = vmatpush1.bf16.msra.mxu0 %v1854
        %2434 = vmatprep.subr.bf16.mxu0 0
        %2435 = vmatpush1.bf16.msra.mxu0 %v1853
        %2436 = vmatprep.subr.bf16.mxu0 0
        %2437 = vmatpush1.bf16.msra.mxu0 %v1852
        %2438 = vmatprep.subr.bf16.mxu0 0
        %2439 = vmatpush1.bf16.msra.mxu0 %v1851
        %2440 = vmatprep.subr.bf16.mxu0 0
        %2441 = vmatpush1.bf16.msra.mxu0 %v1850
        %2442 = vmatprep.subr.bf16.mxu0 0
        %2443 = vmatpush1.bf16.msra.mxu0 %v1849
        %2444 = vmatprep.subr.bf16.mxu0 0
        %2445 = vmatpush2.bf16.msra.mxu0 %v1864
        %2446 = vmatprep.subr.bf16.mxu0 0
        %2447 = vmatpush2.bf16.msra.mxu0 %v1863
        %2448 = vmatprep.subr.bf16.mxu0 0
        %2449 = vmatpush2.bf16.msra.mxu0 %v1862
        %2450 = vmatprep.subr.bf16.mxu0 0
        %2451 = vmatpush2.bf16.msra.mxu0 %v1861
        %2452 = vmatprep.subr.bf16.mxu0 0
        %2453 = vmatpush2.bf16.msra.mxu0 %v1860
        %2454 = vmatprep.subr.bf16.mxu0 0
        %2455 = vmatpush2.bf16.msra.mxu0 %v1859
        %2456 = vmatprep.subr.bf16.mxu0 0
        %2457 = vmatpush2.bf16.msra.mxu0 %v1858
        %2458 = vmatprep.subr.bf16.mxu0 0
        %2459 = vmatpush2.bf16.msra.mxu0 %v1857
        %2460 = vmatprep.mubr.bf16.mxu0 %v1069
        %2461 = vmatmul.mubr.bf16.gmra.mxu0 %v1300
        %v2462 = vpop.f32.mrf.mxu0
        %v2463 = vadd.f32 %v2302, %v2462
        %v2464 = vpop.f32.mrf.mxu0
        %v2465 = vpop.f32.mrf.mxu0
        %v2466 = vadd.f32 %v2305, %v2465
        %v2467 = vpop.f32.mrf.mxu0
        %2468 = vmatprep.mubr.bf16.mxu0 %v1070
        %2469 = vmatmul.mubr.bf16.gmra.mxu0 %v1301
        %v2470 = vpop.f32.mrf.mxu0
        %v2471 = vadd.f32 %v2310, %v2470
        %v2472 = vpop.f32.mrf.mxu0
        %v2473 = vpop.f32.mrf.mxu0
        %v2474 = vadd.f32 %v2313, %v2473
        %v2475 = vpop.f32.mrf.mxu0
        %2476 = vmatprep.mubr.bf16.mxu0 %v1071
        %2477 = vmatmul.mubr.bf16.gmra.mxu0 %v1302
        %v2478 = vpop.f32.mrf.mxu0
        %v2479 = vadd.f32 %v2318, %v2478
        %v2480 = vpop.f32.mrf.mxu0
        %v2481 = vpop.f32.mrf.mxu0
        %v2482 = vadd.f32 %v2321, %v2481
        %v2483 = vpop.f32.mrf.mxu0
        %2484 = vmatprep.mubr.bf16.mxu0 %v1072
        %2485 = vmatmul.mubr.bf16.gmra.mxu0 %v1303
        %v2486 = vpop.f32.mrf.mxu0
        %v2487 = vadd.f32 %v2326, %v2486
        %v2488 = vpop.f32.mrf.mxu0
        %v2489 = vpop.f32.mrf.mxu0
        %v2490 = vadd.f32 %v2329, %v2489
        %v2491 = vpop.f32.mrf.mxu0
        %2492 = vmatprep.mubr.bf16.mxu0 %v1073
        %2493 = vmatmul.mubr.bf16.gmra.mxu0 %v1304
        %v2494 = vpop.f32.mrf.mxu0
        %v2495 = vadd.f32 %v2334, %v2494
        %v2496 = vpop.f32.mrf.mxu0
        %v2497 = vpop.f32.mrf.mxu0
        %v2498 = vadd.f32 %v2337, %v2497
        %v2499 = vpop.f32.mrf.mxu0
        %2500 = vmatprep.mubr.bf16.mxu0 %v1074
        %2501 = vmatmul.mubr.bf16.gmra.mxu0 %v1305
        %v2502 = vpop.f32.mrf.mxu0
        %v2503 = vadd.f32 %v2342, %v2502
        %v2504 = vpop.f32.mrf.mxu0
        %v2505 = vpop.f32.mrf.mxu0
        %v2506 = vadd.f32 %v2345, %v2505
        %v2507 = vpop.f32.mrf.mxu0
        %2508 = vmatprep.mubr.bf16.mxu0 %v1075
        %2509 = vmatmul.mubr.bf16.gmra.mxu0 %v1306
        %v2510 = vpop.f32.mrf.mxu0
        %v2511 = vadd.f32 %v2350, %v2510
        %v2512 = vpop.f32.mrf.mxu0
        %v2513 = vpop.f32.mrf.mxu0
        %v2514 = vadd.f32 %v2353, %v2513
        %v2515 = vpop.f32.mrf.mxu0
        %2516 = vmatprep.mubr.bf16.mxu0 %v1076
        %2517 = vmatmul.mubr.bf16.gmra.mxu0 %v1307
        %v2518 = vpop.f32.mrf.mxu0
        %v2519 = vadd.f32 %v2358, %v2518
        %v2520 = vpop.f32.mrf.mxu0
        %v2521 = vpop.f32.mrf.mxu0
        %v2522 = vadd.f32 %v2361, %v2521
        %v2523 = vpop.f32.mrf.mxu0
        %2524 = vmatprep.mubr.bf16.mxu0 %v1077
        %2525 = vmatmul.mubr.bf16.gmra.mxu0 %v1308
        %v2526 = vpop.f32.mrf.mxu0
        %v2527 = vadd.f32 %v2366, %v2526
        %v2528 = vpop.f32.mrf.mxu0
        %v2529 = vpop.f32.mrf.mxu0
        %v2530 = vadd.f32 %v2369, %v2529
        %v2531 = vpop.f32.mrf.mxu0
        %2532 = vmatprep.mubr.bf16.mxu0 %v1078
        %2533 = vmatmul.mubr.bf16.gmra.mxu0 %v1309
        %v2534 = vpop.f32.mrf.mxu0
        %v2535 = vadd.f32 %v2374, %v2534
        %v2536 = vpop.f32.mrf.mxu0
        %v2537 = vpop.f32.mrf.mxu0
        %v2538 = vadd.f32 %v2377, %v2537
        %v2539 = vpop.f32.mrf.mxu0
        %2540 = vmatprep.mubr.bf16.mxu0 %v1079
        %2541 = vmatmul.mubr.bf16.gmra.mxu0 %v1310
        %v2542 = vpop.f32.mrf.mxu0
        %v2543 = vadd.f32 %v2382, %v2542
        %v2544 = vpop.f32.mrf.mxu0
        %v2545 = vpop.f32.mrf.mxu0
        %v2546 = vadd.f32 %v2385, %v2545
        %v2547 = vpop.f32.mrf.mxu0
        %2548 = vmatprep.mubr.bf16.mxu0 %v1080
        %2549 = vmatmul.mubr.bf16.gmra.mxu0 %v1311
        %v2550 = vpop.f32.mrf.mxu0
        %v2551 = vadd.f32 %v2390, %v2550
        %v2552 = vpop.f32.mrf.mxu0
        %v2553 = vpop.f32.mrf.mxu0
        %v2554 = vadd.f32 %v2393, %v2553
        %v2555 = vpop.f32.mrf.mxu0
        %2556 = vmatprep.mubr.bf16.mxu0 %v1081
        %2557 = vmatmul.mubr.bf16.gmra.mxu0 %v1312
        %v2558 = vpop.f32.mrf.mxu0
        %v2559 = vadd.f32 %v2398, %v2558
        %v2560 = vpop.f32.mrf.mxu0
        %v2561 = vpop.f32.mrf.mxu0
        %v2562 = vadd.f32 %v2401, %v2561
        %v2563 = vpop.f32.mrf.mxu0
        %2564 = vmatprep.mubr.bf16.mxu0 %v1082
        %2565 = vmatmul.mubr.bf16.gmra.mxu0 %v1313
        %v2566 = vpop.f32.mrf.mxu0
        %v2567 = vadd.f32 %v2406, %v2566
        %v2568 = vpop.f32.mrf.mxu0
        %v2569 = vpop.f32.mrf.mxu0
        %v2570 = vadd.f32 %v2409, %v2569
        %v2571 = vpop.f32.mrf.mxu0
        %2572 = vmatprep.mubr.bf16.mxu0 %v1215
        %2573 = vmatmul.mubr.bf16.gmra.mxu0 %v1314
        %v2574 = vpop.f32.mrf.mxu0
        %v2575 = vadd.f32 %v2414, %v2574
        %v2576 = vpop.f32.mrf.mxu0
        %v2577 = vpop.f32.mrf.mxu0
        %v2578 = vadd.f32 %v2417, %v2577
        %v2579 = vpop.f32.mrf.mxu0
        %2580 = vmatprep.mubr.bf16.mxu0 %v1318
        %2581 = vmatmul.mubr.bf16.gmra.mxu0 %v1315
        %v2582 = vpop.f32.mrf.mxu0
        %v2583 = vadd.f32 %v2422, %v2582
        %v2584 = vpop.f32.mrf.mxu0
        %v2585 = vpop.f32.mrf.mxu0
        %v2586 = vadd.f32 %v2425, %v2585
        %v2587 = vpop.f32.mrf.mxu0
        %2588 = vdwg.mxu0
        %2589 = vmatprep.subr.bf16.mxu0 0
        %2590 = vmatpush1.bf16.msra.mxu0 %v1872
        %2591 = vmatprep.subr.bf16.mxu0 0
        %2592 = vmatpush1.bf16.msra.mxu0 %v1871
        %2593 = vmatprep.subr.bf16.mxu0 0
        %2594 = vmatpush1.bf16.msra.mxu0 %v1870
        %2595 = vmatprep.subr.bf16.mxu0 0
        %2596 = vmatpush1.bf16.msra.mxu0 %v1869
        %2597 = vmatprep.subr.bf16.mxu0 0
        %2598 = vmatpush1.bf16.msra.mxu0 %v1868
        %2599 = vmatprep.subr.bf16.mxu0 0
        %2600 = vmatpush1.bf16.msra.mxu0 %v1867
        %2601 = vmatprep.subr.bf16.mxu0 0
        %2602 = vmatpush1.bf16.msra.mxu0 %v1866
        %2603 = vmatprep.subr.bf16.mxu0 0
        %2604 = vmatpush1.bf16.msra.mxu0 %v1865
        %2605 = vmatprep.subr.bf16.mxu0 0
        %2606 = vmatpush2.bf16.msra.mxu0 0
        %2607 = vmatprep.subr.bf16.mxu0 0
        %2608 = vmatpush2.bf16.msra.mxu0 0
        %2609 = vmatprep.subr.bf16.mxu0 0
        %2610 = vmatpush2.bf16.msra.mxu0 0
        %2611 = vmatprep.subr.bf16.mxu0 0
        %2612 = vmatpush2.bf16.msra.mxu0 0
        %2613 = vmatprep.subr.bf16.mxu0 0
        %2614 = vmatpush2.bf16.msra.mxu0 0
        %2615 = vmatprep.subr.bf16.mxu0 0
        %2616 = vmatpush2.bf16.msra.mxu0 0
        %2617 = vmatprep.subr.bf16.mxu0 0
        %2618 = vmatpush2.bf16.msra.mxu0 0
        %2619 = vmatprep.subr.bf16.mxu0 0
        %2620 = vmatpush2.bf16.msra.mxu0 0
        %2621 = vmatprep.mubr.bf16.mxu0 0
        %2622 = vmatmul.mubr.bf16.gmra.mxu0 %v1353
        %v2623 = vpop.f32.mrf.mxu0
        %v2624 = vadd.f32 %v2463, %v2623
        %v2625 = vpop.f32.mrf.mxu0
        %v2626 = vpop.f32.mrf.mxu0
        %v2627 = vadd.f32 %v2466, %v2626
        %v2628 = vpop.f32.mrf.mxu0
        %2629 = vmatprep.mubr.bf16.mxu0 0
        %2630 = vmatmul.mubr.bf16.gmra.mxu0 %v1354
        %v2631 = vpop.f32.mrf.mxu0
        %v2632 = vadd.f32 %v2471, %v2631
        %v2633 = vpop.f32.mrf.mxu0
        %v2634 = vpop.f32.mrf.mxu0
        %v2635 = vadd.f32 %v2474, %v2634
        %v2636 = vpop.f32.mrf.mxu0
        %2637 = vmatprep.mubr.bf16.mxu0 0
        %2638 = vmatmul.mubr.bf16.gmra.mxu0 %v1355
        %v2639 = vpop.f32.mrf.mxu0
        %v2640 = vadd.f32 %v2479, %v2639
        %v2641 = vpop.f32.mrf.mxu0
        %v2642 = vpop.f32.mrf.mxu0
        %v2643 = vadd.f32 %v2482, %v2642
        %v2644 = vpop.f32.mrf.mxu0
        %2645 = vmatprep.mubr.bf16.mxu0 0
        %2646 = vmatmul.mubr.bf16.gmra.mxu0 %v1356
        %v2647 = vpop.f32.mrf.mxu0
        %v2648 = vadd.f32 %v2487, %v2647
        %v2649 = vpop.f32.mrf.mxu0
        %v2650 = vpop.f32.mrf.mxu0
        %v2651 = vadd.f32 %v2490, %v2650
        %v2652 = vpop.f32.mrf.mxu0
        %2653 = vmatprep.mubr.bf16.mxu0 0
        %2654 = vmatmul.mubr.bf16.gmra.mxu0 %v1357
        %v2655 = vpop.f32.mrf.mxu0
        %v2656 = vadd.f32 %v2495, %v2655
        %v2657 = vpop.f32.mrf.mxu0
        %v2658 = vpop.f32.mrf.mxu0
        %v2659 = vadd.f32 %v2498, %v2658
        %v2660 = vpop.f32.mrf.mxu0
        %2661 = vmatprep.mubr.bf16.mxu0 0
        %2662 = vmatmul.mubr.bf16.gmra.mxu0 %v1358
        %v2663 = vpop.f32.mrf.mxu0
        %v2664 = vadd.f32 %v2503, %v2663
        %v2665 = vpop.f32.mrf.mxu0
        %v2666 = vpop.f32.mrf.mxu0
        %v2667 = vadd.f32 %v2506, %v2666
        %v2668 = vpop.f32.mrf.mxu0
        %2669 = vmatprep.mubr.bf16.mxu0 0
        %2670 = vmatmul.mubr.bf16.gmra.mxu0 %v1359
        %v2671 = vpop.f32.mrf.mxu0
        %v2672 = vadd.f32 %v2511, %v2671
        %v2673 = vpop.f32.mrf.mxu0
        %v2674 = vpop.f32.mrf.mxu0
        %v2675 = vadd.f32 %v2514, %v2674
        %v2676 = vpop.f32.mrf.mxu0
        %2677 = vmatprep.mubr.bf16.mxu0 0
        %2678 = vmatmul.mubr.bf16.gmra.mxu0 %v1360
        %v2679 = vpop.f32.mrf.mxu0
        %v2680 = vadd.f32 %v2519, %v2679
        %v2681 = vpop.f32.mrf.mxu0
        %v2682 = vpop.f32.mrf.mxu0
        %v2683 = vadd.f32 %v2522, %v2682
        %v2684 = vpop.f32.mrf.mxu0
        %2685 = vmatprep.mubr.bf16.mxu0 0
        %2686 = vmatmul.mubr.bf16.gmra.mxu0 %v1361
        %v2687 = vpop.f32.mrf.mxu0
        %v2688 = vadd.f32 %v2527, %v2687
        %v2689 = vpop.f32.mrf.mxu0
        %v2690 = vpop.f32.mrf.mxu0
        %v2691 = vadd.f32 %v2530, %v2690
        %v2692 = vpop.f32.mrf.mxu0
        %2693 = vmatprep.mubr.bf16.mxu0 0
        %2694 = vmatmul.mubr.bf16.gmra.mxu0 %v1362
        %v2695 = vpop.f32.mrf.mxu0
        %v2696 = vadd.f32 %v2535, %v2695
        %v2697 = vpop.f32.mrf.mxu0
        %v2698 = vpop.f32.mrf.mxu0
        %v2699 = vadd.f32 %v2538, %v2698
        %v2700 = vpop.f32.mrf.mxu0
        %2701 = vmatprep.mubr.bf16.mxu0 0
        %2702 = vmatmul.mubr.bf16.gmra.mxu0 %v1363
        %v2703 = vpop.f32.mrf.mxu0
        %v2704 = vadd.f32 %v2543, %v2703
        %v2705 = vpop.f32.mrf.mxu0
        %v2706 = vpop.f32.mrf.mxu0
        %v2707 = vadd.f32 %v2546, %v2706
        %v2708 = vpop.f32.mrf.mxu0
        %2709 = vmatprep.mubr.bf16.mxu0 0
        %2710 = vmatmul.mubr.bf16.gmra.mxu0 %v1364
        %v2711 = vpop.f32.mrf.mxu0
        %v2712 = vadd.f32 %v2551, %v2711
        %v2713 = vpop.f32.mrf.mxu0
        %v2714 = vpop.f32.mrf.mxu0
        %v2715 = vadd.f32 %v2554, %v2714
        %v2716 = vpop.f32.mrf.mxu0
        %2717 = vmatprep.mubr.bf16.mxu0 0
        %2718 = vmatmul.mubr.bf16.gmra.mxu0 %v1365
        %v2719 = vpop.f32.mrf.mxu0
        %v2720 = vadd.f32 %v2559, %v2719
        %v2721 = vpop.f32.mrf.mxu0
        %v2722 = vpop.f32.mrf.mxu0
        %v2723 = vadd.f32 %v2562, %v2722
        %v2724 = vpop.f32.mrf.mxu0
        %2725 = vmatprep.mubr.bf16.mxu0 0
        %2726 = vmatmul.mubr.bf16.gmra.mxu0 %v1366
        %v2727 = vpop.f32.mrf.mxu0
        %v2728 = vadd.f32 %v2567, %v2727
        %v2729 = vpop.f32.mrf.mxu0
        %v2730 = vpop.f32.mrf.mxu0
        %v2731 = vadd.f32 %v2570, %v2730
        %v2732 = vpop.f32.mrf.mxu0
        %2733 = vmatprep.mubr.bf16.mxu0 0
        %2734 = vmatmul.mubr.bf16.gmra.mxu0 %v1367
        %v2735 = vpop.f32.mrf.mxu0
        %v2736 = vadd.f32 %v2575, %v2735
        %v2737 = vpop.f32.mrf.mxu0
        %v2738 = vpop.f32.mrf.mxu0
        %v2739 = vadd.f32 %v2578, %v2738
        %v2740 = vpop.f32.mrf.mxu0
        %2741 = vmatprep.mubr.bf16.mxu0 0
        %2742 = vmatmul.mubr.bf16.gmra.mxu0 %v1368
        %v2743 = vpop.f32.mrf.mxu0
        %v2744 = vadd.f32 %v2583, %v2743
        %v2745 = vpop.f32.mrf.mxu0
        %v2746 = vpop.f32.mrf.mxu0
        %v2747 = vadd.f32 %v2586, %v2746
        %v2748 = vpop.f32.mrf.mxu0
        %2749 = vdwg.mxu0
        %v2750 = vld [vmem:[#allocation5] sm:$0x1]
        %v2751 = vlaneseq
        %v2752 = vshrl.u32 %v2751, 7
        %v2753 = vsub.s32 0, %v2752
        %v2754 = vrot.slane %v2750, %v2753
        %v2755 = vmul.f32 %v2624, %v2754
        %v2756 = vmul.f32 %v2627, %v2754
        %v2757 = vmul.f32 %v2632, %v2754
        %v2758 = vmul.f32 %v2635, %v2754
        %v2759 = vmul.f32 %v2640, %v2754
        %v2760 = vmul.f32 %v2643, %v2754
        %v2761 = vmul.f32 %v2648, %v2754
        %v2762 = vmul.f32 %v2651, %v2754
        %v2763 = vmul.f32 %v2656, %v2754
        %v2764 = vmul.f32 %v2659, %v2754
        %v2765 = vmul.f32 %v2664, %v2754
        %v2766 = vmul.f32 %v2667, %v2754
        %v2767 = vmul.f32 %v2672, %v2754
        %v2768 = vmul.f32 %v2675, %v2754
        %v2769 = vmul.f32 %v2680, %v2754
        %v2770 = vmul.f32 %v2683, %v2754
        %v2771 = vmul.f32 %v2688, %v2754
        %v2772 = vmul.f32 %v2691, %v2754
        %v2773 = vmul.f32 %v2696, %v2754
        %v2774 = vmul.f32 %v2699, %v2754
        %v2775 = vmul.f32 %v2704, %v2754
        %v2776 = vmul.f32 %v2707, %v2754
        %v2777 = vmul.f32 %v2712, %v2754
        %v2778 = vmul.f32 %v2715, %v2754
        %v2779 = vmul.f32 %v2720, %v2754
        %v2780 = vmul.f32 %v2723, %v2754
        %v2781 = vmul.f32 %v2728, %v2754
        %v2782 = vmul.f32 %v2731, %v2754
        %v2783 = vmul.f32 %v2736, %v2754
        %v2784 = vmul.f32 %v2739, %v2754
        %v2785 = vmul.f32 %v2744, %v2754
        %v2786 = vmul.f32 %v2747, %v2754
        %v2787 = vld [vmem:[#allocation5 + $0x8] sm:$0x1]
        %v2788 = vlaneseq
        %v2789 = vshrl.u32 %v2788, 7
        %v2790 = vsub.s32 0, %v2789
        %v2791 = vrot.slane %v2787, %v2790
        %v2792 = vadd.f32 %v2755, %v2791
        %v2793 = vadd.f32 %v2756, %v2791
        %v2794 = vadd.f32 %v2757, %v2791
        %v2795 = vadd.f32 %v2758, %v2791
        %v2796 = vadd.f32 %v2759, %v2791
        %v2797 = vadd.f32 %v2760, %v2791
        %v2798 = vadd.f32 %v2761, %v2791
        %v2799 = vadd.f32 %v2762, %v2791
        %v2800 = vadd.f32 %v2763, %v2791
        %v2801 = vadd.f32 %v2764, %v2791
        %v2802 = vadd.f32 %v2765, %v2791
        %v2803 = vadd.f32 %v2766, %v2791
        %v2804 = vadd.f32 %v2767, %v2791
        %v2805 = vadd.f32 %v2768, %v2791
        %v2806 = vadd.f32 %v2769, %v2791
        %v2807 = vadd.f32 %v2770, %v2791
        %v2808 = vadd.f32 %v2771, %v2791
        %v2809 = vadd.f32 %v2772, %v2791
        %v2810 = vadd.f32 %v2773, %v2791
        %v2811 = vadd.f32 %v2774, %v2791
        %v2812 = vadd.f32 %v2775, %v2791
        %v2813 = vadd.f32 %v2776, %v2791
        %v2814 = vadd.f32 %v2777, %v2791
        %v2815 = vadd.f32 %v2778, %v2791
        %v2816 = vadd.f32 %v2779, %v2791
        %v2817 = vadd.f32 %v2780, %v2791
        %v2818 = vadd.f32 %v2781, %v2791
        %v2819 = vadd.f32 %v2782, %v2791
        %v2820 = vadd.f32 %v2783, %v2791
        %v2821 = vadd.f32 %v2784, %v2791
        %v2822 = vadd.f32 %v2785, %v2791
        %v2823 = vadd.f32 %v2786, %v2791
        %v2824 = vmax.f32 %v2792, 0.0
        %v2825 = vmax.f32 %v2793, 0.0
        %v2826 = vmax.f32 %v2794, 0.0
        %v2827 = vmax.f32 %v2795, 0.0
        %v2828 = vmax.f32 %v2796, 0.0
        %v2829 = vmax.f32 %v2797, 0.0
        %v2830 = vmax.f32 %v2798, 0.0
        %v2831 = vmax.f32 %v2799, 0.0
        %v2832 = vmax.f32 %v2800, 0.0
        %v2833 = vmax.f32 %v2801, 0.0
        %v2834 = vmax.f32 %v2802, 0.0
        %v2835 = vmax.f32 %v2803, 0.0
        %v2836 = vmax.f32 %v2804, 0.0
        %v2837 = vmax.f32 %v2805, 0.0
        %v2838 = vmax.f32 %v2806, 0.0
        %v2839 = vmax.f32 %v2807, 0.0
        %v2840 = vmax.f32 %v2808, 0.0
        %v2841 = vmax.f32 %v2809, 0.0
        %v2842 = vmax.f32 %v2810, 0.0
        %v2843 = vmax.f32 %v2811, 0.0
        %v2844 = vmax.f32 %v2812, 0.0
        %v2845 = vmax.f32 %v2813, 0.0
        %v2846 = vmax.f32 %v2814, 0.0
        %v2847 = vmax.f32 %v2815, 0.0
        %v2848 = vmax.f32 %v2816, 0.0
        %v2849 = vmax.f32 %v2817, 0.0
        %v2850 = vmax.f32 %v2818, 0.0
        %v2851 = vmax.f32 %v2819, 0.0
        %v2852 = vmax.f32 %v2820, 0.0
        %v2853 = vmax.f32 %v2821, 0.0
        %v2854 = vmax.f32 %v2822, 0.0
        %v2855 = vmax.f32 %v2823, 0.0
        %2856 = vst [vmem:[#allocation2] sm:$0xff] %v2824
        %2857 = vst [vmem:[#allocation2 + $0x8] sm:$0xff] %v2825
        %2858 = vst [vmem:[#allocation2 + $0x10] sm:$0xff] %v2826
        %2859 = vst [vmem:[#allocation2 + $0x18] sm:$0xff] %v2827
        %2860 = vst [vmem:[#allocation2 + $0x20] sm:$0xff] %v2828
        %2861 = vst [vmem:[#allocation2 + $0x28] sm:$0xff] %v2829
        %2862 = vst [vmem:[#allocation2 + $0x30] sm:$0xff] %v2830
        %2863 = vst [vmem:[#allocation2 + $0x38] sm:$0xff] %v2831
        %2864 = vst [vmem:[#allocation2 + $0x40] sm:$0xff] %v2832
        %2865 = vst [vmem:[#allocation2 + $0x48] sm:$0xff] %v2833
        %2866 = vst [vmem:[#allocation2 + $0x50] sm:$0xff] %v2834
        %2867 = vst [vmem:[#allocation2 + $0x58] sm:$0xff] %v2835
        %2868 = vst [vmem:[#allocation2 + $0x60] sm:$0xff] %v2836
        %2869 = vst [vmem:[#allocation2 + $0x68] sm:$0xff] %v2837
        %2870 = vst [vmem:[#allocation2 + $0x70] sm:$0xff] %v2838
        %2871 = vst [vmem:[#allocation2 + $0x78] sm:$0xff] %v2839
        %2872 = vst [vmem:[#allocation2 + $0x80] sm:$0xff] %v2840
        %2873 = vst [vmem:[#allocation2 + $0x88] sm:$0xff] %v2841
        %2874 = vst [vmem:[#allocation2 + $0x90] sm:$0xff] %v2842
        %2875 = vst [vmem:[#allocation2 + $0x98] sm:$0xff] %v2843
        %2876 = vst [vmem:[#allocation2 + $0xa0] sm:$0xff] %v2844
        %2877 = vst [vmem:[#allocation2 + $0xa8] sm:$0xff] %v2845
        %2878 = vst [vmem:[#allocation2 + $0xb0] sm:$0xff] %v2846
        %2879 = vst [vmem:[#allocation2 + $0xb8] sm:$0xff] %v2847
        %2880 = vst [vmem:[#allocation2 + $0xc0] sm:$0xff] %v2848
        %2881 = vst [vmem:[#allocation2 + $0xc8] sm:$0xff] %v2849
        %2882 = vst [vmem:[#allocation2 + $0xd0] sm:$0xff] %v2850
        %2883 = vst [vmem:[#allocation2 + $0xd8] sm:$0xff] %v2851
        %2884 = vst [vmem:[#allocation2 + $0xe0] sm:$0xff] %v2852
        %2885 = vst [vmem:[#allocation2 + $0xe8] sm:$0xff] %v2853
        %2886 = vst [vmem:[#allocation2 + $0xf0] sm:$0xff] %v2854
        %2887 = vst [vmem:[#allocation2 + $0xf8] sm:$0xff] %v2855
        %v2888 = vld [vmem:[#allocation2] ss:$2 sm:$0xff]
        %s2889 = scalar_lea.vmem [#allocation2], 1
        %v2890 = vld [vmem:[%s2889] ss:$2 sm:$0xff]
        %s2891 = scalar_lea.vmem [#allocation2], 16
        %v2892 = vld [vmem:[%s2891] ss:$2 sm:$0xff]
        %s2893 = scalar_lea.vmem [#allocation2], 17
        %v2894 = vld [vmem:[%s2893] ss:$2 sm:$0xff]
        %v2895 = vmax.f32 %v2888, %v2890
        %v2896 = vmax.f32 %v2892, %v2894
        %v2897 = vmax.f32 %v2895, %v2896
        %s2898 = scalar_lea.vmem [#allocation2], 32
        %v2899 = vld [vmem:[%s2898] ss:$2 sm:$0xff]
        %s2900 = scalar_lea.vmem [#allocation2], 33
        %v2901 = vld [vmem:[%s2900] ss:$2 sm:$0xff]
        %s2902 = scalar_lea.vmem [#allocation2], 48
        %v2903 = vld [vmem:[%s2902] ss:$2 sm:$0xff]
        %s2904 = scalar_lea.vmem [#allocation2], 49
        %v2905 = vld [vmem:[%s2904] ss:$2 sm:$0xff]
        %v2906 = vmax.f32 %v2899, %v2901
        %v2907 = vmax.f32 %v2903, %v2905
        %v2908 = vmax.f32 %v2906, %v2907
        %s2909 = scalar_lea.vmem [#allocation2], 64
        %v2910 = vld [vmem:[%s2909] ss:$2 sm:$0xff]
        %s2911 = scalar_lea.vmem [#allocation2], 65
        %v2912 = vld [vmem:[%s2911] ss:$2 sm:$0xff]
        %s2913 = scalar_lea.vmem [#allocation2], 80
        %v2914 = vld [vmem:[%s2913] ss:$2 sm:$0xff]
        %s2915 = scalar_lea.vmem [#allocation2], 81
        %v2916 = vld [vmem:[%s2915] ss:$2 sm:$0xff]
        %v2917 = vmax.f32 %v2910, %v2912
        %v2918 = vmax.f32 %v2914, %v2916
        %v2919 = vmax.f32 %v2917, %v2918
        %s2920 = scalar_lea.vmem [#allocation2], 96
        %v2921 = vld [vmem:[%s2920] ss:$2 sm:$0xff]
        %s2922 = scalar_lea.vmem [#allocation2], 97
        %v2923 = vld [vmem:[%s2922] ss:$2 sm:$0xff]
        %s2924 = scalar_lea.vmem [#allocation2], 112
        %v2925 = vld [vmem:[%s2924] ss:$2 sm:$0xff]
        %s2926 = scalar_lea.vmem [#allocation2], 113
        %v2927 = vld [vmem:[%s2926] ss:$2 sm:$0xff]
        %v2928 = vmax.f32 %v2921, %v2923
        %v2929 = vmax.f32 %v2925, %v2927
        %v2930 = vmax.f32 %v2928, %v2929
        %s2931 = scalar_lea.vmem [#allocation2], 128
        %v2932 = vld [vmem:[%s2931] ss:$2 sm:$0xff]
        %s2933 = scalar_lea.vmem [#allocation2], 129
        %v2934 = vld [vmem:[%s2933] ss:$2 sm:$0xff]
        %s2935 = scalar_lea.vmem [#allocation2], 144
        %v2936 = vld [vmem:[%s2935] ss:$2 sm:$0xff]
        %s2937 = scalar_lea.vmem [#allocation2], 145
        %v2938 = vld [vmem:[%s2937] ss:$2 sm:$0xff]
        %v2939 = vmax.f32 %v2932, %v2934
        %v2940 = vmax.f32 %v2936, %v2938
        %v2941 = vmax.f32 %v2939, %v2940
        %s2942 = scalar_lea.vmem [#allocation2], 160
        %v2943 = vld [vmem:[%s2942] ss:$2 sm:$0xff]
        %s2944 = scalar_lea.vmem [#allocation2], 161
        %v2945 = vld [vmem:[%s2944] ss:$2 sm:$0xff]
        %s2946 = scalar_lea.vmem [#allocation2], 176
        %v2947 = vld [vmem:[%s2946] ss:$2 sm:$0xff]
        %s2948 = scalar_lea.vmem [#allocation2], 177
        %v2949 = vld [vmem:[%s2948] ss:$2 sm:$0xff]
        %v2950 = vmax.f32 %v2943, %v2945
        %v2951 = vmax.f32 %v2947, %v2949
        %v2952 = vmax.f32 %v2950, %v2951
        %s2953 = scalar_lea.vmem [#allocation2], 192
        %v2954 = vld [vmem:[%s2953] ss:$2 sm:$0xff]
        %s2955 = scalar_lea.vmem [#allocation2], 193
        %v2956 = vld [vmem:[%s2955] ss:$2 sm:$0xff]
        %s2957 = scalar_lea.vmem [#allocation2], 208
        %v2958 = vld [vmem:[%s2957] ss:$2 sm:$0xff]
        %s2959 = scalar_lea.vmem [#allocation2], 209
        %v2960 = vld [vmem:[%s2959] ss:$2 sm:$0xff]
        %v2961 = vmax.f32 %v2954, %v2956
        %v2962 = vmax.f32 %v2958, %v2960
        %v2963 = vmax.f32 %v2961, %v2962
        %s2964 = scalar_lea.vmem [#allocation2], 224
        %v2965 = vld [vmem:[%s2964] ss:$2 sm:$0xff]
        %s2966 = scalar_lea.vmem [#allocation2], 225
        %v2967 = vld [vmem:[%s2966] ss:$2 sm:$0xff]
        %s2968 = scalar_lea.vmem [#allocation2], 240
        %v2969 = vld [vmem:[%s2968] ss:$2 sm:$0xff]
        %s2970 = scalar_lea.vmem [#allocation2], 241
        %v2971 = vld [vmem:[%s2970] ss:$2 sm:$0xff]
        %v2972 = vmax.f32 %v2965, %v2967
        %v2973 = vmax.f32 %v2969, %v2971
        %v2974 = vmax.f32 %v2972, %v2973
        %2975 = vst [vmem:[#allocation2] sm:$0xff] 0.0
        %2976 = vst [vmem:[#allocation2 + $0x8] sm:$0x1] 0.0
        %2977 = vst [vmem:[#allocation2 + $0x49] sm:$0xff] 0.0
        %2978 = vst [vmem:[#allocation2 + $0x51] sm:$0x1] 0.0
        %2979 = vst [vmem:[#allocation2 + $0x9] sm:$0xff] %v2897
        %2980 = vst [vmem:[#allocation2 + $0x11] sm:$0xff] %v2908
        %2981 = vst [vmem:[#allocation2 + $0x19] sm:$0xff] %v2919
        %2982 = vst [vmem:[#allocation2 + $0x21] sm:$0xff] %v2930
        %2983 = vst [vmem:[#allocation2 + $0x29] sm:$0xff] %v2941
        %2984 = vst [vmem:[#allocation2 + $0x31] sm:$0xff] %v2952
        %2985 = vst [vmem:[#allocation2 + $0x39] sm:$0xff] %v2963
        %2986 = vst [vmem:[#allocation2 + $0x41] sm:$0xff] %v2974
        %vm2987 = vcmp.lt.s32.totalorder %v347, 0
        %v2988 = vsub.s32 0, %v347
        %v2989 = vsel %vm2987, %v2988, %v347
        %v2990 = vshrl.u32 %v2989, 3
        %v2991 = vand.u32 %v2989, 7
        %v2992 = vsub.s32 0, %v2991
        %v2993 = vsel %vm2987, %v2992, %v2991
        %vm2994 = vcmp.lt.s32.totalorder %v348, 0
        %v2995 = vsub.s32 0, %v348
        %v2996 = vsel %vm2994, %v2995, %v348
        %v2997 = vshrl.u32 %v2996, 3
        %v2998 = vand.u32 %v2996, 7
        %v2999 = vsub.s32 0, %v2998
        %v3000 = vsel %vm2994, %v2999, %v2998
        %vm3001 = vcmp.lt.s32.totalorder %v349, 0
        %v3002 = vsub.s32 0, %v349
        %v3003 = vsel %vm3001, %v3002, %v349
        %v3004 = vshrl.u32 %v3003, 3
        %v3005 = vand.u32 %v3003, 7
        %v3006 = vsub.s32 0, %v3005
        %v3007 = vsel %vm3001, %v3006, %v3005
        %vm3008 = vcmp.lt.s32.totalorder %v350, 0
        %v3009 = vsub.s32 0, %v350
        %v3010 = vsel %vm3008, %v3009, %v350
        %v3011 = vshrl.u32 %v3010, 3
        %v3012 = vand.u32 %v3010, 7
        %v3013 = vsub.s32 0, %v3012
        %v3014 = vsel %vm3008, %v3013, %v3012
        %vm3015 = vcmp.lt.s32.totalorder %v351, 0
        %v3016 = vsub.s32 0, %v351
        %v3017 = vsel %vm3015, %v3016, %v351
        %v3018 = vshrl.u32 %v3017, 3
        %v3019 = vand.u32 %v3017, 7
        %v3020 = vsub.s32 0, %v3019
        %v3021 = vsel %vm3015, %v3020, %v3019
        %vm3022 = vcmp.lt.s32.totalorder %v352, 0
        %v3023 = vsub.s32 0, %v352
        %v3024 = vsel %vm3022, %v3023, %v352
        %v3025 = vshrl.u32 %v3024, 3
        %v3026 = vand.u32 %v3024, 7
        %v3027 = vsub.s32 0, %v3026
        %v3028 = vsel %vm3022, %v3027, %v3026
        %vm3029 = vcmp.lt.s32.totalorder %v353, 0
        %v3030 = vsub.s32 0, %v353
        %v3031 = vsel %vm3029, %v3030, %v353
        %v3032 = vshrl.u32 %v3031, 3
        %v3033 = vand.u32 %v3031, 7
        %v3034 = vsub.s32 0, %v3033
        %v3035 = vsel %vm3029, %v3034, %v3033
        %vm3036 = vcmp.lt.s32.totalorder %v354, 0
        %v3037 = vsub.s32 0, %v354
        %v3038 = vsel %vm3036, %v3037, %v354
        %v3039 = vshrl.u32 %v3038, 3
        %v3040 = vand.u32 %v3038, 7
        %v3041 = vsub.s32 0, %v3040
        %v3042 = vsel %vm3036, %v3041, %v3040
        %vm3043 = vcmp.ne.s32.totalorder %v2993, 0
        %vm3044 = vcmp.ne.s32.totalorder %v3000, 0
        %vm3045 = vcmp.ne.s32.totalorder %v3007, 0
        %vm3046 = vcmp.ne.s32.totalorder %v3014, 0
        %vm3047 = vcmp.ne.s32.totalorder %v3021, 0
        %vm3048 = vcmp.ne.s32.totalorder %v3028, 0
        %vm3049 = vcmp.ne.s32.totalorder %v3035, 0
        %vm3050 = vcmp.ne.s32.totalorder %v3042, 0
        %vm3051 = vcmp.lt.s32.totalorder %v2993, 0
        %vm3052 = vcmp.lt.s32.totalorder %v3000, 0
        %vm3053 = vcmp.lt.s32.totalorder %v3007, 0
        %vm3054 = vcmp.lt.s32.totalorder %v3014, 0
        %vm3055 = vcmp.lt.s32.totalorder %v3021, 0
        %vm3056 = vcmp.lt.s32.totalorder %v3028, 0
        %vm3057 = vcmp.lt.s32.totalorder %v3035, 0
        %vm3058 = vcmp.lt.s32.totalorder %v3042, 0
        %vm3059 = vmand %vm3051, %vm3043
        %vm3060 = vmand %vm3052, %vm3044
        %vm3061 = vmand %vm3053, %vm3045
        %vm3062 = vmand %vm3054, %vm3046
        %vm3063 = vmand %vm3055, %vm3047
        %vm3064 = vmand %vm3056, %vm3048
        %vm3065 = vmand %vm3057, %vm3049
        %vm3066 = vmand %vm3058, %vm3050
        %v3067 = vadd.s32 %v2993, 8
        %v3068 = vadd.s32 %v3000, 8
        %v3069 = vadd.s32 %v3007, 8
        %v3070 = vadd.s32 %v3014, 8
        %v3071 = vadd.s32 %v3021, 8
        %v3072 = vadd.s32 %v3028, 8
        %v3073 = vadd.s32 %v3035, 8
        %v3074 = vadd.s32 %v3042, 8
        %v3075 = vsel %vm3059, %v3067, %v2993
        %v3076 = vsel %vm3060, %v3068, %v3000
        %v3077 = vsel %vm3061, %v3069, %v3007
        %v3078 = vsel %vm3062, %v3070, %v3014
        %v3079 = vsel %vm3063, %v3071, %v3021
        %v3080 = vsel %vm3064, %v3072, %v3028
        %v3081 = vsel %vm3065, %v3073, %v3035
        %v3082 = vsel %vm3066, %v3074, %v3042
        %vm3083 = vcmp.ge.s32.totalorder %v3075, 1
        %vm3084 = vcmp.ge.s32.totalorder %v3076, 1
        %vm3085 = vcmp.ge.s32.totalorder %v3077, 1
        %vm3086 = vcmp.ge.s32.totalorder %v3078, 1
        %vm3087 = vcmp.ge.s32.totalorder %v3079, 1
        %vm3088 = vcmp.ge.s32.totalorder %v3080, 1
        %vm3089 = vcmp.ge.s32.totalorder %v3081, 1
        %vm3090 = vcmp.ge.s32.totalorder %v3082, 1
        %v3091 = vsel %vm3083, 1, 0
        %v3092 = vsel %vm3084, 1, 0
        %v3093 = vsel %vm3085, 1, 0
        %v3094 = vsel %vm3086, 1, 0
        %v3095 = vsel %vm3087, 1, 0
        %v3096 = vsel %vm3088, 1, 0
        %v3097 = vsel %vm3089, 1, 0
        %v3098 = vsel %vm3090, 1, 0
        %v3099 = vcvt.s32.f32 %v3091
        %v3100 = vcvt.s32.f32 %v3092
        %v3101 = vcvt.s32.f32 %v3093
        %v3102 = vcvt.s32.f32 %v3094
        %v3103 = vcvt.s32.f32 %v3095
        %v3104 = vcvt.s32.f32 %v3096
        %v3105 = vcvt.s32.f32 %v3097
        %v3106 = vcvt.s32.f32 %v3098
        %vm3107 = vcmp.le.s32.totalorder %v3075, 6
        %vm3108 = vcmp.le.s32.totalorder %v3076, 6
        %vm3109 = vcmp.le.s32.totalorder %v3077, 6
        %vm3110 = vcmp.le.s32.totalorder %v3078, 6
        %vm3111 = vcmp.le.s32.totalorder %v3079, 6
        %vm3112 = vcmp.le.s32.totalorder %v3080, 6
        %vm3113 = vcmp.le.s32.totalorder %v3081, 6
        %vm3114 = vcmp.le.s32.totalorder %v3082, 6
        %v3115 = vsel %vm3107, 1, 0
        %v3116 = vsel %vm3108, 1, 0
        %v3117 = vsel %vm3109, 1, 0
        %v3118 = vsel %vm3110, 1, 0
        %v3119 = vsel %vm3111, 1, 0
        %v3120 = vsel %vm3112, 1, 0
        %v3121 = vsel %vm3113, 1, 0
        %v3122 = vsel %vm3114, 1, 0
        %v3123 = vcvt.s32.f32 %v3115
        %v3124 = vcvt.s32.f32 %v3116
        %v3125 = vcvt.s32.f32 %v3117
        %v3126 = vcvt.s32.f32 %v3118
        %v3127 = vcvt.s32.f32 %v3119
        %v3128 = vcvt.s32.f32 %v3120
        %v3129 = vcvt.s32.f32 %v3121
        %v3130 = vcvt.s32.f32 %v3122
        %v3131 = vld [vmem:[#allocation2] sm:$0xff]
        %v3132 = vld [vmem:[#allocation2 + $0x8] sm:$0xff]
        %v3133 = vld [vmem:[#allocation2 + $0x10] sm:$0xff]
        %v3134 = vld [vmem:[#allocation2 + $0x18] sm:$0xff]
        %v3135 = vld [vmem:[#allocation2 + $0x20] sm:$0xff]
        %v3136 = vld [vmem:[#allocation2 + $0x28] sm:$0xff]
        %v3137 = vld [vmem:[#allocation2 + $0x30] sm:$0xff]
        %v3138 = vld [vmem:[#allocation2 + $0x38] sm:$0xff]
        %v3139 = vmul.f32 %v3131, %v3099
        %v3140 = vmul.f32 %v3132, %v3100
        %v3141 = vmul.f32 %v3133, %v3101
        %v3142 = vmul.f32 %v3134, %v3102
        %v3143 = vmul.f32 %v3135, %v3103
        %v3144 = vmul.f32 %v3136, %v3104
        %v3145 = vmul.f32 %v3137, %v3105
        %v3146 = vmul.f32 %v3138, %v3106
        %v3147 = vpack.c.bf16 %v3140, %v3139
        %v3148 = vpack.c.bf16 %v3142, %v3141
        %v3149 = vpack.c.bf16 %v3144, %v3143
        %v3150 = vpack.c.bf16 %v3146, %v3145
        %v3151 = vld [vmem:[#allocation2 + $0x1] sm:$0xff]
        %v3152 = vld [vmem:[#allocation2 + $0x9] sm:$0xff]
        %v3153 = vld [vmem:[#allocation2 + $0x11] sm:$0xff]
        %v3154 = vld [vmem:[#allocation2 + $0x19] sm:$0xff]
        %v3155 = vld [vmem:[#allocation2 + $0x21] sm:$0xff]
        %v3156 = vld [vmem:[#allocation2 + $0x29] sm:$0xff]
        %v3157 = vld [vmem:[#allocation2 + $0x31] sm:$0xff]
        %v3158 = vld [vmem:[#allocation2 + $0x39] sm:$0xff]
        %v3159 = vpack.c.bf16 %v3152, %v3151
        %v3160 = vpack.c.bf16 %v3154, %v3153
        %v3161 = vpack.c.bf16 %v3156, %v3155
        %v3162 = vpack.c.bf16 %v3158, %v3157
        %v3163 = vld [vmem:[#allocation2 + $0x2] sm:$0xff]
        %v3164 = vld [vmem:[#allocation2 + $0xa] sm:$0xff]
        %v3165 = vld [vmem:[#allocation2 + $0x12] sm:$0xff]
        %v3166 = vld [vmem:[#allocation2 + $0x1a] sm:$0xff]
        %v3167 = vld [vmem:[#allocation2 + $0x22] sm:$0xff]
        %v3168 = vld [vmem:[#allocation2 + $0x2a] sm:$0xff]
        %v3169 = vld [vmem:[#allocation2 + $0x32] sm:$0xff]
        %v3170 = vld [vmem:[#allocation2 + $0x3a] sm:$0xff]
        %v3171 = vmul.f32 %v3163, %v3123
        %v3172 = vmul.f32 %v3164, %v3124
        %v3173 = vmul.f32 %v3165, %v3125
        %v3174 = vmul.f32 %v3166, %v3126
        %v3175 = vmul.f32 %v3167, %v3127
        %v3176 = vmul.f32 %v3168, %v3128
        %v3177 = vmul.f32 %v3169, %v3129
        %v3178 = vmul.f32 %v3170, %v3130
        %v3179 = vpack.c.bf16 %v3172, %v3171
        %v3180 = vpack.c.bf16 %v3174, %v3173
        %v3181 = vpack.c.bf16 %v3176, %v3175
        %v3182 = vpack.c.bf16 %v3178, %v3177
        %v3183 = vld [vmem:[#allocation2 + $0x40] sm:$0xff]
        %v3184 = vmul.f32 %v3132, %v3099
        %v3185 = vmul.f32 %v3133, %v3100
        %v3186 = vmul.f32 %v3134, %v3101
        %v3187 = vmul.f32 %v3135, %v3102
        %v3188 = vmul.f32 %v3136, %v3103
        %v3189 = vmul.f32 %v3137, %v3104
        %v3190 = vmul.f32 %v3138, %v3105
        %v3191 = vmul.f32 %v3183, %v3106
        %v3192 = vpack.c.bf16 %v3185, %v3184
        %v3193 = vpack.c.bf16 %v3187, %v3186
        %v3194 = vpack.c.bf16 %v3189, %v3188
        %v3195 = vpack.c.bf16 %v3191, %v3190
        %v3196 = vld [vmem:[#allocation2 + $0x41] sm:$0xff]
        %v3197 = vpack.c.bf16 %v3153, %v3152
        %v3198 = vpack.c.bf16 %v3155, %v3154
        %v3199 = vpack.c.bf16 %v3157, %v3156
        %v3200 = vpack.c.bf16 %v3196, %v3158
        %v3201 = vld [vmem:[#allocation2 + $0x42] sm:$0xff]
        %v3202 = vmul.f32 %v3164, %v3123
        %v3203 = vmul.f32 %v3165, %v3124
        %v3204 = vmul.f32 %v3166, %v3125
        %v3205 = vmul.f32 %v3167, %v3126
        %v3206 = vmul.f32 %v3168, %v3127
        %v3207 = vmul.f32 %v3169, %v3128
        %v3208 = vmul.f32 %v3170, %v3129
        %v3209 = vmul.f32 %v3201, %v3130
        %v3210 = vpack.c.bf16 %v3203, %v3202
        %v3211 = vpack.c.bf16 %v3205, %v3204
        %v3212 = vpack.c.bf16 %v3207, %v3206
        %v3213 = vpack.c.bf16 %v3209, %v3208
        %v3214 = vld [vmem:[#allocation2 + $0x48] sm:$0xff]
        %v3215 = vmul.f32 %v3133, %v3099
        %v3216 = vmul.f32 %v3134, %v3100
        %v3217 = vmul.f32 %v3135, %v3101
        %v3218 = vmul.f32 %v3136, %v3102
        %v3219 = vmul.f32 %v3137, %v3103
        %v3220 = vmul.f32 %v3138, %v3104
        %v3221 = vmul.f32 %v3183, %v3105
        %v3222 = vmul.f32 %v3214, %v3106
        %v3223 = vpack.c.bf16 %v3216, %v3215
        %v3224 = vpack.c.bf16 %v3218, %v3217
        %v3225 = vpack.c.bf16 %v3220, %v3219
        %v3226 = vpack.c.bf16 %v3222, %v3221
        %v3227 = vld [vmem:[#allocation2 + $0x49] sm:$0xff]
        %v3228 = vpack.c.bf16 %v3227, %v3196
        %v3229 = vld [vmem:[#allocation2 + $0x4a] sm:$0xff]
        %v3230 = vmul.f32 %v3165, %v3123
        %v3231 = vmul.f32 %v3166, %v3124
        %v3232 = vmul.f32 %v3167, %v3125
        %v3233 = vmul.f32 %v3168, %v3126
        %v3234 = vmul.f32 %v3169, %v3127
        %v3235 = vmul.f32 %v3170, %v3128
        %v3236 = vmul.f32 %v3201, %v3129
        %v3237 = vmul.f32 %v3229, %v3130
        %v3238 = vpack.c.bf16 %v3231, %v3230
        %v3239 = vpack.c.bf16 %v3233, %v3232
        %v3240 = vpack.c.bf16 %v3235, %v3234
        %v3241 = vpack.c.bf16 %v3237, %v3236
        %v3242 = vld [vmem:[#allocation3 + $0x240] sm:$0xf]
        %v3243 = vld [vmem:[#allocation3 + $0x244] sm:$0xf]
        %v3244 = vld [vmem:[#allocation3 + $0x248] sm:$0xf]
        %v3245 = vld [vmem:[#allocation3 + $0x24c] sm:$0xf]
        %v3246 = vld [vmem:[#allocation3 + $0x250] sm:$0xf]
        %v3247 = vld [vmem:[#allocation3 + $0x254] sm:$0xf]
        %v3248 = vld [vmem:[#allocation3 + $0x258] sm:$0xf]
        %v3249 = vld [vmem:[#allocation3 + $0x25c] sm:$0xf]
        %v3250 = vld [vmem:[#allocation3 + $0x260] sm:$0xf]
        %v3251 = vld [vmem:[#allocation3 + $0x264] sm:$0xf]
        %v3252 = vld [vmem:[#allocation3 + $0x268] sm:$0xf]
        %v3253 = vld [vmem:[#allocation3 + $0x26c] sm:$0xf]
        %v3254 = vld [vmem:[#allocation3 + $0x270] sm:$0xf]
        %v3255 = vld [vmem:[#allocation3 + $0x274] sm:$0xf]
        %v3256 = vld [vmem:[#allocation3 + $0x278] sm:$0xf]
        %v3257 = vld [vmem:[#allocation3 + $0x27c] sm:$0xf]
        %v3258 = vld [vmem:[#allocation3 + $0x280] sm:$0xf]
        %v3259 = vld [vmem:[#allocation3 + $0x284] sm:$0xf]
        %v3260 = vld [vmem:[#allocation3 + $0x288] sm:$0xf]
        %v3261 = vld [vmem:[#allocation3 + $0x28c] sm:$0xf]
        %v3262 = vld [vmem:[#allocation3 + $0x290] sm:$0xf]
        %v3263 = vld [vmem:[#allocation3 + $0x294] sm:$0xf]
        %v3264 = vld [vmem:[#allocation3 + $0x298] sm:$0xf]
        %v3265 = vld [vmem:[#allocation3 + $0x29c] sm:$0xf]
        %v3266 = vld [vmem:[#allocation3 + $0x2a0] sm:$0xf]
        %v3267 = vld [vmem:[#allocation3 + $0x2a4] sm:$0xf]
        %v3268 = vld [vmem:[#allocation3 + $0x2a8] sm:$0xf]
        %v3269 = vld [vmem:[#allocation3 + $0x2ac] sm:$0xf]
        %v3270 = vld [vmem:[#allocation3 + $0x2b0] sm:$0xf]
        %v3271 = vld [vmem:[#allocation3 + $0x2b4] sm:$0xf]
        %v3272 = vld [vmem:[#allocation3 + $0x2b8] sm:$0xf]
        %v3273 = vld [vmem:[#allocation3 + $0x2bc] sm:$0xf]
        %v3274 = vld [vmem:[#allocation3 + $0x2c0] sm:$0xf]
        %v3275 = vld [vmem:[#allocation3 + $0x2c4] sm:$0xf]
        %v3276 = vld [vmem:[#allocation3 + $0x2c8] sm:$0xf]
        %v3277 = vld [vmem:[#allocation3 + $0x2cc] sm:$0xf]
        %v3278 = vld [vmem:[#allocation3 + $0x2d0] sm:$0xf]
        %v3279 = vld [vmem:[#allocation3 + $0x2d4] sm:$0xf]
        %v3280 = vld [vmem:[#allocation3 + $0x2d8] sm:$0xf]
        %v3281 = vld [vmem:[#allocation3 + $0x2dc] sm:$0xf]
        %v3282 = vld [vmem:[#allocation3 + $0x2e0] sm:$0xf]
        %v3283 = vld [vmem:[#allocation3 + $0x2e4] sm:$0xf]
        %v3284 = vld [vmem:[#allocation3 + $0x2e8] sm:$0xf]
        %v3285 = vld [vmem:[#allocation3 + $0x2ec] sm:$0xf]
        %v3286 = vld [vmem:[#allocation3 + $0x2f0] sm:$0xf]
        %v3287 = vld [vmem:[#allocation3 + $0x2f4] sm:$0xf]
        %v3288 = vld [vmem:[#allocation3 + $0x2f8] sm:$0xf]
        %v3289 = vld [vmem:[#allocation3 + $0x2fc] sm:$0xf]
        %v3290 = vld [vmem:[#allocation3 + $0x300] sm:$0xf]
        %v3291 = vld [vmem:[#allocation3 + $0x304] sm:$0xf]
        %v3292 = vld [vmem:[#allocation3 + $0x308] sm:$0xf]
        %v3293 = vld [vmem:[#allocation3 + $0x30c] sm:$0xf]
        %v3294 = vld [vmem:[#allocation3 + $0x310] sm:$0xf]
        %v3295 = vld [vmem:[#allocation3 + $0x314] sm:$0xf]
        %v3296 = vld [vmem:[#allocation3 + $0x318] sm:$0xf]
        %v3297 = vld [vmem:[#allocation3 + $0x31c] sm:$0xf]
        %v3298 = vld [vmem:[#allocation3 + $0x320] sm:$0xf]
        %v3299 = vld [vmem:[#allocation3 + $0x324] sm:$0xf]
        %v3300 = vld [vmem:[#allocation3 + $0x328] sm:$0xf]
        %v3301 = vld [vmem:[#allocation3 + $0x32c] sm:$0xf]
        %v3302 = vld [vmem:[#allocation3 + $0x330] sm:$0xf]
        %v3303 = vld [vmem:[#allocation3 + $0x334] sm:$0xf]
        %v3304 = vld [vmem:[#allocation3 + $0x338] sm:$0xf]
        %v3305 = vld [vmem:[#allocation3 + $0x33c] sm:$0xf]
        %v3306 = vld [vmem:[#allocation3 + $0x340] sm:$0xf]
        %v3307 = vld [vmem:[#allocation3 + $0x344] sm:$0xf]
        %v3308 = vld [vmem:[#allocation3 + $0x348] sm:$0xf]
        %v3309 = vld [vmem:[#allocation3 + $0x34c] sm:$0xf]
        %v3310 = vld [vmem:[#allocation3 + $0x350] sm:$0xf]
        %v3311 = vld [vmem:[#allocation3 + $0x354] sm:$0xf]
        %v3312 = vld [vmem:[#allocation3 + $0x358] sm:$0xf]
        %v3313 = vld [vmem:[#allocation3 + $0x35c] sm:$0xf]
        %v3314 = vld [vmem:[#allocation3 + $0x360] sm:$0xf]
        %v3315 = vld [vmem:[#allocation3 + $0x364] sm:$0xf]
        %v3316 = vld [vmem:[#allocation3 + $0x368] sm:$0xf]
        %v3317 = vld [vmem:[#allocation3 + $0x36c] sm:$0xf]
        %v3318 = vld [vmem:[#allocation3 + $0x370] sm:$0xf]
        %v3319 = vld [vmem:[#allocation3 + $0x374] sm:$0xf]
        %v3320 = vld [vmem:[#allocation3 + $0x378] sm:$0xf]
        %v3321 = vld [vmem:[#allocation3 + $0x37c] sm:$0xf]
        %v3322 = vld [vmem:[#allocation3 + $0x380] sm:$0xf]
        %v3323 = vld [vmem:[#allocation3 + $0x384] sm:$0xf]
        %v3324 = vld [vmem:[#allocation3 + $0x388] sm:$0xf]
        %v3325 = vld [vmem:[#allocation3 + $0x38c] sm:$0xf]
        %v3326 = vld [vmem:[#allocation3 + $0x390] sm:$0xf]
        %v3327 = vld [vmem:[#allocation3 + $0x394] sm:$0xf]
        %v3328 = vld [vmem:[#allocation3 + $0x398] sm:$0xf]
        %v3329 = vld [vmem:[#allocation3 + $0x39c] sm:$0xf]
        %v3330 = vld [vmem:[#allocation3 + $0x3a0] sm:$0xf]
        %v3331 = vld [vmem:[#allocation3 + $0x3a4] sm:$0xf]
        %v3332 = vld [vmem:[#allocation3 + $0x3a8] sm:$0xf]
        %v3333 = vld [vmem:[#allocation3 + $0x3ac] sm:$0xf]
        %v3334 = vld [vmem:[#allocation3 + $0x3b0] sm:$0xf]
        %v3335 = vld [vmem:[#allocation3 + $0x3b4] sm:$0xf]
        %v3336 = vld [vmem:[#allocation3 + $0x3b8] sm:$0xf]
        %v3337 = vld [vmem:[#allocation3 + $0x3bc] sm:$0xf]
        %v3338 = vld [vmem:[#allocation3 + $0x3c0] sm:$0xf]
        %v3339 = vld [vmem:[#allocation3 + $0x3c4] sm:$0xf]
        %v3340 = vld [vmem:[#allocation3 + $0x3c8] sm:$0xf]
        %v3341 = vld [vmem:[#allocation3 + $0x3cc] sm:$0xf]
        %v3342 = vld [vmem:[#allocation3 + $0x3d0] sm:$0xf]
        %v3343 = vld [vmem:[#allocation3 + $0x3d4] sm:$0xf]
        %v3344 = vld [vmem:[#allocation3 + $0x3d8] sm:$0xf]
        %v3345 = vld [vmem:[#allocation3 + $0x3dc] sm:$0xf]
        %v3346 = vld [vmem:[#allocation3 + $0x3e0] sm:$0xf]
        %v3347 = vld [vmem:[#allocation3 + $0x3e4] sm:$0xf]
        %v3348 = vld [vmem:[#allocation3 + $0x3e8] sm:$0xf]
        %v3349 = vld [vmem:[#allocation3 + $0x3ec] sm:$0xf]
        %v3350 = vld [vmem:[#allocation3 + $0x3f0] sm:$0xf]
        %v3351 = vld [vmem:[#allocation3 + $0x3f4] sm:$0xf]
        %v3352 = vld [vmem:[#allocation3 + $0x3f8] sm:$0xf]
        %v3353 = vld [vmem:[#allocation3 + $0x3fc] sm:$0xf]
        %v3354 = vld [vmem:[#allocation3 + $0x400] sm:$0xf]
        %v3355 = vld [vmem:[#allocation3 + $0x404] sm:$0xf]
        %v3356 = vld [vmem:[#allocation3 + $0x408] sm:$0xf]
        %v3357 = vld [vmem:[#allocation3 + $0x40c] sm:$0xf]
        %v3358 = vld [vmem:[#allocation3 + $0x410] sm:$0xf]
        %v3359 = vld [vmem:[#allocation3 + $0x414] sm:$0xf]
        %v3360 = vld [vmem:[#allocation3 + $0x418] sm:$0xf]
        %v3361 = vld [vmem:[#allocation3 + $0x41c] sm:$0xf]
        %v3362 = vld [vmem:[#allocation3 + $0x420] sm:$0xf]
        %v3363 = vld [vmem:[#allocation3 + $0x424] sm:$0xf]
        %v3364 = vld [vmem:[#allocation3 + $0x428] sm:$0xf]
        %v3365 = vld [vmem:[#allocation3 + $0x42c] sm:$0xf]
        %v3366 = vld [vmem:[#allocation3 + $0x430] sm:$0xf]
        %v3367 = vld [vmem:[#allocation3 + $0x434] sm:$0xf]
        %v3368 = vld [vmem:[#allocation3 + $0x438] sm:$0xf]
        %v3369 = vld [vmem:[#allocation3 + $0x43c] sm:$0xf]
        %v3370 = vld [vmem:[#allocation3 + $0x440] sm:$0xf]
        %v3371 = vld [vmem:[#allocation3 + $0x444] sm:$0xf]
        %v3372 = vld [vmem:[#allocation3 + $0x448] sm:$0xf]
        %v3373 = vld [vmem:[#allocation3 + $0x44c] sm:$0xf]
        %v3374 = vld [vmem:[#allocation3 + $0x450] sm:$0xf]
        %v3375 = vld [vmem:[#allocation3 + $0x454] sm:$0xf]
        %v3376 = vld [vmem:[#allocation3 + $0x458] sm:$0xf]
        %v3377 = vld [vmem:[#allocation3 + $0x45c] sm:$0xf]
        %v3378 = vld [vmem:[#allocation3 + $0x460] sm:$0xf]
        %v3379 = vld [vmem:[#allocation3 + $0x464] sm:$0xf]
        %v3380 = vld [vmem:[#allocation3 + $0x468] sm:$0xf]
        %v3381 = vld [vmem:[#allocation3 + $0x46c] sm:$0xf]
        %v3382 = vld [vmem:[#allocation3 + $0x470] sm:$0xf]
        %v3383 = vld [vmem:[#allocation3 + $0x474] sm:$0xf]
        %v3384 = vld [vmem:[#allocation3 + $0x478] sm:$0xf]
        %v3385 = vld [vmem:[#allocation3 + $0x47c] sm:$0xf]
        %v3530 = vunpack.c.l.b16 %v3242
        %v3531 = vunpack.c.l.b16 %v3243
        %v3532 = vunpack.c.l.b16 %v3244
        %v3533 = vunpack.c.l.b16 %v3245
        %v3534 = vunpack.c.l.b16 %v3246
        %v3535 = vunpack.c.l.b16 %v3247
        %v3536 = vunpack.c.l.b16 %v3248
        %v3537 = vunpack.c.l.b16 %v3249
        %v3538 = vunpack.c.l.b16 %v3250
        %v3539 = vunpack.c.l.b16 %v3251
        %v3540 = vunpack.c.l.b16 %v3252
        %v3541 = vunpack.c.l.b16 %v3253
        %v3542 = vunpack.c.l.b16 %v3254
        %v3543 = vunpack.c.l.b16 %v3255
        %v3544 = vunpack.c.l.b16 %v3256
        %v3545 = vunpack.c.l.b16 %v3257
        %v3546 = vunpack.c.l.b16 %v3258
        %v3547 = vunpack.c.l.b16 %v3259
        %v3548 = vunpack.c.l.b16 %v3260
        %v3549 = vunpack.c.l.b16 %v3261
        %v3550 = vunpack.c.l.b16 %v3262
        %v3551 = vunpack.c.l.b16 %v3263
        %v3552 = vunpack.c.l.b16 %v3264
        %v3553 = vunpack.c.l.b16 %v3265
        %v3554 = vunpack.c.l.b16 %v3266
        %v3555 = vunpack.c.l.b16 %v3267
        %v3556 = vunpack.c.l.b16 %v3268
        %v3557 = vunpack.c.l.b16 %v3269
        %v3558 = vunpack.c.l.b16 %v3270
        %v3559 = vunpack.c.l.b16 %v3271
        %v3560 = vunpack.c.l.b16 %v3272
        %v3561 = vunpack.c.l.b16 %v3273
        %v3562 = vunpack.c.l.b16 %v3274
        %v3563 = vunpack.c.l.b16 %v3275
        %v3564 = vunpack.c.l.b16 %v3276
        %v3565 = vunpack.c.l.b16 %v3277
        %v3566 = vunpack.c.l.b16 %v3278
        %v3567 = vunpack.c.l.b16 %v3279
        %v3568 = vunpack.c.l.b16 %v3280
        %v3569 = vunpack.c.l.b16 %v3281
        %v3570 = vunpack.c.l.b16 %v3282
        %v3571 = vunpack.c.l.b16 %v3283
        %v3572 = vunpack.c.l.b16 %v3284
        %v3573 = vunpack.c.l.b16 %v3285
        %v3574 = vunpack.c.l.b16 %v3286
        %v3575 = vunpack.c.l.b16 %v3287
        %v3576 = vunpack.c.l.b16 %v3288
        %v3577 = vunpack.c.l.b16 %v3289
        %v3578 = vunpack.c.l.b16 %v3290
        %v3579 = vunpack.c.l.b16 %v3291
        %v3580 = vunpack.c.l.b16 %v3292
        %v3581 = vunpack.c.l.b16 %v3293
        %v3582 = vunpack.c.l.b16 %v3294
        %v3583 = vunpack.c.l.b16 %v3295
        %v3584 = vunpack.c.l.b16 %v3296
        %v3585 = vunpack.c.l.b16 %v3297
        %v3586 = vunpack.c.l.b16 %v3298
        %v3587 = vunpack.c.l.b16 %v3299
        %v3588 = vunpack.c.l.b16 %v3300
        %v3589 = vunpack.c.l.b16 %v3301
        %v3590 = vunpack.c.l.b16 %v3302
        %v3591 = vunpack.c.l.b16 %v3303
        %v3592 = vunpack.c.l.b16 %v3304
        %v3593 = vunpack.c.l.b16 %v3305
        %v3594 = vunpack.c.l.b16 %v3306
        %v3595 = vunpack.c.l.b16 %v3307
        %v3596 = vunpack.c.l.b16 %v3308
        %v3597 = vunpack.c.l.b16 %v3309
        %v3598 = vunpack.c.l.b16 %v3310
        %v3599 = vunpack.c.l.b16 %v3311
        %v3600 = vunpack.c.l.b16 %v3312
        %v3601 = vunpack.c.l.b16 %v3313
        %v3602 = vunpack.c.l.b16 %v3314
        %v3603 = vunpack.c.l.b16 %v3315
        %v3604 = vunpack.c.l.b16 %v3316
        %v3605 = vunpack.c.l.b16 %v3317
        %v3606 = vunpack.c.l.b16 %v3318
        %v3607 = vunpack.c.l.b16 %v3319
        %v3608 = vunpack.c.l.b16 %v3320
        %v3609 = vunpack.c.l.b16 %v3321
        %v3610 = vunpack.c.l.b16 %v3322
        %v3611 = vunpack.c.l.b16 %v3323
        %v3612 = vunpack.c.l.b16 %v3324
        %v3613 = vunpack.c.l.b16 %v3325
        %v3614 = vunpack.c.l.b16 %v3326
        %v3615 = vunpack.c.l.b16 %v3327
        %v3616 = vunpack.c.l.b16 %v3328
        %v3617 = vunpack.c.l.b16 %v3329
        %v3618 = vunpack.c.l.b16 %v3330
        %v3619 = vunpack.c.l.b16 %v3331
        %v3620 = vunpack.c.l.b16 %v3332
        %v3621 = vunpack.c.l.b16 %v3333
        %v3622 = vunpack.c.l.b16 %v3334
        %v3623 = vunpack.c.l.b16 %v3335
        %v3624 = vunpack.c.l.b16 %v3336
        %v3625 = vunpack.c.l.b16 %v3337
        %v3626 = vunpack.c.l.b16 %v3338
        %v3627 = vunpack.c.l.b16 %v3339
        %v3628 = vunpack.c.l.b16 %v3340
        %v3629 = vunpack.c.l.b16 %v3341
        %v3630 = vunpack.c.l.b16 %v3342
        %v3631 = vunpack.c.l.b16 %v3343
        %v3632 = vunpack.c.l.b16 %v3344
        %v3633 = vunpack.c.l.b16 %v3345
        %v3634 = vunpack.c.l.b16 %v3346
        %v3635 = vunpack.c.l.b16 %v3347
        %v3636 = vunpack.c.l.b16 %v3348
        %v3637 = vunpack.c.l.b16 %v3349
        %v3638 = vunpack.c.l.b16 %v3350
        %v3639 = vunpack.c.l.b16 %v3351
        %v3640 = vunpack.c.l.b16 %v3352
        %v3641 = vunpack.c.l.b16 %v3353
        %v3642 = vunpack.c.l.b16 %v3354
        %v3643 = vunpack.c.l.b16 %v3355
        %v3644 = vunpack.c.l.b16 %v3356
        %v3645 = vunpack.c.l.b16 %v3357
        %v3646 = vunpack.c.l.b16 %v3358
        %v3647 = vunpack.c.l.b16 %v3359
        %v3648 = vunpack.c.l.b16 %v3360
        %v3649 = vunpack.c.l.b16 %v3361
        %v3650 = vunpack.c.l.b16 %v3362
        %v3651 = vunpack.c.l.b16 %v3363
        %v3652 = vunpack.c.l.b16 %v3364
        %v3653 = vunpack.c.l.b16 %v3365
        %v3654 = vunpack.c.l.b16 %v3366
        %v3655 = vunpack.c.l.b16 %v3367
        %v3656 = vunpack.c.l.b16 %v3368
        %v3657 = vunpack.c.l.b16 %v3369
        %v3658 = vunpack.c.l.b16 %v3370
        %v3659 = vunpack.c.l.b16 %v3371
        %v3660 = vunpack.c.l.b16 %v3372
        %v3661 = vunpack.c.l.b16 %v3373
        %v3662 = vunpack.c.l.b16 %v3374
        %v3663 = vunpack.c.l.b16 %v3375
        %v3664 = vunpack.c.l.b16 %v3376
        %v3665 = vunpack.c.l.b16 %v3377
        %v3666 = vunpack.c.l.b16 %v3378
        %v3667 = vunpack.c.l.b16 %v3379
        %v3668 = vunpack.c.l.b16 %v3380
        %v3669 = vunpack.c.l.b16 %v3381
        %v3670 = vunpack.c.l.b16 %v3382
        %v3671 = vunpack.c.l.b16 %v3383
        %v3672 = vunpack.c.l.b16 %v3384
        %v3673 = vunpack.c.l.b16 %v3385
        %v3674 = vpack.c.b16 %v3531, %v3530
        %v3675 = vpack.c.b16 %v3533, %v3532
        %v3676 = vpack.c.b16 %v3535, %v3534
        %v3677 = vpack.c.b16 %v3537, %v3536
        %v3678 = vpack.c.b16 %v3539, %v3538
        %v3679 = vpack.c.b16 %v3541, %v3540
        %v3680 = vpack.c.b16 %v3543, %v3542
        %v3681 = vpack.c.b16 %v3545, %v3544
        %v3682 = vpack.c.b16 %v3547, %v3546
        %v3683 = vpack.c.b16 %v3549, %v3548
        %v3684 = vpack.c.b16 %v3551, %v3550
        %v3685 = vpack.c.b16 %v3553, %v3552
        %v3686 = vpack.c.b16 %v3555, %v3554
        %v3687 = vpack.c.b16 %v3557, %v3556
        %v3688 = vpack.c.b16 %v3559, %v3558
        %v3689 = vpack.c.b16 %v3561, %v3560
        %v3690 = vpack.c.b16 %v3563, %v3562
        %v3691 = vpack.c.b16 %v3565, %v3564
        %v3692 = vpack.c.b16 %v3567, %v3566
        %v3693 = vpack.c.b16 %v3569, %v3568
        %v3694 = vpack.c.b16 %v3571, %v3570
        %v3695 = vpack.c.b16 %v3573, %v3572
        %v3696 = vpack.c.b16 %v3575, %v3574
        %v3697 = vpack.c.b16 %v3577, %v3576
        %v3698 = vpack.c.b16 %v3579, %v3578
        %v3699 = vpack.c.b16 %v3581, %v3580
        %v3700 = vpack.c.b16 %v3583, %v3582
        %v3701 = vpack.c.b16 %v3585, %v3584
        %v3702 = vpack.c.b16 %v3587, %v3586
        %v3703 = vpack.c.b16 %v3589, %v3588
        %v3704 = vpack.c.b16 %v3591, %v3590
        %v3705 = vpack.c.b16 %v3593, %v3592
        %v3706 = vpack.c.b16 %v3595, %v3594
        %v3707 = vpack.c.b16 %v3597, %v3596
        %v3708 = vpack.c.b16 %v3599, %v3598
        %v3709 = vpack.c.b16 %v3601, %v3600
        %v3710 = vpack.c.b16 %v3603, %v3602
        %v3711 = vpack.c.b16 %v3605, %v3604
        %v3712 = vpack.c.b16 %v3607, %v3606
        %v3713 = vpack.c.b16 %v3609, %v3608
        %v3714 = vpack.c.b16 %v3611, %v3610
        %v3715 = vpack.c.b16 %v3613, %v3612
        %v3716 = vpack.c.b16 %v3615, %v3614
        %v3717 = vpack.c.b16 %v3617, %v3616
        %v3718 = vpack.c.b16 %v3619, %v3618
        %v3719 = vpack.c.b16 %v3621, %v3620
        %v3720 = vpack.c.b16 %v3623, %v3622
        %v3721 = vpack.c.b16 %v3625, %v3624
        %v3722 = vpack.c.b16 %v3627, %v3626
        %v3723 = vpack.c.b16 %v3629, %v3628
        %v3724 = vpack.c.b16 %v3631, %v3630
        %v3725 = vpack.c.b16 %v3633, %v3632
        %v3726 = vpack.c.b16 %v3635, %v3634
        %v3727 = vpack.c.b16 %v3637, %v3636
        %v3728 = vpack.c.b16 %v3639, %v3638
        %v3729 = vpack.c.b16 %v3641, %v3640
        %v3730 = vpack.c.b16 %v3643, %v3642
        %v3731 = vpack.c.b16 %v3645, %v3644
        %v3732 = vpack.c.b16 %v3647, %v3646
        %v3733 = vpack.c.b16 %v3649, %v3648
        %v3734 = vpack.c.b16 %v3651, %v3650
        %v3735 = vpack.c.b16 %v3653, %v3652
        %v3736 = vpack.c.b16 %v3655, %v3654
        %v3737 = vpack.c.b16 %v3657, %v3656
        %v3738 = vpack.c.b16 %v3659, %v3658
        %v3739 = vpack.c.b16 %v3661, %v3660
        %v3740 = vpack.c.b16 %v3663, %v3662
        %v3741 = vpack.c.b16 %v3665, %v3664
        %v3742 = vpack.c.b16 %v3667, %v3666
        %v3743 = vpack.c.b16 %v3669, %v3668
        %v3744 = vpack.c.b16 %v3671, %v3670
        %v3745 = vpack.c.b16 %v3673, %v3672
        %3818 = vmatprep.subr.bf16.mxu0 0
        %3819 = vmatpush1.bf16.msra.mxu0 %v3681
        %3820 = vmatprep.subr.bf16.mxu0 0
        %3821 = vmatpush1.bf16.msra.mxu0 %v3680
        %3822 = vmatprep.subr.bf16.mxu0 0
        %3823 = vmatpush1.bf16.msra.mxu0 %v3679
        %3824 = vmatprep.subr.bf16.mxu0 0
        %3825 = vmatpush1.bf16.msra.mxu0 %v3678
        %3826 = vmatprep.subr.bf16.mxu0 0
        %3827 = vmatpush1.bf16.msra.mxu0 %v3677
        %3828 = vmatprep.subr.bf16.mxu0 0
        %3829 = vmatpush1.bf16.msra.mxu0 %v3676
        %3830 = vmatprep.subr.bf16.mxu0 0
        %3831 = vmatpush1.bf16.msra.mxu0 %v3675
        %3832 = vmatprep.subr.bf16.mxu0 0
        %3833 = vmatpush1.bf16.msra.mxu0 %v3674
        %3834 = vmatprep.subr.bf16.mxu0 0
        %3835 = vmatpush2.bf16.msra.mxu0 %v3689
        %3836 = vmatprep.subr.bf16.mxu0 0
        %3837 = vmatpush2.bf16.msra.mxu0 %v3688
        %3838 = vmatprep.subr.bf16.mxu0 0
        %3839 = vmatpush2.bf16.msra.mxu0 %v3687
        %3840 = vmatprep.subr.bf16.mxu0 0
        %3841 = vmatpush2.bf16.msra.mxu0 %v3686
        %3842 = vmatprep.subr.bf16.mxu0 0
        %3843 = vmatpush2.bf16.msra.mxu0 %v3685
        %3844 = vmatprep.subr.bf16.mxu0 0
        %3845 = vmatpush2.bf16.msra.mxu0 %v3684
        %3846 = vmatprep.subr.bf16.mxu0 0
        %3847 = vmatpush2.bf16.msra.mxu0 %v3683
        %3848 = vmatprep.subr.bf16.mxu0 0
        %3849 = vmatpush2.bf16.msra.mxu0 %v3682
        %3850 = vmatprep.mubr.bf16.mxu0 %v3159
        %3851 = vmatmul.mubr.bf16.gmra.mxu0 %v3147
        %v3852 = vpop.f32.mrf.mxu0
        %v3853 = vadd.f32 0.0, %v3852
        %v3854 = vpop.f32.mrf.mxu0
        %v3855 = vpop.f32.mrf.mxu0
        %v3856 = vadd.f32 0.0, %v3855
        %v3857 = vpop.f32.mrf.mxu0
        %3858 = vmatprep.mubr.bf16.mxu0 %v3160
        %3859 = vmatmul.mubr.bf16.gmra.mxu0 %v3148
        %v3860 = vpop.f32.mrf.mxu0
        %v3861 = vadd.f32 0.0, %v3860
        %v3862 = vpop.f32.mrf.mxu0
        %v3863 = vpop.f32.mrf.mxu0
        %v3864 = vadd.f32 0.0, %v3863
        %v3865 = vpop.f32.mrf.mxu0
        %3866 = vmatprep.mubr.bf16.mxu0 %v3161
        %3867 = vmatmul.mubr.bf16.gmra.mxu0 %v3149
        %v3868 = vpop.f32.mrf.mxu0
        %v3869 = vadd.f32 0.0, %v3868
        %v3870 = vpop.f32.mrf.mxu0
        %v3871 = vpop.f32.mrf.mxu0
        %v3872 = vadd.f32 0.0, %v3871
        %v3873 = vpop.f32.mrf.mxu0
        %3874 = vmatprep.mubr.bf16.mxu0 %v3162
        %3875 = vmatmul.mubr.bf16.gmra.mxu0 %v3150
        %v3876 = vpop.f32.mrf.mxu0
        %v3877 = vadd.f32 0.0, %v3876
        %v3878 = vpop.f32.mrf.mxu0
        %v3879 = vpop.f32.mrf.mxu0
        %v3880 = vadd.f32 0.0, %v3879
        %v3881 = vpop.f32.mrf.mxu0
        %3882 = vdwg.mxu0
        %3883 = vmatprep.subr.bf16.mxu0 0
        %3884 = vmatpush1.bf16.msra.mxu0 %v3697
        %3885 = vmatprep.subr.bf16.mxu0 0
        %3886 = vmatpush1.bf16.msra.mxu0 %v3696
        %3887 = vmatprep.subr.bf16.mxu0 0
        %3888 = vmatpush1.bf16.msra.mxu0 %v3695
        %3889 = vmatprep.subr.bf16.mxu0 0
        %3890 = vmatpush1.bf16.msra.mxu0 %v3694
        %3891 = vmatprep.subr.bf16.mxu0 0
        %3892 = vmatpush1.bf16.msra.mxu0 %v3693
        %3893 = vmatprep.subr.bf16.mxu0 0
        %3894 = vmatpush1.bf16.msra.mxu0 %v3692
        %3895 = vmatprep.subr.bf16.mxu0 0
        %3896 = vmatpush1.bf16.msra.mxu0 %v3691
        %3897 = vmatprep.subr.bf16.mxu0 0
        %3898 = vmatpush1.bf16.msra.mxu0 %v3690
        %3899 = vmatprep.subr.bf16.mxu0 0
        %3900 = vmatpush2.bf16.msra.mxu0 %v3705
        %3901 = vmatprep.subr.bf16.mxu0 0
        %3902 = vmatpush2.bf16.msra.mxu0 %v3704
        %3903 = vmatprep.subr.bf16.mxu0 0
        %3904 = vmatpush2.bf16.msra.mxu0 %v3703
        %3905 = vmatprep.subr.bf16.mxu0 0
        %3906 = vmatpush2.bf16.msra.mxu0 %v3702
        %3907 = vmatprep.subr.bf16.mxu0 0
        %3908 = vmatpush2.bf16.msra.mxu0 %v3701
        %3909 = vmatprep.subr.bf16.mxu0 0
        %3910 = vmatpush2.bf16.msra.mxu0 %v3700
        %3911 = vmatprep.subr.bf16.mxu0 0
        %3912 = vmatpush2.bf16.msra.mxu0 %v3699
        %3913 = vmatprep.subr.bf16.mxu0 0
        %3914 = vmatpush2.bf16.msra.mxu0 %v3698
        %3915 = vmatprep.mubr.bf16.mxu0 %v3192
        %3916 = vmatmul.mubr.bf16.gmra.mxu0 %v3179
        %v3917 = vpop.f32.mrf.mxu0
        %v3918 = vadd.f32 %v3853, %v3917
        %v3919 = vpop.f32.mrf.mxu0
        %v3920 = vpop.f32.mrf.mxu0
        %v3921 = vadd.f32 %v3856, %v3920
        %v3922 = vpop.f32.mrf.mxu0
        %3923 = vmatprep.mubr.bf16.mxu0 %v3193
        %3924 = vmatmul.mubr.bf16.gmra.mxu0 %v3180
        %v3925 = vpop.f32.mrf.mxu0
        %v3926 = vadd.f32 %v3861, %v3925
        %v3927 = vpop.f32.mrf.mxu0
        %v3928 = vpop.f32.mrf.mxu0
        %v3929 = vadd.f32 %v3864, %v3928
        %v3930 = vpop.f32.mrf.mxu0
        %3931 = vmatprep.mubr.bf16.mxu0 %v3194
        %3932 = vmatmul.mubr.bf16.gmra.mxu0 %v3181
        %v3933 = vpop.f32.mrf.mxu0
        %v3934 = vadd.f32 %v3869, %v3933
        %v3935 = vpop.f32.mrf.mxu0
        %v3936 = vpop.f32.mrf.mxu0
        %v3937 = vadd.f32 %v3872, %v3936
        %v3938 = vpop.f32.mrf.mxu0
        %3939 = vmatprep.mubr.bf16.mxu0 %v3195
        %3940 = vmatmul.mubr.bf16.gmra.mxu0 %v3182
        %v3941 = vpop.f32.mrf.mxu0
        %v3942 = vadd.f32 %v3877, %v3941
        %v3943 = vpop.f32.mrf.mxu0
        %v3944 = vpop.f32.mrf.mxu0
        %v3945 = vadd.f32 %v3880, %v3944
        %v3946 = vpop.f32.mrf.mxu0
        %3947 = vdwg.mxu0
        %3948 = vmatprep.subr.bf16.mxu0 0
        %3949 = vmatpush1.bf16.msra.mxu0 %v3713
        %3950 = vmatprep.subr.bf16.mxu0 0
        %3951 = vmatpush1.bf16.msra.mxu0 %v3712
        %3952 = vmatprep.subr.bf16.mxu0 0
        %3953 = vmatpush1.bf16.msra.mxu0 %v3711
        %3954 = vmatprep.subr.bf16.mxu0 0
        %3955 = vmatpush1.bf16.msra.mxu0 %v3710
        %3956 = vmatprep.subr.bf16.mxu0 0
        %3957 = vmatpush1.bf16.msra.mxu0 %v3709
        %3958 = vmatprep.subr.bf16.mxu0 0
        %3959 = vmatpush1.bf16.msra.mxu0 %v3708
        %3960 = vmatprep.subr.bf16.mxu0 0
        %3961 = vmatpush1.bf16.msra.mxu0 %v3707
        %3962 = vmatprep.subr.bf16.mxu0 0
        %3963 = vmatpush1.bf16.msra.mxu0 %v3706
        %3964 = vmatprep.subr.bf16.mxu0 0
        %3965 = vmatpush2.bf16.msra.mxu0 %v3721
        %3966 = vmatprep.subr.bf16.mxu0 0
        %3967 = vmatpush2.bf16.msra.mxu0 %v3720
        %3968 = vmatprep.subr.bf16.mxu0 0
        %3969 = vmatpush2.bf16.msra.mxu0 %v3719
        %3970 = vmatprep.subr.bf16.mxu0 0
        %3971 = vmatpush2.bf16.msra.mxu0 %v3718
        %3972 = vmatprep.subr.bf16.mxu0 0
        %3973 = vmatpush2.bf16.msra.mxu0 %v3717
        %3974 = vmatprep.subr.bf16.mxu0 0
        %3975 = vmatpush2.bf16.msra.mxu0 %v3716
        %3976 = vmatprep.subr.bf16.mxu0 0
        %3977 = vmatpush2.bf16.msra.mxu0 %v3715
        %3978 = vmatprep.subr.bf16.mxu0 0
        %3979 = vmatpush2.bf16.msra.mxu0 %v3714
        %3980 = vmatprep.mubr.bf16.mxu0 %v3210
        %3981 = vmatmul.mubr.bf16.gmra.mxu0 %v3197
        %v3982 = vpop.f32.mrf.mxu0
        %v3983 = vadd.f32 %v3918, %v3982
        %v3984 = vpop.f32.mrf.mxu0
        %v3985 = vpop.f32.mrf.mxu0
        %v3986 = vadd.f32 %v3921, %v3985
        %v3987 = vpop.f32.mrf.mxu0
        %3988 = vmatprep.mubr.bf16.mxu0 %v3211
        %3989 = vmatmul.mubr.bf16.gmra.mxu0 %v3198
        %v3990 = vpop.f32.mrf.mxu0
        %v3991 = vadd.f32 %v3926, %v3990
        %v3992 = vpop.f32.mrf.mxu0
        %v3993 = vpop.f32.mrf.mxu0
        %v3994 = vadd.f32 %v3929, %v3993
        %v3995 = vpop.f32.mrf.mxu0
        %3996 = vmatprep.mubr.bf16.mxu0 %v3212
        %3997 = vmatmul.mubr.bf16.gmra.mxu0 %v3199
        %v3998 = vpop.f32.mrf.mxu0
        %v3999 = vadd.f32 %v3934, %v3998
        %v4000 = vpop.f32.mrf.mxu0
        %v4001 = vpop.f32.mrf.mxu0
        %v4002 = vadd.f32 %v3937, %v4001
        %v4003 = vpop.f32.mrf.mxu0
        %4004 = vmatprep.mubr.bf16.mxu0 %v3213
        %4005 = vmatmul.mubr.bf16.gmra.mxu0 %v3200
        %v4006 = vpop.f32.mrf.mxu0
        %v4007 = vadd.f32 %v3942, %v4006
        %v4008 = vpop.f32.mrf.mxu0
        %v4009 = vpop.f32.mrf.mxu0
        %v4010 = vadd.f32 %v3945, %v4009
        %v4011 = vpop.f32.mrf.mxu0
        %4012 = vdwg.mxu0
        %4013 = vmatprep.subr.bf16.mxu0 0
        %4014 = vmatpush1.bf16.msra.mxu0 %v3729
        %4015 = vmatprep.subr.bf16.mxu0 0
        %4016 = vmatpush1.bf16.msra.mxu0 %v3728
        %4017 = vmatprep.subr.bf16.mxu0 0
        %4018 = vmatpush1.bf16.msra.mxu0 %v3727
        %4019 = vmatprep.subr.bf16.mxu0 0
        %4020 = vmatpush1.bf16.msra.mxu0 %v3726
        %4021 = vmatprep.subr.bf16.mxu0 0
        %4022 = vmatpush1.bf16.msra.mxu0 %v3725
        %4023 = vmatprep.subr.bf16.mxu0 0
        %4024 = vmatpush1.bf16.msra.mxu0 %v3724
        %4025 = vmatprep.subr.bf16.mxu0 0
        %4026 = vmatpush1.bf16.msra.mxu0 %v3723
        %4027 = vmatprep.subr.bf16.mxu0 0
        %4028 = vmatpush1.bf16.msra.mxu0 %v3722
        %4029 = vmatprep.subr.bf16.mxu0 0
        %4030 = vmatpush2.bf16.msra.mxu0 %v3737
        %4031 = vmatprep.subr.bf16.mxu0 0
        %4032 = vmatpush2.bf16.msra.mxu0 %v3736
        %4033 = vmatprep.subr.bf16.mxu0 0
        %4034 = vmatpush2.bf16.msra.mxu0 %v3735
        %4035 = vmatprep.subr.bf16.mxu0 0
        %4036 = vmatpush2.bf16.msra.mxu0 %v3734
        %4037 = vmatprep.subr.bf16.mxu0 0
        %4038 = vmatpush2.bf16.msra.mxu0 %v3733
        %4039 = vmatprep.subr.bf16.mxu0 0
        %4040 = vmatpush2.bf16.msra.mxu0 %v3732
        %4041 = vmatprep.subr.bf16.mxu0 0
        %4042 = vmatpush2.bf16.msra.mxu0 %v3731
        %4043 = vmatprep.subr.bf16.mxu0 0
        %4044 = vmatpush2.bf16.msra.mxu0 %v3730
        %4045 = vmatprep.mubr.bf16.mxu0 %v3160
        %4046 = vmatmul.mubr.bf16.gmra.mxu0 %v3223
        %v4047 = vpop.f32.mrf.mxu0
        %v4048 = vadd.f32 %v3983, %v4047
        %v4049 = vpop.f32.mrf.mxu0
        %v4050 = vpop.f32.mrf.mxu0
        %v4051 = vadd.f32 %v3986, %v4050
        %v4052 = vpop.f32.mrf.mxu0
        %4053 = vmatprep.mubr.bf16.mxu0 %v3161
        %4054 = vmatmul.mubr.bf16.gmra.mxu0 %v3224
        %v4055 = vpop.f32.mrf.mxu0
        %v4056 = vadd.f32 %v3991, %v4055
        %v4057 = vpop.f32.mrf.mxu0
        %v4058 = vpop.f32.mrf.mxu0
        %v4059 = vadd.f32 %v3994, %v4058
        %v4060 = vpop.f32.mrf.mxu0
        %4061 = vmatprep.mubr.bf16.mxu0 %v3162
        %4062 = vmatmul.mubr.bf16.gmra.mxu0 %v3225
        %v4063 = vpop.f32.mrf.mxu0
        %v4064 = vadd.f32 %v3999, %v4063
        %v4065 = vpop.f32.mrf.mxu0
        %v4066 = vpop.f32.mrf.mxu0
        %v4067 = vadd.f32 %v4002, %v4066
        %v4068 = vpop.f32.mrf.mxu0
        %4069 = vmatprep.mubr.bf16.mxu0 %v3228
        %4070 = vmatmul.mubr.bf16.gmra.mxu0 %v3226
        %v4071 = vpop.f32.mrf.mxu0
        %v4072 = vadd.f32 %v4007, %v4071
        %v4073 = vpop.f32.mrf.mxu0
        %v4074 = vpop.f32.mrf.mxu0
        %v4075 = vadd.f32 %v4010, %v4074
        %v4076 = vpop.f32.mrf.mxu0
        %4077 = vdwg.mxu0
        %4078 = vmatprep.subr.bf16.mxu0 0
        %4079 = vmatpush1.bf16.msra.mxu0 %v3745
        %4080 = vmatprep.subr.bf16.mxu0 0
        %4081 = vmatpush1.bf16.msra.mxu0 %v3744
        %4082 = vmatprep.subr.bf16.mxu0 0
        %4083 = vmatpush1.bf16.msra.mxu0 %v3743
        %4084 = vmatprep.subr.bf16.mxu0 0
        %4085 = vmatpush1.bf16.msra.mxu0 %v3742
        %4086 = vmatprep.subr.bf16.mxu0 0
        %4087 = vmatpush1.bf16.msra.mxu0 %v3741
        %4088 = vmatprep.subr.bf16.mxu0 0
        %4089 = vmatpush1.bf16.msra.mxu0 %v3740
        %4090 = vmatprep.subr.bf16.mxu0 0
        %4091 = vmatpush1.bf16.msra.mxu0 %v3739
        %4092 = vmatprep.subr.bf16.mxu0 0
        %4093 = vmatpush1.bf16.msra.mxu0 %v3738
        %4094 = vmatprep.subr.bf16.mxu0 0
        %4095 = vmatpush2.bf16.msra.mxu0 0
        %4096 = vmatprep.subr.bf16.mxu0 0
        %4097 = vmatpush2.bf16.msra.mxu0 0
        %4098 = vmatprep.subr.bf16.mxu0 0
        %4099 = vmatpush2.bf16.msra.mxu0 0
        %4100 = vmatprep.subr.bf16.mxu0 0
        %4101 = vmatpush2.bf16.msra.mxu0 0
        %4102 = vmatprep.subr.bf16.mxu0 0
        %4103 = vmatpush2.bf16.msra.mxu0 0
        %4104 = vmatprep.subr.bf16.mxu0 0
        %4105 = vmatpush2.bf16.msra.mxu0 0
        %4106 = vmatprep.subr.bf16.mxu0 0
        %4107 = vmatpush2.bf16.msra.mxu0 0
        %4108 = vmatprep.subr.bf16.mxu0 0
        %4109 = vmatpush2.bf16.msra.mxu0 0
        %4110 = vmatprep.mubr.bf16.mxu0 0
        %4111 = vmatmul.mubr.bf16.gmra.mxu0 %v3238
        %v4112 = vpop.f32.mrf.mxu0
        %v4113 = vadd.f32 %v4048, %v4112
        %v4114 = vpop.f32.mrf.mxu0
        %v4115 = vpop.f32.mrf.mxu0
        %v4116 = vadd.f32 %v4051, %v4115
        %v4117 = vpop.f32.mrf.mxu0
        %4118 = vmatprep.mubr.bf16.mxu0 0
        %4119 = vmatmul.mubr.bf16.gmra.mxu0 %v3239
        %v4120 = vpop.f32.mrf.mxu0
        %v4121 = vadd.f32 %v4056, %v4120
        %v4122 = vpop.f32.mrf.mxu0
        %v4123 = vpop.f32.mrf.mxu0
        %v4124 = vadd.f32 %v4059, %v4123
        %v4125 = vpop.f32.mrf.mxu0
        %4126 = vmatprep.mubr.bf16.mxu0 0
        %4127 = vmatmul.mubr.bf16.gmra.mxu0 %v3240
        %v4128 = vpop.f32.mrf.mxu0
        %v4129 = vadd.f32 %v4064, %v4128
        %v4130 = vpop.f32.mrf.mxu0
        %v4131 = vpop.f32.mrf.mxu0
        %v4132 = vadd.f32 %v4067, %v4131
        %v4133 = vpop.f32.mrf.mxu0
        %4134 = vmatprep.mubr.bf16.mxu0 0
        %4135 = vmatmul.mubr.bf16.gmra.mxu0 %v3241
        %v4136 = vpop.f32.mrf.mxu0
        %v4137 = vadd.f32 %v4072, %v4136
        %v4138 = vpop.f32.mrf.mxu0
        %v4139 = vpop.f32.mrf.mxu0
        %v4140 = vadd.f32 %v4075, %v4139
        %v4141 = vpop.f32.mrf.mxu0
        %4142 = vdwg.mxu0
        %v4143 = vld [vmem:[#allocation5 + $0x10] sm:$0x1]
        %v4144 = vlaneseq
        %v4145 = vshrl.u32 %v4144, 7
        %v4146 = vsub.s32 0, %v4145
        %v4147 = vrot.slane %v4143, %v4146
        %v4148 = vmul.f32 %v4113, %v4147
        %v4149 = vmul.f32 %v4116, %v4147
        %v4150 = vmul.f32 %v4121, %v4147
        %v4151 = vmul.f32 %v4124, %v4147
        %v4152 = vmul.f32 %v4129, %v4147
        %v4153 = vmul.f32 %v4132, %v4147
        %v4154 = vmul.f32 %v4137, %v4147
        %v4155 = vmul.f32 %v4140, %v4147
        %v4156 = vld [vmem:[#allocation5 + $0x18] sm:$0x1]
        %v4157 = vlaneseq
        %v4158 = vshrl.u32 %v4157, 7
        %v4159 = vsub.s32 0, %v4158
        %v4160 = vrot.slane %v4156, %v4159
        %v4161 = vadd.f32 %v4148, %v4160
        %v4162 = vadd.f32 %v4149, %v4160
        %v4163 = vadd.f32 %v4150, %v4160
        %v4164 = vadd.f32 %v4151, %v4160
        %v4165 = vadd.f32 %v4152, %v4160
        %v4166 = vadd.f32 %v4153, %v4160
        %v4167 = vadd.f32 %v4154, %v4160
        %v4168 = vadd.f32 %v4155, %v4160
        %v4169 = vmax.f32 %v4161, 0.0
        %v4170 = vmax.f32 %v4162, 0.0
        %v4171 = vmax.f32 %v4163, 0.0
        %v4172 = vmax.f32 %v4164, 0.0
        %v4173 = vmax.f32 %v4165, 0.0
        %v4174 = vmax.f32 %v4166, 0.0
        %v4175 = vmax.f32 %v4167, 0.0
        %v4176 = vmax.f32 %v4168, 0.0
        %4177 = vst [vmem:[#allocation2] sm:$0xff] %v4169
        %4178 = vst [vmem:[#allocation2 + $0x8] sm:$0xff] %v4170
        %4179 = vst [vmem:[#allocation2 + $0x10] sm:$0xff] %v4171
        %4180 = vst [vmem:[#allocation2 + $0x18] sm:$0xff] %v4172
        %4181 = vst [vmem:[#allocation2 + $0x20] sm:$0xff] %v4173
        %4182 = vst [vmem:[#allocation2 + $0x28] sm:$0xff] %v4174
        %4183 = vst [vmem:[#allocation2 + $0x30] sm:$0xff] %v4175
        %4184 = vst [vmem:[#allocation2 + $0x38] sm:$0xff] %v4176
        %v4185 = vld [vmem:[#allocation2] ss:$2 sm:$0xf]
        %v4186 = vld [vmem:[%s2889] ss:$2 sm:$0xf]
        %s4187 = scalar_lea.vmem [#allocation2], 8
        %v4188 = vld [vmem:[%s4187] ss:$2 sm:$0xf]
        %s4189 = scalar_lea.vmem [#allocation2], 9
        %v4190 = vld [vmem:[%s4189] ss:$2 sm:$0xf]
        %v4191 = vmax.f32 %v4185, %v4186
        %v4192 = vmax.f32 %v4188, %v4190
        %v4193 = vmax.f32 %v4191, %v4192
        %v4194 = vld [vmem:[%s2891] ss:$2 sm:$0xf]
        %v4195 = vld [vmem:[%s2893] ss:$2 sm:$0xf]
        %s4196 = scalar_lea.vmem [#allocation2], 24
        %v4197 = vld [vmem:[%s4196] ss:$2 sm:$0xf]
        %s4198 = scalar_lea.vmem [#allocation2], 25
        %v4199 = vld [vmem:[%s4198] ss:$2 sm:$0xf]
        %v4200 = vmax.f32 %v4194, %v4195
        %v4201 = vmax.f32 %v4197, %v4199
        %v4202 = vmax.f32 %v4200, %v4201
        %v4203 = vld [vmem:[%s2898] ss:$2 sm:$0xf]
        %v4204 = vld [vmem:[%s2900] ss:$2 sm:$0xf]
        %s4205 = scalar_lea.vmem [#allocation2], 40
        %v4206 = vld [vmem:[%s4205] ss:$2 sm:$0xf]
        %s4207 = scalar_lea.vmem [#allocation2], 41
        %v4208 = vld [vmem:[%s4207] ss:$2 sm:$0xf]
        %v4209 = vmax.f32 %v4203, %v4204
        %v4210 = vmax.f32 %v4206, %v4208
        %v4211 = vmax.f32 %v4209, %v4210
        %v4212 = vld [vmem:[%s2902] ss:$2 sm:$0xf]
        %v4213 = vld [vmem:[%s2904] ss:$2 sm:$0xf]
        %s4214 = scalar_lea.vmem [#allocation2], 56
        %v4215 = vld [vmem:[%s4214] ss:$2 sm:$0xf]
        %s4216 = scalar_lea.vmem [#allocation2], 57
        %v4217 = vld [vmem:[%s4216] ss:$2 sm:$0xf]
        %v4218 = vmax.f32 %v4212, %v4213
        %v4219 = vmax.f32 %v4215, %v4217
        %v4220 = vmax.f32 %v4218, %v4219
        %v4222 = vrot.slane %v4202, 4
        %v4225 = vrot.slane %v4220, 4
        %vm4227 = vcmask 1043456
        %v4228 = vsel %vm4227, %v4193, %v4222
        %v4229 = vsel %vm4227, %v4211, %v4225
        %4230 = vst [vmem:[#allocation2] sm:$0x1f] 0.0
        %4231 = vst [vmem:[#allocation2 + $0x15] sm:$0x1f] 0.0
        %4232 = vst [vmem:[#allocation2 + $0x5] sm:$0xff] %v4228
        %4233 = vst [vmem:[#allocation2 + $0xd] sm:$0xff] %v4229
        %vm4234 = vcmp.lt.s32.totalorder %v347, 0
        %v4235 = vsub.s32 0, %v347
        %v4236 = vsel %vm4234, %v4235, %v347
        %v4237 = vshrl.u32 %v4236, 2
        %v4238 = vand.u32 %v4236, 3
        %v4239 = vsub.s32 0, %v4238
        %v4240 = vsel %vm4234, %v4239, %v4238
        %vm4241 = vcmp.lt.s32.totalorder %v348, 0
        %v4242 = vsub.s32 0, %v348
        %v4243 = vsel %vm4241, %v4242, %v348
        %v4244 = vshrl.u32 %v4243, 2
        %v4245 = vand.u32 %v4243, 3
        %v4246 = vsub.s32 0, %v4245
        %v4247 = vsel %vm4241, %v4246, %v4245
        %vm4248 = vcmp.ne.s32.totalorder %v4240, 0
        %vm4249 = vcmp.ne.s32.totalorder %v4247, 0
        %vm4250 = vcmp.lt.s32.totalorder %v4240, 0
        %vm4251 = vcmp.lt.s32.totalorder %v4247, 0
        %vm4252 = vmand %vm4250, %vm4248
        %vm4253 = vmand %vm4251, %vm4249
        %v4254 = vadd.s32 %v4240, 4
        %v4255 = vadd.s32 %v4247, 4
        %v4256 = vsel %vm4252, %v4254, %v4240
        %v4257 = vsel %vm4253, %v4255, %v4247
        %vm4258 = vcmp.ge.s32.totalorder %v4256, 1
        %vm4259 = vcmp.ge.s32.totalorder %v4257, 1
        %v4260 = vsel %vm4258, 1, 0
        %v4261 = vsel %vm4259, 1, 0
        %v4262 = vcvt.s32.f32 %v4260
        %v4263 = vcvt.s32.f32 %v4261
        %vm4264 = vcmp.le.s32.totalorder %v4256, 2
        %vm4265 = vcmp.le.s32.totalorder %v4257, 2
        %v4266 = vsel %vm4264, 1, 0
        %v4267 = vsel %vm4265, 1, 0
        %v4268 = vcvt.s32.f32 %v4266
        %v4269 = vcvt.s32.f32 %v4267
        %v4270 = vld [vmem:[#allocation2] sm:$0xff]
        %v4271 = vld [vmem:[#allocation2 + $0x8] sm:$0xff]
        %v4272 = vmul.f32 %v4270, %v4262
        %v4273 = vmul.f32 %v4271, %v4263
        %v4274 = vpack.c.bf16 %v4273, %v4272
        %v4275 = vld [vmem:[#allocation2 + $0x1] sm:$0xff]
        %v4276 = vld [vmem:[#allocation2 + $0x9] sm:$0xff]
        %v4277 = vpack.c.bf16 %v4276, %v4275
        %v4278 = vld [vmem:[#allocation2 + $0x2] sm:$0xff]
        %v4279 = vld [vmem:[#allocation2 + $0xa] sm:$0xff]
        %v4280 = vmul.f32 %v4278, %v4268
        %v4281 = vmul.f32 %v4279, %v4269
        %v4282 = vpack.c.bf16 %v4281, %v4280
        %v4283 = vld [vmem:[#allocation2 + $0x4] sm:$0xff]
        %v4284 = vld [vmem:[#allocation2 + $0xc] sm:$0xff]
        %v4285 = vmul.f32 %v4283, %v4262
        %v4286 = vmul.f32 %v4284, %v4263
        %v4287 = vpack.c.bf16 %v4286, %v4285
        %v4288 = vld [vmem:[#allocation2 + $0x5] sm:$0xff]
        %v4289 = vld [vmem:[#allocation2 + $0xd] sm:$0xff]
        %v4290 = vpack.c.bf16 %v4289, %v4288
        %v4291 = vld [vmem:[#allocation2 + $0x6] sm:$0xff]
        %v4292 = vld [vmem:[#allocation2 + $0xe] sm:$0xff]
        %v4293 = vmul.f32 %v4291, %v4268
        %v4294 = vmul.f32 %v4292, %v4269
        %v4295 = vpack.c.bf16 %v4294, %v4293
        %v4296 = vld [vmem:[#allocation2 + $0x10] sm:$0xff]
        %v4297 = vmul.f32 %v4271, %v4262
        %v4298 = vmul.f32 %v4296, %v4263
        %v4299 = vpack.c.bf16 %v4298, %v4297
        %v4300 = vld [vmem:[#allocation2 + $0x11] sm:$0xff]
        %v4301 = vpack.c.bf16 %v4300, %v4276
        %v4302 = vld [vmem:[#allocation2 + $0x12] sm:$0xff]
        %v4303 = vmul.f32 %v4279, %v4268
        %v4304 = vmul.f32 %v4302, %v4269
        %v4305 = vpack.c.bf16 %v4304, %v4303
        %v4306 = vld [vmem:[#allocation3 + $0x480] sm:$0xf]
        %v4307 = vld [vmem:[#allocation3 + $0x484] sm:$0xf]
        %v4308 = vld [vmem:[#allocation3 + $0x488] sm:$0xf]
        %v4309 = vld [vmem:[#allocation3 + $0x48c] sm:$0xf]
        %v4310 = vld [vmem:[#allocation3 + $0x490] sm:$0xf]
        %v4311 = vld [vmem:[#allocation3 + $0x494] sm:$0xf]
        %v4312 = vld [vmem:[#allocation3 + $0x498] sm:$0xf]
        %v4313 = vld [vmem:[#allocation3 + $0x49c] sm:$0xf]
        %v4314 = vld [vmem:[#allocation3 + $0x4a0] sm:$0xf]
        %v4315 = vld [vmem:[#allocation3 + $0x4a4] sm:$0xf]
        %v4316 = vld [vmem:[#allocation3 + $0x4a8] sm:$0xf]
        %v4317 = vld [vmem:[#allocation3 + $0x4ac] sm:$0xf]
        %v4318 = vld [vmem:[#allocation3 + $0x4b0] sm:$0xf]
        %v4319 = vld [vmem:[#allocation3 + $0x4b4] sm:$0xf]
        %v4320 = vld [vmem:[#allocation3 + $0x4b8] sm:$0xf]
        %v4321 = vld [vmem:[#allocation3 + $0x4bc] sm:$0xf]
        %v4322 = vld [vmem:[#allocation3 + $0x4c0] sm:$0xf]
        %v4323 = vld [vmem:[#allocation3 + $0x4c4] sm:$0xf]
        %v4324 = vld [vmem:[#allocation3 + $0x4c8] sm:$0xf]
        %v4325 = vld [vmem:[#allocation3 + $0x4cc] sm:$0xf]
        %v4326 = vld [vmem:[#allocation3 + $0x4d0] sm:$0xf]
        %v4327 = vld [vmem:[#allocation3 + $0x4d4] sm:$0xf]
        %v4328 = vld [vmem:[#allocation3 + $0x4d8] sm:$0xf]
        %v4329 = vld [vmem:[#allocation3 + $0x4dc] sm:$0xf]
        %v4330 = vld [vmem:[#allocation3 + $0x4e0] sm:$0xf]
        %v4331 = vld [vmem:[#allocation3 + $0x4e4] sm:$0xf]
        %v4332 = vld [vmem:[#allocation3 + $0x4e8] sm:$0xf]
        %v4333 = vld [vmem:[#allocation3 + $0x4ec] sm:$0xf]
        %v4334 = vld [vmem:[#allocation3 + $0x4f0] sm:$0xf]
        %v4335 = vld [vmem:[#allocation3 + $0x4f4] sm:$0xf]
        %v4336 = vld [vmem:[#allocation3 + $0x4f8] sm:$0xf]
        %v4337 = vld [vmem:[#allocation3 + $0x4fc] sm:$0xf]
        %v4338 = vld [vmem:[#allocation3 + $0x500] sm:$0xf]
        %v4339 = vld [vmem:[#allocation3 + $0x504] sm:$0xf]
        %v4340 = vld [vmem:[#allocation3 + $0x508] sm:$0xf]
        %v4341 = vld [vmem:[#allocation3 + $0x50c] sm:$0xf]
        %v4342 = vld [vmem:[#allocation3 + $0x510] sm:$0xf]
        %v4343 = vld [vmem:[#allocation3 + $0x514] sm:$0xf]
        %v4344 = vld [vmem:[#allocation3 + $0x518] sm:$0xf]
        %v4345 = vld [vmem:[#allocation3 + $0x51c] sm:$0xf]
        %v4346 = vld [vmem:[#allocation3 + $0x520] sm:$0xf]
        %v4347 = vld [vmem:[#allocation3 + $0x524] sm:$0xf]
        %v4348 = vld [vmem:[#allocation3 + $0x528] sm:$0xf]
        %v4349 = vld [vmem:[#allocation3 + $0x52c] sm:$0xf]
        %v4350 = vld [vmem:[#allocation3 + $0x530] sm:$0xf]
        %v4351 = vld [vmem:[#allocation3 + $0x534] sm:$0xf]
        %v4352 = vld [vmem:[#allocation3 + $0x538] sm:$0xf]
        %v4353 = vld [vmem:[#allocation3 + $0x53c] sm:$0xf]
        %v4354 = vld [vmem:[#allocation3 + $0x540] sm:$0xf]
        %v4355 = vld [vmem:[#allocation3 + $0x544] sm:$0xf]
        %v4356 = vld [vmem:[#allocation3 + $0x548] sm:$0xf]
        %v4357 = vld [vmem:[#allocation3 + $0x54c] sm:$0xf]
        %v4358 = vld [vmem:[#allocation3 + $0x550] sm:$0xf]
        %v4359 = vld [vmem:[#allocation3 + $0x554] sm:$0xf]
        %v4360 = vld [vmem:[#allocation3 + $0x558] sm:$0xf]
        %v4361 = vld [vmem:[#allocation3 + $0x55c] sm:$0xf]
        %v4362 = vld [vmem:[#allocation3 + $0x560] sm:$0xf]
        %v4363 = vld [vmem:[#allocation3 + $0x564] sm:$0xf]
        %v4364 = vld [vmem:[#allocation3 + $0x568] sm:$0xf]
        %v4365 = vld [vmem:[#allocation3 + $0x56c] sm:$0xf]
        %v4366 = vld [vmem:[#allocation3 + $0x570] sm:$0xf]
        %v4367 = vld [vmem:[#allocation3 + $0x574] sm:$0xf]
        %v4368 = vld [vmem:[#allocation3 + $0x578] sm:$0xf]
        %v4369 = vld [vmem:[#allocation3 + $0x57c] sm:$0xf]
        %v4370 = vld [vmem:[#allocation3 + $0x580] sm:$0xf]
        %v4371 = vld [vmem:[#allocation3 + $0x584] sm:$0xf]
        %v4372 = vld [vmem:[#allocation3 + $0x588] sm:$0xf]
        %v4373 = vld [vmem:[#allocation3 + $0x58c] sm:$0xf]
        %v4374 = vld [vmem:[#allocation3 + $0x590] sm:$0xf]
        %v4375 = vld [vmem:[#allocation3 + $0x594] sm:$0xf]
        %v4376 = vld [vmem:[#allocation3 + $0x598] sm:$0xf]
        %v4377 = vld [vmem:[#allocation3 + $0x59c] sm:$0xf]
        %v4378 = vld [vmem:[#allocation3 + $0x5a0] sm:$0xf]
        %v4379 = vld [vmem:[#allocation3 + $0x5a4] sm:$0xf]
        %v4380 = vld [vmem:[#allocation3 + $0x5a8] sm:$0xf]
        %v4381 = vld [vmem:[#allocation3 + $0x5ac] sm:$0xf]
        %v4382 = vld [vmem:[#allocation3 + $0x5b0] sm:$0xf]
        %v4383 = vld [vmem:[#allocation3 + $0x5b4] sm:$0xf]
        %v4384 = vld [vmem:[#allocation3 + $0x5b8] sm:$0xf]
        %v4385 = vld [vmem:[#allocation3 + $0x5bc] sm:$0xf]
        %v4386 = vld [vmem:[#allocation3 + $0x5c0] sm:$0xf]
        %v4387 = vld [vmem:[#allocation3 + $0x5c4] sm:$0xf]
        %v4388 = vld [vmem:[#allocation3 + $0x5c8] sm:$0xf]
        %v4389 = vld [vmem:[#allocation3 + $0x5cc] sm:$0xf]
        %v4390 = vld [vmem:[#allocation3 + $0x5d0] sm:$0xf]
        %v4391 = vld [vmem:[#allocation3 + $0x5d4] sm:$0xf]
        %v4392 = vld [vmem:[#allocation3 + $0x5d8] sm:$0xf]
        %v4393 = vld [vmem:[#allocation3 + $0x5dc] sm:$0xf]
        %v4394 = vld [vmem:[#allocation3 + $0x5e0] sm:$0xf]
        %v4395 = vld [vmem:[#allocation3 + $0x5e4] sm:$0xf]
        %v4396 = vld [vmem:[#allocation3 + $0x5e8] sm:$0xf]
        %v4397 = vld [vmem:[#allocation3 + $0x5ec] sm:$0xf]
        %v4398 = vld [vmem:[#allocation3 + $0x5f0] sm:$0xf]
        %v4399 = vld [vmem:[#allocation3 + $0x5f4] sm:$0xf]
        %v4400 = vld [vmem:[#allocation3 + $0x5f8] sm:$0xf]
        %v4401 = vld [vmem:[#allocation3 + $0x5fc] sm:$0xf]
        %v4402 = vld [vmem:[#allocation3 + $0x600] sm:$0xf]
        %v4403 = vld [vmem:[#allocation3 + $0x604] sm:$0xf]
        %v4404 = vld [vmem:[#allocation3 + $0x608] sm:$0xf]
        %v4405 = vld [vmem:[#allocation3 + $0x60c] sm:$0xf]
        %v4406 = vld [vmem:[#allocation3 + $0x610] sm:$0xf]
        %v4407 = vld [vmem:[#allocation3 + $0x614] sm:$0xf]
        %v4408 = vld [vmem:[#allocation3 + $0x618] sm:$0xf]
        %v4409 = vld [vmem:[#allocation3 + $0x61c] sm:$0xf]
        %v4410 = vld [vmem:[#allocation3 + $0x620] sm:$0xf]
        %v4411 = vld [vmem:[#allocation3 + $0x624] sm:$0xf]
        %v4412 = vld [vmem:[#allocation3 + $0x628] sm:$0xf]
        %v4413 = vld [vmem:[#allocation3 + $0x62c] sm:$0xf]
        %v4414 = vld [vmem:[#allocation3 + $0x630] sm:$0xf]
        %v4415 = vld [vmem:[#allocation3 + $0x634] sm:$0xf]
        %v4416 = vld [vmem:[#allocation3 + $0x638] sm:$0xf]
        %v4417 = vld [vmem:[#allocation3 + $0x63c] sm:$0xf]
        %v4418 = vld [vmem:[#allocation3 + $0x640] sm:$0xf]
        %v4419 = vld [vmem:[#allocation3 + $0x644] sm:$0xf]
        %v4420 = vld [vmem:[#allocation3 + $0x648] sm:$0xf]
        %v4421 = vld [vmem:[#allocation3 + $0x64c] sm:$0xf]
        %v4422 = vld [vmem:[#allocation3 + $0x650] sm:$0xf]
        %v4423 = vld [vmem:[#allocation3 + $0x654] sm:$0xf]
        %v4424 = vld [vmem:[#allocation3 + $0x658] sm:$0xf]
        %v4425 = vld [vmem:[#allocation3 + $0x65c] sm:$0xf]
        %v4426 = vld [vmem:[#allocation3 + $0x660] sm:$0xf]
        %v4427 = vld [vmem:[#allocation3 + $0x664] sm:$0xf]
        %v4428 = vld [vmem:[#allocation3 + $0x668] sm:$0xf]
        %v4429 = vld [vmem:[#allocation3 + $0x66c] sm:$0xf]
        %v4430 = vld [vmem:[#allocation3 + $0x670] sm:$0xf]
        %v4431 = vld [vmem:[#allocation3 + $0x674] sm:$0xf]
        %v4432 = vld [vmem:[#allocation3 + $0x678] sm:$0xf]
        %v4433 = vld [vmem:[#allocation3 + $0x67c] sm:$0xf]
        %v4434 = vld [vmem:[#allocation3 + $0x680] sm:$0xf]
        %v4435 = vld [vmem:[#allocation3 + $0x684] sm:$0xf]
        %v4436 = vld [vmem:[#allocation3 + $0x688] sm:$0xf]
        %v4437 = vld [vmem:[#allocation3 + $0x68c] sm:$0xf]
        %v4438 = vld [vmem:[#allocation3 + $0x690] sm:$0xf]
        %v4439 = vld [vmem:[#allocation3 + $0x694] sm:$0xf]
        %v4440 = vld [vmem:[#allocation3 + $0x698] sm:$0xf]
        %v4441 = vld [vmem:[#allocation3 + $0x69c] sm:$0xf]
        %v4442 = vld [vmem:[#allocation3 + $0x6a0] sm:$0xf]
        %v4443 = vld [vmem:[#allocation3 + $0x6a4] sm:$0xf]
        %v4444 = vld [vmem:[#allocation3 + $0x6a8] sm:$0xf]
        %v4445 = vld [vmem:[#allocation3 + $0x6ac] sm:$0xf]
        %v4446 = vld [vmem:[#allocation3 + $0x6b0] sm:$0xf]
        %v4447 = vld [vmem:[#allocation3 + $0x6b4] sm:$0xf]
        %v4448 = vld [vmem:[#allocation3 + $0x6b8] sm:$0xf]
        %v4449 = vld [vmem:[#allocation3 + $0x6bc] sm:$0xf]
        %v4594 = vunpack.c.l.b16 %v4306
        %v4595 = vunpack.c.l.b16 %v4307
        %v4596 = vunpack.c.l.b16 %v4308
        %v4597 = vunpack.c.l.b16 %v4309
        %v4598 = vunpack.c.l.b16 %v4310
        %v4599 = vunpack.c.l.b16 %v4311
        %v4600 = vunpack.c.l.b16 %v4312
        %v4601 = vunpack.c.l.b16 %v4313
        %v4602 = vunpack.c.l.b16 %v4314
        %v4603 = vunpack.c.l.b16 %v4315
        %v4604 = vunpack.c.l.b16 %v4316
        %v4605 = vunpack.c.l.b16 %v4317
        %v4606 = vunpack.c.l.b16 %v4318
        %v4607 = vunpack.c.l.b16 %v4319
        %v4608 = vunpack.c.l.b16 %v4320
        %v4609 = vunpack.c.l.b16 %v4321
        %v4610 = vunpack.c.l.b16 %v4322
        %v4611 = vunpack.c.l.b16 %v4323
        %v4612 = vunpack.c.l.b16 %v4324
        %v4613 = vunpack.c.l.b16 %v4325
        %v4614 = vunpack.c.l.b16 %v4326
        %v4615 = vunpack.c.l.b16 %v4327
        %v4616 = vunpack.c.l.b16 %v4328
        %v4617 = vunpack.c.l.b16 %v4329
        %v4618 = vunpack.c.l.b16 %v4330
        %v4619 = vunpack.c.l.b16 %v4331
        %v4620 = vunpack.c.l.b16 %v4332
        %v4621 = vunpack.c.l.b16 %v4333
        %v4622 = vunpack.c.l.b16 %v4334
        %v4623 = vunpack.c.l.b16 %v4335
        %v4624 = vunpack.c.l.b16 %v4336
        %v4625 = vunpack.c.l.b16 %v4337
        %v4626 = vunpack.c.l.b16 %v4338
        %v4627 = vunpack.c.l.b16 %v4339
        %v4628 = vunpack.c.l.b16 %v4340
        %v4629 = vunpack.c.l.b16 %v4341
        %v4630 = vunpack.c.l.b16 %v4342
        %v4631 = vunpack.c.l.b16 %v4343
        %v4632 = vunpack.c.l.b16 %v4344
        %v4633 = vunpack.c.l.b16 %v4345
        %v4634 = vunpack.c.l.b16 %v4346
        %v4635 = vunpack.c.l.b16 %v4347
        %v4636 = vunpack.c.l.b16 %v4348
        %v4637 = vunpack.c.l.b16 %v4349
        %v4638 = vunpack.c.l.b16 %v4350
        %v4639 = vunpack.c.l.b16 %v4351
        %v4640 = vunpack.c.l.b16 %v4352
        %v4641 = vunpack.c.l.b16 %v4353
        %v4642 = vunpack.c.l.b16 %v4354
        %v4643 = vunpack.c.l.b16 %v4355
        %v4644 = vunpack.c.l.b16 %v4356
        %v4645 = vunpack.c.l.b16 %v4357
        %v4646 = vunpack.c.l.b16 %v4358
        %v4647 = vunpack.c.l.b16 %v4359
        %v4648 = vunpack.c.l.b16 %v4360
        %v4649 = vunpack.c.l.b16 %v4361
        %v4650 = vunpack.c.l.b16 %v4362
        %v4651 = vunpack.c.l.b16 %v4363
        %v4652 = vunpack.c.l.b16 %v4364
        %v4653 = vunpack.c.l.b16 %v4365
        %v4654 = vunpack.c.l.b16 %v4366
        %v4655 = vunpack.c.l.b16 %v4367
        %v4656 = vunpack.c.l.b16 %v4368
        %v4657 = vunpack.c.l.b16 %v4369
        %v4658 = vunpack.c.l.b16 %v4370
        %v4659 = vunpack.c.l.b16 %v4371
        %v4660 = vunpack.c.l.b16 %v4372
        %v4661 = vunpack.c.l.b16 %v4373
        %v4662 = vunpack.c.l.b16 %v4374
        %v4663 = vunpack.c.l.b16 %v4375
        %v4664 = vunpack.c.l.b16 %v4376
        %v4665 = vunpack.c.l.b16 %v4377
        %v4666 = vunpack.c.l.b16 %v4378
        %v4667 = vunpack.c.l.b16 %v4379
        %v4668 = vunpack.c.l.b16 %v4380
        %v4669 = vunpack.c.l.b16 %v4381
        %v4670 = vunpack.c.l.b16 %v4382
        %v4671 = vunpack.c.l.b16 %v4383
        %v4672 = vunpack.c.l.b16 %v4384
        %v4673 = vunpack.c.l.b16 %v4385
        %v4674 = vunpack.c.l.b16 %v4386
        %v4675 = vunpack.c.l.b16 %v4387
        %v4676 = vunpack.c.l.b16 %v4388
        %v4677 = vunpack.c.l.b16 %v4389
        %v4678 = vunpack.c.l.b16 %v4390
        %v4679 = vunpack.c.l.b16 %v4391
        %v4680 = vunpack.c.l.b16 %v4392
        %v4681 = vunpack.c.l.b16 %v4393
        %v4682 = vunpack.c.l.b16 %v4394
        %v4683 = vunpack.c.l.b16 %v4395
        %v4684 = vunpack.c.l.b16 %v4396
        %v4685 = vunpack.c.l.b16 %v4397
        %v4686 = vunpack.c.l.b16 %v4398
        %v4687 = vunpack.c.l.b16 %v4399
        %v4688 = vunpack.c.l.b16 %v4400
        %v4689 = vunpack.c.l.b16 %v4401
        %v4690 = vunpack.c.l.b16 %v4402
        %v4691 = vunpack.c.l.b16 %v4403
        %v4692 = vunpack.c.l.b16 %v4404
        %v4693 = vunpack.c.l.b16 %v4405
        %v4694 = vunpack.c.l.b16 %v4406
        %v4695 = vunpack.c.l.b16 %v4407
        %v4696 = vunpack.c.l.b16 %v4408
        %v4697 = vunpack.c.l.b16 %v4409
        %v4698 = vunpack.c.l.b16 %v4410
        %v4699 = vunpack.c.l.b16 %v4411
        %v4700 = vunpack.c.l.b16 %v4412
        %v4701 = vunpack.c.l.b16 %v4413
        %v4702 = vunpack.c.l.b16 %v4414
        %v4703 = vunpack.c.l.b16 %v4415
        %v4704 = vunpack.c.l.b16 %v4416
        %v4705 = vunpack.c.l.b16 %v4417
        %v4706 = vunpack.c.l.b16 %v4418
        %v4707 = vunpack.c.l.b16 %v4419
        %v4708 = vunpack.c.l.b16 %v4420
        %v4709 = vunpack.c.l.b16 %v4421
        %v4710 = vunpack.c.l.b16 %v4422
        %v4711 = vunpack.c.l.b16 %v4423
        %v4712 = vunpack.c.l.b16 %v4424
        %v4713 = vunpack.c.l.b16 %v4425
        %v4714 = vunpack.c.l.b16 %v4426
        %v4715 = vunpack.c.l.b16 %v4427
        %v4716 = vunpack.c.l.b16 %v4428
        %v4717 = vunpack.c.l.b16 %v4429
        %v4718 = vunpack.c.l.b16 %v4430
        %v4719 = vunpack.c.l.b16 %v4431
        %v4720 = vunpack.c.l.b16 %v4432
        %v4721 = vunpack.c.l.b16 %v4433
        %v4722 = vunpack.c.l.b16 %v4434
        %v4723 = vunpack.c.l.b16 %v4435
        %v4724 = vunpack.c.l.b16 %v4436
        %v4725 = vunpack.c.l.b16 %v4437
        %v4726 = vunpack.c.l.b16 %v4438
        %v4727 = vunpack.c.l.b16 %v4439
        %v4728 = vunpack.c.l.b16 %v4440
        %v4729 = vunpack.c.l.b16 %v4441
        %v4730 = vunpack.c.l.b16 %v4442
        %v4731 = vunpack.c.l.b16 %v4443
        %v4732 = vunpack.c.l.b16 %v4444
        %v4733 = vunpack.c.l.b16 %v4445
        %v4734 = vunpack.c.l.b16 %v4446
        %v4735 = vunpack.c.l.b16 %v4447
        %v4736 = vunpack.c.l.b16 %v4448
        %v4737 = vunpack.c.l.b16 %v4449
        %v4738 = vpack.c.b16 %v4595, %v4594
        %v4739 = vpack.c.b16 %v4597, %v4596
        %v4740 = vpack.c.b16 %v4599, %v4598
        %v4741 = vpack.c.b16 %v4601, %v4600
        %v4742 = vpack.c.b16 %v4603, %v4602
        %v4743 = vpack.c.b16 %v4605, %v4604
        %v4744 = vpack.c.b16 %v4607, %v4606
        %v4745 = vpack.c.b16 %v4609, %v4608
        %v4746 = vpack.c.b16 %v4611, %v4610
        %v4747 = vpack.c.b16 %v4613, %v4612
        %v4748 = vpack.c.b16 %v4615, %v4614
        %v4749 = vpack.c.b16 %v4617, %v4616
        %v4750 = vpack.c.b16 %v4619, %v4618
        %v4751 = vpack.c.b16 %v4621, %v4620
        %v4752 = vpack.c.b16 %v4623, %v4622
        %v4753 = vpack.c.b16 %v4625, %v4624
        %v4754 = vpack.c.b16 %v4627, %v4626
        %v4755 = vpack.c.b16 %v4629, %v4628
        %v4756 = vpack.c.b16 %v4631, %v4630
        %v4757 = vpack.c.b16 %v4633, %v4632
        %v4758 = vpack.c.b16 %v4635, %v4634
        %v4759 = vpack.c.b16 %v4637, %v4636
        %v4760 = vpack.c.b16 %v4639, %v4638
        %v4761 = vpack.c.b16 %v4641, %v4640
        %v4762 = vpack.c.b16 %v4643, %v4642
        %v4763 = vpack.c.b16 %v4645, %v4644
        %v4764 = vpack.c.b16 %v4647, %v4646
        %v4765 = vpack.c.b16 %v4649, %v4648
        %v4766 = vpack.c.b16 %v4651, %v4650
        %v4767 = vpack.c.b16 %v4653, %v4652
        %v4768 = vpack.c.b16 %v4655, %v4654
        %v4769 = vpack.c.b16 %v4657, %v4656
        %v4770 = vpack.c.b16 %v4659, %v4658
        %v4771 = vpack.c.b16 %v4661, %v4660
        %v4772 = vpack.c.b16 %v4663, %v4662
        %v4773 = vpack.c.b16 %v4665, %v4664
        %v4774 = vpack.c.b16 %v4667, %v4666
        %v4775 = vpack.c.b16 %v4669, %v4668
        %v4776 = vpack.c.b16 %v4671, %v4670
        %v4777 = vpack.c.b16 %v4673, %v4672
        %v4778 = vpack.c.b16 %v4675, %v4674
        %v4779 = vpack.c.b16 %v4677, %v4676
        %v4780 = vpack.c.b16 %v4679, %v4678
        %v4781 = vpack.c.b16 %v4681, %v4680
        %v4782 = vpack.c.b16 %v4683, %v4682
        %v4783 = vpack.c.b16 %v4685, %v4684
        %v4784 = vpack.c.b16 %v4687, %v4686
        %v4785 = vpack.c.b16 %v4689, %v4688
        %v4786 = vpack.c.b16 %v4691, %v4690
        %v4787 = vpack.c.b16 %v4693, %v4692
        %v4788 = vpack.c.b16 %v4695, %v4694
        %v4789 = vpack.c.b16 %v4697, %v4696
        %v4790 = vpack.c.b16 %v4699, %v4698
        %v4791 = vpack.c.b16 %v4701, %v4700
        %v4792 = vpack.c.b16 %v4703, %v4702
        %v4793 = vpack.c.b16 %v4705, %v4704
        %v4794 = vpack.c.b16 %v4707, %v4706
        %v4795 = vpack.c.b16 %v4709, %v4708
        %v4796 = vpack.c.b16 %v4711, %v4710
        %v4797 = vpack.c.b16 %v4713, %v4712
        %v4798 = vpack.c.b16 %v4715, %v4714
        %v4799 = vpack.c.b16 %v4717, %v4716
        %v4800 = vpack.c.b16 %v4719, %v4718
        %v4801 = vpack.c.b16 %v4721, %v4720
        %v4802 = vpack.c.b16 %v4723, %v4722
        %v4803 = vpack.c.b16 %v4725, %v4724
        %v4804 = vpack.c.b16 %v4727, %v4726
        %v4805 = vpack.c.b16 %v4729, %v4728
        %v4806 = vpack.c.b16 %v4731, %v4730
        %v4807 = vpack.c.b16 %v4733, %v4732
        %v4808 = vpack.c.b16 %v4735, %v4734
        %v4809 = vpack.c.b16 %v4737, %v4736
        %4882 = vmatprep.subr.bf16.mxu0 0
        %4883 = vmatpush1.bf16.msra.mxu0 %v4745
        %4884 = vmatprep.subr.bf16.mxu0 0
        %4885 = vmatpush1.bf16.msra.mxu0 %v4744
        %4886 = vmatprep.subr.bf16.mxu0 0
        %4887 = vmatpush1.bf16.msra.mxu0 %v4743
        %4888 = vmatprep.subr.bf16.mxu0 0
        %4889 = vmatpush1.bf16.msra.mxu0 %v4742
        %4890 = vmatprep.subr.bf16.mxu0 0
        %4891 = vmatpush1.bf16.msra.mxu0 %v4741
        %4892 = vmatprep.subr.bf16.mxu0 0
        %4893 = vmatpush1.bf16.msra.mxu0 %v4740
        %4894 = vmatprep.subr.bf16.mxu0 0
        %4895 = vmatpush1.bf16.msra.mxu0 %v4739
        %4896 = vmatprep.subr.bf16.mxu0 0
        %4897 = vmatpush1.bf16.msra.mxu0 %v4738
        %4898 = vmatprep.subr.bf16.mxu0 0
        %4899 = vmatpush2.bf16.msra.mxu0 %v4753
        %4900 = vmatprep.subr.bf16.mxu0 0
        %4901 = vmatpush2.bf16.msra.mxu0 %v4752
        %4902 = vmatprep.subr.bf16.mxu0 0
        %4903 = vmatpush2.bf16.msra.mxu0 %v4751
        %4904 = vmatprep.subr.bf16.mxu0 0
        %4905 = vmatpush2.bf16.msra.mxu0 %v4750
        %4906 = vmatprep.subr.bf16.mxu0 0
        %4907 = vmatpush2.bf16.msra.mxu0 %v4749
        %4908 = vmatprep.subr.bf16.mxu0 0
        %4909 = vmatpush2.bf16.msra.mxu0 %v4748
        %4910 = vmatprep.subr.bf16.mxu0 0
        %4911 = vmatpush2.bf16.msra.mxu0 %v4747
        %4912 = vmatprep.subr.bf16.mxu0 0
        %4913 = vmatpush2.bf16.msra.mxu0 %v4746
        %4914 = vmatprep.mubr.bf16.mxu0 %v4277
        %4915 = vmatmul.mubr.bf16.gmra.mxu0 %v4274
        %v4916 = vpop.f32.mrf.mxu0
        %v4917 = vadd.f32 0.0, %v4916
        %v4918 = vpop.f32.mrf.mxu0
        %v4919 = vpop.f32.mrf.mxu0
        %v4920 = vadd.f32 0.0, %v4919
        %v4921 = vpop.f32.mrf.mxu0
        %4922 = vdwg.mxu0
        %4923 = vmatprep.subr.bf16.mxu0 0
        %4924 = vmatpush1.bf16.msra.mxu0 %v4761
        %4925 = vmatprep.subr.bf16.mxu0 0
        %4926 = vmatpush1.bf16.msra.mxu0 %v4760
        %4927 = vmatprep.subr.bf16.mxu0 0
        %4928 = vmatpush1.bf16.msra.mxu0 %v4759
        %4929 = vmatprep.subr.bf16.mxu0 0
        %4930 = vmatpush1.bf16.msra.mxu0 %v4758
        %4931 = vmatprep.subr.bf16.mxu0 0
        %4932 = vmatpush1.bf16.msra.mxu0 %v4757
        %4933 = vmatprep.subr.bf16.mxu0 0
        %4934 = vmatpush1.bf16.msra.mxu0 %v4756
        %4935 = vmatprep.subr.bf16.mxu0 0
        %4936 = vmatpush1.bf16.msra.mxu0 %v4755
        %4937 = vmatprep.subr.bf16.mxu0 0
        %4938 = vmatpush1.bf16.msra.mxu0 %v4754
        %4939 = vmatprep.subr.bf16.mxu0 0
        %4940 = vmatpush2.bf16.msra.mxu0 %v4769
        %4941 = vmatprep.subr.bf16.mxu0 0
        %4942 = vmatpush2.bf16.msra.mxu0 %v4768
        %4943 = vmatprep.subr.bf16.mxu0 0
        %4944 = vmatpush2.bf16.msra.mxu0 %v4767
        %4945 = vmatprep.subr.bf16.mxu0 0
        %4946 = vmatpush2.bf16.msra.mxu0 %v4766
        %4947 = vmatprep.subr.bf16.mxu0 0
        %4948 = vmatpush2.bf16.msra.mxu0 %v4765
        %4949 = vmatprep.subr.bf16.mxu0 0
        %4950 = vmatpush2.bf16.msra.mxu0 %v4764
        %4951 = vmatprep.subr.bf16.mxu0 0
        %4952 = vmatpush2.bf16.msra.mxu0 %v4763
        %4953 = vmatprep.subr.bf16.mxu0 0
        %4954 = vmatpush2.bf16.msra.mxu0 %v4762
        %4955 = vmatprep.mubr.bf16.mxu0 %v4287
        %4956 = vmatmul.mubr.bf16.gmra.mxu0 %v4282
        %v4957 = vpop.f32.mrf.mxu0
        %v4958 = vadd.f32 %v4917, %v4957
        %v4959 = vpop.f32.mrf.mxu0
        %v4960 = vpop.f32.mrf.mxu0
        %v4961 = vadd.f32 %v4920, %v4960
        %v4962 = vpop.f32.mrf.mxu0
        %4963 = vdwg.mxu0
        %4964 = vmatprep.subr.bf16.mxu0 0
        %4965 = vmatpush1.bf16.msra.mxu0 %v4777
        %4966 = vmatprep.subr.bf16.mxu0 0
        %4967 = vmatpush1.bf16.msra.mxu0 %v4776
        %4968 = vmatprep.subr.bf16.mxu0 0
        %4969 = vmatpush1.bf16.msra.mxu0 %v4775
        %4970 = vmatprep.subr.bf16.mxu0 0
        %4971 = vmatpush1.bf16.msra.mxu0 %v4774
        %4972 = vmatprep.subr.bf16.mxu0 0
        %4973 = vmatpush1.bf16.msra.mxu0 %v4773
        %4974 = vmatprep.subr.bf16.mxu0 0
        %4975 = vmatpush1.bf16.msra.mxu0 %v4772
        %4976 = vmatprep.subr.bf16.mxu0 0
        %4977 = vmatpush1.bf16.msra.mxu0 %v4771
        %4978 = vmatprep.subr.bf16.mxu0 0
        %4979 = vmatpush1.bf16.msra.mxu0 %v4770
        %4980 = vmatprep.subr.bf16.mxu0 0
        %4981 = vmatpush2.bf16.msra.mxu0 %v4785
        %4982 = vmatprep.subr.bf16.mxu0 0
        %4983 = vmatpush2.bf16.msra.mxu0 %v4784
        %4984 = vmatprep.subr.bf16.mxu0 0
        %4985 = vmatpush2.bf16.msra.mxu0 %v4783
        %4986 = vmatprep.subr.bf16.mxu0 0
        %4987 = vmatpush2.bf16.msra.mxu0 %v4782
        %4988 = vmatprep.subr.bf16.mxu0 0
        %4989 = vmatpush2.bf16.msra.mxu0 %v4781
        %4990 = vmatprep.subr.bf16.mxu0 0
        %4991 = vmatpush2.bf16.msra.mxu0 %v4780
        %4992 = vmatprep.subr.bf16.mxu0 0
        %4993 = vmatpush2.bf16.msra.mxu0 %v4779
        %4994 = vmatprep.subr.bf16.mxu0 0
        %4995 = vmatpush2.bf16.msra.mxu0 %v4778
        %4996 = vmatprep.mubr.bf16.mxu0 %v4295
        %4997 = vmatmul.mubr.bf16.gmra.mxu0 %v4290
        %v4998 = vpop.f32.mrf.mxu0
        %v4999 = vadd.f32 %v4958, %v4998
        %v5000 = vpop.f32.mrf.mxu0
        %v5001 = vpop.f32.mrf.mxu0
        %v5002 = vadd.f32 %v4961, %v5001
        %v5003 = vpop.f32.mrf.mxu0
        %5004 = vdwg.mxu0
        %5005 = vmatprep.subr.bf16.mxu0 0
        %5006 = vmatpush1.bf16.msra.mxu0 %v4793
        %5007 = vmatprep.subr.bf16.mxu0 0
        %5008 = vmatpush1.bf16.msra.mxu0 %v4792
        %5009 = vmatprep.subr.bf16.mxu0 0
        %5010 = vmatpush1.bf16.msra.mxu0 %v4791
        %5011 = vmatprep.subr.bf16.mxu0 0
        %5012 = vmatpush1.bf16.msra.mxu0 %v4790
        %5013 = vmatprep.subr.bf16.mxu0 0
        %5014 = vmatpush1.bf16.msra.mxu0 %v4789
        %5015 = vmatprep.subr.bf16.mxu0 0
        %5016 = vmatpush1.bf16.msra.mxu0 %v4788
        %5017 = vmatprep.subr.bf16.mxu0 0
        %5018 = vmatpush1.bf16.msra.mxu0 %v4787
        %5019 = vmatprep.subr.bf16.mxu0 0
        %5020 = vmatpush1.bf16.msra.mxu0 %v4786
        %5021 = vmatprep.subr.bf16.mxu0 0
        %5022 = vmatpush2.bf16.msra.mxu0 %v4801
        %5023 = vmatprep.subr.bf16.mxu0 0
        %5024 = vmatpush2.bf16.msra.mxu0 %v4800
        %5025 = vmatprep.subr.bf16.mxu0 0
        %5026 = vmatpush2.bf16.msra.mxu0 %v4799
        %5027 = vmatprep.subr.bf16.mxu0 0
        %5028 = vmatpush2.bf16.msra.mxu0 %v4798
        %5029 = vmatprep.subr.bf16.mxu0 0
        %5030 = vmatpush2.bf16.msra.mxu0 %v4797
        %5031 = vmatprep.subr.bf16.mxu0 0
        %5032 = vmatpush2.bf16.msra.mxu0 %v4796
        %5033 = vmatprep.subr.bf16.mxu0 0
        %5034 = vmatpush2.bf16.msra.mxu0 %v4795
        %5035 = vmatprep.subr.bf16.mxu0 0
        %5036 = vmatpush2.bf16.msra.mxu0 %v4794
        %5037 = vmatprep.mubr.bf16.mxu0 %v4301
        %5038 = vmatmul.mubr.bf16.gmra.mxu0 %v4299
        %v5039 = vpop.f32.mrf.mxu0
        %v5040 = vadd.f32 %v4999, %v5039
        %v5041 = vpop.f32.mrf.mxu0
        %v5042 = vpop.f32.mrf.mxu0
        %v5043 = vadd.f32 %v5002, %v5042
        %v5044 = vpop.f32.mrf.mxu0
        %5045 = vdwg.mxu0
        %5046 = vmatprep.subr.bf16.mxu0 0
        %5047 = vmatpush1.bf16.msra.mxu0 %v4809
        %5048 = vmatprep.subr.bf16.mxu0 0
        %5049 = vmatpush1.bf16.msra.mxu0 %v4808
        %5050 = vmatprep.subr.bf16.mxu0 0
        %5051 = vmatpush1.bf16.msra.mxu0 %v4807
        %5052 = vmatprep.subr.bf16.mxu0 0
        %5053 = vmatpush1.bf16.msra.mxu0 %v4806
        %5054 = vmatprep.subr.bf16.mxu0 0
        %5055 = vmatpush1.bf16.msra.mxu0 %v4805
        %5056 = vmatprep.subr.bf16.mxu0 0
        %5057 = vmatpush1.bf16.msra.mxu0 %v4804
        %5058 = vmatprep.subr.bf16.mxu0 0
        %5059 = vmatpush1.bf16.msra.mxu0 %v4803
        %5060 = vmatprep.subr.bf16.mxu0 0
        %5061 = vmatpush1.bf16.msra.mxu0 %v4802
        %5062 = vmatprep.subr.bf16.mxu0 0
        %5063 = vmatpush2.bf16.msra.mxu0 0
        %5064 = vmatprep.subr.bf16.mxu0 0
        %5065 = vmatpush2.bf16.msra.mxu0 0
        %5066 = vmatprep.subr.bf16.mxu0 0
        %5067 = vmatpush2.bf16.msra.mxu0 0
        %5068 = vmatprep.subr.bf16.mxu0 0
        %5069 = vmatpush2.bf16.msra.mxu0 0
        %5070 = vmatprep.subr.bf16.mxu0 0
        %5071 = vmatpush2.bf16.msra.mxu0 0
        %5072 = vmatprep.subr.bf16.mxu0 0
        %5073 = vmatpush2.bf16.msra.mxu0 0
        %5074 = vmatprep.subr.bf16.mxu0 0
        %5075 = vmatpush2.bf16.msra.mxu0 0
        %5076 = vmatprep.subr.bf16.mxu0 0
        %5077 = vmatpush2.bf16.msra.mxu0 0
        %5078 = vmatprep.mubr.bf16.mxu0 0
        %5079 = vmatmul.mubr.bf16.gmra.mxu0 %v4305
        %v5080 = vpop.f32.mrf.mxu0
        %v5081 = vadd.f32 %v5040, %v5080
        %v5082 = vpop.f32.mrf.mxu0
        %v5083 = vpop.f32.mrf.mxu0
        %v5084 = vadd.f32 %v5043, %v5083
        %v5085 = vpop.f32.mrf.mxu0
        %5086 = vdwg.mxu0
        %v5087 = vld [vmem:[#allocation5 + $0x20] sm:$0x1]
        %v5088 = vlaneseq
        %v5089 = vshrl.u32 %v5088, 7
        %v5090 = vsub.s32 0, %v5089
        %v5091 = vrot.slane %v5087, %v5090
        %v5092 = vmul.f32 %v5081, %v5091
        %v5093 = vmul.f32 %v5084, %v5091
        %v5094 = vld [vmem:[#allocation5 + $0x28] sm:$0x1]
        %v5095 = vlaneseq
        %v5096 = vshrl.u32 %v5095, 7
        %v5097 = vsub.s32 0, %v5096
        %v5098 = vrot.slane %v5094, %v5097
        %v5099 = vadd.f32 %v5092, %v5098
        %v5100 = vadd.f32 %v5093, %v5098
        %v5101 = vmax.f32 %v5099, 0.0
        %v5102 = vmax.f32 %v5100, 0.0
        %v5103 = vpack.c.bf16 %v5102, %v5101
        %v5104 = vld [vmem:[#allocation3 + $0x6c0] sm:$0xf]
        %v5105 = vld [vmem:[#allocation3 + $0x6c4] sm:$0xf]
        %v5106 = vld [vmem:[#allocation3 + $0x6c8] sm:$0xf]
        %v5107 = vld [vmem:[#allocation3 + $0x6cc] sm:$0xf]
        %v5108 = vld [vmem:[#allocation3 + $0x6d0] sm:$0xf]
        %v5109 = vld [vmem:[#allocation3 + $0x6d4] sm:$0xf]
        %v5110 = vld [vmem:[#allocation3 + $0x6d8] sm:$0xf]
        %v5111 = vld [vmem:[#allocation3 + $0x6dc] sm:$0xf]
        %v5112 = vld [vmem:[#allocation3 + $0x6e0] sm:$0xf]
        %v5113 = vld [vmem:[#allocation3 + $0x6e4] sm:$0xf]
        %v5114 = vld [vmem:[#allocation3 + $0x6e8] sm:$0xf]
        %v5115 = vld [vmem:[#allocation3 + $0x6ec] sm:$0xf]
        %v5116 = vld [vmem:[#allocation3 + $0x6f0] sm:$0xf]
        %v5117 = vld [vmem:[#allocation3 + $0x6f4] sm:$0xf]
        %v5118 = vld [vmem:[#allocation3 + $0x6f8] sm:$0xf]
        %v5119 = vld [vmem:[#allocation3 + $0x6fc] sm:$0xf]
        %v5136 = vunpack.c.l.b16 %v5104
        %v5137 = vunpack.c.l.b16 %v5105
        %v5138 = vunpack.c.l.b16 %v5106
        %v5139 = vunpack.c.l.b16 %v5107
        %v5140 = vunpack.c.l.b16 %v5108
        %v5141 = vunpack.c.l.b16 %v5109
        %v5142 = vunpack.c.l.b16 %v5110
        %v5143 = vunpack.c.l.b16 %v5111
        %v5144 = vunpack.c.l.b16 %v5112
        %v5145 = vunpack.c.l.b16 %v5113
        %v5146 = vunpack.c.l.b16 %v5114
        %v5147 = vunpack.c.l.b16 %v5115
        %v5148 = vunpack.c.l.b16 %v5116
        %v5149 = vunpack.c.l.b16 %v5117
        %v5150 = vunpack.c.l.b16 %v5118
        %v5151 = vunpack.c.l.b16 %v5119
        %v5152 = vpack.c.b16 %v5137, %v5136
        %v5153 = vpack.c.b16 %v5139, %v5138
        %v5154 = vpack.c.b16 %v5141, %v5140
        %v5155 = vpack.c.b16 %v5143, %v5142
        %v5156 = vpack.c.b16 %v5145, %v5144
        %v5157 = vpack.c.b16 %v5147, %v5146
        %v5158 = vpack.c.b16 %v5149, %v5148
        %v5159 = vpack.c.b16 %v5151, %v5150
        %5168 = vmatprep.subr.bf16.mxu0 0
        %5169 = vmatpush1.bf16.msra.mxu0 %v5159
        %5170 = vmatprep.subr.bf16.mxu0 0
        %5171 = vmatpush1.bf16.msra.mxu0 %v5158
        %5172 = vmatprep.subr.bf16.mxu0 0
        %5173 = vmatpush1.bf16.msra.mxu0 %v5157
        %5174 = vmatprep.subr.bf16.mxu0 0
        %5175 = vmatpush1.bf16.msra.mxu0 %v5156
        %5176 = vmatprep.subr.bf16.mxu0 0
        %5177 = vmatpush1.bf16.msra.mxu0 %v5155
        %5178 = vmatprep.subr.bf16.mxu0 0
        %5179 = vmatpush1.bf16.msra.mxu0 %v5154
        %5180 = vmatprep.subr.bf16.mxu0 0
        %5181 = vmatpush1.bf16.msra.mxu0 %v5153
        %5182 = vmatprep.subr.bf16.mxu0 0
        %5183 = vmatpush1.bf16.msra.mxu0 %v5152
        %5184 = vmatprep.subr.bf16.mxu0 0
        %5185 = vmatpush2.bf16.msra.mxu0 0
        %5186 = vmatprep.subr.bf16.mxu0 0
        %5187 = vmatpush2.bf16.msra.mxu0 0
        %5188 = vmatprep.subr.bf16.mxu0 0
        %5189 = vmatpush2.bf16.msra.mxu0 0
        %5190 = vmatprep.subr.bf16.mxu0 0
        %5191 = vmatpush2.bf16.msra.mxu0 0
        %5192 = vmatprep.subr.bf16.mxu0 0
        %5193 = vmatpush2.bf16.msra.mxu0 0
        %5194 = vmatprep.subr.bf16.mxu0 0
        %5195 = vmatpush2.bf16.msra.mxu0 0
        %5196 = vmatprep.subr.bf16.mxu0 0
        %5197 = vmatpush2.bf16.msra.mxu0 0
        %5198 = vmatprep.subr.bf16.mxu0 0
        %5199 = vmatpush2.bf16.msra.mxu0 0
        %5200 = vmatprep.mubr.bf16.mxu0 0
        %5201 = vmatmul.mubr.bf16.gmra.mxu0 %v5103
        %v5202 = vpop.f32.mrf.mxu0
        %v5203 = vadd.f32 0.0, %v5202
        %v5204 = vpop.f32.mrf.mxu0
        %v5205 = vpop.f32.mrf.mxu0
        %v5206 = vadd.f32 0.0, %v5205
        %v5207 = vpop.f32.mrf.mxu0
        %5208 = vdwg.mxu0
        %v5209 = vld [vmem:[#allocation5 + $0x30] sm:$0x1]
        %v5210 = vlaneseq
        %v5211 = vshrl.u32 %v5210, 7
        %v5212 = vsub.s32 0, %v5211
        %v5213 = vrot.slane %v5209, %v5212
        %v5214 = vmul.f32 %v5203, %v5213
        %v5215 = vmul.f32 %v5206, %v5213
        %v5216 = vld [vmem:[#allocation5 + $0x38] sm:$0x1]
        %v5217 = vlaneseq
        %v5218 = vshrl.u32 %v5217, 7
        %v5219 = vsub.s32 0, %v5218
        %v5220 = vrot.slane %v5216, %v5219
        %v5221 = vadd.f32 %v5214, %v5220
        %v5222 = vadd.f32 %v5215, %v5220
        %v5223 = vpack.c.bf16 %v5222, %v5221
        %v5224 = vld [vmem:[#allocation3 + $0x700] sm:$0xf]
        %v5225 = vld [vmem:[#allocation3 + $0x704] sm:$0xf]
        %v5226 = vld [vmem:[#allocation3 + $0x708] sm:$0xf]
        %v5227 = vld [vmem:[#allocation3 + $0x70c] sm:$0xf]
        %v5228 = vld [vmem:[#allocation3 + $0x710] sm:$0x3]
        %v5234 = vunpack.c.l.b16 %v5224
        %v5235 = vunpack.c.l.b16 %v5225
        %v5236 = vunpack.c.l.b16 %v5226
        %v5237 = vunpack.c.l.b16 %v5227
        %v5238 = vunpack.c.l.b16 %v5228
        %v5239 = vpack.c.b16 %v5235, %v5234
        %v5240 = vpack.c.b16 %v5237, %v5236
        %v5241 = vpack.c.b16 %v5238, %v5238
        %vm5242 = vcmask 130048
        %v5244 = vsel %vm5242, %v5239, 0
        %v5247 = vsel %vm5242, %v5240, 0
        %v5250 = vsel %vm5242, %v5241, 0
        %5252 = vmatprep.subr.bf16.mxu0 0
        %5253 = vmatpush1.bf16.msra.mxu0 0
        %5254 = vmatprep.subr.bf16.mxu0 0
        %5255 = vmatpush1.bf16.msra.mxu0 0
        %5256 = vmatprep.subr.bf16.mxu0 0
        %5257 = vmatpush1.bf16.msra.mxu0 0
        %5258 = vmatprep.subr.bf16.mxu0 0
        %5259 = vmatpush1.bf16.msra.mxu0 0
        %5260 = vmatprep.subr.bf16.mxu0 0
        %5261 = vmatpush1.bf16.msra.mxu0 0
        %5262 = vmatprep.subr.bf16.mxu0 0
        %5263 = vmatpush1.bf16.msra.mxu0 0
        %5264 = vmatprep.subr.bf16.mxu0 0
        %5265 = vmatpush1.bf16.msra.mxu0 0
        %5266 = vmatprep.subr.bf16.mxu0 0
        %5267 = vmatpush1.bf16.msra.mxu0 %v5223
        %5268 = vmatprep.subr.bf16.mxu0 0
        %5269 = vmatpush2.bf16.msra.mxu0 0
        %5270 = vmatprep.subr.bf16.mxu0 0
        %5271 = vmatpush2.bf16.msra.mxu0 0
        %5272 = vmatprep.subr.bf16.mxu0 0
        %5273 = vmatpush2.bf16.msra.mxu0 0
        %5274 = vmatprep.subr.bf16.mxu0 0
        %5275 = vmatpush2.bf16.msra.mxu0 0
        %5276 = vmatprep.subr.bf16.mxu0 0
        %5277 = vmatpush2.bf16.msra.mxu0 0
        %5278 = vmatprep.subr.bf16.mxu0 0
        %5279 = vmatpush2.bf16.msra.mxu0 0
        %5280 = vmatprep.subr.bf16.mxu0 0
        %5281 = vmatpush2.bf16.msra.mxu0 0
        %5282 = vmatprep.subr.bf16.mxu0 0
        %5283 = vmatpush2.bf16.msra.mxu0 0
        %5284 = vmatprep.mubr.bf16.mxu0 0
        %5285 = vmatmul.mubr.bf16.gmra.mxu0 %v5244
        %v5286 = vpop.f32.mrf.mxu0
        %v5287 = vadd.f32 0.0, %v5286
        %v5288 = vpop.f32.mrf.mxu0
        %v5289 = vpop.f32.mrf.mxu0
        %v5290 = vadd.f32 0.0, %v5289
        %v5291 = vpop.f32.mrf.mxu0
        %5292 = vmatprep.mubr.bf16.mxu0 0
        %5293 = vmatmul.mubr.bf16.gmra.mxu0 %v5247
        %v5294 = vpop.f32.mrf.mxu0
        %v5295 = vadd.f32 0.0, %v5294
        %v5296 = vpop.f32.mrf.mxu0
        %v5297 = vpop.f32.mrf.mxu0
        %v5298 = vadd.f32 0.0, %v5297
        %v5299 = vpop.f32.mrf.mxu0
        %5300 = vmatprep.mubr.bf16.mxu0 0
        %5301 = vmatmul.mubr.bf16.gmra.mxu0 %v5250
        %v5302 = vpop.f32.mrf.mxu0
        %v5303 = vadd.f32 0.0, %v5302
        %v5304 = vpop.f32.mrf.mxu0
        %v5305 = vpop.f32.mrf.mxu0
        %v5306 = vpop.f32.mrf.mxu0
        %5307 = vdwg.mxu0
        %v5308 = vld [vmem:[#allocation5 + $0x40] sm:$0xff]
        %v5309 = vld [vmem:[#allocation5 + $0x48] sm:$0x1]
        %v5310 = vlaneseq
        %v5311 = vshrl.u32 %v5310, 7
        %v5312 = vsub.s32 0, %v5311
        %v5313 = vrot.slane %v5308, %v5312
        %v5314 = vmul.f32 %v5287, %v5313
        %v5315 = vlaneseq
        %v5316 = vshrl.u32 %v5315, 7
        %v5317 = vsub.s32 1, %v5316
        %v5318 = vrot.slane %v5308, %v5317
        %v5319 = vmul.f32 %v5287, %v5318
        %v5321 = vrot.slane %v5319, 4
        %v5323 = vadd.f32 %v5314, %v5321
        %v5324 = vlaneseq
        %v5325 = vshrl.u32 %v5324, 7
        %v5326 = vsub.s32 2, %v5325
        %v5327 = vrot.slane %v5308, %v5326
        %v5328 = vmul.f32 %v5290, %v5327
        %v5329 = vadd.f32 %v5323, %v5328
        %v5330 = vlaneseq
        %v5331 = vshrl.u32 %v5330, 7
        %v5332 = vsub.s32 3, %v5331
        %v5333 = vrot.slane %v5308, %v5332
        %v5334 = vmul.f32 %v5290, %v5333
        %v5336 = vrot.slane %v5334, 4
        %v5338 = vadd.f32 %v5329, %v5336
        %v5339 = vlaneseq
        %v5340 = vshrl.u32 %v5339, 7
        %v5341 = vsub.s32 4, %v5340
        %v5342 = vrot.slane %v5308, %v5341
        %v5343 = vmul.f32 %v5295, %v5342
        %v5344 = vadd.f32 %v5338, %v5343
        %v5345 = vlaneseq
        %v5346 = vshrl.u32 %v5345, 7
        %v5347 = vsub.s32 5, %v5346
        %v5348 = vrot.slane %v5308, %v5347
        %v5349 = vmul.f32 %v5295, %v5348
        %v5351 = vrot.slane %v5349, 4
        %v5353 = vadd.f32 %v5344, %v5351
        %v5354 = vlaneseq
        %v5355 = vshrl.u32 %v5354, 7
        %v5356 = vsub.s32 6, %v5355
        %v5357 = vrot.slane %v5308, %v5356
        %v5358 = vmul.f32 %v5298, %v5357
        %v5359 = vadd.f32 %v5353, %v5358
        %v5360 = vlaneseq
        %v5361 = vshrl.u32 %v5360, 7
        %v5362 = vsub.s32 7, %v5361
        %v5363 = vrot.slane %v5308, %v5362
        %v5364 = vmul.f32 %v5298, %v5363
        %v5366 = vrot.slane %v5364, 4
        %v5368 = vadd.f32 %v5359, %v5366
        %v5369 = vlaneseq
        %v5370 = vshrl.u32 %v5369, 7
        %v5371 = vsub.s32 0, %v5370
        %v5372 = vrot.slane %v5309, %v5371
        %v5373 = vmul.f32 %v5303, %v5372
        %v5374 = vadd.f32 %v5368, %v5373
        %v5375 = vld [vmem:[#allocation5 + $0x50] sm:$0x1]
        %v5376 = vlaneseq
        %v5377 = vshrl.u32 %v5376, 7
        %v5378 = vsub.s32 0, %v5377
        %v5379 = vrot.slane %v5375, %v5378
        %v5380 = vmul.f32 %v5374, %v5379
        %v5381 = vld [vmem:[#allocation5 + $0x58] sm:$0x1]
        %v5382 = vlaneseq
        %v5383 = vshrl.u32 %v5382, 7
        %v5384 = vsub.s32 0, %v5383
        %v5385 = vrot.slane %v5381, %v5384
        %v5386 = vadd.f32 %v5380, %v5385
        %v5387 = vmax.f32 %v5386, 0.0
        %v5388 = vld [vmem:[#allocation3 + $0x718] sm:$0xf]
        %v5389 = vld [vmem:[#allocation3 + $0x71c] sm:$0xf]
        %v5390 = vpack.c.bf16 %v5387, %v5387
        %v5393 = vunpack.c.l.b16 %v5388
        %v5394 = vunpack.c.l.b16 %v5389
        %v5395 = vpack.c.b16 %v5394, %v5393
        %vm5396 = vcmask 31744
        %v5398 = vsel %vm5396, %v5395, 0
        %vm5400 = vcmask 1041408
        %v5402 = vsel %vm5400, %v5390, 0
        %5404 = vmatprep.subr.bf16.mxu0 0
        %5405 = vmatpush1.bf16.msra.mxu0 0
        %5406 = vmatprep.subr.bf16.mxu0 0
        %5407 = vmatpush1.bf16.msra.mxu0 0
        %5408 = vmatprep.subr.bf16.mxu0 0
        %5409 = vmatpush1.bf16.msra.mxu0 0
        %5410 = vmatprep.subr.bf16.mxu0 0
        %5411 = vmatpush1.bf16.msra.mxu0 0
        %5412 = vmatprep.subr.bf16.mxu0 0
        %5413 = vmatpush1.bf16.msra.mxu0 0
        %5414 = vmatprep.subr.bf16.mxu0 0
        %5415 = vmatpush1.bf16.msra.mxu0 0
        %5416 = vmatprep.subr.bf16.mxu0 0
        %5417 = vmatpush1.bf16.msra.mxu0 0
        %5418 = vmatprep.subr.bf16.mxu0 0
        %5419 = vmatpush1.bf16.msra.mxu0 %v5402
        %5420 = vmatprep.subr.bf16.mxu0 0
        %5421 = vmatpush2.bf16.msra.mxu0 0
        %5422 = vmatprep.subr.bf16.mxu0 0
        %5423 = vmatpush2.bf16.msra.mxu0 0
        %5424 = vmatprep.subr.bf16.mxu0 0
        %5425 = vmatpush2.bf16.msra.mxu0 0
        %5426 = vmatprep.subr.bf16.mxu0 0
        %5427 = vmatpush2.bf16.msra.mxu0 0
        %5428 = vmatprep.subr.bf16.mxu0 0
        %5429 = vmatpush2.bf16.msra.mxu0 0
        %5430 = vmatprep.subr.bf16.mxu0 0
        %5431 = vmatpush2.bf16.msra.mxu0 0
        %5432 = vmatprep.subr.bf16.mxu0 0
        %5433 = vmatpush2.bf16.msra.mxu0 0
        %5434 = vmatprep.subr.bf16.mxu0 0
        %5435 = vmatpush2.bf16.msra.mxu0 0
        %5436 = vmatprep.mubr.bf16.mxu0 0
        %5437 = vmatmul.mubr.bf16.gmra.mxu0 %v5398
        %v5438 = vpop.f32.mrf.mxu0
        %v5439 = vadd.f32 0.0, %v5438
        %v5440 = vpop.f32.mrf.mxu0
        %v5441 = vpop.f32.mrf.mxu0
        %v5442 = vadd.f32 0.0, %v5441
        %v5443 = vpop.f32.mrf.mxu0
        %5444 = vdwg.mxu0
        %v5445 = vld [vmem:[#allocation3 + $0x720] sm:$0xf]
        %v5446 = vld [vmem:[#allocation3 + $0x724] sm:$0x1]
        %v5449 = vunpack.c.l.b16 %v5445
        %v5450 = vunpack.c.l.b16 %v5446
        %v5451 = vpack.c.b16 %v5450, %v5449
        %v5453 = vsel %vm5242, %v5451, 0
        %5455 = vmatprep.subr.bf16.mxu0 0
        %5456 = vmatpush1.bf16.msra.mxu0 0
        %5457 = vmatprep.subr.bf16.mxu0 0
        %5458 = vmatpush1.bf16.msra.mxu0 0
        %5459 = vmatprep.subr.bf16.mxu0 0
        %5460 = vmatpush1.bf16.msra.mxu0 0
        %5461 = vmatprep.subr.bf16.mxu0 0
        %5462 = vmatpush1.bf16.msra.mxu0 0
        %5463 = vmatprep.subr.bf16.mxu0 0
        %5464 = vmatpush1.bf16.msra.mxu0 0
        %5465 = vmatprep.subr.bf16.mxu0 0
        %5466 = vmatpush1.bf16.msra.mxu0 0
        %5467 = vmatprep.subr.bf16.mxu0 0
        %5468 = vmatpush1.bf16.msra.mxu0 0
        %5469 = vmatprep.subr.bf16.mxu0 0
        %5470 = vmatpush1.bf16.msra.mxu0 %v5223
        %5471 = vmatprep.subr.bf16.mxu0 0
        %5472 = vmatpush2.bf16.msra.mxu0 0
        %5473 = vmatprep.subr.bf16.mxu0 0
        %5474 = vmatpush2.bf16.msra.mxu0 0
        %5475 = vmatprep.subr.bf16.mxu0 0
        %5476 = vmatpush2.bf16.msra.mxu0 0
        %5477 = vmatprep.subr.bf16.mxu0 0
        %5478 = vmatpush2.bf16.msra.mxu0 0
        %5479 = vmatprep.subr.bf16.mxu0 0
        %5480 = vmatpush2.bf16.msra.mxu0 0
        %5481 = vmatprep.subr.bf16.mxu0 0
        %5482 = vmatpush2.bf16.msra.mxu0 0
        %5483 = vmatprep.subr.bf16.mxu0 0
        %5484 = vmatpush2.bf16.msra.mxu0 0
        %5485 = vmatprep.subr.bf16.mxu0 0
        %5486 = vmatpush2.bf16.msra.mxu0 0
        %5487 = vmatprep.mubr.bf16.mxu0 0
        %5488 = vmatmul.mubr.bf16.gmra.mxu0 %v5453
        %v5489 = vpop.f32.mrf.mxu0
        %v5490 = vadd.f32 0.0, %v5489
        %v5491 = vpop.f32.mrf.mxu0
        %v5492 = vpop.f32.mrf.mxu0
        %v5493 = vadd.f32 0.0, %v5492
        %v5494 = vpop.f32.mrf.mxu0
        %5495 = vdwg.mxu0
        %v5496 = vld [vmem:[#allocation5 + $0x60] sm:$0xff]
        %v5497 = vld [vmem:[#allocation5 + $0x68] sm:$0x1]
        %v5498 = vmul.f32 %v5490, %v5496
        %v5500 = vrot.slane %v5498, 1
        %v5502 = vadd.f32 %v5498, %v5500
        %v5503 = vrot.slane %v5498, 2
        %v5505 = vadd.f32 %v5502, %v5503
        %v5506 = vrot.slane %v5498, 3
        %v5508 = vadd.f32 %v5505, %v5506
        %v5509 = vrot.slane %v5498, 4
        %v5511 = vadd.f32 %v5508, %v5509
        %v5512 = vrot.slane %v5498, 5
        %v5514 = vadd.f32 %v5511, %v5512
        %v5515 = vrot.slane %v5498, 6
        %v5517 = vadd.f32 %v5514, %v5515
        %v5518 = vrot.slane %v5498, 7
        %v5520 = vadd.f32 %v5517, %v5518
        %v5521 = vmul.f32 %v5493, %v5497
        %v5522 = vadd.f32 %v5520, %v5521
        %v5523 = vld [vmem:[#allocation5 + $0x70] sm:$0x1]
        %v5524 = vmul.f32 %v5522, %v5523
        %v5525 = vld [vmem:[#allocation5 + $0x78] sm:$0x1]
        %v5526 = vadd.f32 %v5524, %v5525
        %v5527 = vmax.f32 %v5526, 0.0
        %v5528 = vld [vmem:[#allocation3 + $0x728] sm:$0xf]
        %v5529 = vld [vmem:[#allocation3 + $0x72c] sm:$0xf]
        %v5530 = vpack.c.bf16 %v5527, %v5527
        %v5533 = vunpack.c.l.b16 %v5528
        %v5534 = vunpack.c.l.b16 %v5529
        %v5535 = vpack.c.b16 %v5534, %v5533
        %vm5536 = vcmask 7168
        %v5538 = vsel %vm5536, %v5535, 0
        %vm5540 = vcmask 1040384
        %v5541 = vsel 0, 4294967295, 65535
        %v5542 = vsel %vm5540, %v5541, 0
        %v5544 = vand.u32 %v5530, %v5542
        %5546 = vmatprep.subr.bf16.mxu0 0
        %5547 = vmatpush1.bf16.msra.mxu0 0
        %5548 = vmatprep.subr.bf16.mxu0 0
        %5549 = vmatpush1.bf16.msra.mxu0 0
        %5550 = vmatprep.subr.bf16.mxu0 0
        %5551 = vmatpush1.bf16.msra.mxu0 0
        %5552 = vmatprep.subr.bf16.mxu0 0
        %5553 = vmatpush1.bf16.msra.mxu0 0
        %5554 = vmatprep.subr.bf16.mxu0 0
        %5555 = vmatpush1.bf16.msra.mxu0 0
        %5556 = vmatprep.subr.bf16.mxu0 0
        %5557 = vmatpush1.bf16.msra.mxu0 0
        %5558 = vmatprep.subr.bf16.mxu0 0
        %5559 = vmatpush1.bf16.msra.mxu0 0
        %5560 = vmatprep.subr.bf16.mxu0 0
        %5561 = vmatpush1.bf16.msra.mxu0 %v5544
        %5562 = vmatprep.subr.bf16.mxu0 0
        %5563 = vmatpush2.bf16.msra.mxu0 0
        %5564 = vmatprep.subr.bf16.mxu0 0
        %5565 = vmatpush2.bf16.msra.mxu0 0
        %5566 = vmatprep.subr.bf16.mxu0 0
        %5567 = vmatpush2.bf16.msra.mxu0 0
        %5568 = vmatprep.subr.bf16.mxu0 0
        %5569 = vmatpush2.bf16.msra.mxu0 0
        %5570 = vmatprep.subr.bf16.mxu0 0
        %5571 = vmatpush2.bf16.msra.mxu0 0
        %5572 = vmatprep.subr.bf16.mxu0 0
        %5573 = vmatpush2.bf16.msra.mxu0 0
        %5574 = vmatprep.subr.bf16.mxu0 0
        %5575 = vmatpush2.bf16.msra.mxu0 0
        %5576 = vmatprep.subr.bf16.mxu0 0
        %5577 = vmatpush2.bf16.msra.mxu0 0
        %5578 = vmatprep.mubr.bf16.mxu0 0
        %5579 = vmatmul.mubr.bf16.gmra.mxu0 %v5538
        %v5580 = vpop.f32.mrf.mxu0
        %v5581 = vadd.f32 0.0, %v5580
        %v5582 = vpop.f32.mrf.mxu0
        %v5583 = vpop.f32.mrf.mxu0
        %v5584 = vadd.f32 0.0, %v5583
        %v5585 = vpop.f32.mrf.mxu0
        %5586 = vdwg.mxu0
        %v5587 = vpack.c.bf16 %v5442, %v5439
        %v5588 = vld [vmem:[#allocation3 + $0x730] sm:$0xf]
        %v5589 = vld [vmem:[#allocation3 + $0x734] sm:$0xf]
        %v5590 = vld [vmem:[#allocation3 + $0x738] sm:$0xf]
        %v5591 = vld [vmem:[#allocation3 + $0x73c] sm:$0xf]
        %v5592 = vld [vmem:[#allocation3 + $0x740] sm:$0xf]
        %v5593 = vld [vmem:[#allocation3 + $0x744] sm:$0xf]
        %v5594 = vld [vmem:[#allocation3 + $0x748] sm:$0xf]
        %v5595 = vld [vmem:[#allocation3 + $0x74c] sm:$0xf]
        %v5596 = vld [vmem:[#allocation3 + $0x750] sm:$0xf]
        %v5597 = vld [vmem:[#allocation3 + $0x754] sm:$0xf]
        %v5598 = vld [vmem:[#allocation3 + $0x758] sm:$0xf]
        %v5599 = vld [vmem:[#allocation3 + $0x75c] sm:$0xf]
        %v5600 = vld [vmem:[#allocation3 + $0x760] sm:$0xf]
        %v5601 = vld [vmem:[#allocation3 + $0x764] sm:$0xf]
        %v5602 = vld [vmem:[#allocation3 + $0x768] sm:$0xf]
        %v5603 = vld [vmem:[#allocation3 + $0x76c] sm:$0xf]
        %v5604 = vpack.c.bf16 %v5584, %v5581
        %v5605 = vld [vmem:[#allocation3 + $0x770] sm:$0xf]
        %v5606 = vld [vmem:[#allocation3 + $0x774] sm:$0xf]
        %v5607 = vld [vmem:[#allocation3 + $0x778] sm:$0xf]
        %v5608 = vld [vmem:[#allocation3 + $0x77c] sm:$0xf]
        %v5609 = vld [vmem:[#allocation3 + $0x780] sm:$0xf]
        %v5610 = vld [vmem:[#allocation3 + $0x784] sm:$0xf]
        %v5611 = vld [vmem:[#allocation3 + $0x788] sm:$0xf]
        %v5612 = vld [vmem:[#allocation3 + $0x78c] sm:$0xf]
        %v5613 = vld [vmem:[#allocation3 + $0x790] sm:$0xf]
        %v5614 = vld [vmem:[#allocation3 + $0x794] sm:$0xf]
        %v5615 = vld [vmem:[#allocation3 + $0x798] sm:$0xf]
        %v5616 = vld [vmem:[#allocation3 + $0x79c] sm:$0xf]
        %v5617 = vld [vmem:[#allocation3 + $0x7a0] sm:$0xf]
        %v5618 = vld [vmem:[#allocation3 + $0x7a4] sm:$0xf]
        %v5619 = vld [vmem:[#allocation3 + $0x7a8] sm:$0xf]
        %v5620 = vld [vmem:[#allocation3 + $0x7ac] sm:$0xf]
        %v5637 = vunpack.c.l.b16 %v5605
        %v5638 = vunpack.c.l.b16 %v5606
        %v5639 = vunpack.c.l.b16 %v5607
        %v5640 = vunpack.c.l.b16 %v5608
        %v5641 = vunpack.c.l.b16 %v5609
        %v5642 = vunpack.c.l.b16 %v5610
        %v5643 = vunpack.c.l.b16 %v5611
        %v5644 = vunpack.c.l.b16 %v5612
        %v5645 = vunpack.c.l.b16 %v5613
        %v5646 = vunpack.c.l.b16 %v5614
        %v5647 = vunpack.c.l.b16 %v5615
        %v5648 = vunpack.c.l.b16 %v5616
        %v5649 = vunpack.c.l.b16 %v5617
        %v5650 = vunpack.c.l.b16 %v5618
        %v5651 = vunpack.c.l.b16 %v5619
        %v5652 = vunpack.c.l.b16 %v5620
        %v5653 = vpack.c.b16 %v5638, %v5637
        %v5654 = vpack.c.b16 %v5640, %v5639
        %v5655 = vpack.c.b16 %v5642, %v5641
        %v5656 = vpack.c.b16 %v5644, %v5643
        %v5657 = vpack.c.b16 %v5646, %v5645
        %v5658 = vpack.c.b16 %v5648, %v5647
        %v5659 = vpack.c.b16 %v5650, %v5649
        %v5660 = vpack.c.b16 %v5652, %v5651
        %5669 = vmatprep.subr.bf16.mxu0 0
        %5670 = vmatpush1.bf16.msra.mxu0 %v5660
        %5671 = vmatprep.subr.bf16.mxu0 0
        %5672 = vmatpush1.bf16.msra.mxu0 %v5659
        %5673 = vmatprep.subr.bf16.mxu0 0
        %5674 = vmatpush1.bf16.msra.mxu0 %v5658
        %5675 = vmatprep.subr.bf16.mxu0 0
        %5676 = vmatpush1.bf16.msra.mxu0 %v5657
        %5677 = vmatprep.subr.bf16.mxu0 0
        %5678 = vmatpush1.bf16.msra.mxu0 %v5656
        %5679 = vmatprep.subr.bf16.mxu0 0
        %5680 = vmatpush1.bf16.msra.mxu0 %v5655
        %5681 = vmatprep.subr.bf16.mxu0 0
        %5682 = vmatpush1.bf16.msra.mxu0 %v5654
        %5683 = vmatprep.subr.bf16.mxu0 0
        %5684 = vmatpush1.bf16.msra.mxu0 %v5653
        %5685 = vmatprep.subr.bf16.mxu0 0
        %5686 = vmatpush2.bf16.msra.mxu0 0
        %5687 = vmatprep.subr.bf16.mxu0 0
        %5688 = vmatpush2.bf16.msra.mxu0 0
        %5689 = vmatprep.subr.bf16.mxu0 0
        %5690 = vmatpush2.bf16.msra.mxu0 0
        %5691 = vmatprep.subr.bf16.mxu0 0
        %5692 = vmatpush2.bf16.msra.mxu0 0
        %5693 = vmatprep.subr.bf16.mxu0 0
        %5694 = vmatpush2.bf16.msra.mxu0 0
        %5695 = vmatprep.subr.bf16.mxu0 0
        %5696 = vmatpush2.bf16.msra.mxu0 0
        %5697 = vmatprep.subr.bf16.mxu0 0
        %5698 = vmatpush2.bf16.msra.mxu0 0
        %5699 = vmatprep.subr.bf16.mxu0 0
        %5700 = vmatpush2.bf16.msra.mxu0 0
        %5701 = vmatprep.mubr.bf16.mxu0 0
        %5702 = vmatmul.mubr.bf16.gmra.mxu0 %v5604
        %v5703 = vpop.f32.mrf.mxu0
        %v5704 = vadd.f32 0.0, %v5703
        %v5705 = vpop.f32.mrf.mxu0
        %v5706 = vpop.f32.mrf.mxu0
        %v5707 = vadd.f32 0.0, %v5706
        %v5708 = vpop.f32.mrf.mxu0
        %5709 = vdwg.mxu0
        %v5726 = vunpack.c.l.b16 %v5588
        %v5727 = vunpack.c.l.b16 %v5589
        %v5728 = vunpack.c.l.b16 %v5590
        %v5729 = vunpack.c.l.b16 %v5591
        %v5730 = vunpack.c.l.b16 %v5592
        %v5731 = vunpack.c.l.b16 %v5593
        %v5732 = vunpack.c.l.b16 %v5594
        %v5733 = vunpack.c.l.b16 %v5595
        %v5734 = vunpack.c.l.b16 %v5596
        %v5735 = vunpack.c.l.b16 %v5597
        %v5736 = vunpack.c.l.b16 %v5598
        %v5737 = vunpack.c.l.b16 %v5599
        %v5738 = vunpack.c.l.b16 %v5600
        %v5739 = vunpack.c.l.b16 %v5601
        %v5740 = vunpack.c.l.b16 %v5602
        %v5741 = vunpack.c.l.b16 %v5603
        %v5742 = vpack.c.b16 %v5727, %v5726
        %v5743 = vpack.c.b16 %v5729, %v5728
        %v5744 = vpack.c.b16 %v5731, %v5730
        %v5745 = vpack.c.b16 %v5733, %v5732
        %v5746 = vpack.c.b16 %v5735, %v5734
        %v5747 = vpack.c.b16 %v5737, %v5736
        %v5748 = vpack.c.b16 %v5739, %v5738
        %v5749 = vpack.c.b16 %v5741, %v5740
        %5758 = vmatprep.subr.bf16.mxu0 0
        %5759 = vmatpush1.bf16.msra.mxu0 %v5749
        %5760 = vmatprep.subr.bf16.mxu0 0
        %5761 = vmatpush1.bf16.msra.mxu0 %v5748
        %5762 = vmatprep.subr.bf16.mxu0 0
        %5763 = vmatpush1.bf16.msra.mxu0 %v5747
        %5764 = vmatprep.subr.bf16.mxu0 0
        %5765 = vmatpush1.bf16.msra.mxu0 %v5746
        %5766 = vmatprep.subr.bf16.mxu0 0
        %5767 = vmatpush1.bf16.msra.mxu0 %v5745
        %5768 = vmatprep.subr.bf16.mxu0 0
        %5769 = vmatpush1.bf16.msra.mxu0 %v5744
        %5770 = vmatprep.subr.bf16.mxu0 0
        %5771 = vmatpush1.bf16.msra.mxu0 %v5743
        %5772 = vmatprep.subr.bf16.mxu0 0
        %5773 = vmatpush1.bf16.msra.mxu0 %v5742
        %5774 = vmatprep.subr.bf16.mxu0 0
        %5775 = vmatpush2.bf16.msra.mxu0 0
        %5776 = vmatprep.subr.bf16.mxu0 0
        %5777 = vmatpush2.bf16.msra.mxu0 0
        %5778 = vmatprep.subr.bf16.mxu0 0
        %5779 = vmatpush2.bf16.msra.mxu0 0
        %5780 = vmatprep.subr.bf16.mxu0 0
        %5781 = vmatpush2.bf16.msra.mxu0 0
        %5782 = vmatprep.subr.bf16.mxu0 0
        %5783 = vmatpush2.bf16.msra.mxu0 0
        %5784 = vmatprep.subr.bf16.mxu0 0
        %5785 = vmatpush2.bf16.msra.mxu0 0
        %5786 = vmatprep.subr.bf16.mxu0 0
        %5787 = vmatpush2.bf16.msra.mxu0 0
        %5788 = vmatprep.subr.bf16.mxu0 0
        %5789 = vmatpush2.bf16.msra.mxu0 0
        %5790 = vmatprep.mubr.bf16.mxu0 0
        %5791 = vmatmul.mubr.bf16.gmra.mxu0 %v5587
        %v5792 = vpop.f32.mrf.mxu0
        %v5793 = vadd.f32 %v5704, %v5792
        %v5794 = vpop.f32.mrf.mxu0
        %v5795 = vpop.f32.mrf.mxu0
        %v5796 = vadd.f32 %v5707, %v5795
        %v5797 = vpop.f32.mrf.mxu0
        %5798 = vdwg.mxu0
        %v5799 = vld [vmem:[#allocation5 + $0x80] sm:$0x1]
        %v5800 = vlaneseq
        %v5801 = vshrl.u32 %v5800, 7
        %v5802 = vsub.s32 0, %v5801
        %v5803 = vrot.slane %v5799, %v5802
        %v5804 = vmul.f32 %v5793, %v5803
        %v5805 = vmul.f32 %v5796, %v5803
        %v5806 = vld [vmem:[#allocation5 + $0x88] sm:$0x1]
        %v5807 = vlaneseq
        %v5808 = vshrl.u32 %v5807, 7
        %v5809 = vsub.s32 0, %v5808
        %v5810 = vrot.slane %v5806, %v5809
        %v5811 = vadd.f32 %v5804, %v5810
        %v5812 = vadd.f32 %v5805, %v5810
        %v5813 = vadd.f32 %v5811, %v5101
        %v5814 = vadd.f32 %v5812, %v5102
        %vm5815 = vcmp.ge.f32.partialorder %v5813, 0.0
        %vm5816 = vcmp.ge.f32.partialorder %v5814, 0.0
        %v5817 = vld [vmem:[#allocation5 + $0x90] sm:$0x1]
        %v5818 = vlaneseq
        %v5819 = vshrl.u32 %v5818, 7
        %v5820 = vsub.s32 0, %v5819
        %v5821 = vrot.slane %v5817, %v5820
        %v5822 = vmul.f32 %v5813, %v5821
        %v5823 = vmul.f32 %v5814, %v5821
        %v5824 = vsel %vm5815, %v5813, %v5822
        %v5825 = vsel %vm5816, %v5814, %v5823
        %v5826 = vld [vmem:[#allocation3 + $0xc70] sm:$0xf]
        %v5827 = vld [vmem:[#allocation3 + $0xc74] sm:$0xf]
        %v5828 = vld [vmem:[#allocation3 + $0xc78] sm:$0xf]
        %v5829 = vld [vmem:[#allocation3 + $0xc7c] sm:$0xf]
        %v5830 = vld [vmem:[#allocation3 + $0xc80] sm:$0xf]
        %v5831 = vld [vmem:[#allocation3 + $0xc84] sm:$0xf]
        %v5832 = vld [vmem:[#allocation3 + $0xc88] sm:$0xf]
        %v5833 = vld [vmem:[#allocation3 + $0xc8c] sm:$0xf]
        %v5834 = vpack.c.bf16 %v5825, %v5824
        %v5843 = vunpack.c.l.b16 %v5826
        %v5844 = vunpack.c.l.b16 %v5827
        %v5845 = vunpack.c.l.b16 %v5828
        %v5846 = vunpack.c.l.b16 %v5829
        %v5847 = vunpack.c.l.b16 %v5830
        %v5848 = vunpack.c.l.b16 %v5831
        %v5849 = vunpack.c.l.b16 %v5832
        %v5850 = vunpack.c.l.b16 %v5833
        %v5851 = vpack.c.b16 %v5844, %v5843
        %v5852 = vpack.c.b16 %v5846, %v5845
        %v5853 = vpack.c.b16 %v5848, %v5847
        %v5854 = vpack.c.b16 %v5850, %v5849
        %v5856 = vsel %vm5242, %v5851, 0
        %v5859 = vsel %vm5242, %v5852, 0
        %v5862 = vsel %vm5242, %v5853, 0
        %v5865 = vsel %vm5242, %v5854, 0
        %5867 = vmatprep.subr.bf16.mxu0 0
        %5868 = vmatpush1.bf16.msra.mxu0 0
        %5869 = vmatprep.subr.bf16.mxu0 0
        %5870 = vmatpush1.bf16.msra.mxu0 0
        %5871 = vmatprep.subr.bf16.mxu0 0
        %5872 = vmatpush1.bf16.msra.mxu0 0
        %5873 = vmatprep.subr.bf16.mxu0 0
        %5874 = vmatpush1.bf16.msra.mxu0 0
        %5875 = vmatprep.subr.bf16.mxu0 0
        %5876 = vmatpush1.bf16.msra.mxu0 0
        %5877 = vmatprep.subr.bf16.mxu0 0
        %5878 = vmatpush1.bf16.msra.mxu0 0
        %5879 = vmatprep.subr.bf16.mxu0 0
        %5880 = vmatpush1.bf16.msra.mxu0 0
        %5881 = vmatprep.subr.bf16.mxu0 0
        %5882 = vmatpush1.bf16.msra.mxu0 %v5834
        %5883 = vmatprep.subr.bf16.mxu0 0
        %5884 = vmatpush2.bf16.msra.mxu0 0
        %5885 = vmatprep.subr.bf16.mxu0 0
        %5886 = vmatpush2.bf16.msra.mxu0 0
        %5887 = vmatprep.subr.bf16.mxu0 0
        %5888 = vmatpush2.bf16.msra.mxu0 0
        %5889 = vmatprep.subr.bf16.mxu0 0
        %5890 = vmatpush2.bf16.msra.mxu0 0
        %5891 = vmatprep.subr.bf16.mxu0 0
        %5892 = vmatpush2.bf16.msra.mxu0 0
        %5893 = vmatprep.subr.bf16.mxu0 0
        %5894 = vmatpush2.bf16.msra.mxu0 0
        %5895 = vmatprep.subr.bf16.mxu0 0
        %5896 = vmatpush2.bf16.msra.mxu0 0
        %5897 = vmatprep.subr.bf16.mxu0 0
        %5898 = vmatpush2.bf16.msra.mxu0 0
        %5899 = vmatprep.mubr.bf16.mxu0 0
        %5900 = vmatmul.mubr.bf16.gmra.mxu0 %v5856
        %v5901 = vpop.f32.mrf.mxu0
        %v5902 = vadd.f32 0.0, %v5901
        %v5903 = vpop.f32.mrf.mxu0
        %v5904 = vpop.f32.mrf.mxu0
        %v5905 = vadd.f32 0.0, %v5904
        %v5906 = vpop.f32.mrf.mxu0
        %5907 = vmatprep.mubr.bf16.mxu0 0
        %5908 = vmatmul.mubr.bf16.gmra.mxu0 %v5859
        %v5909 = vpop.f32.mrf.mxu0
        %v5910 = vadd.f32 0.0, %v5909
        %v5911 = vpop.f32.mrf.mxu0
        %v5912 = vpop.f32.mrf.mxu0
        %v5913 = vadd.f32 0.0, %v5912
        %v5914 = vpop.f32.mrf.mxu0
        %5915 = vmatprep.mubr.bf16.mxu0 0
        %5916 = vmatmul.mubr.bf16.gmra.mxu0 %v5862
        %v5917 = vpop.f32.mrf.mxu0
        %v5918 = vadd.f32 0.0, %v5917
        %v5919 = vpop.f32.mrf.mxu0
        %v5920 = vpop.f32.mrf.mxu0
        %v5921 = vadd.f32 0.0, %v5920
        %v5922 = vpop.f32.mrf.mxu0
        %5923 = vmatprep.mubr.bf16.mxu0 0
        %5924 = vmatmul.mubr.bf16.gmra.mxu0 %v5865
        %v5925 = vpop.f32.mrf.mxu0
        %v5926 = vadd.f32 0.0, %v5925
        %v5927 = vpop.f32.mrf.mxu0
        %v5928 = vpop.f32.mrf.mxu0
        %v5929 = vadd.f32 0.0, %v5928
        %v5930 = vpop.f32.mrf.mxu0
        %5931 = vdwg.mxu0
        %5932 = vst [vmem:[#allocation2] sm:$0xff] 0.0
        %5933 = vst [vmem:[#allocation2 + $0x8] sm:$0x1] 0.0
        %5934 = vst [vmem:[#allocation2 + $0x49] sm:$0xff] 0.0
        %5935 = vst [vmem:[#allocation2 + $0x51] sm:$0x1] 0.0
        %5936 = vst [vmem:[#allocation2 + $0x9] sm:$0xff] %v5902
        %5937 = vst [vmem:[#allocation2 + $0x11] sm:$0xff] %v5905
        %5938 = vst [vmem:[#allocation2 + $0x19] sm:$0xff] %v5910
        %5939 = vst [vmem:[#allocation2 + $0x21] sm:$0xff] %v5913
        %5940 = vst [vmem:[#allocation2 + $0x29] sm:$0xff] %v5918
        %5941 = vst [vmem:[#allocation2 + $0x31] sm:$0xff] %v5921
        %5942 = vst [vmem:[#allocation2 + $0x39] sm:$0xff] %v5926
        %5943 = vst [vmem:[#allocation2 + $0x41] sm:$0xff] %v5929
        %v5944 = vld [vmem:[#allocation2] sm:$0xff]
        %v5945 = vld [vmem:[#allocation2 + $0x8] sm:$0xff]
        %v5946 = vld [vmem:[#allocation2 + $0x10] sm:$0xff]
        %v5947 = vld [vmem:[#allocation2 + $0x18] sm:$0xff]
        %v5948 = vld [vmem:[#allocation2 + $0x20] sm:$0xff]
        %v5949 = vld [vmem:[#allocation2 + $0x28] sm:$0xff]
        %v5950 = vld [vmem:[#allocation2 + $0x30] sm:$0xff]
        %v5951 = vld [vmem:[#allocation2 + $0x38] sm:$0xff]
        %v5952 = vmul.f32 %v5944, %v3099
        %v5953 = vmul.f32 %v5945, %v3100
        %v5954 = vmul.f32 %v5946, %v3101
        %v5955 = vmul.f32 %v5947, %v3102
        %v5956 = vmul.f32 %v5948, %v3103
        %v5957 = vmul.f32 %v5949, %v3104
        %v5958 = vmul.f32 %v5950, %v3105
        %v5959 = vmul.f32 %v5951, %v3106
        %v5960 = vpack.c.bf16 %v5953, %v5952
        %v5961 = vpack.c.bf16 %v5955, %v5954
        %v5962 = vpack.c.bf16 %v5957, %v5956
        %v5963 = vpack.c.bf16 %v5959, %v5958
        %v5964 = vld [vmem:[#allocation2 + $0x1] sm:$0xff]
        %v5965 = vld [vmem:[#allocation2 + $0x9] sm:$0xff]
        %v5966 = vld [vmem:[#allocation2 + $0x11] sm:$0xff]
        %v5967 = vld [vmem:[#allocation2 + $0x19] sm:$0xff]
        %v5968 = vld [vmem:[#allocation2 + $0x21] sm:$0xff]
        %v5969 = vld [vmem:[#allocation2 + $0x29] sm:$0xff]
        %v5970 = vld [vmem:[#allocation2 + $0x31] sm:$0xff]
        %v5971 = vld [vmem:[#allocation2 + $0x39] sm:$0xff]
        %v5972 = vpack.c.bf16 %v5965, %v5964
        %v5973 = vpack.c.bf16 %v5967, %v5966
        %v5974 = vpack.c.bf16 %v5969, %v5968
        %v5975 = vpack.c.bf16 %v5971, %v5970
        %v5976 = vld [vmem:[#allocation2 + $0x2] sm:$0xff]
        %v5977 = vld [vmem:[#allocation2 + $0xa] sm:$0xff]
        %v5978 = vld [vmem:[#allocation2 + $0x12] sm:$0xff]
        %v5979 = vld [vmem:[#allocation2 + $0x1a] sm:$0xff]
        %v5980 = vld [vmem:[#allocation2 + $0x22] sm:$0xff]
        %v5981 = vld [vmem:[#allocation2 + $0x2a] sm:$0xff]
        %v5982 = vld [vmem:[#allocation2 + $0x32] sm:$0xff]
        %v5983 = vld [vmem:[#allocation2 + $0x3a] sm:$0xff]
        %v5984 = vmul.f32 %v5976, %v3123
        %v5985 = vmul.f32 %v5977, %v3124
        %v5986 = vmul.f32 %v5978, %v3125
        %v5987 = vmul.f32 %v5979, %v3126
        %v5988 = vmul.f32 %v5980, %v3127
        %v5989 = vmul.f32 %v5981, %v3128
        %v5990 = vmul.f32 %v5982, %v3129
        %v5991 = vmul.f32 %v5983, %v3130
        %v5992 = vpack.c.bf16 %v5985, %v5984
        %v5993 = vpack.c.bf16 %v5987, %v5986
        %v5994 = vpack.c.bf16 %v5989, %v5988
        %v5995 = vpack.c.bf16 %v5991, %v5990
        %v5996 = vld [vmem:[#allocation2 + $0x40] sm:$0xff]
        %v5997 = vmul.f32 %v5945, %v3099
        %v5998 = vmul.f32 %v5946, %v3100
        %v5999 = vmul.f32 %v5947, %v3101
        %v6000 = vmul.f32 %v5948, %v3102
        %v6001 = vmul.f32 %v5949, %v3103
        %v6002 = vmul.f32 %v5950, %v3104
        %v6003 = vmul.f32 %v5951, %v3105
        %v6004 = vmul.f32 %v5996, %v3106
        %v6005 = vpack.c.bf16 %v5998, %v5997
        %v6006 = vpack.c.bf16 %v6000, %v5999
        %v6007 = vpack.c.bf16 %v6002, %v6001
        %v6008 = vpack.c.bf16 %v6004, %v6003
        %v6009 = vld [vmem:[#allocation2 + $0x41] sm:$0xff]
        %v6010 = vpack.c.bf16 %v5966, %v5965
        %v6011 = vpack.c.bf16 %v5968, %v5967
        %v6012 = vpack.c.bf16 %v5970, %v5969
        %v6013 = vpack.c.bf16 %v6009, %v5971
        %v6014 = vld [vmem:[#allocation2 + $0x42] sm:$0xff]
        %v6015 = vmul.f32 %v5977, %v3123
        %v6016 = vmul.f32 %v5978, %v3124
        %v6017 = vmul.f32 %v5979, %v3125
        %v6018 = vmul.f32 %v5980, %v3126
        %v6019 = vmul.f32 %v5981, %v3127
        %v6020 = vmul.f32 %v5982, %v3128
        %v6021 = vmul.f32 %v5983, %v3129
        %v6022 = vmul.f32 %v6014, %v3130
        %v6023 = vpack.c.bf16 %v6016, %v6015
        %v6024 = vpack.c.bf16 %v6018, %v6017
        %v6025 = vpack.c.bf16 %v6020, %v6019
        %v6026 = vpack.c.bf16 %v6022, %v6021
        %v6027 = vld [vmem:[#allocation2 + $0x48] sm:$0xff]
        %v6028 = vmul.f32 %v5946, %v3099
        %v6029 = vmul.f32 %v5947, %v3100
        %v6030 = vmul.f32 %v5948, %v3101
        %v6031 = vmul.f32 %v5949, %v3102
        %v6032 = vmul.f32 %v5950, %v3103
        %v6033 = vmul.f32 %v5951, %v3104
        %v6034 = vmul.f32 %v5996, %v3105
        %v6035 = vmul.f32 %v6027, %v3106
        %v6036 = vpack.c.bf16 %v6029, %v6028
        %v6037 = vpack.c.bf16 %v6031, %v6030
        %v6038 = vpack.c.bf16 %v6033, %v6032
        %v6039 = vpack.c.bf16 %v6035, %v6034
        %v6040 = vld [vmem:[#allocation2 + $0x49] sm:$0xff]
        %v6041 = vpack.c.bf16 %v6040, %v6009
        %v6042 = vld [vmem:[#allocation2 + $0x4a] sm:$0xff]
        %v6043 = vmul.f32 %v5978, %v3123
        %v6044 = vmul.f32 %v5979, %v3124
        %v6045 = vmul.f32 %v5980, %v3125
        %v6046 = vmul.f32 %v5981, %v3126
        %v6047 = vmul.f32 %v5982, %v3127
        %v6048 = vmul.f32 %v5983, %v3128
        %v6049 = vmul.f32 %v6014, %v3129
        %v6050 = vmul.f32 %v6042, %v3130
        %v6051 = vpack.c.bf16 %v6044, %v6043
        %v6052 = vpack.c.bf16 %v6046, %v6045
        %v6053 = vpack.c.bf16 %v6048, %v6047
        %v6054 = vpack.c.bf16 %v6050, %v6049
        %v6055 = vld [vmem:[#allocation3 + $0x7b0] sm:$0xf]
        %v6056 = vld [vmem:[#allocation3 + $0x7b4] sm:$0xf]
        %v6057 = vld [vmem:[#allocation3 + $0x7b8] sm:$0xf]
        %v6058 = vld [vmem:[#allocation3 + $0x7bc] sm:$0xf]
        %v6059 = vld [vmem:[#allocation3 + $0x7c0] sm:$0xf]
        %v6060 = vld [vmem:[#allocation3 + $0x7c4] sm:$0xf]
        %v6061 = vld [vmem:[#allocation3 + $0x7c8] sm:$0xf]
        %v6062 = vld [vmem:[#allocation3 + $0x7cc] sm:$0xf]
        %v6063 = vld [vmem:[#allocation3 + $0x7d0] sm:$0xf]
        %v6064 = vld [vmem:[#allocation3 + $0x7d4] sm:$0xf]
        %v6065 = vld [vmem:[#allocation3 + $0x7d8] sm:$0xf]
        %v6066 = vld [vmem:[#allocation3 + $0x7dc] sm:$0xf]
        %v6067 = vld [vmem:[#allocation3 + $0x7e0] sm:$0xf]
        %v6068 = vld [vmem:[#allocation3 + $0x7e4] sm:$0xf]
        %v6069 = vld [vmem:[#allocation3 + $0x7e8] sm:$0xf]
        %v6070 = vld [vmem:[#allocation3 + $0x7ec] sm:$0xf]
        %v6071 = vld [vmem:[#allocation3 + $0x7f0] sm:$0xf]
        %v6072 = vld [vmem:[#allocation3 + $0x7f4] sm:$0xf]
        %v6073 = vld [vmem:[#allocation3 + $0x7f8] sm:$0xf]
        %v6074 = vld [vmem:[#allocation3 + $0x7fc] sm:$0xf]
        %v6075 = vld [vmem:[#allocation3 + $0x800] sm:$0xf]
        %v6076 = vld [vmem:[#allocation3 + $0x804] sm:$0xf]
        %v6077 = vld [vmem:[#allocation3 + $0x808] sm:$0xf]
        %v6078 = vld [vmem:[#allocation3 + $0x80c] sm:$0xf]
        %v6079 = vld [vmem:[#allocation3 + $0x810] sm:$0xf]
        %v6080 = vld [vmem:[#allocation3 + $0x814] sm:$0xf]
        %v6081 = vld [vmem:[#allocation3 + $0x818] sm:$0xf]
        %v6082 = vld [vmem:[#allocation3 + $0x81c] sm:$0xf]
        %v6083 = vld [vmem:[#allocation3 + $0x820] sm:$0xf]
        %v6084 = vld [vmem:[#allocation3 + $0x824] sm:$0xf]
        %v6085 = vld [vmem:[#allocation3 + $0x828] sm:$0xf]
        %v6086 = vld [vmem:[#allocation3 + $0x82c] sm:$0xf]
        %v6087 = vld [vmem:[#allocation3 + $0x830] sm:$0xf]
        %v6088 = vld [vmem:[#allocation3 + $0x834] sm:$0xf]
        %v6089 = vld [vmem:[#allocation3 + $0x838] sm:$0xf]
        %v6090 = vld [vmem:[#allocation3 + $0x83c] sm:$0xf]
        %v6091 = vld [vmem:[#allocation3 + $0x840] sm:$0xf]
        %v6092 = vld [vmem:[#allocation3 + $0x844] sm:$0xf]
        %v6093 = vld [vmem:[#allocation3 + $0x848] sm:$0xf]
        %v6094 = vld [vmem:[#allocation3 + $0x84c] sm:$0xf]
        %v6095 = vld [vmem:[#allocation3 + $0x850] sm:$0xf]
        %v6096 = vld [vmem:[#allocation3 + $0x854] sm:$0xf]
        %v6097 = vld [vmem:[#allocation3 + $0x858] sm:$0xf]
        %v6098 = vld [vmem:[#allocation3 + $0x85c] sm:$0xf]
        %v6099 = vld [vmem:[#allocation3 + $0x860] sm:$0xf]
        %v6100 = vld [vmem:[#allocation3 + $0x864] sm:$0xf]
        %v6101 = vld [vmem:[#allocation3 + $0x868] sm:$0xf]
        %v6102 = vld [vmem:[#allocation3 + $0x86c] sm:$0xf]
        %v6103 = vld [vmem:[#allocation3 + $0x870] sm:$0xf]
        %v6104 = vld [vmem:[#allocation3 + $0x874] sm:$0xf]
        %v6105 = vld [vmem:[#allocation3 + $0x878] sm:$0xf]
        %v6106 = vld [vmem:[#allocation3 + $0x87c] sm:$0xf]
        %v6107 = vld [vmem:[#allocation3 + $0x880] sm:$0xf]
        %v6108 = vld [vmem:[#allocation3 + $0x884] sm:$0xf]
        %v6109 = vld [vmem:[#allocation3 + $0x888] sm:$0xf]
        %v6110 = vld [vmem:[#allocation3 + $0x88c] sm:$0xf]
        %v6111 = vld [vmem:[#allocation3 + $0x890] sm:$0xf]
        %v6112 = vld [vmem:[#allocation3 + $0x894] sm:$0xf]
        %v6113 = vld [vmem:[#allocation3 + $0x898] sm:$0xf]
        %v6114 = vld [vmem:[#allocation3 + $0x89c] sm:$0xf]
        %v6115 = vld [vmem:[#allocation3 + $0x8a0] sm:$0xf]
        %v6116 = vld [vmem:[#allocation3 + $0x8a4] sm:$0xf]
        %v6117 = vld [vmem:[#allocation3 + $0x8a8] sm:$0xf]
        %v6118 = vld [vmem:[#allocation3 + $0x8ac] sm:$0xf]
        %v6119 = vld [vmem:[#allocation3 + $0x8b0] sm:$0xf]
        %v6120 = vld [vmem:[#allocation3 + $0x8b4] sm:$0xf]
        %v6121 = vld [vmem:[#allocation3 + $0x8b8] sm:$0xf]
        %v6122 = vld [vmem:[#allocation3 + $0x8bc] sm:$0xf]
        %v6123 = vld [vmem:[#allocation3 + $0x8c0] sm:$0xf]
        %v6124 = vld [vmem:[#allocation3 + $0x8c4] sm:$0xf]
        %v6125 = vld [vmem:[#allocation3 + $0x8c8] sm:$0xf]
        %v6126 = vld [vmem:[#allocation3 + $0x8cc] sm:$0xf]
        %v6127 = vld [vmem:[#allocation3 + $0x8d0] sm:$0xf]
        %v6128 = vld [vmem:[#allocation3 + $0x8d4] sm:$0xf]
        %v6129 = vld [vmem:[#allocation3 + $0x8d8] sm:$0xf]
        %v6130 = vld [vmem:[#allocation3 + $0x8dc] sm:$0xf]
        %v6131 = vld [vmem:[#allocation3 + $0x8e0] sm:$0xf]
        %v6132 = vld [vmem:[#allocation3 + $0x8e4] sm:$0xf]
        %v6133 = vld [vmem:[#allocation3 + $0x8e8] sm:$0xf]
        %v6134 = vld [vmem:[#allocation3 + $0x8ec] sm:$0xf]
        %v6135 = vld [vmem:[#allocation3 + $0x8f0] sm:$0xf]
        %v6136 = vld [vmem:[#allocation3 + $0x8f4] sm:$0xf]
        %v6137 = vld [vmem:[#allocation3 + $0x8f8] sm:$0xf]
        %v6138 = vld [vmem:[#allocation3 + $0x8fc] sm:$0xf]
        %v6139 = vld [vmem:[#allocation3 + $0x900] sm:$0xf]
        %v6140 = vld [vmem:[#allocation3 + $0x904] sm:$0xf]
        %v6141 = vld [vmem:[#allocation3 + $0x908] sm:$0xf]
        %v6142 = vld [vmem:[#allocation3 + $0x90c] sm:$0xf]
        %v6143 = vld [vmem:[#allocation3 + $0x910] sm:$0xf]
        %v6144 = vld [vmem:[#allocation3 + $0x914] sm:$0xf]
        %v6145 = vld [vmem:[#allocation3 + $0x918] sm:$0xf]
        %v6146 = vld [vmem:[#allocation3 + $0x91c] sm:$0xf]
        %v6147 = vld [vmem:[#allocation3 + $0x920] sm:$0xf]
        %v6148 = vld [vmem:[#allocation3 + $0x924] sm:$0xf]
        %v6149 = vld [vmem:[#allocation3 + $0x928] sm:$0xf]
        %v6150 = vld [vmem:[#allocation3 + $0x92c] sm:$0xf]
        %v6151 = vld [vmem:[#allocation3 + $0x930] sm:$0xf]
        %v6152 = vld [vmem:[#allocation3 + $0x934] sm:$0xf]
        %v6153 = vld [vmem:[#allocation3 + $0x938] sm:$0xf]
        %v6154 = vld [vmem:[#allocation3 + $0x93c] sm:$0xf]
        %v6155 = vld [vmem:[#allocation3 + $0x940] sm:$0xf]
        %v6156 = vld [vmem:[#allocation3 + $0x944] sm:$0xf]
        %v6157 = vld [vmem:[#allocation3 + $0x948] sm:$0xf]
        %v6158 = vld [vmem:[#allocation3 + $0x94c] sm:$0xf]
        %v6159 = vld [vmem:[#allocation3 + $0x950] sm:$0xf]
        %v6160 = vld [vmem:[#allocation3 + $0x954] sm:$0xf]
        %v6161 = vld [vmem:[#allocation3 + $0x958] sm:$0xf]
        %v6162 = vld [vmem:[#allocation3 + $0x95c] sm:$0xf]
        %v6163 = vld [vmem:[#allocation3 + $0x960] sm:$0xf]
        %v6164 = vld [vmem:[#allocation3 + $0x964] sm:$0xf]
        %v6165 = vld [vmem:[#allocation3 + $0x968] sm:$0xf]
        %v6166 = vld [vmem:[#allocation3 + $0x96c] sm:$0xf]
        %v6167 = vld [vmem:[#allocation3 + $0x970] sm:$0xf]
        %v6168 = vld [vmem:[#allocation3 + $0x974] sm:$0xf]
        %v6169 = vld [vmem:[#allocation3 + $0x978] sm:$0xf]
        %v6170 = vld [vmem:[#allocation3 + $0x97c] sm:$0xf]
        %v6171 = vld [vmem:[#allocation3 + $0x980] sm:$0xf]
        %v6172 = vld [vmem:[#allocation3 + $0x984] sm:$0xf]
        %v6173 = vld [vmem:[#allocation3 + $0x988] sm:$0xf]
        %v6174 = vld [vmem:[#allocation3 + $0x98c] sm:$0xf]
        %v6175 = vld [vmem:[#allocation3 + $0x990] sm:$0xf]
        %v6176 = vld [vmem:[#allocation3 + $0x994] sm:$0xf]
        %v6177 = vld [vmem:[#allocation3 + $0x998] sm:$0xf]
        %v6178 = vld [vmem:[#allocation3 + $0x99c] sm:$0xf]
        %v6179 = vld [vmem:[#allocation3 + $0x9a0] sm:$0xf]
        %v6180 = vld [vmem:[#allocation3 + $0x9a4] sm:$0xf]
        %v6181 = vld [vmem:[#allocation3 + $0x9a8] sm:$0xf]
        %v6182 = vld [vmem:[#allocation3 + $0x9ac] sm:$0xf]
        %v6183 = vld [vmem:[#allocation3 + $0x9b0] sm:$0xf]
        %v6184 = vld [vmem:[#allocation3 + $0x9b4] sm:$0xf]
        %v6185 = vld [vmem:[#allocation3 + $0x9b8] sm:$0xf]
        %v6186 = vld [vmem:[#allocation3 + $0x9bc] sm:$0xf]
        %v6187 = vld [vmem:[#allocation3 + $0x9c0] sm:$0xf]
        %v6188 = vld [vmem:[#allocation3 + $0x9c4] sm:$0xf]
        %v6189 = vld [vmem:[#allocation3 + $0x9c8] sm:$0xf]
        %v6190 = vld [vmem:[#allocation3 + $0x9cc] sm:$0xf]
        %v6191 = vld [vmem:[#allocation3 + $0x9d0] sm:$0xf]
        %v6192 = vld [vmem:[#allocation3 + $0x9d4] sm:$0xf]
        %v6193 = vld [vmem:[#allocation3 + $0x9d8] sm:$0xf]
        %v6194 = vld [vmem:[#allocation3 + $0x9dc] sm:$0xf]
        %v6195 = vld [vmem:[#allocation3 + $0x9e0] sm:$0xf]
        %v6196 = vld [vmem:[#allocation3 + $0x9e4] sm:$0xf]
        %v6197 = vld [vmem:[#allocation3 + $0x9e8] sm:$0xf]
        %v6198 = vld [vmem:[#allocation3 + $0x9ec] sm:$0xf]
        %v6343 = vunpack.c.l.b16 %v6055
        %v6344 = vunpack.c.l.b16 %v6056
        %v6345 = vunpack.c.l.b16 %v6057
        %v6346 = vunpack.c.l.b16 %v6058
        %v6347 = vunpack.c.l.b16 %v6059
        %v6348 = vunpack.c.l.b16 %v6060
        %v6349 = vunpack.c.l.b16 %v6061
        %v6350 = vunpack.c.l.b16 %v6062
        %v6351 = vunpack.c.l.b16 %v6063
        %v6352 = vunpack.c.l.b16 %v6064
        %v6353 = vunpack.c.l.b16 %v6065
        %v6354 = vunpack.c.l.b16 %v6066
        %v6355 = vunpack.c.l.b16 %v6067
        %v6356 = vunpack.c.l.b16 %v6068
        %v6357 = vunpack.c.l.b16 %v6069
        %v6358 = vunpack.c.l.b16 %v6070
        %v6359 = vunpack.c.l.b16 %v6071
        %v6360 = vunpack.c.l.b16 %v6072
        %v6361 = vunpack.c.l.b16 %v6073
        %v6362 = vunpack.c.l.b16 %v6074
        %v6363 = vunpack.c.l.b16 %v6075
        %v6364 = vunpack.c.l.b16 %v6076
        %v6365 = vunpack.c.l.b16 %v6077
        %v6366 = vunpack.c.l.b16 %v6078
        %v6367 = vunpack.c.l.b16 %v6079
        %v6368 = vunpack.c.l.b16 %v6080
        %v6369 = vunpack.c.l.b16 %v6081
        %v6370 = vunpack.c.l.b16 %v6082
        %v6371 = vunpack.c.l.b16 %v6083
        %v6372 = vunpack.c.l.b16 %v6084
        %v6373 = vunpack.c.l.b16 %v6085
        %v6374 = vunpack.c.l.b16 %v6086
        %v6375 = vunpack.c.l.b16 %v6087
        %v6376 = vunpack.c.l.b16 %v6088
        %v6377 = vunpack.c.l.b16 %v6089
        %v6378 = vunpack.c.l.b16 %v6090
        %v6379 = vunpack.c.l.b16 %v6091
        %v6380 = vunpack.c.l.b16 %v6092
        %v6381 = vunpack.c.l.b16 %v6093
        %v6382 = vunpack.c.l.b16 %v6094
        %v6383 = vunpack.c.l.b16 %v6095
        %v6384 = vunpack.c.l.b16 %v6096
        %v6385 = vunpack.c.l.b16 %v6097
        %v6386 = vunpack.c.l.b16 %v6098
        %v6387 = vunpack.c.l.b16 %v6099
        %v6388 = vunpack.c.l.b16 %v6100
        %v6389 = vunpack.c.l.b16 %v6101
        %v6390 = vunpack.c.l.b16 %v6102
        %v6391 = vunpack.c.l.b16 %v6103
        %v6392 = vunpack.c.l.b16 %v6104
        %v6393 = vunpack.c.l.b16 %v6105
        %v6394 = vunpack.c.l.b16 %v6106
        %v6395 = vunpack.c.l.b16 %v6107
        %v6396 = vunpack.c.l.b16 %v6108
        %v6397 = vunpack.c.l.b16 %v6109
        %v6398 = vunpack.c.l.b16 %v6110
        %v6399 = vunpack.c.l.b16 %v6111
        %v6400 = vunpack.c.l.b16 %v6112
        %v6401 = vunpack.c.l.b16 %v6113
        %v6402 = vunpack.c.l.b16 %v6114
        %v6403 = vunpack.c.l.b16 %v6115
        %v6404 = vunpack.c.l.b16 %v6116
        %v6405 = vunpack.c.l.b16 %v6117
        %v6406 = vunpack.c.l.b16 %v6118
        %v6407 = vunpack.c.l.b16 %v6119
        %v6408 = vunpack.c.l.b16 %v6120
        %v6409 = vunpack.c.l.b16 %v6121
        %v6410 = vunpack.c.l.b16 %v6122
        %v6411 = vunpack.c.l.b16 %v6123
        %v6412 = vunpack.c.l.b16 %v6124
        %v6413 = vunpack.c.l.b16 %v6125
        %v6414 = vunpack.c.l.b16 %v6126
        %v6415 = vunpack.c.l.b16 %v6127
        %v6416 = vunpack.c.l.b16 %v6128
        %v6417 = vunpack.c.l.b16 %v6129
        %v6418 = vunpack.c.l.b16 %v6130
        %v6419 = vunpack.c.l.b16 %v6131
        %v6420 = vunpack.c.l.b16 %v6132
        %v6421 = vunpack.c.l.b16 %v6133
        %v6422 = vunpack.c.l.b16 %v6134
        %v6423 = vunpack.c.l.b16 %v6135
        %v6424 = vunpack.c.l.b16 %v6136
        %v6425 = vunpack.c.l.b16 %v6137
        %v6426 = vunpack.c.l.b16 %v6138
        %v6427 = vunpack.c.l.b16 %v6139
        %v6428 = vunpack.c.l.b16 %v6140
        %v6429 = vunpack.c.l.b16 %v6141
        %v6430 = vunpack.c.l.b16 %v6142
        %v6431 = vunpack.c.l.b16 %v6143
        %v6432 = vunpack.c.l.b16 %v6144
        %v6433 = vunpack.c.l.b16 %v6145
        %v6434 = vunpack.c.l.b16 %v6146
        %v6435 = vunpack.c.l.b16 %v6147
        %v6436 = vunpack.c.l.b16 %v6148
        %v6437 = vunpack.c.l.b16 %v6149
        %v6438 = vunpack.c.l.b16 %v6150
        %v6439 = vunpack.c.l.b16 %v6151
        %v6440 = vunpack.c.l.b16 %v6152
        %v6441 = vunpack.c.l.b16 %v6153
        %v6442 = vunpack.c.l.b16 %v6154
        %v6443 = vunpack.c.l.b16 %v6155
        %v6444 = vunpack.c.l.b16 %v6156
        %v6445 = vunpack.c.l.b16 %v6157
        %v6446 = vunpack.c.l.b16 %v6158
        %v6447 = vunpack.c.l.b16 %v6159
        %v6448 = vunpack.c.l.b16 %v6160
        %v6449 = vunpack.c.l.b16 %v6161
        %v6450 = vunpack.c.l.b16 %v6162
        %v6451 = vunpack.c.l.b16 %v6163
        %v6452 = vunpack.c.l.b16 %v6164
        %v6453 = vunpack.c.l.b16 %v6165
        %v6454 = vunpack.c.l.b16 %v6166
        %v6455 = vunpack.c.l.b16 %v6167
        %v6456 = vunpack.c.l.b16 %v6168
        %v6457 = vunpack.c.l.b16 %v6169
        %v6458 = vunpack.c.l.b16 %v6170
        %v6459 = vunpack.c.l.b16 %v6171
        %v6460 = vunpack.c.l.b16 %v6172
        %v6461 = vunpack.c.l.b16 %v6173
        %v6462 = vunpack.c.l.b16 %v6174
        %v6463 = vunpack.c.l.b16 %v6175
        %v6464 = vunpack.c.l.b16 %v6176
        %v6465 = vunpack.c.l.b16 %v6177
        %v6466 = vunpack.c.l.b16 %v6178
        %v6467 = vunpack.c.l.b16 %v6179
        %v6468 = vunpack.c.l.b16 %v6180
        %v6469 = vunpack.c.l.b16 %v6181
        %v6470 = vunpack.c.l.b16 %v6182
        %v6471 = vunpack.c.l.b16 %v6183
        %v6472 = vunpack.c.l.b16 %v6184
        %v6473 = vunpack.c.l.b16 %v6185
        %v6474 = vunpack.c.l.b16 %v6186
        %v6475 = vunpack.c.l.b16 %v6187
        %v6476 = vunpack.c.l.b16 %v6188
        %v6477 = vunpack.c.l.b16 %v6189
        %v6478 = vunpack.c.l.b16 %v6190
        %v6479 = vunpack.c.l.b16 %v6191
        %v6480 = vunpack.c.l.b16 %v6192
        %v6481 = vunpack.c.l.b16 %v6193
        %v6482 = vunpack.c.l.b16 %v6194
        %v6483 = vunpack.c.l.b16 %v6195
        %v6484 = vunpack.c.l.b16 %v6196
        %v6485 = vunpack.c.l.b16 %v6197
        %v6486 = vunpack.c.l.b16 %v6198
        %v6487 = vpack.c.b16 %v6344, %v6343
        %v6488 = vpack.c.b16 %v6346, %v6345
        %v6489 = vpack.c.b16 %v6348, %v6347
        %v6490 = vpack.c.b16 %v6350, %v6349
        %v6491 = vpack.c.b16 %v6352, %v6351
        %v6492 = vpack.c.b16 %v6354, %v6353
        %v6493 = vpack.c.b16 %v6356, %v6355
        %v6494 = vpack.c.b16 %v6358, %v6357
        %v6495 = vpack.c.b16 %v6360, %v6359
        %v6496 = vpack.c.b16 %v6362, %v6361
        %v6497 = vpack.c.b16 %v6364, %v6363
        %v6498 = vpack.c.b16 %v6366, %v6365
        %v6499 = vpack.c.b16 %v6368, %v6367
        %v6500 = vpack.c.b16 %v6370, %v6369
        %v6501 = vpack.c.b16 %v6372, %v6371
        %v6502 = vpack.c.b16 %v6374, %v6373
        %v6503 = vpack.c.b16 %v6376, %v6375
        %v6504 = vpack.c.b16 %v6378, %v6377
        %v6505 = vpack.c.b16 %v6380, %v6379
        %v6506 = vpack.c.b16 %v6382, %v6381
        %v6507 = vpack.c.b16 %v6384, %v6383
        %v6508 = vpack.c.b16 %v6386, %v6385
        %v6509 = vpack.c.b16 %v6388, %v6387
        %v6510 = vpack.c.b16 %v6390, %v6389
        %v6511 = vpack.c.b16 %v6392, %v6391
        %v6512 = vpack.c.b16 %v6394, %v6393
        %v6513 = vpack.c.b16 %v6396, %v6395
        %v6514 = vpack.c.b16 %v6398, %v6397
        %v6515 = vpack.c.b16 %v6400, %v6399
        %v6516 = vpack.c.b16 %v6402, %v6401
        %v6517 = vpack.c.b16 %v6404, %v6403
        %v6518 = vpack.c.b16 %v6406, %v6405
        %v6519 = vpack.c.b16 %v6408, %v6407
        %v6520 = vpack.c.b16 %v6410, %v6409
        %v6521 = vpack.c.b16 %v6412, %v6411
        %v6522 = vpack.c.b16 %v6414, %v6413
        %v6523 = vpack.c.b16 %v6416, %v6415
        %v6524 = vpack.c.b16 %v6418, %v6417
        %v6525 = vpack.c.b16 %v6420, %v6419
        %v6526 = vpack.c.b16 %v6422, %v6421
        %v6527 = vpack.c.b16 %v6424, %v6423
        %v6528 = vpack.c.b16 %v6426, %v6425
        %v6529 = vpack.c.b16 %v6428, %v6427
        %v6530 = vpack.c.b16 %v6430, %v6429
        %v6531 = vpack.c.b16 %v6432, %v6431
        %v6532 = vpack.c.b16 %v6434, %v6433
        %v6533 = vpack.c.b16 %v6436, %v6435
        %v6534 = vpack.c.b16 %v6438, %v6437
        %v6535 = vpack.c.b16 %v6440, %v6439
        %v6536 = vpack.c.b16 %v6442, %v6441
        %v6537 = vpack.c.b16 %v6444, %v6443
        %v6538 = vpack.c.b16 %v6446, %v6445
        %v6539 = vpack.c.b16 %v6448, %v6447
        %v6540 = vpack.c.b16 %v6450, %v6449
        %v6541 = vpack.c.b16 %v6452, %v6451
        %v6542 = vpack.c.b16 %v6454, %v6453
        %v6543 = vpack.c.b16 %v6456, %v6455
        %v6544 = vpack.c.b16 %v6458, %v6457
        %v6545 = vpack.c.b16 %v6460, %v6459
        %v6546 = vpack.c.b16 %v6462, %v6461
        %v6547 = vpack.c.b16 %v6464, %v6463
        %v6548 = vpack.c.b16 %v6466, %v6465
        %v6549 = vpack.c.b16 %v6468, %v6467
        %v6550 = vpack.c.b16 %v6470, %v6469
        %v6551 = vpack.c.b16 %v6472, %v6471
        %v6552 = vpack.c.b16 %v6474, %v6473
        %v6553 = vpack.c.b16 %v6476, %v6475
        %v6554 = vpack.c.b16 %v6478, %v6477
        %v6555 = vpack.c.b16 %v6480, %v6479
        %v6556 = vpack.c.b16 %v6482, %v6481
        %v6557 = vpack.c.b16 %v6484, %v6483
        %v6558 = vpack.c.b16 %v6486, %v6485
        %6631 = vmatprep.subr.bf16.mxu0 0
        %6632 = vmatpush1.bf16.msra.mxu0 %v6494
        %6633 = vmatprep.subr.bf16.mxu0 0
        %6634 = vmatpush1.bf16.msra.mxu0 %v6493
        %6635 = vmatprep.subr.bf16.mxu0 0
        %6636 = vmatpush1.bf16.msra.mxu0 %v6492
        %6637 = vmatprep.subr.bf16.mxu0 0
        %6638 = vmatpush1.bf16.msra.mxu0 %v6491
        %6639 = vmatprep.subr.bf16.mxu0 0
        %6640 = vmatpush1.bf16.msra.mxu0 %v6490
        %6641 = vmatprep.subr.bf16.mxu0 0
        %6642 = vmatpush1.bf16.msra.mxu0 %v6489
        %6643 = vmatprep.subr.bf16.mxu0 0
        %6644 = vmatpush1.bf16.msra.mxu0 %v6488
        %6645 = vmatprep.subr.bf16.mxu0 0
        %6646 = vmatpush1.bf16.msra.mxu0 %v6487
        %6647 = vmatprep.subr.bf16.mxu0 0
        %6648 = vmatpush2.bf16.msra.mxu0 %v6502
        %6649 = vmatprep.subr.bf16.mxu0 0
        %6650 = vmatpush2.bf16.msra.mxu0 %v6501
        %6651 = vmatprep.subr.bf16.mxu0 0
        %6652 = vmatpush2.bf16.msra.mxu0 %v6500
        %6653 = vmatprep.subr.bf16.mxu0 0
        %6654 = vmatpush2.bf16.msra.mxu0 %v6499
        %6655 = vmatprep.subr.bf16.mxu0 0
        %6656 = vmatpush2.bf16.msra.mxu0 %v6498
        %6657 = vmatprep.subr.bf16.mxu0 0
        %6658 = vmatpush2.bf16.msra.mxu0 %v6497
        %6659 = vmatprep.subr.bf16.mxu0 0
        %6660 = vmatpush2.bf16.msra.mxu0 %v6496
        %6661 = vmatprep.subr.bf16.mxu0 0
        %6662 = vmatpush2.bf16.msra.mxu0 %v6495
        %6663 = vmatprep.mubr.bf16.mxu0 %v5972
        %6664 = vmatmul.mubr.bf16.gmra.mxu0 %v5960
        %v6665 = vpop.f32.mrf.mxu0
        %v6666 = vadd.f32 0.0, %v6665
        %v6667 = vpop.f32.mrf.mxu0
        %v6668 = vpop.f32.mrf.mxu0
        %v6669 = vadd.f32 0.0, %v6668
        %v6670 = vpop.f32.mrf.mxu0
        %6671 = vmatprep.mubr.bf16.mxu0 %v5973
        %6672 = vmatmul.mubr.bf16.gmra.mxu0 %v5961
        %v6673 = vpop.f32.mrf.mxu0
        %v6674 = vadd.f32 0.0, %v6673
        %v6675 = vpop.f32.mrf.mxu0
        %v6676 = vpop.f32.mrf.mxu0
        %v6677 = vadd.f32 0.0, %v6676
        %v6678 = vpop.f32.mrf.mxu0
        %6679 = vmatprep.mubr.bf16.mxu0 %v5974
        %6680 = vmatmul.mubr.bf16.gmra.mxu0 %v5962
        %v6681 = vpop.f32.mrf.mxu0
        %v6682 = vadd.f32 0.0, %v6681
        %v6683 = vpop.f32.mrf.mxu0
        %v6684 = vpop.f32.mrf.mxu0
        %v6685 = vadd.f32 0.0, %v6684
        %v6686 = vpop.f32.mrf.mxu0
        %6687 = vmatprep.mubr.bf16.mxu0 %v5975
        %6688 = vmatmul.mubr.bf16.gmra.mxu0 %v5963
        %v6689 = vpop.f32.mrf.mxu0
        %v6690 = vadd.f32 0.0, %v6689
        %v6691 = vpop.f32.mrf.mxu0
        %v6692 = vpop.f32.mrf.mxu0
        %v6693 = vadd.f32 0.0, %v6692
        %v6694 = vpop.f32.mrf.mxu0
        %6695 = vdwg.mxu0
        %6696 = vmatprep.subr.bf16.mxu0 0
        %6697 = vmatpush1.bf16.msra.mxu0 %v6510
        %6698 = vmatprep.subr.bf16.mxu0 0
        %6699 = vmatpush1.bf16.msra.mxu0 %v6509
        %6700 = vmatprep.subr.bf16.mxu0 0
        %6701 = vmatpush1.bf16.msra.mxu0 %v6508
        %6702 = vmatprep.subr.bf16.mxu0 0
        %6703 = vmatpush1.bf16.msra.mxu0 %v6507
        %6704 = vmatprep.subr.bf16.mxu0 0
        %6705 = vmatpush1.bf16.msra.mxu0 %v6506
        %6706 = vmatprep.subr.bf16.mxu0 0
        %6707 = vmatpush1.bf16.msra.mxu0 %v6505
        %6708 = vmatprep.subr.bf16.mxu0 0
        %6709 = vmatpush1.bf16.msra.mxu0 %v6504
        %6710 = vmatprep.subr.bf16.mxu0 0
        %6711 = vmatpush1.bf16.msra.mxu0 %v6503
        %6712 = vmatprep.subr.bf16.mxu0 0
        %6713 = vmatpush2.bf16.msra.mxu0 %v6518
        %6714 = vmatprep.subr.bf16.mxu0 0
        %6715 = vmatpush2.bf16.msra.mxu0 %v6517
        %6716 = vmatprep.subr.bf16.mxu0 0
        %6717 = vmatpush2.bf16.msra.mxu0 %v6516
        %6718 = vmatprep.subr.bf16.mxu0 0
        %6719 = vmatpush2.bf16.msra.mxu0 %v6515
        %6720 = vmatprep.subr.bf16.mxu0 0
        %6721 = vmatpush2.bf16.msra.mxu0 %v6514
        %6722 = vmatprep.subr.bf16.mxu0 0
        %6723 = vmatpush2.bf16.msra.mxu0 %v6513
        %6724 = vmatprep.subr.bf16.mxu0 0
        %6725 = vmatpush2.bf16.msra.mxu0 %v6512
        %6726 = vmatprep.subr.bf16.mxu0 0
        %6727 = vmatpush2.bf16.msra.mxu0 %v6511
        %6728 = vmatprep.mubr.bf16.mxu0 %v6005
        %6729 = vmatmul.mubr.bf16.gmra.mxu0 %v5992
        %v6730 = vpop.f32.mrf.mxu0
        %v6731 = vadd.f32 %v6666, %v6730
        %v6732 = vpop.f32.mrf.mxu0
        %v6733 = vpop.f32.mrf.mxu0
        %v6734 = vadd.f32 %v6669, %v6733
        %v6735 = vpop.f32.mrf.mxu0
        %6736 = vmatprep.mubr.bf16.mxu0 %v6006
        %6737 = vmatmul.mubr.bf16.gmra.mxu0 %v5993
        %v6738 = vpop.f32.mrf.mxu0
        %v6739 = vadd.f32 %v6674, %v6738
        %v6740 = vpop.f32.mrf.mxu0
        %v6741 = vpop.f32.mrf.mxu0
        %v6742 = vadd.f32 %v6677, %v6741
        %v6743 = vpop.f32.mrf.mxu0
        %6744 = vmatprep.mubr.bf16.mxu0 %v6007
        %6745 = vmatmul.mubr.bf16.gmra.mxu0 %v5994
        %v6746 = vpop.f32.mrf.mxu0
        %v6747 = vadd.f32 %v6682, %v6746
        %v6748 = vpop.f32.mrf.mxu0
        %v6749 = vpop.f32.mrf.mxu0
        %v6750 = vadd.f32 %v6685, %v6749
        %v6751 = vpop.f32.mrf.mxu0
        %6752 = vmatprep.mubr.bf16.mxu0 %v6008
        %6753 = vmatmul.mubr.bf16.gmra.mxu0 %v5995
        %v6754 = vpop.f32.mrf.mxu0
        %v6755 = vadd.f32 %v6690, %v6754
        %v6756 = vpop.f32.mrf.mxu0
        %v6757 = vpop.f32.mrf.mxu0
        %v6758 = vadd.f32 %v6693, %v6757
        %v6759 = vpop.f32.mrf.mxu0
        %6760 = vdwg.mxu0
        %6761 = vmatprep.subr.bf16.mxu0 0
        %6762 = vmatpush1.bf16.msra.mxu0 %v6526
        %6763 = vmatprep.subr.bf16.mxu0 0
        %6764 = vmatpush1.bf16.msra.mxu0 %v6525
        %6765 = vmatprep.subr.bf16.mxu0 0
        %6766 = vmatpush1.bf16.msra.mxu0 %v6524
        %6767 = vmatprep.subr.bf16.mxu0 0
        %6768 = vmatpush1.bf16.msra.mxu0 %v6523
        %6769 = vmatprep.subr.bf16.mxu0 0
        %6770 = vmatpush1.bf16.msra.mxu0 %v6522
        %6771 = vmatprep.subr.bf16.mxu0 0
        %6772 = vmatpush1.bf16.msra.mxu0 %v6521
        %6773 = vmatprep.subr.bf16.mxu0 0
        %6774 = vmatpush1.bf16.msra.mxu0 %v6520
        %6775 = vmatprep.subr.bf16.mxu0 0
        %6776 = vmatpush1.bf16.msra.mxu0 %v6519
        %6777 = vmatprep.subr.bf16.mxu0 0
        %6778 = vmatpush2.bf16.msra.mxu0 %v6534
        %6779 = vmatprep.subr.bf16.mxu0 0
        %6780 = vmatpush2.bf16.msra.mxu0 %v6533
        %6781 = vmatprep.subr.bf16.mxu0 0
        %6782 = vmatpush2.bf16.msra.mxu0 %v6532
        %6783 = vmatprep.subr.bf16.mxu0 0
        %6784 = vmatpush2.bf16.msra.mxu0 %v6531
        %6785 = vmatprep.subr.bf16.mxu0 0
        %6786 = vmatpush2.bf16.msra.mxu0 %v6530
        %6787 = vmatprep.subr.bf16.mxu0 0
        %6788 = vmatpush2.bf16.msra.mxu0 %v6529
        %6789 = vmatprep.subr.bf16.mxu0 0
        %6790 = vmatpush2.bf16.msra.mxu0 %v6528
        %6791 = vmatprep.subr.bf16.mxu0 0
        %6792 = vmatpush2.bf16.msra.mxu0 %v6527
        %6793 = vmatprep.mubr.bf16.mxu0 %v6023
        %6794 = vmatmul.mubr.bf16.gmra.mxu0 %v6010
        %v6795 = vpop.f32.mrf.mxu0
        %v6796 = vadd.f32 %v6731, %v6795
        %v6797 = vpop.f32.mrf.mxu0
        %v6798 = vpop.f32.mrf.mxu0
        %v6799 = vadd.f32 %v6734, %v6798
        %v6800 = vpop.f32.mrf.mxu0
        %6801 = vmatprep.mubr.bf16.mxu0 %v6024
        %6802 = vmatmul.mubr.bf16.gmra.mxu0 %v6011
        %v6803 = vpop.f32.mrf.mxu0
        %v6804 = vadd.f32 %v6739, %v6803
        %v6805 = vpop.f32.mrf.mxu0
        %v6806 = vpop.f32.mrf.mxu0
        %v6807 = vadd.f32 %v6742, %v6806
        %v6808 = vpop.f32.mrf.mxu0
        %6809 = vmatprep.mubr.bf16.mxu0 %v6025
        %6810 = vmatmul.mubr.bf16.gmra.mxu0 %v6012
        %v6811 = vpop.f32.mrf.mxu0
        %v6812 = vadd.f32 %v6747, %v6811
        %v6813 = vpop.f32.mrf.mxu0
        %v6814 = vpop.f32.mrf.mxu0
        %v6815 = vadd.f32 %v6750, %v6814
        %v6816 = vpop.f32.mrf.mxu0
        %6817 = vmatprep.mubr.bf16.mxu0 %v6026
        %6818 = vmatmul.mubr.bf16.gmra.mxu0 %v6013
        %v6819 = vpop.f32.mrf.mxu0
        %v6820 = vadd.f32 %v6755, %v6819
        %v6821 = vpop.f32.mrf.mxu0
        %v6822 = vpop.f32.mrf.mxu0
        %v6823 = vadd.f32 %v6758, %v6822
        %v6824 = vpop.f32.mrf.mxu0
        %6825 = vdwg.mxu0
        %6826 = vmatprep.subr.bf16.mxu0 0
        %6827 = vmatpush1.bf16.msra.mxu0 %v6542
        %6828 = vmatprep.subr.bf16.mxu0 0
        %6829 = vmatpush1.bf16.msra.mxu0 %v6541
        %6830 = vmatprep.subr.bf16.mxu0 0
        %6831 = vmatpush1.bf16.msra.mxu0 %v6540
        %6832 = vmatprep.subr.bf16.mxu0 0
        %6833 = vmatpush1.bf16.msra.mxu0 %v6539
        %6834 = vmatprep.subr.bf16.mxu0 0
        %6835 = vmatpush1.bf16.msra.mxu0 %v6538
        %6836 = vmatprep.subr.bf16.mxu0 0
        %6837 = vmatpush1.bf16.msra.mxu0 %v6537
        %6838 = vmatprep.subr.bf16.mxu0 0
        %6839 = vmatpush1.bf16.msra.mxu0 %v6536
        %6840 = vmatprep.subr.bf16.mxu0 0
        %6841 = vmatpush1.bf16.msra.mxu0 %v6535
        %6842 = vmatprep.subr.bf16.mxu0 0
        %6843 = vmatpush2.bf16.msra.mxu0 %v6550
        %6844 = vmatprep.subr.bf16.mxu0 0
        %6845 = vmatpush2.bf16.msra.mxu0 %v6549
        %6846 = vmatprep.subr.bf16.mxu0 0
        %6847 = vmatpush2.bf16.msra.mxu0 %v6548
        %6848 = vmatprep.subr.bf16.mxu0 0
        %6849 = vmatpush2.bf16.msra.mxu0 %v6547
        %6850 = vmatprep.subr.bf16.mxu0 0
        %6851 = vmatpush2.bf16.msra.mxu0 %v6546
        %6852 = vmatprep.subr.bf16.mxu0 0
        %6853 = vmatpush2.bf16.msra.mxu0 %v6545
        %6854 = vmatprep.subr.bf16.mxu0 0
        %6855 = vmatpush2.bf16.msra.mxu0 %v6544
        %6856 = vmatprep.subr.bf16.mxu0 0
        %6857 = vmatpush2.bf16.msra.mxu0 %v6543
        %6858 = vmatprep.mubr.bf16.mxu0 %v5973
        %6859 = vmatmul.mubr.bf16.gmra.mxu0 %v6036
        %v6860 = vpop.f32.mrf.mxu0
        %v6861 = vadd.f32 %v6796, %v6860
        %v6862 = vpop.f32.mrf.mxu0
        %v6863 = vpop.f32.mrf.mxu0
        %v6864 = vadd.f32 %v6799, %v6863
        %v6865 = vpop.f32.mrf.mxu0
        %6866 = vmatprep.mubr.bf16.mxu0 %v5974
        %6867 = vmatmul.mubr.bf16.gmra.mxu0 %v6037
        %v6868 = vpop.f32.mrf.mxu0
        %v6869 = vadd.f32 %v6804, %v6868
        %v6870 = vpop.f32.mrf.mxu0
        %v6871 = vpop.f32.mrf.mxu0
        %v6872 = vadd.f32 %v6807, %v6871
        %v6873 = vpop.f32.mrf.mxu0
        %6874 = vmatprep.mubr.bf16.mxu0 %v5975
        %6875 = vmatmul.mubr.bf16.gmra.mxu0 %v6038
        %v6876 = vpop.f32.mrf.mxu0
        %v6877 = vadd.f32 %v6812, %v6876
        %v6878 = vpop.f32.mrf.mxu0
        %v6879 = vpop.f32.mrf.mxu0
        %v6880 = vadd.f32 %v6815, %v6879
        %v6881 = vpop.f32.mrf.mxu0
        %6882 = vmatprep.mubr.bf16.mxu0 %v6041
        %6883 = vmatmul.mubr.bf16.gmra.mxu0 %v6039
        %v6884 = vpop.f32.mrf.mxu0
        %v6885 = vadd.f32 %v6820, %v6884
        %v6886 = vpop.f32.mrf.mxu0
        %v6887 = vpop.f32.mrf.mxu0
        %v6888 = vadd.f32 %v6823, %v6887
        %v6889 = vpop.f32.mrf.mxu0
        %6890 = vdwg.mxu0
        %6891 = vmatprep.subr.bf16.mxu0 0
        %6892 = vmatpush1.bf16.msra.mxu0 %v6558
        %6893 = vmatprep.subr.bf16.mxu0 0
        %6894 = vmatpush1.bf16.msra.mxu0 %v6557
        %6895 = vmatprep.subr.bf16.mxu0 0
        %6896 = vmatpush1.bf16.msra.mxu0 %v6556
        %6897 = vmatprep.subr.bf16.mxu0 0
        %6898 = vmatpush1.bf16.msra.mxu0 %v6555
        %6899 = vmatprep.subr.bf16.mxu0 0
        %6900 = vmatpush1.bf16.msra.mxu0 %v6554
        %6901 = vmatprep.subr.bf16.mxu0 0
        %6902 = vmatpush1.bf16.msra.mxu0 %v6553
        %6903 = vmatprep.subr.bf16.mxu0 0
        %6904 = vmatpush1.bf16.msra.mxu0 %v6552
        %6905 = vmatprep.subr.bf16.mxu0 0
        %6906 = vmatpush1.bf16.msra.mxu0 %v6551
        %6907 = vmatprep.subr.bf16.mxu0 0
        %6908 = vmatpush2.bf16.msra.mxu0 0
        %6909 = vmatprep.subr.bf16.mxu0 0
        %6910 = vmatpush2.bf16.msra.mxu0 0
        %6911 = vmatprep.subr.bf16.mxu0 0
        %6912 = vmatpush2.bf16.msra.mxu0 0
        %6913 = vmatprep.subr.bf16.mxu0 0
        %6914 = vmatpush2.bf16.msra.mxu0 0
        %6915 = vmatprep.subr.bf16.mxu0 0
        %6916 = vmatpush2.bf16.msra.mxu0 0
        %6917 = vmatprep.subr.bf16.mxu0 0
        %6918 = vmatpush2.bf16.msra.mxu0 0
        %6919 = vmatprep.subr.bf16.mxu0 0
        %6920 = vmatpush2.bf16.msra.mxu0 0
        %6921 = vmatprep.subr.bf16.mxu0 0
        %6922 = vmatpush2.bf16.msra.mxu0 0
        %6923 = vmatprep.mubr.bf16.mxu0 0
        %6924 = vmatmul.mubr.bf16.gmra.mxu0 %v6051
        %v6925 = vpop.f32.mrf.mxu0
        %v6926 = vadd.f32 %v6861, %v6925
        %v6927 = vpop.f32.mrf.mxu0
        %v6928 = vpop.f32.mrf.mxu0
        %v6929 = vadd.f32 %v6864, %v6928
        %v6930 = vpop.f32.mrf.mxu0
        %6931 = vmatprep.mubr.bf16.mxu0 0
        %6932 = vmatmul.mubr.bf16.gmra.mxu0 %v6052
        %v6933 = vpop.f32.mrf.mxu0
        %v6934 = vadd.f32 %v6869, %v6933
        %v6935 = vpop.f32.mrf.mxu0
        %v6936 = vpop.f32.mrf.mxu0
        %v6937 = vadd.f32 %v6872, %v6936
        %v6938 = vpop.f32.mrf.mxu0
        %6939 = vmatprep.mubr.bf16.mxu0 0
        %6940 = vmatmul.mubr.bf16.gmra.mxu0 %v6053
        %v6941 = vpop.f32.mrf.mxu0
        %v6942 = vadd.f32 %v6877, %v6941
        %v6943 = vpop.f32.mrf.mxu0
        %v6944 = vpop.f32.mrf.mxu0
        %v6945 = vadd.f32 %v6880, %v6944
        %v6946 = vpop.f32.mrf.mxu0
        %6947 = vmatprep.mubr.bf16.mxu0 0
        %6948 = vmatmul.mubr.bf16.gmra.mxu0 %v6054
        %v6949 = vpop.f32.mrf.mxu0
        %v6950 = vadd.f32 %v6885, %v6949
        %v6951 = vpop.f32.mrf.mxu0
        %v6952 = vpop.f32.mrf.mxu0
        %v6953 = vadd.f32 %v6888, %v6952
        %v6954 = vpop.f32.mrf.mxu0
        %6955 = vdwg.mxu0
        %v6956 = vld [vmem:[#allocation5 + $0x98] sm:$0x1]
        %v6957 = vlaneseq
        %v6958 = vshrl.u32 %v6957, 7
        %v6959 = vsub.s32 0, %v6958
        %v6960 = vrot.slane %v6956, %v6959
        %v6961 = vmul.f32 %v6926, %v6960
        %v6962 = vmul.f32 %v6929, %v6960
        %v6963 = vmul.f32 %v6934, %v6960
        %v6964 = vmul.f32 %v6937, %v6960
        %v6965 = vmul.f32 %v6942, %v6960
        %v6966 = vmul.f32 %v6945, %v6960
        %v6967 = vmul.f32 %v6950, %v6960
        %v6968 = vmul.f32 %v6953, %v6960
        %v6969 = vld [vmem:[#allocation5 + $0xa0] sm:$0x1]
        %v6970 = vlaneseq
        %v6971 = vshrl.u32 %v6970, 7
        %v6972 = vsub.s32 0, %v6971
        %v6973 = vrot.slane %v6969, %v6972
        %v6974 = vadd.f32 %v6961, %v6973
        %v6975 = vadd.f32 %v6962, %v6973
        %v6976 = vadd.f32 %v6963, %v6973
        %v6977 = vadd.f32 %v6964, %v6973
        %v6978 = vadd.f32 %v6965, %v6973
        %v6979 = vadd.f32 %v6966, %v6973
        %v6980 = vadd.f32 %v6967, %v6973
        %v6981 = vadd.f32 %v6968, %v6973
        %v6982 = vmax.f32 %v6974, 0.0
        %v6983 = vmax.f32 %v6975, 0.0
        %v6984 = vmax.f32 %v6976, 0.0
        %v6985 = vmax.f32 %v6977, 0.0
        %v6986 = vmax.f32 %v6978, 0.0
        %v6987 = vmax.f32 %v6979, 0.0
        %v6988 = vmax.f32 %v6980, 0.0
        %v6989 = vmax.f32 %v6981, 0.0
        %v6990 = vld [vmem:[#allocation3 + $0xc90] sm:$0xf]
        %v6991 = vld [vmem:[#allocation3 + $0xc94] sm:$0xf]
        %v6992 = vld [vmem:[#allocation3 + $0xc98] sm:$0xf]
        %v6993 = vld [vmem:[#allocation3 + $0xc9c] sm:$0xf]
        %v6994 = vld [vmem:[#allocation3 + $0xca0] sm:$0xf]
        %v6995 = vld [vmem:[#allocation3 + $0xca4] sm:$0xf]
        %v6996 = vld [vmem:[#allocation3 + $0xca8] sm:$0xf]
        %v6997 = vld [vmem:[#allocation3 + $0xcac] sm:$0xf]
        %v6998 = vld [vmem:[#allocation3 + $0xcb0] sm:$0xf]
        %v6999 = vld [vmem:[#allocation3 + $0xcb4] sm:$0xf]
        %v7000 = vld [vmem:[#allocation3 + $0xcb8] sm:$0xf]
        %v7001 = vld [vmem:[#allocation3 + $0xcbc] sm:$0xf]
        %v7002 = vld [vmem:[#allocation3 + $0xcc0] sm:$0xf]
        %v7003 = vld [vmem:[#allocation3 + $0xcc4] sm:$0xf]
        %v7004 = vld [vmem:[#allocation3 + $0xcc8] sm:$0xf]
        %v7005 = vld [vmem:[#allocation3 + $0xccc] sm:$0xf]
        %v7006 = vld [vmem:[#allocation3 + $0xcd0] sm:$0xf]
        %v7007 = vld [vmem:[#allocation3 + $0xcd4] sm:$0xf]
        %v7008 = vld [vmem:[#allocation3 + $0xcd8] sm:$0xf]
        %v7009 = vld [vmem:[#allocation3 + $0xcdc] sm:$0xf]
        %v7010 = vld [vmem:[#allocation3 + $0xce0] sm:$0xf]
        %v7011 = vld [vmem:[#allocation3 + $0xce4] sm:$0xf]
        %v7012 = vld [vmem:[#allocation3 + $0xce8] sm:$0xf]
        %v7013 = vld [vmem:[#allocation3 + $0xcec] sm:$0xf]
        %v7014 = vld [vmem:[#allocation3 + $0xcf0] sm:$0xf]
        %v7015 = vld [vmem:[#allocation3 + $0xcf4] sm:$0xf]
        %v7016 = vld [vmem:[#allocation3 + $0xcf8] sm:$0xf]
        %v7017 = vld [vmem:[#allocation3 + $0xcfc] sm:$0xf]
        %v7018 = vld [vmem:[#allocation3 + $0xd00] sm:$0xf]
        %v7019 = vld [vmem:[#allocation3 + $0xd04] sm:$0xf]
        %v7020 = vld [vmem:[#allocation3 + $0xd08] sm:$0xf]
        %v7021 = vld [vmem:[#allocation3 + $0xd0c] sm:$0xf]
        %v7022 = vpack.c.bf16 %v6983, %v6982
        %v7023 = vpack.c.bf16 %v6985, %v6984
        %v7024 = vpack.c.bf16 %v6987, %v6986
        %v7025 = vpack.c.bf16 %v6989, %v6988
        %v7058 = vunpack.c.l.b16 %v6990
        %v7059 = vunpack.c.l.b16 %v6991
        %v7060 = vunpack.c.l.b16 %v6992
        %v7061 = vunpack.c.l.b16 %v6993
        %v7062 = vunpack.c.l.b16 %v6994
        %v7063 = vunpack.c.l.b16 %v6995
        %v7064 = vunpack.c.l.b16 %v6996
        %v7065 = vunpack.c.l.b16 %v6997
        %v7066 = vunpack.c.l.b16 %v6998
        %v7067 = vunpack.c.l.b16 %v6999
        %v7068 = vunpack.c.l.b16 %v7000
        %v7069 = vunpack.c.l.b16 %v7001
        %v7070 = vunpack.c.l.b16 %v7002
        %v7071 = vunpack.c.l.b16 %v7003
        %v7072 = vunpack.c.l.b16 %v7004
        %v7073 = vunpack.c.l.b16 %v7005
        %v7074 = vunpack.c.l.b16 %v7006
        %v7075 = vunpack.c.l.b16 %v7007
        %v7076 = vunpack.c.l.b16 %v7008
        %v7077 = vunpack.c.l.b16 %v7009
        %v7078 = vunpack.c.l.b16 %v7010
        %v7079 = vunpack.c.l.b16 %v7011
        %v7080 = vunpack.c.l.b16 %v7012
        %v7081 = vunpack.c.l.b16 %v7013
        %v7082 = vunpack.c.l.b16 %v7014
        %v7083 = vunpack.c.l.b16 %v7015
        %v7084 = vunpack.c.l.b16 %v7016
        %v7085 = vunpack.c.l.b16 %v7017
        %v7086 = vunpack.c.l.b16 %v7018
        %v7087 = vunpack.c.l.b16 %v7019
        %v7088 = vunpack.c.l.b16 %v7020
        %v7089 = vunpack.c.l.b16 %v7021
        %v7090 = vpack.c.b16 %v7059, %v7058
        %v7091 = vpack.c.b16 %v7061, %v7060
        %v7092 = vpack.c.b16 %v7063, %v7062
        %v7093 = vpack.c.b16 %v7065, %v7064
        %v7094 = vpack.c.b16 %v7067, %v7066
        %v7095 = vpack.c.b16 %v7069, %v7068
        %v7096 = vpack.c.b16 %v7071, %v7070
        %v7097 = vpack.c.b16 %v7073, %v7072
        %v7098 = vpack.c.b16 %v7075, %v7074
        %v7099 = vpack.c.b16 %v7077, %v7076
        %v7100 = vpack.c.b16 %v7079, %v7078
        %v7101 = vpack.c.b16 %v7081, %v7080
        %v7102 = vpack.c.b16 %v7083, %v7082
        %v7103 = vpack.c.b16 %v7085, %v7084
        %v7104 = vpack.c.b16 %v7087, %v7086
        %v7105 = vpack.c.b16 %v7089, %v7088
        %vm7106 = vcmask 523264
        %v7108 = vsel %vm7106, %v7090, 0
        %v7111 = vsel %vm7106, %v7091, 0
        %v7114 = vsel %vm7106, %v7092, 0
        %v7117 = vsel %vm7106, %v7093, 0
        %v7120 = vsel %vm7106, %v7094, 0
        %v7123 = vsel %vm7106, %v7095, 0
        %v7126 = vsel %vm7106, %v7096, 0
        %v7129 = vsel %vm7106, %v7097, 0
        %v7132 = vsel %vm7106, %v7098, 0
        %v7135 = vsel %vm7106, %v7099, 0
        %v7138 = vsel %vm7106, %v7100, 0
        %v7141 = vsel %vm7106, %v7101, 0
        %v7144 = vsel %vm7106, %v7102, 0
        %v7147 = vsel %vm7106, %v7103, 0
        %v7150 = vsel %vm7106, %v7104, 0
        %v7153 = vsel %vm7106, %v7105, 0
        %7155 = vmatprep.subr.bf16.mxu0 0
        %7156 = vmatpush1.bf16.msra.mxu0 0
        %7157 = vmatprep.subr.bf16.mxu0 0
        %7158 = vmatpush1.bf16.msra.mxu0 0
        %7159 = vmatprep.subr.bf16.mxu0 0
        %7160 = vmatpush1.bf16.msra.mxu0 0
        %7161 = vmatprep.subr.bf16.mxu0 0
        %7162 = vmatpush1.bf16.msra.mxu0 0
        %7163 = vmatprep.subr.bf16.mxu0 0
        %7164 = vmatpush1.bf16.msra.mxu0 %v7025
        %7165 = vmatprep.subr.bf16.mxu0 0
        %7166 = vmatpush1.bf16.msra.mxu0 %v7024
        %7167 = vmatprep.subr.bf16.mxu0 0
        %7168 = vmatpush1.bf16.msra.mxu0 %v7023
        %7169 = vmatprep.subr.bf16.mxu0 0
        %7170 = vmatpush1.bf16.msra.mxu0 %v7022
        %7171 = vmatprep.subr.bf16.mxu0 0
        %7172 = vmatpush2.bf16.msra.mxu0 0
        %7173 = vmatprep.subr.bf16.mxu0 0
        %7174 = vmatpush2.bf16.msra.mxu0 0
        %7175 = vmatprep.subr.bf16.mxu0 0
        %7176 = vmatpush2.bf16.msra.mxu0 0
        %7177 = vmatprep.subr.bf16.mxu0 0
        %7178 = vmatpush2.bf16.msra.mxu0 0
        %7179 = vmatprep.subr.bf16.mxu0 0
        %7180 = vmatpush2.bf16.msra.mxu0 0
        %7181 = vmatprep.subr.bf16.mxu0 0
        %7182 = vmatpush2.bf16.msra.mxu0 0
        %7183 = vmatprep.subr.bf16.mxu0 0
        %7184 = vmatpush2.bf16.msra.mxu0 0
        %7185 = vmatprep.subr.bf16.mxu0 0
        %7186 = vmatpush2.bf16.msra.mxu0 0
        %7187 = vmatprep.mubr.bf16.mxu0 0
        %7188 = vmatmul.mubr.bf16.gmra.mxu0 %v7108
        %v7189 = vpop.f32.mrf.mxu0
        %v7190 = vadd.f32 0.0, %v7189
        %v7191 = vpop.f32.mrf.mxu0
        %v7192 = vpop.f32.mrf.mxu0
        %v7193 = vadd.f32 0.0, %v7192
        %v7194 = vpop.f32.mrf.mxu0
        %7195 = vmatprep.mubr.bf16.mxu0 0
        %7196 = vmatmul.mubr.bf16.gmra.mxu0 %v7111
        %v7197 = vpop.f32.mrf.mxu0
        %v7198 = vadd.f32 0.0, %v7197
        %v7199 = vpop.f32.mrf.mxu0
        %v7200 = vpop.f32.mrf.mxu0
        %v7201 = vadd.f32 0.0, %v7200
        %v7202 = vpop.f32.mrf.mxu0
        %7203 = vmatprep.mubr.bf16.mxu0 0
        %7204 = vmatmul.mubr.bf16.gmra.mxu0 %v7114
        %v7205 = vpop.f32.mrf.mxu0
        %v7206 = vadd.f32 0.0, %v7205
        %v7207 = vpop.f32.mrf.mxu0
        %v7208 = vpop.f32.mrf.mxu0
        %v7209 = vadd.f32 0.0, %v7208
        %v7210 = vpop.f32.mrf.mxu0
        %7211 = vmatprep.mubr.bf16.mxu0 0
        %7212 = vmatmul.mubr.bf16.gmra.mxu0 %v7117
        %v7213 = vpop.f32.mrf.mxu0
        %v7214 = vadd.f32 0.0, %v7213
        %v7215 = vpop.f32.mrf.mxu0
        %v7216 = vpop.f32.mrf.mxu0
        %v7217 = vadd.f32 0.0, %v7216
        %v7218 = vpop.f32.mrf.mxu0
        %7219 = vmatprep.mubr.bf16.mxu0 0
        %7220 = vmatmul.mubr.bf16.gmra.mxu0 %v7120
        %v7221 = vpop.f32.mrf.mxu0
        %v7222 = vadd.f32 0.0, %v7221
        %v7223 = vpop.f32.mrf.mxu0
        %v7224 = vpop.f32.mrf.mxu0
        %v7225 = vadd.f32 0.0, %v7224
        %v7226 = vpop.f32.mrf.mxu0
        %7227 = vmatprep.mubr.bf16.mxu0 0
        %7228 = vmatmul.mubr.bf16.gmra.mxu0 %v7123
        %v7229 = vpop.f32.mrf.mxu0
        %v7230 = vadd.f32 0.0, %v7229
        %v7231 = vpop.f32.mrf.mxu0
        %v7232 = vpop.f32.mrf.mxu0
        %v7233 = vadd.f32 0.0, %v7232
        %v7234 = vpop.f32.mrf.mxu0
        %7235 = vmatprep.mubr.bf16.mxu0 0
        %7236 = vmatmul.mubr.bf16.gmra.mxu0 %v7126
        %v7237 = vpop.f32.mrf.mxu0
        %v7238 = vadd.f32 0.0, %v7237
        %v7239 = vpop.f32.mrf.mxu0
        %v7240 = vpop.f32.mrf.mxu0
        %v7241 = vadd.f32 0.0, %v7240
        %v7242 = vpop.f32.mrf.mxu0
        %7243 = vmatprep.mubr.bf16.mxu0 0
        %7244 = vmatmul.mubr.bf16.gmra.mxu0 %v7129
        %v7245 = vpop.f32.mrf.mxu0
        %v7246 = vadd.f32 0.0, %v7245
        %v7247 = vpop.f32.mrf.mxu0
        %v7248 = vpop.f32.mrf.mxu0
        %v7249 = vadd.f32 0.0, %v7248
        %v7250 = vpop.f32.mrf.mxu0
        %7251 = vmatprep.mubr.bf16.mxu0 0
        %7252 = vmatmul.mubr.bf16.gmra.mxu0 %v7132
        %v7253 = vpop.f32.mrf.mxu0
        %v7254 = vadd.f32 0.0, %v7253
        %v7255 = vpop.f32.mrf.mxu0
        %v7256 = vpop.f32.mrf.mxu0
        %v7257 = vadd.f32 0.0, %v7256
        %v7258 = vpop.f32.mrf.mxu0
        %7259 = vmatprep.mubr.bf16.mxu0 0
        %7260 = vmatmul.mubr.bf16.gmra.mxu0 %v7135
        %v7261 = vpop.f32.mrf.mxu0
        %v7262 = vadd.f32 0.0, %v7261
        %v7263 = vpop.f32.mrf.mxu0
        %v7264 = vpop.f32.mrf.mxu0
        %v7265 = vadd.f32 0.0, %v7264
        %v7266 = vpop.f32.mrf.mxu0
        %7267 = vmatprep.mubr.bf16.mxu0 0
        %7268 = vmatmul.mubr.bf16.gmra.mxu0 %v7138
        %v7269 = vpop.f32.mrf.mxu0
        %v7270 = vadd.f32 0.0, %v7269
        %v7271 = vpop.f32.mrf.mxu0
        %v7272 = vpop.f32.mrf.mxu0
        %v7273 = vadd.f32 0.0, %v7272
        %v7274 = vpop.f32.mrf.mxu0
        %7275 = vmatprep.mubr.bf16.mxu0 0
        %7276 = vmatmul.mubr.bf16.gmra.mxu0 %v7141
        %v7277 = vpop.f32.mrf.mxu0
        %v7278 = vadd.f32 0.0, %v7277
        %v7279 = vpop.f32.mrf.mxu0
        %v7280 = vpop.f32.mrf.mxu0
        %v7281 = vadd.f32 0.0, %v7280
        %v7282 = vpop.f32.mrf.mxu0
        %7283 = vmatprep.mubr.bf16.mxu0 0
        %7284 = vmatmul.mubr.bf16.gmra.mxu0 %v7144
        %v7285 = vpop.f32.mrf.mxu0
        %v7286 = vadd.f32 0.0, %v7285
        %v7287 = vpop.f32.mrf.mxu0
        %v7288 = vpop.f32.mrf.mxu0
        %v7289 = vadd.f32 0.0, %v7288
        %v7290 = vpop.f32.mrf.mxu0
        %7291 = vmatprep.mubr.bf16.mxu0 0
        %7292 = vmatmul.mubr.bf16.gmra.mxu0 %v7147
        %v7293 = vpop.f32.mrf.mxu0
        %v7294 = vadd.f32 0.0, %v7293
        %v7295 = vpop.f32.mrf.mxu0
        %v7296 = vpop.f32.mrf.mxu0
        %v7297 = vadd.f32 0.0, %v7296
        %v7298 = vpop.f32.mrf.mxu0
        %7299 = vmatprep.mubr.bf16.mxu0 0
        %7300 = vmatmul.mubr.bf16.gmra.mxu0 %v7150
        %v7301 = vpop.f32.mrf.mxu0
        %v7302 = vadd.f32 0.0, %v7301
        %v7303 = vpop.f32.mrf.mxu0
        %v7304 = vpop.f32.mrf.mxu0
        %v7305 = vadd.f32 0.0, %v7304
        %v7306 = vpop.f32.mrf.mxu0
        %7307 = vmatprep.mubr.bf16.mxu0 0
        %7308 = vmatmul.mubr.bf16.gmra.mxu0 %v7153
        %v7309 = vpop.f32.mrf.mxu0
        %v7310 = vadd.f32 0.0, %v7309
        %v7311 = vpop.f32.mrf.mxu0
        %v7312 = vpop.f32.mrf.mxu0
        %v7313 = vadd.f32 0.0, %v7312
        %v7314 = vpop.f32.mrf.mxu0
        %7315 = vdwg.mxu0
        %7316 = vst [vmem:[#allocation2] sm:$0xff] 0.0
        %7317 = vst [vmem:[#allocation2 + $0x8] sm:$0xff] 0.0
        %7318 = vst [vmem:[#allocation2 + $0x10] sm:$0x1] 0.0
        %7319 = vst [vmem:[#allocation2 + $0x111] sm:$0xff] 0.0
        %7320 = vst [vmem:[#allocation2 + $0x119] sm:$0xff] 0.0
        %7321 = vst [vmem:[#allocation2 + $0x121] sm:$0x1] 0.0
        %7322 = vst [vmem:[#allocation2 + $0x11] sm:$0xff] %v7190
        %7323 = vst [vmem:[#allocation2 + $0x19] sm:$0xff] %v7193
        %7324 = vst [vmem:[#allocation2 + $0x21] sm:$0xff] %v7198
        %7325 = vst [vmem:[#allocation2 + $0x29] sm:$0xff] %v7201
        %7326 = vst [vmem:[#allocation2 + $0x31] sm:$0xff] %v7206
        %7327 = vst [vmem:[#allocation2 + $0x39] sm:$0xff] %v7209
        %7328 = vst [vmem:[#allocation2 + $0x41] sm:$0xff] %v7214
        %7329 = vst [vmem:[#allocation2 + $0x49] sm:$0xff] %v7217
        %7330 = vst [vmem:[#allocation2 + $0x51] sm:$0xff] %v7222
        %7331 = vst [vmem:[#allocation2 + $0x59] sm:$0xff] %v7225
        %7332 = vst [vmem:[#allocation2 + $0x61] sm:$0xff] %v7230
        %7333 = vst [vmem:[#allocation2 + $0x69] sm:$0xff] %v7233
        %7334 = vst [vmem:[#allocation2 + $0x71] sm:$0xff] %v7238
        %7335 = vst [vmem:[#allocation2 + $0x79] sm:$0xff] %v7241
        %7336 = vst [vmem:[#allocation2 + $0x81] sm:$0xff] %v7246
        %7337 = vst [vmem:[#allocation2 + $0x89] sm:$0xff] %v7249
        %7338 = vst [vmem:[#allocation2 + $0x91] sm:$0xff] %v7254
        %7339 = vst [vmem:[#allocation2 + $0x99] sm:$0xff] %v7257
        %7340 = vst [vmem:[#allocation2 + $0xa1] sm:$0xff] %v7262
        %7341 = vst [vmem:[#allocation2 + $0xa9] sm:$0xff] %v7265
        %7342 = vst [vmem:[#allocation2 + $0xb1] sm:$0xff] %v7270
        %7343 = vst [vmem:[#allocation2 + $0xb9] sm:$0xff] %v7273
        %7344 = vst [vmem:[#allocation2 + $0xc1] sm:$0xff] %v7278
        %7345 = vst [vmem:[#allocation2 + $0xc9] sm:$0xff] %v7281
        %7346 = vst [vmem:[#allocation2 + $0xd1] sm:$0xff] %v7286
        %7347 = vst [vmem:[#allocation2 + $0xd9] sm:$0xff] %v7289
        %7348 = vst [vmem:[#allocation2 + $0xe1] sm:$0xff] %v7294
        %7349 = vst [vmem:[#allocation2 + $0xe9] sm:$0xff] %v7297
        %7350 = vst [vmem:[#allocation2 + $0xf1] sm:$0xff] %v7302
        %7351 = vst [vmem:[#allocation2 + $0xf9] sm:$0xff] %v7305
        %7352 = vst [vmem:[#allocation2 + $0x101] sm:$0xff] %v7310
        %7353 = vst [vmem:[#allocation2 + $0x109] sm:$0xff] %v7313
        %v7354 = vld [vmem:[#allocation2] sm:$0xff]
        %v7355 = vld [vmem:[#allocation2 + $0x8] sm:$0xff]
        %v7356 = vld [vmem:[#allocation2 + $0x10] sm:$0xff]
        %v7357 = vld [vmem:[#allocation2 + $0x18] sm:$0xff]
        %v7358 = vld [vmem:[#allocation2 + $0x20] sm:$0xff]
        %v7359 = vld [vmem:[#allocation2 + $0x28] sm:$0xff]
        %v7360 = vld [vmem:[#allocation2 + $0x30] sm:$0xff]
        %v7361 = vld [vmem:[#allocation2 + $0x38] sm:$0xff]
        %v7362 = vld [vmem:[#allocation2 + $0x40] sm:$0xff]
        %v7363 = vld [vmem:[#allocation2 + $0x48] sm:$0xff]
        %v7364 = vld [vmem:[#allocation2 + $0x50] sm:$0xff]
        %v7365 = vld [vmem:[#allocation2 + $0x58] sm:$0xff]
        %v7366 = vld [vmem:[#allocation2 + $0x60] sm:$0xff]
        %v7367 = vld [vmem:[#allocation2 + $0x68] sm:$0xff]
        %v7368 = vld [vmem:[#allocation2 + $0x70] sm:$0xff]
        %v7369 = vld [vmem:[#allocation2 + $0x78] sm:$0xff]
        %v7370 = vld [vmem:[#allocation2 + $0x80] sm:$0xff]
        %v7371 = vld [vmem:[#allocation2 + $0x88] sm:$0xff]
        %v7372 = vld [vmem:[#allocation2 + $0x90] sm:$0xff]
        %v7373 = vld [vmem:[#allocation2 + $0x98] sm:$0xff]
        %v7374 = vld [vmem:[#allocation2 + $0xa0] sm:$0xff]
        %v7375 = vld [vmem:[#allocation2 + $0xa8] sm:$0xff]
        %v7376 = vld [vmem:[#allocation2 + $0xb0] sm:$0xff]
        %v7377 = vld [vmem:[#allocation2 + $0xb8] sm:$0xff]
        %v7378 = vld [vmem:[#allocation2 + $0xc0] sm:$0xff]
        %v7379 = vld [vmem:[#allocation2 + $0xc8] sm:$0xff]
        %v7380 = vld [vmem:[#allocation2 + $0xd0] sm:$0xff]
        %v7381 = vld [vmem:[#allocation2 + $0xd8] sm:$0xff]
        %v7382 = vld [vmem:[#allocation2 + $0xe0] sm:$0xff]
        %v7383 = vld [vmem:[#allocation2 + $0xe8] sm:$0xff]
        %v7384 = vld [vmem:[#allocation2 + $0xf0] sm:$0xff]
        %v7385 = vld [vmem:[#allocation2 + $0xf8] sm:$0xff]
        %v7386 = vmul.f32 %v7354, %v827
        %v7387 = vmul.f32 %v7355, %v828
        %v7388 = vmul.f32 %v7356, %v829
        %v7389 = vmul.f32 %v7357, %v830
        %v7390 = vmul.f32 %v7358, %v831
        %v7391 = vmul.f32 %v7359, %v832
        %v7392 = vmul.f32 %v7360, %v833
        %v7393 = vmul.f32 %v7361, %v834
        %v7394 = vmul.f32 %v7362, %v835
        %v7395 = vmul.f32 %v7363, %v836
        %v7396 = vmul.f32 %v7364, %v837
        %v7397 = vmul.f32 %v7365, %v838
        %v7398 = vmul.f32 %v7366, %v839
        %v7399 = vmul.f32 %v7367, %v840
        %v7400 = vmul.f32 %v7368, %v841
        %v7401 = vmul.f32 %v7369, %v842
        %v7402 = vmul.f32 %v7370, %v843
        %v7403 = vmul.f32 %v7371, %v844
        %v7404 = vmul.f32 %v7372, %v845
        %v7405 = vmul.f32 %v7373, %v846
        %v7406 = vmul.f32 %v7374, %v847
        %v7407 = vmul.f32 %v7375, %v848
        %v7408 = vmul.f32 %v7376, %v849
        %v7409 = vmul.f32 %v7377, %v850
        %v7410 = vmul.f32 %v7378, %v851
        %v7411 = vmul.f32 %v7379, %v852
        %v7412 = vmul.f32 %v7380, %v853
        %v7413 = vmul.f32 %v7381, %v854
        %v7414 = vmul.f32 %v7382, %v855
        %v7415 = vmul.f32 %v7383, %v856
        %v7416 = vmul.f32 %v7384, %v857
        %v7417 = vmul.f32 %v7385, %v858
        %v7418 = vpack.c.bf16 %v7387, %v7386
        %v7419 = vpack.c.bf16 %v7389, %v7388
        %v7420 = vpack.c.bf16 %v7391, %v7390
        %v7421 = vpack.c.bf16 %v7393, %v7392
        %v7422 = vpack.c.bf16 %v7395, %v7394
        %v7423 = vpack.c.bf16 %v7397, %v7396
        %v7424 = vpack.c.bf16 %v7399, %v7398
        %v7425 = vpack.c.bf16 %v7401, %v7400
        %v7426 = vpack.c.bf16 %v7403, %v7402
        %v7427 = vpack.c.bf16 %v7405, %v7404
        %v7428 = vpack.c.bf16 %v7407, %v7406
        %v7429 = vpack.c.bf16 %v7409, %v7408
        %v7430 = vpack.c.bf16 %v7411, %v7410
        %v7431 = vpack.c.bf16 %v7413, %v7412
        %v7432 = vpack.c.bf16 %v7415, %v7414
        %v7433 = vpack.c.bf16 %v7417, %v7416
        %v7434 = vld [vmem:[#allocation2 + $0x1] sm:$0xff]
        %v7435 = vld [vmem:[#allocation2 + $0x9] sm:$0xff]
        %v7436 = vld [vmem:[#allocation2 + $0x11] sm:$0xff]
        %v7437 = vld [vmem:[#allocation2 + $0x19] sm:$0xff]
        %v7438 = vld [vmem:[#allocation2 + $0x21] sm:$0xff]
        %v7439 = vld [vmem:[#allocation2 + $0x29] sm:$0xff]
        %v7440 = vld [vmem:[#allocation2 + $0x31] sm:$0xff]
        %v7441 = vld [vmem:[#allocation2 + $0x39] sm:$0xff]
        %v7442 = vld [vmem:[#allocation2 + $0x41] sm:$0xff]
        %v7443 = vld [vmem:[#allocation2 + $0x49] sm:$0xff]
        %v7444 = vld [vmem:[#allocation2 + $0x51] sm:$0xff]
        %v7445 = vld [vmem:[#allocation2 + $0x59] sm:$0xff]
        %v7446 = vld [vmem:[#allocation2 + $0x61] sm:$0xff]
        %v7447 = vld [vmem:[#allocation2 + $0x69] sm:$0xff]
        %v7448 = vld [vmem:[#allocation2 + $0x71] sm:$0xff]
        %v7449 = vld [vmem:[#allocation2 + $0x79] sm:$0xff]
        %v7450 = vld [vmem:[#allocation2 + $0x81] sm:$0xff]
        %v7451 = vld [vmem:[#allocation2 + $0x89] sm:$0xff]
        %v7452 = vld [vmem:[#allocation2 + $0x91] sm:$0xff]
        %v7453 = vld [vmem:[#allocation2 + $0x99] sm:$0xff]
        %v7454 = vld [vmem:[#allocation2 + $0xa1] sm:$0xff]
        %v7455 = vld [vmem:[#allocation2 + $0xa9] sm:$0xff]
        %v7456 = vld [vmem:[#allocation2 + $0xb1] sm:$0xff]
        %v7457 = vld [vmem:[#allocation2 + $0xb9] sm:$0xff]
        %v7458 = vld [vmem:[#allocation2 + $0xc1] sm:$0xff]
        %v7459 = vld [vmem:[#allocation2 + $0xc9] sm:$0xff]
        %v7460 = vld [vmem:[#allocation2 + $0xd1] sm:$0xff]
        %v7461 = vld [vmem:[#allocation2 + $0xd9] sm:$0xff]
        %v7462 = vld [vmem:[#allocation2 + $0xe1] sm:$0xff]
        %v7463 = vld [vmem:[#allocation2 + $0xe9] sm:$0xff]
        %v7464 = vld [vmem:[#allocation2 + $0xf1] sm:$0xff]
        %v7465 = vld [vmem:[#allocation2 + $0xf9] sm:$0xff]
        %v7466 = vpack.c.bf16 %v7435, %v7434
        %v7467 = vpack.c.bf16 %v7437, %v7436
        %v7468 = vpack.c.bf16 %v7439, %v7438
        %v7469 = vpack.c.bf16 %v7441, %v7440
        %v7470 = vpack.c.bf16 %v7443, %v7442
        %v7471 = vpack.c.bf16 %v7445, %v7444
        %v7472 = vpack.c.bf16 %v7447, %v7446
        %v7473 = vpack.c.bf16 %v7449, %v7448
        %v7474 = vpack.c.bf16 %v7451, %v7450
        %v7475 = vpack.c.bf16 %v7453, %v7452
        %v7476 = vpack.c.bf16 %v7455, %v7454
        %v7477 = vpack.c.bf16 %v7457, %v7456
        %v7478 = vpack.c.bf16 %v7459, %v7458
        %v7479 = vpack.c.bf16 %v7461, %v7460
        %v7480 = vpack.c.bf16 %v7463, %v7462
        %v7481 = vpack.c.bf16 %v7465, %v7464
        %v7482 = vld [vmem:[#allocation2 + $0x2] sm:$0xff]
        %v7483 = vld [vmem:[#allocation2 + $0xa] sm:$0xff]
        %v7484 = vld [vmem:[#allocation2 + $0x12] sm:$0xff]
        %v7485 = vld [vmem:[#allocation2 + $0x1a] sm:$0xff]
        %v7486 = vld [vmem:[#allocation2 + $0x22] sm:$0xff]
        %v7487 = vld [vmem:[#allocation2 + $0x2a] sm:$0xff]
        %v7488 = vld [vmem:[#allocation2 + $0x32] sm:$0xff]
        %v7489 = vld [vmem:[#allocation2 + $0x3a] sm:$0xff]
        %v7490 = vld [vmem:[#allocation2 + $0x42] sm:$0xff]
        %v7491 = vld [vmem:[#allocation2 + $0x4a] sm:$0xff]
        %v7492 = vld [vmem:[#allocation2 + $0x52] sm:$0xff]
        %v7493 = vld [vmem:[#allocation2 + $0x5a] sm:$0xff]
        %v7494 = vld [vmem:[#allocation2 + $0x62] sm:$0xff]
        %v7495 = vld [vmem:[#allocation2 + $0x6a] sm:$0xff]
        %v7496 = vld [vmem:[#allocation2 + $0x72] sm:$0xff]
        %v7497 = vld [vmem:[#allocation2 + $0x7a] sm:$0xff]
        %v7498 = vld [vmem:[#allocation2 + $0x82] sm:$0xff]
        %v7499 = vld [vmem:[#allocation2 + $0x8a] sm:$0xff]
        %v7500 = vld [vmem:[#allocation2 + $0x92] sm:$0xff]
        %v7501 = vld [vmem:[#allocation2 + $0x9a] sm:$0xff]
        %v7502 = vld [vmem:[#allocation2 + $0xa2] sm:$0xff]
        %v7503 = vld [vmem:[#allocation2 + $0xaa] sm:$0xff]
        %v7504 = vld [vmem:[#allocation2 + $0xb2] sm:$0xff]
        %v7505 = vld [vmem:[#allocation2 + $0xba] sm:$0xff]
        %v7506 = vld [vmem:[#allocation2 + $0xc2] sm:$0xff]
        %v7507 = vld [vmem:[#allocation2 + $0xca] sm:$0xff]
        %v7508 = vld [vmem:[#allocation2 + $0xd2] sm:$0xff]
        %v7509 = vld [vmem:[#allocation2 + $0xda] sm:$0xff]
        %v7510 = vld [vmem:[#allocation2 + $0xe2] sm:$0xff]
        %v7511 = vld [vmem:[#allocation2 + $0xea] sm:$0xff]
        %v7512 = vld [vmem:[#allocation2 + $0xf2] sm:$0xff]
        %v7513 = vld [vmem:[#allocation2 + $0xfa] sm:$0xff]
        %v7514 = vmul.f32 %v7482, %v923
        %v7515 = vmul.f32 %v7483, %v924
        %v7516 = vmul.f32 %v7484, %v925
        %v7517 = vmul.f32 %v7485, %v926
        %v7518 = vmul.f32 %v7486, %v927
        %v7519 = vmul.f32 %v7487, %v928
        %v7520 = vmul.f32 %v7488, %v929
        %v7521 = vmul.f32 %v7489, %v930
        %v7522 = vmul.f32 %v7490, %v931
        %v7523 = vmul.f32 %v7491, %v932
        %v7524 = vmul.f32 %v7492, %v933
        %v7525 = vmul.f32 %v7493, %v934
        %v7526 = vmul.f32 %v7494, %v935
        %v7527 = vmul.f32 %v7495, %v936
        %v7528 = vmul.f32 %v7496, %v937
        %v7529 = vmul.f32 %v7497, %v938
        %v7530 = vmul.f32 %v7498, %v939
        %v7531 = vmul.f32 %v7499, %v940
        %v7532 = vmul.f32 %v7500, %v941
        %v7533 = vmul.f32 %v7501, %v942
        %v7534 = vmul.f32 %v7502, %v943
        %v7535 = vmul.f32 %v7503, %v944
        %v7536 = vmul.f32 %v7504, %v945
        %v7537 = vmul.f32 %v7505, %v946
        %v7538 = vmul.f32 %v7506, %v947
        %v7539 = vmul.f32 %v7507, %v948
        %v7540 = vmul.f32 %v7508, %v949
        %v7541 = vmul.f32 %v7509, %v950
        %v7542 = vmul.f32 %v7510, %v951
        %v7543 = vmul.f32 %v7511, %v952
        %v7544 = vmul.f32 %v7512, %v953
        %v7545 = vmul.f32 %v7513, %v954
        %v7546 = vpack.c.bf16 %v7515, %v7514
        %v7547 = vpack.c.bf16 %v7517, %v7516
        %v7548 = vpack.c.bf16 %v7519, %v7518
        %v7549 = vpack.c.bf16 %v7521, %v7520
        %v7550 = vpack.c.bf16 %v7523, %v7522
        %v7551 = vpack.c.bf16 %v7525, %v7524
        %v7552 = vpack.c.bf16 %v7527, %v7526
        %v7553 = vpack.c.bf16 %v7529, %v7528
        %v7554 = vpack.c.bf16 %v7531, %v7530
        %v7555 = vpack.c.bf16 %v7533, %v7532
        %v7556 = vpack.c.bf16 %v7535, %v7534
        %v7557 = vpack.c.bf16 %v7537, %v7536
        %v7558 = vpack.c.bf16 %v7539, %v7538
        %v7559 = vpack.c.bf16 %v7541, %v7540
        %v7560 = vpack.c.bf16 %v7543, %v7542
        %v7561 = vpack.c.bf16 %v7545, %v7544
        %v7562 = vld [vmem:[#allocation2 + $0x100] sm:$0xff]
        %v7563 = vld [vmem:[#allocation2 + $0x108] sm:$0xff]
        %v7564 = vmul.f32 %v7356, %v827
        %v7565 = vmul.f32 %v7357, %v828
        %v7566 = vmul.f32 %v7358, %v829
        %v7567 = vmul.f32 %v7359, %v830
        %v7568 = vmul.f32 %v7360, %v831
        %v7569 = vmul.f32 %v7361, %v832
        %v7570 = vmul.f32 %v7362, %v833
        %v7571 = vmul.f32 %v7363, %v834
        %v7572 = vmul.f32 %v7364, %v835
        %v7573 = vmul.f32 %v7365, %v836
        %v7574 = vmul.f32 %v7366, %v837
        %v7575 = vmul.f32 %v7367, %v838
        %v7576 = vmul.f32 %v7368, %v839
        %v7577 = vmul.f32 %v7369, %v840
        %v7578 = vmul.f32 %v7370, %v841
        %v7579 = vmul.f32 %v7371, %v842
        %v7580 = vmul.f32 %v7372, %v843
        %v7581 = vmul.f32 %v7373, %v844
        %v7582 = vmul.f32 %v7374, %v845
        %v7583 = vmul.f32 %v7375, %v846
        %v7584 = vmul.f32 %v7376, %v847
        %v7585 = vmul.f32 %v7377, %v848
        %v7586 = vmul.f32 %v7378, %v849
        %v7587 = vmul.f32 %v7379, %v850
        %v7588 = vmul.f32 %v7380, %v851
        %v7589 = vmul.f32 %v7381, %v852
        %v7590 = vmul.f32 %v7382, %v853
        %v7591 = vmul.f32 %v7383, %v854
        %v7592 = vmul.f32 %v7384, %v855
        %v7593 = vmul.f32 %v7385, %v856
        %v7594 = vmul.f32 %v7562, %v857
        %v7595 = vmul.f32 %v7563, %v858
        %v7596 = vpack.c.bf16 %v7565, %v7564
        %v7597 = vpack.c.bf16 %v7567, %v7566
        %v7598 = vpack.c.bf16 %v7569, %v7568
        %v7599 = vpack.c.bf16 %v7571, %v7570
        %v7600 = vpack.c.bf16 %v7573, %v7572
        %v7601 = vpack.c.bf16 %v7575, %v7574
        %v7602 = vpack.c.bf16 %v7577, %v7576
        %v7603 = vpack.c.bf16 %v7579, %v7578
        %v7604 = vpack.c.bf16 %v7581, %v7580
        %v7605 = vpack.c.bf16 %v7583, %v7582
        %v7606 = vpack.c.bf16 %v7585, %v7584
        %v7607 = vpack.c.bf16 %v7587, %v7586
        %v7608 = vpack.c.bf16 %v7589, %v7588
        %v7609 = vpack.c.bf16 %v7591, %v7590
        %v7610 = vpack.c.bf16 %v7593, %v7592
        %v7611 = vpack.c.bf16 %v7595, %v7594
        %v7612 = vld [vmem:[#allocation2 + $0x101] sm:$0xff]
        %v7613 = vld [vmem:[#allocation2 + $0x109] sm:$0xff]
        %v7614 = vpack.c.bf16 %v7613, %v7612
        %v7615 = vld [vmem:[#allocation2 + $0x102] sm:$0xff]
        %v7616 = vld [vmem:[#allocation2 + $0x10a] sm:$0xff]
        %v7617 = vmul.f32 %v7484, %v923
        %v7618 = vmul.f32 %v7485, %v924
        %v7619 = vmul.f32 %v7486, %v925
        %v7620 = vmul.f32 %v7487, %v926
        %v7621 = vmul.f32 %v7488, %v927
        %v7622 = vmul.f32 %v7489, %v928
        %v7623 = vmul.f32 %v7490, %v929
        %v7624 = vmul.f32 %v7491, %v930
        %v7625 = vmul.f32 %v7492, %v931
        %v7626 = vmul.f32 %v7493, %v932
        %v7627 = vmul.f32 %v7494, %v933
        %v7628 = vmul.f32 %v7495, %v934
        %v7629 = vmul.f32 %v7496, %v935
        %v7630 = vmul.f32 %v7497, %v936
        %v7631 = vmul.f32 %v7498, %v937
        %v7632 = vmul.f32 %v7499, %v938
        %v7633 = vmul.f32 %v7500, %v939
        %v7634 = vmul.f32 %v7501, %v940
        %v7635 = vmul.f32 %v7502, %v941
        %v7636 = vmul.f32 %v7503, %v942
        %v7637 = vmul.f32 %v7504, %v943
        %v7638 = vmul.f32 %v7505, %v944
        %v7639 = vmul.f32 %v7506, %v945
        %v7640 = vmul.f32 %v7507, %v946
        %v7641 = vmul.f32 %v7508, %v947
        %v7642 = vmul.f32 %v7509, %v948
        %v7643 = vmul.f32 %v7510, %v949
        %v7644 = vmul.f32 %v7511, %v950
        %v7645 = vmul.f32 %v7512, %v951
        %v7646 = vmul.f32 %v7513, %v952
        %v7647 = vmul.f32 %v7615, %v953
        %v7648 = vmul.f32 %v7616, %v954
        %v7649 = vpack.c.bf16 %v7618, %v7617
        %v7650 = vpack.c.bf16 %v7620, %v7619
        %v7651 = vpack.c.bf16 %v7622, %v7621
        %v7652 = vpack.c.bf16 %v7624, %v7623
        %v7653 = vpack.c.bf16 %v7626, %v7625
        %v7654 = vpack.c.bf16 %v7628, %v7627
        %v7655 = vpack.c.bf16 %v7630, %v7629
        %v7656 = vpack.c.bf16 %v7632, %v7631
        %v7657 = vpack.c.bf16 %v7634, %v7633
        %v7658 = vpack.c.bf16 %v7636, %v7635
        %v7659 = vpack.c.bf16 %v7638, %v7637
        %v7660 = vpack.c.bf16 %v7640, %v7639
        %v7661 = vpack.c.bf16 %v7642, %v7641
        %v7662 = vpack.c.bf16 %v7644, %v7643
        %v7663 = vpack.c.bf16 %v7646, %v7645
        %v7664 = vpack.c.bf16 %v7648, %v7647
        %v7665 = vld [vmem:[#allocation2 + $0x110] sm:$0xff]
        %v7666 = vld [vmem:[#allocation2 + $0x118] sm:$0xff]
        %v7667 = vmul.f32 %v7358, %v827
        %v7668 = vmul.f32 %v7359, %v828
        %v7669 = vmul.f32 %v7360, %v829
        %v7670 = vmul.f32 %v7361, %v830
        %v7671 = vmul.f32 %v7362, %v831
        %v7672 = vmul.f32 %v7363, %v832
        %v7673 = vmul.f32 %v7364, %v833
        %v7674 = vmul.f32 %v7365, %v834
        %v7675 = vmul.f32 %v7366, %v835
        %v7676 = vmul.f32 %v7367, %v836
        %v7677 = vmul.f32 %v7368, %v837
        %v7678 = vmul.f32 %v7369, %v838
        %v7679 = vmul.f32 %v7370, %v839
        %v7680 = vmul.f32 %v7371, %v840
        %v7681 = vmul.f32 %v7372, %v841
        %v7682 = vmul.f32 %v7373, %v842
        %v7683 = vmul.f32 %v7374, %v843
        %v7684 = vmul.f32 %v7375, %v844
        %v7685 = vmul.f32 %v7376, %v845
        %v7686 = vmul.f32 %v7377, %v846
        %v7687 = vmul.f32 %v7378, %v847
        %v7688 = vmul.f32 %v7379, %v848
        %v7689 = vmul.f32 %v7380, %v849
        %v7690 = vmul.f32 %v7381, %v850
        %v7691 = vmul.f32 %v7382, %v851
        %v7692 = vmul.f32 %v7383, %v852
        %v7693 = vmul.f32 %v7384, %v853
        %v7694 = vmul.f32 %v7385, %v854
        %v7695 = vmul.f32 %v7562, %v855
        %v7696 = vmul.f32 %v7563, %v856
        %v7697 = vmul.f32 %v7665, %v857
        %v7698 = vmul.f32 %v7666, %v858
        %v7699 = vpack.c.bf16 %v7668, %v7667
        %v7700 = vpack.c.bf16 %v7670, %v7669
        %v7701 = vpack.c.bf16 %v7672, %v7671
        %v7702 = vpack.c.bf16 %v7674, %v7673
        %v7703 = vpack.c.bf16 %v7676, %v7675
        %v7704 = vpack.c.bf16 %v7678, %v7677
        %v7705 = vpack.c.bf16 %v7680, %v7679
        %v7706 = vpack.c.bf16 %v7682, %v7681
        %v7707 = vpack.c.bf16 %v7684, %v7683
        %v7708 = vpack.c.bf16 %v7686, %v7685
        %v7709 = vpack.c.bf16 %v7688, %v7687
        %v7710 = vpack.c.bf16 %v7690, %v7689
        %v7711 = vpack.c.bf16 %v7692, %v7691
        %v7712 = vpack.c.bf16 %v7694, %v7693
        %v7713 = vpack.c.bf16 %v7696, %v7695
        %v7714 = vpack.c.bf16 %v7698, %v7697
        %v7715 = vld [vmem:[#allocation2 + $0x111] sm:$0xff]
        %v7716 = vld [vmem:[#allocation2 + $0x119] sm:$0xff]
        %v7717 = vpack.c.bf16 %v7716, %v7715
        %v7718 = vld [vmem:[#allocation2 + $0x112] sm:$0xff]
        %v7719 = vld [vmem:[#allocation2 + $0x11a] sm:$0xff]
        %v7720 = vmul.f32 %v7486, %v923
        %v7721 = vmul.f32 %v7487, %v924
        %v7722 = vmul.f32 %v7488, %v925
        %v7723 = vmul.f32 %v7489, %v926
        %v7724 = vmul.f32 %v7490, %v927
        %v7725 = vmul.f32 %v7491, %v928
        %v7726 = vmul.f32 %v7492, %v929
        %v7727 = vmul.f32 %v7493, %v930
        %v7728 = vmul.f32 %v7494, %v931
        %v7729 = vmul.f32 %v7495, %v932
        %v7730 = vmul.f32 %v7496, %v933
        %v7731 = vmul.f32 %v7497, %v934
        %v7732 = vmul.f32 %v7498, %v935
        %v7733 = vmul.f32 %v7499, %v936
        %v7734 = vmul.f32 %v7500, %v937
        %v7735 = vmul.f32 %v7501, %v938
        %v7736 = vmul.f32 %v7502, %v939
        %v7737 = vmul.f32 %v7503, %v940
        %v7738 = vmul.f32 %v7504, %v941
        %v7739 = vmul.f32 %v7505, %v942
        %v7740 = vmul.f32 %v7506, %v943
        %v7741 = vmul.f32 %v7507, %v944
        %v7742 = vmul.f32 %v7508, %v945
        %v7743 = vmul.f32 %v7509, %v946
        %v7744 = vmul.f32 %v7510, %v947
        %v7745 = vmul.f32 %v7511, %v948
        %v7746 = vmul.f32 %v7512, %v949
        %v7747 = vmul.f32 %v7513, %v950
        %v7748 = vmul.f32 %v7615, %v951
        %v7749 = vmul.f32 %v7616, %v952
        %v7750 = vmul.f32 %v7718, %v953
        %v7751 = vmul.f32 %v7719, %v954
        %v7752 = vpack.c.bf16 %v7721, %v7720
        %v7753 = vpack.c.bf16 %v7723, %v7722
        %v7754 = vpack.c.bf16 %v7725, %v7724
        %v7755 = vpack.c.bf16 %v7727, %v7726
        %v7756 = vpack.c.bf16 %v7729, %v7728
        %v7757 = vpack.c.bf16 %v7731, %v7730
        %v7758 = vpack.c.bf16 %v7733, %v7732
        %v7759 = vpack.c.bf16 %v7735, %v7734
        %v7760 = vpack.c.bf16 %v7737, %v7736
        %v7761 = vpack.c.bf16 %v7739, %v7738
        %v7762 = vpack.c.bf16 %v7741, %v7740
        %v7763 = vpack.c.bf16 %v7743, %v7742
        %v7764 = vpack.c.bf16 %v7745, %v7744
        %v7765 = vpack.c.bf16 %v7747, %v7746
        %v7766 = vpack.c.bf16 %v7749, %v7748
        %v7767 = vpack.c.bf16 %v7751, %v7750
        %v7768 = vld [vmem:[#allocation3 + $0x9f0] sm:$0xf]
        %v7769 = vld [vmem:[#allocation3 + $0x9f4] sm:$0xf]
        %v7770 = vld [vmem:[#allocation3 + $0x9f8] sm:$0xf]
        %v7771 = vld [vmem:[#allocation3 + $0x9fc] sm:$0xf]
        %v7772 = vld [vmem:[#allocation3 + $0xa00] sm:$0xf]
        %v7773 = vld [vmem:[#allocation3 + $0xa04] sm:$0xf]
        %v7774 = vld [vmem:[#allocation3 + $0xa08] sm:$0xf]
        %v7775 = vld [vmem:[#allocation3 + $0xa0c] sm:$0xf]
        %v7776 = vld [vmem:[#allocation3 + $0xa10] sm:$0xf]
        %v7777 = vld [vmem:[#allocation3 + $0xa14] sm:$0xf]
        %v7778 = vld [vmem:[#allocation3 + $0xa18] sm:$0xf]
        %v7779 = vld [vmem:[#allocation3 + $0xa1c] sm:$0xf]
        %v7780 = vld [vmem:[#allocation3 + $0xa20] sm:$0xf]
        %v7781 = vld [vmem:[#allocation3 + $0xa24] sm:$0xf]
        %v7782 = vld [vmem:[#allocation3 + $0xa28] sm:$0xf]
        %v7783 = vld [vmem:[#allocation3 + $0xa2c] sm:$0xf]
        %v7784 = vld [vmem:[#allocation3 + $0xa30] sm:$0xf]
        %v7785 = vld [vmem:[#allocation3 + $0xa34] sm:$0xf]
        %v7786 = vld [vmem:[#allocation3 + $0xa38] sm:$0xf]
        %v7787 = vld [vmem:[#allocation3 + $0xa3c] sm:$0xf]
        %v7788 = vld [vmem:[#allocation3 + $0xa40] sm:$0xf]
        %v7789 = vld [vmem:[#allocation3 + $0xa44] sm:$0xf]
        %v7790 = vld [vmem:[#allocation3 + $0xa48] sm:$0xf]
        %v7791 = vld [vmem:[#allocation3 + $0xa4c] sm:$0xf]
        %v7792 = vld [vmem:[#allocation3 + $0xa50] sm:$0xf]
        %v7793 = vld [vmem:[#allocation3 + $0xa54] sm:$0xf]
        %v7794 = vld [vmem:[#allocation3 + $0xa58] sm:$0xf]
        %v7795 = vld [vmem:[#allocation3 + $0xa5c] sm:$0xf]
        %v7796 = vld [vmem:[#allocation3 + $0xa60] sm:$0xf]
        %v7797 = vld [vmem:[#allocation3 + $0xa64] sm:$0xf]
        %v7798 = vld [vmem:[#allocation3 + $0xa68] sm:$0xf]
        %v7799 = vld [vmem:[#allocation3 + $0xa6c] sm:$0xf]
        %v7800 = vld [vmem:[#allocation3 + $0xa70] sm:$0xf]
        %v7801 = vld [vmem:[#allocation3 + $0xa74] sm:$0xf]
        %v7802 = vld [vmem:[#allocation3 + $0xa78] sm:$0xf]
        %v7803 = vld [vmem:[#allocation3 + $0xa7c] sm:$0xf]
        %v7804 = vld [vmem:[#allocation3 + $0xa80] sm:$0xf]
        %v7805 = vld [vmem:[#allocation3 + $0xa84] sm:$0xf]
        %v7806 = vld [vmem:[#allocation3 + $0xa88] sm:$0xf]
        %v7807 = vld [vmem:[#allocation3 + $0xa8c] sm:$0xf]
        %v7808 = vld [vmem:[#allocation3 + $0xa90] sm:$0xf]
        %v7809 = vld [vmem:[#allocation3 + $0xa94] sm:$0xf]
        %v7810 = vld [vmem:[#allocation3 + $0xa98] sm:$0xf]
        %v7811 = vld [vmem:[#allocation3 + $0xa9c] sm:$0xf]
        %v7812 = vld [vmem:[#allocation3 + $0xaa0] sm:$0xf]
        %v7813 = vld [vmem:[#allocation3 + $0xaa4] sm:$0xf]
        %v7814 = vld [vmem:[#allocation3 + $0xaa8] sm:$0xf]
        %v7815 = vld [vmem:[#allocation3 + $0xaac] sm:$0xf]
        %v7816 = vld [vmem:[#allocation3 + $0xab0] sm:$0xf]
        %v7817 = vld [vmem:[#allocation3 + $0xab4] sm:$0xf]
        %v7818 = vld [vmem:[#allocation3 + $0xab8] sm:$0xf]
        %v7819 = vld [vmem:[#allocation3 + $0xabc] sm:$0xf]
        %v7820 = vld [vmem:[#allocation3 + $0xac0] sm:$0xf]
        %v7821 = vld [vmem:[#allocation3 + $0xac4] sm:$0xf]
        %v7822 = vld [vmem:[#allocation3 + $0xac8] sm:$0xf]
        %v7823 = vld [vmem:[#allocation3 + $0xacc] sm:$0xf]
        %v7824 = vld [vmem:[#allocation3 + $0xad0] sm:$0xf]
        %v7825 = vld [vmem:[#allocation3 + $0xad4] sm:$0xf]
        %v7826 = vld [vmem:[#allocation3 + $0xad8] sm:$0xf]
        %v7827 = vld [vmem:[#allocation3 + $0xadc] sm:$0xf]
        %v7828 = vld [vmem:[#allocation3 + $0xae0] sm:$0xf]
        %v7829 = vld [vmem:[#allocation3 + $0xae4] sm:$0xf]
        %v7830 = vld [vmem:[#allocation3 + $0xae8] sm:$0xf]
        %v7831 = vld [vmem:[#allocation3 + $0xaec] sm:$0xf]
        %v7832 = vld [vmem:[#allocation3 + $0xaf0] sm:$0xf]
        %v7833 = vld [vmem:[#allocation3 + $0xaf4] sm:$0xf]
        %v7834 = vld [vmem:[#allocation3 + $0xaf8] sm:$0xf]
        %v7835 = vld [vmem:[#allocation3 + $0xafc] sm:$0xf]
        %v7836 = vld [vmem:[#allocation3 + $0xb00] sm:$0xf]
        %v7837 = vld [vmem:[#allocation3 + $0xb04] sm:$0xf]
        %v7838 = vld [vmem:[#allocation3 + $0xb08] sm:$0xf]
        %v7839 = vld [vmem:[#allocation3 + $0xb0c] sm:$0xf]
        %v7840 = vld [vmem:[#allocation3 + $0xb10] sm:$0xf]
        %v7841 = vld [vmem:[#allocation3 + $0xb14] sm:$0xf]
        %v7842 = vld [vmem:[#allocation3 + $0xb18] sm:$0xf]
        %v7843 = vld [vmem:[#allocation3 + $0xb1c] sm:$0xf]
        %v7844 = vld [vmem:[#allocation3 + $0xb20] sm:$0xf]
        %v7845 = vld [vmem:[#allocation3 + $0xb24] sm:$0xf]
        %v7846 = vld [vmem:[#allocation3 + $0xb28] sm:$0xf]
        %v7847 = vld [vmem:[#allocation3 + $0xb2c] sm:$0xf]
        %v7848 = vld [vmem:[#allocation3 + $0xb30] sm:$0xf]
        %v7849 = vld [vmem:[#allocation3 + $0xb34] sm:$0xf]
        %v7850 = vld [vmem:[#allocation3 + $0xb38] sm:$0xf]
        %v7851 = vld [vmem:[#allocation3 + $0xb3c] sm:$0xf]
        %v7852 = vld [vmem:[#allocation3 + $0xb40] sm:$0xf]
        %v7853 = vld [vmem:[#allocation3 + $0xb44] sm:$0xf]
        %v7854 = vld [vmem:[#allocation3 + $0xb48] sm:$0xf]
        %v7855 = vld [vmem:[#allocation3 + $0xb4c] sm:$0xf]
        %v7856 = vld [vmem:[#allocation3 + $0xb50] sm:$0xf]
        %v7857 = vld [vmem:[#allocation3 + $0xb54] sm:$0xf]
        %v7858 = vld [vmem:[#allocation3 + $0xb58] sm:$0xf]
        %v7859 = vld [vmem:[#allocation3 + $0xb5c] sm:$0xf]
        %v7860 = vld [vmem:[#allocation3 + $0xb60] sm:$0xf]
        %v7861 = vld [vmem:[#allocation3 + $0xb64] sm:$0xf]
        %v7862 = vld [vmem:[#allocation3 + $0xb68] sm:$0xf]
        %v7863 = vld [vmem:[#allocation3 + $0xb6c] sm:$0xf]
        %v7864 = vld [vmem:[#allocation3 + $0xb70] sm:$0xf]
        %v7865 = vld [vmem:[#allocation3 + $0xb74] sm:$0xf]
        %v7866 = vld [vmem:[#allocation3 + $0xb78] sm:$0xf]
        %v7867 = vld [vmem:[#allocation3 + $0xb7c] sm:$0xf]
        %v7868 = vld [vmem:[#allocation3 + $0xb80] sm:$0xf]
        %v7869 = vld [vmem:[#allocation3 + $0xb84] sm:$0xf]
        %v7870 = vld [vmem:[#allocation3 + $0xb88] sm:$0xf]
        %v7871 = vld [vmem:[#allocation3 + $0xb8c] sm:$0xf]
        %v7872 = vld [vmem:[#allocation3 + $0xb90] sm:$0xf]
        %v7873 = vld [vmem:[#allocation3 + $0xb94] sm:$0xf]
        %v7874 = vld [vmem:[#allocation3 + $0xb98] sm:$0xf]
        %v7875 = vld [vmem:[#allocation3 + $0xb9c] sm:$0xf]
        %v7876 = vld [vmem:[#allocation3 + $0xba0] sm:$0xf]
        %v7877 = vld [vmem:[#allocation3 + $0xba4] sm:$0xf]
        %v7878 = vld [vmem:[#allocation3 + $0xba8] sm:$0xf]
        %v7879 = vld [vmem:[#allocation3 + $0xbac] sm:$0xf]
        %v7880 = vld [vmem:[#allocation3 + $0xbb0] sm:$0xf]
        %v7881 = vld [vmem:[#allocation3 + $0xbb4] sm:$0xf]
        %v7882 = vld [vmem:[#allocation3 + $0xbb8] sm:$0xf]
        %v7883 = vld [vmem:[#allocation3 + $0xbbc] sm:$0xf]
        %v7884 = vld [vmem:[#allocation3 + $0xbc0] sm:$0xf]
        %v7885 = vld [vmem:[#allocation3 + $0xbc4] sm:$0xf]
        %v7886 = vld [vmem:[#allocation3 + $0xbc8] sm:$0xf]
        %v7887 = vld [vmem:[#allocation3 + $0xbcc] sm:$0xf]
        %v7888 = vld [vmem:[#allocation3 + $0xbd0] sm:$0xf]
        %v7889 = vld [vmem:[#allocation3 + $0xbd4] sm:$0xf]
        %v7890 = vld [vmem:[#allocation3 + $0xbd8] sm:$0xf]
        %v7891 = vld [vmem:[#allocation3 + $0xbdc] sm:$0xf]
        %v7892 = vld [vmem:[#allocation3 + $0xbe0] sm:$0xf]
        %v7893 = vld [vmem:[#allocation3 + $0xbe4] sm:$0xf]
        %v7894 = vld [vmem:[#allocation3 + $0xbe8] sm:$0xf]
        %v7895 = vld [vmem:[#allocation3 + $0xbec] sm:$0xf]
        %v7896 = vld [vmem:[#allocation3 + $0xbf0] sm:$0xf]
        %v7897 = vld [vmem:[#allocation3 + $0xbf4] sm:$0xf]
        %v7898 = vld [vmem:[#allocation3 + $0xbf8] sm:$0xf]
        %v7899 = vld [vmem:[#allocation3 + $0xbfc] sm:$0xf]
        %v7900 = vld [vmem:[#allocation3 + $0xc00] sm:$0xf]
        %v7901 = vld [vmem:[#allocation3 + $0xc04] sm:$0xf]
        %v7902 = vld [vmem:[#allocation3 + $0xc08] sm:$0xf]
        %v7903 = vld [vmem:[#allocation3 + $0xc0c] sm:$0xf]
        %v7904 = vld [vmem:[#allocation3 + $0xc10] sm:$0xf]
        %v7905 = vld [vmem:[#allocation3 + $0xc14] sm:$0xf]
        %v7906 = vld [vmem:[#allocation3 + $0xc18] sm:$0xf]
        %v7907 = vld [vmem:[#allocation3 + $0xc1c] sm:$0xf]
        %v7908 = vld [vmem:[#allocation3 + $0xc20] sm:$0xf]
        %v7909 = vld [vmem:[#allocation3 + $0xc24] sm:$0xf]
        %v7910 = vld [vmem:[#allocation3 + $0xc28] sm:$0xf]
        %v7911 = vld [vmem:[#allocation3 + $0xc2c] sm:$0xf]
        %v8056 = vunpack.c.l.b16 %v7768
        %v8057 = vunpack.c.l.b16 %v7769
        %v8058 = vunpack.c.l.b16 %v7770
        %v8059 = vunpack.c.l.b16 %v7771
        %v8060 = vunpack.c.l.b16 %v7772
        %v8061 = vunpack.c.l.b16 %v7773
        %v8062 = vunpack.c.l.b16 %v7774
        %v8063 = vunpack.c.l.b16 %v7775
        %v8064 = vunpack.c.l.b16 %v7776
        %v8065 = vunpack.c.l.b16 %v7777
        %v8066 = vunpack.c.l.b16 %v7778
        %v8067 = vunpack.c.l.b16 %v7779
        %v8068 = vunpack.c.l.b16 %v7780
        %v8069 = vunpack.c.l.b16 %v7781
        %v8070 = vunpack.c.l.b16 %v7782
        %v8071 = vunpack.c.l.b16 %v7783
        %v8072 = vunpack.c.l.b16 %v7784
        %v8073 = vunpack.c.l.b16 %v7785
        %v8074 = vunpack.c.l.b16 %v7786
        %v8075 = vunpack.c.l.b16 %v7787
        %v8076 = vunpack.c.l.b16 %v7788
        %v8077 = vunpack.c.l.b16 %v7789
        %v8078 = vunpack.c.l.b16 %v7790
        %v8079 = vunpack.c.l.b16 %v7791
        %v8080 = vunpack.c.l.b16 %v7792
        %v8081 = vunpack.c.l.b16 %v7793
        %v8082 = vunpack.c.l.b16 %v7794
        %v8083 = vunpack.c.l.b16 %v7795
        %v8084 = vunpack.c.l.b16 %v7796
        %v8085 = vunpack.c.l.b16 %v7797
        %v8086 = vunpack.c.l.b16 %v7798
        %v8087 = vunpack.c.l.b16 %v7799
        %v8088 = vunpack.c.l.b16 %v7800
        %v8089 = vunpack.c.l.b16 %v7801
        %v8090 = vunpack.c.l.b16 %v7802
        %v8091 = vunpack.c.l.b16 %v7803
        %v8092 = vunpack.c.l.b16 %v7804
        %v8093 = vunpack.c.l.b16 %v7805
        %v8094 = vunpack.c.l.b16 %v7806
        %v8095 = vunpack.c.l.b16 %v7807
        %v8096 = vunpack.c.l.b16 %v7808
        %v8097 = vunpack.c.l.b16 %v7809
        %v8098 = vunpack.c.l.b16 %v7810
        %v8099 = vunpack.c.l.b16 %v7811
        %v8100 = vunpack.c.l.b16 %v7812
        %v8101 = vunpack.c.l.b16 %v7813
        %v8102 = vunpack.c.l.b16 %v7814
        %v8103 = vunpack.c.l.b16 %v7815
        %v8104 = vunpack.c.l.b16 %v7816
        %v8105 = vunpack.c.l.b16 %v7817
        %v8106 = vunpack.c.l.b16 %v7818
        %v8107 = vunpack.c.l.b16 %v7819
        %v8108 = vunpack.c.l.b16 %v7820
        %v8109 = vunpack.c.l.b16 %v7821
        %v8110 = vunpack.c.l.b16 %v7822
        %v8111 = vunpack.c.l.b16 %v7823
        %v8112 = vunpack.c.l.b16 %v7824
        %v8113 = vunpack.c.l.b16 %v7825
        %v8114 = vunpack.c.l.b16 %v7826
        %v8115 = vunpack.c.l.b16 %v7827
        %v8116 = vunpack.c.l.b16 %v7828
        %v8117 = vunpack.c.l.b16 %v7829
        %v8118 = vunpack.c.l.b16 %v7830
        %v8119 = vunpack.c.l.b16 %v7831
        %v8120 = vunpack.c.l.b16 %v7832
        %v8121 = vunpack.c.l.b16 %v7833
        %v8122 = vunpack.c.l.b16 %v7834
        %v8123 = vunpack.c.l.b16 %v7835
        %v8124 = vunpack.c.l.b16 %v7836
        %v8125 = vunpack.c.l.b16 %v7837
        %v8126 = vunpack.c.l.b16 %v7838
        %v8127 = vunpack.c.l.b16 %v7839
        %v8128 = vunpack.c.l.b16 %v7840
        %v8129 = vunpack.c.l.b16 %v7841
        %v8130 = vunpack.c.l.b16 %v7842
        %v8131 = vunpack.c.l.b16 %v7843
        %v8132 = vunpack.c.l.b16 %v7844
        %v8133 = vunpack.c.l.b16 %v7845
        %v8134 = vunpack.c.l.b16 %v7846
        %v8135 = vunpack.c.l.b16 %v7847
        %v8136 = vunpack.c.l.b16 %v7848
        %v8137 = vunpack.c.l.b16 %v7849
        %v8138 = vunpack.c.l.b16 %v7850
        %v8139 = vunpack.c.l.b16 %v7851
        %v8140 = vunpack.c.l.b16 %v7852
        %v8141 = vunpack.c.l.b16 %v7853
        %v8142 = vunpack.c.l.b16 %v7854
        %v8143 = vunpack.c.l.b16 %v7855
        %v8144 = vunpack.c.l.b16 %v7856
        %v8145 = vunpack.c.l.b16 %v7857
        %v8146 = vunpack.c.l.b16 %v7858
        %v8147 = vunpack.c.l.b16 %v7859
        %v8148 = vunpack.c.l.b16 %v7860
        %v8149 = vunpack.c.l.b16 %v7861
        %v8150 = vunpack.c.l.b16 %v7862
        %v8151 = vunpack.c.l.b16 %v7863
        %v8152 = vunpack.c.l.b16 %v7864
        %v8153 = vunpack.c.l.b16 %v7865
        %v8154 = vunpack.c.l.b16 %v7866
        %v8155 = vunpack.c.l.b16 %v7867
        %v8156 = vunpack.c.l.b16 %v7868
        %v8157 = vunpack.c.l.b16 %v7869
        %v8158 = vunpack.c.l.b16 %v7870
        %v8159 = vunpack.c.l.b16 %v7871
        %v8160 = vunpack.c.l.b16 %v7872
        %v8161 = vunpack.c.l.b16 %v7873
        %v8162 = vunpack.c.l.b16 %v7874
        %v8163 = vunpack.c.l.b16 %v7875
        %v8164 = vunpack.c.l.b16 %v7876
        %v8165 = vunpack.c.l.b16 %v7877
        %v8166 = vunpack.c.l.b16 %v7878
        %v8167 = vunpack.c.l.b16 %v7879
        %v8168 = vunpack.c.l.b16 %v7880
        %v8169 = vunpack.c.l.b16 %v7881
        %v8170 = vunpack.c.l.b16 %v7882
        %v8171 = vunpack.c.l.b16 %v7883
        %v8172 = vunpack.c.l.b16 %v7884
        %v8173 = vunpack.c.l.b16 %v7885
        %v8174 = vunpack.c.l.b16 %v7886
        %v8175 = vunpack.c.l.b16 %v7887
        %v8176 = vunpack.c.l.b16 %v7888
        %v8177 = vunpack.c.l.b16 %v7889
        %v8178 = vunpack.c.l.b16 %v7890
        %v8179 = vunpack.c.l.b16 %v7891
        %v8180 = vunpack.c.l.b16 %v7892
        %v8181 = vunpack.c.l.b16 %v7893
        %v8182 = vunpack.c.l.b16 %v7894
        %v8183 = vunpack.c.l.b16 %v7895
        %v8184 = vunpack.c.l.b16 %v7896
        %v8185 = vunpack.c.l.b16 %v7897
        %v8186 = vunpack.c.l.b16 %v7898
        %v8187 = vunpack.c.l.b16 %v7899
        %v8188 = vunpack.c.l.b16 %v7900
        %v8189 = vunpack.c.l.b16 %v7901
        %v8190 = vunpack.c.l.b16 %v7902
        %v8191 = vunpack.c.l.b16 %v7903
        %v8192 = vunpack.c.l.b16 %v7904
        %v8193 = vunpack.c.l.b16 %v7905
        %v8194 = vunpack.c.l.b16 %v7906
        %v8195 = vunpack.c.l.b16 %v7907
        %v8196 = vunpack.c.l.b16 %v7908
        %v8197 = vunpack.c.l.b16 %v7909
        %v8198 = vunpack.c.l.b16 %v7910
        %v8199 = vunpack.c.l.b16 %v7911
        %v8200 = vpack.c.b16 %v8057, %v8056
        %v8201 = vpack.c.b16 %v8059, %v8058
        %v8202 = vpack.c.b16 %v8061, %v8060
        %v8203 = vpack.c.b16 %v8063, %v8062
        %v8204 = vpack.c.b16 %v8065, %v8064
        %v8205 = vpack.c.b16 %v8067, %v8066
        %v8206 = vpack.c.b16 %v8069, %v8068
        %v8207 = vpack.c.b16 %v8071, %v8070
        %v8208 = vpack.c.b16 %v8073, %v8072
        %v8209 = vpack.c.b16 %v8075, %v8074
        %v8210 = vpack.c.b16 %v8077, %v8076
        %v8211 = vpack.c.b16 %v8079, %v8078
        %v8212 = vpack.c.b16 %v8081, %v8080
        %v8213 = vpack.c.b16 %v8083, %v8082
        %v8214 = vpack.c.b16 %v8085, %v8084
        %v8215 = vpack.c.b16 %v8087, %v8086
        %v8216 = vpack.c.b16 %v8089, %v8088
        %v8217 = vpack.c.b16 %v8091, %v8090
        %v8218 = vpack.c.b16 %v8093, %v8092
        %v8219 = vpack.c.b16 %v8095, %v8094
        %v8220 = vpack.c.b16 %v8097, %v8096
        %v8221 = vpack.c.b16 %v8099, %v8098
        %v8222 = vpack.c.b16 %v8101, %v8100
        %v8223 = vpack.c.b16 %v8103, %v8102
        %v8224 = vpack.c.b16 %v8105, %v8104
        %v8225 = vpack.c.b16 %v8107, %v8106
        %v8226 = vpack.c.b16 %v8109, %v8108
        %v8227 = vpack.c.b16 %v8111, %v8110
        %v8228 = vpack.c.b16 %v8113, %v8112
        %v8229 = vpack.c.b16 %v8115, %v8114
        %v8230 = vpack.c.b16 %v8117, %v8116
        %v8231 = vpack.c.b16 %v8119, %v8118
        %v8232 = vpack.c.b16 %v8121, %v8120
        %v8233 = vpack.c.b16 %v8123, %v8122
        %v8234 = vpack.c.b16 %v8125, %v8124
        %v8235 = vpack.c.b16 %v8127, %v8126
        %v8236 = vpack.c.b16 %v8129, %v8128
        %v8237 = vpack.c.b16 %v8131, %v8130
        %v8238 = vpack.c.b16 %v8133, %v8132
        %v8239 = vpack.c.b16 %v8135, %v8134
        %v8240 = vpack.c.b16 %v8137, %v8136
        %v8241 = vpack.c.b16 %v8139, %v8138
        %v8242 = vpack.c.b16 %v8141, %v8140
        %v8243 = vpack.c.b16 %v8143, %v8142
        %v8244 = vpack.c.b16 %v8145, %v8144
        %v8245 = vpack.c.b16 %v8147, %v8146
        %v8246 = vpack.c.b16 %v8149, %v8148
        %v8247 = vpack.c.b16 %v8151, %v8150
        %v8248 = vpack.c.b16 %v8153, %v8152
        %v8249 = vpack.c.b16 %v8155, %v8154
        %v8250 = vpack.c.b16 %v8157, %v8156
        %v8251 = vpack.c.b16 %v8159, %v8158
        %v8252 = vpack.c.b16 %v8161, %v8160
        %v8253 = vpack.c.b16 %v8163, %v8162
        %v8254 = vpack.c.b16 %v8165, %v8164
        %v8255 = vpack.c.b16 %v8167, %v8166
        %v8256 = vpack.c.b16 %v8169, %v8168
        %v8257 = vpack.c.b16 %v8171, %v8170
        %v8258 = vpack.c.b16 %v8173, %v8172
        %v8259 = vpack.c.b16 %v8175, %v8174
        %v8260 = vpack.c.b16 %v8177, %v8176
        %v8261 = vpack.c.b16 %v8179, %v8178
        %v8262 = vpack.c.b16 %v8181, %v8180
        %v8263 = vpack.c.b16 %v8183, %v8182
        %v8264 = vpack.c.b16 %v8185, %v8184
        %v8265 = vpack.c.b16 %v8187, %v8186
        %v8266 = vpack.c.b16 %v8189, %v8188
        %v8267 = vpack.c.b16 %v8191, %v8190
        %v8268 = vpack.c.b16 %v8193, %v8192
        %v8269 = vpack.c.b16 %v8195, %v8194
        %v8270 = vpack.c.b16 %v8197, %v8196
        %v8271 = vpack.c.b16 %v8199, %v8198
        %8344 = vmatprep.subr.bf16.mxu0 0
        %8345 = vmatpush1.bf16.msra.mxu0 %v8207
        %8346 = vmatprep.subr.bf16.mxu0 0
        %8347 = vmatpush1.bf16.msra.mxu0 %v8206
        %8348 = vmatprep.subr.bf16.mxu0 0
        %8349 = vmatpush1.bf16.msra.mxu0 %v8205
        %8350 = vmatprep.subr.bf16.mxu0 0
        %8351 = vmatpush1.bf16.msra.mxu0 %v8204
        %8352 = vmatprep.subr.bf16.mxu0 0
        %8353 = vmatpush1.bf16.msra.mxu0 %v8203
        %8354 = vmatprep.subr.bf16.mxu0 0
        %8355 = vmatpush1.bf16.msra.mxu0 %v8202
        %8356 = vmatprep.subr.bf16.mxu0 0
        %8357 = vmatpush1.bf16.msra.mxu0 %v8201
        %8358 = vmatprep.subr.bf16.mxu0 0
        %8359 = vmatpush1.bf16.msra.mxu0 %v8200
        %8360 = vmatprep.subr.bf16.mxu0 0
        %8361 = vmatpush2.bf16.msra.mxu0 %v8215
        %8362 = vmatprep.subr.bf16.mxu0 0
        %8363 = vmatpush2.bf16.msra.mxu0 %v8214
        %8364 = vmatprep.subr.bf16.mxu0 0
        %8365 = vmatpush2.bf16.msra.mxu0 %v8213
        %8366 = vmatprep.subr.bf16.mxu0 0
        %8367 = vmatpush2.bf16.msra.mxu0 %v8212
        %8368 = vmatprep.subr.bf16.mxu0 0
        %8369 = vmatpush2.bf16.msra.mxu0 %v8211
        %8370 = vmatprep.subr.bf16.mxu0 0
        %8371 = vmatpush2.bf16.msra.mxu0 %v8210
        %8372 = vmatprep.subr.bf16.mxu0 0
        %8373 = vmatpush2.bf16.msra.mxu0 %v8209
        %8374 = vmatprep.subr.bf16.mxu0 0
        %8375 = vmatpush2.bf16.msra.mxu0 %v8208
        %8376 = vmatprep.mubr.bf16.mxu0 %v7466
        %8377 = vmatmul.mubr.bf16.gmra.mxu0 %v7418
        %v8378 = vpop.f32.mrf.mxu0
        %v8379 = vadd.f32 0.0, %v8378
        %v8380 = vpop.f32.mrf.mxu0
        %v8381 = vpop.f32.mrf.mxu0
        %v8382 = vadd.f32 0.0, %v8381
        %v8383 = vpop.f32.mrf.mxu0
        %8384 = vmatprep.mubr.bf16.mxu0 %v7467
        %8385 = vmatmul.mubr.bf16.gmra.mxu0 %v7419
        %v8386 = vpop.f32.mrf.mxu0
        %v8387 = vadd.f32 0.0, %v8386
        %v8388 = vpop.f32.mrf.mxu0
        %v8389 = vpop.f32.mrf.mxu0
        %v8390 = vadd.f32 0.0, %v8389
        %v8391 = vpop.f32.mrf.mxu0
        %8392 = vmatprep.mubr.bf16.mxu0 %v7468
        %8393 = vmatmul.mubr.bf16.gmra.mxu0 %v7420
        %v8394 = vpop.f32.mrf.mxu0
        %v8395 = vadd.f32 0.0, %v8394
        %v8396 = vpop.f32.mrf.mxu0
        %v8397 = vpop.f32.mrf.mxu0
        %v8398 = vadd.f32 0.0, %v8397
        %v8399 = vpop.f32.mrf.mxu0
        %8400 = vmatprep.mubr.bf16.mxu0 %v7469
        %8401 = vmatmul.mubr.bf16.gmra.mxu0 %v7421
        %v8402 = vpop.f32.mrf.mxu0
        %v8403 = vadd.f32 0.0, %v8402
        %v8404 = vpop.f32.mrf.mxu0
        %v8405 = vpop.f32.mrf.mxu0
        %v8406 = vadd.f32 0.0, %v8405
        %v8407 = vpop.f32.mrf.mxu0
        %8408 = vmatprep.mubr.bf16.mxu0 %v7470
        %8409 = vmatmul.mubr.bf16.gmra.mxu0 %v7422
        %v8410 = vpop.f32.mrf.mxu0
        %v8411 = vadd.f32 0.0, %v8410
        %v8412 = vpop.f32.mrf.mxu0
        %v8413 = vpop.f32.mrf.mxu0
        %v8414 = vadd.f32 0.0, %v8413
        %v8415 = vpop.f32.mrf.mxu0
        %8416 = vmatprep.mubr.bf16.mxu0 %v7471
        %8417 = vmatmul.mubr.bf16.gmra.mxu0 %v7423
        %v8418 = vpop.f32.mrf.mxu0
        %v8419 = vadd.f32 0.0, %v8418
        %v8420 = vpop.f32.mrf.mxu0
        %v8421 = vpop.f32.mrf.mxu0
        %v8422 = vadd.f32 0.0, %v8421
        %v8423 = vpop.f32.mrf.mxu0
        %8424 = vmatprep.mubr.bf16.mxu0 %v7472
        %8425 = vmatmul.mubr.bf16.gmra.mxu0 %v7424
        %v8426 = vpop.f32.mrf.mxu0
        %v8427 = vadd.f32 0.0, %v8426
        %v8428 = vpop.f32.mrf.mxu0
        %v8429 = vpop.f32.mrf.mxu0
        %v8430 = vadd.f32 0.0, %v8429
        %v8431 = vpop.f32.mrf.mxu0
        %8432 = vmatprep.mubr.bf16.mxu0 %v7473
        %8433 = vmatmul.mubr.bf16.gmra.mxu0 %v7425
        %v8434 = vpop.f32.mrf.mxu0
        %v8435 = vadd.f32 0.0, %v8434
        %v8436 = vpop.f32.mrf.mxu0
        %v8437 = vpop.f32.mrf.mxu0
        %v8438 = vadd.f32 0.0, %v8437
        %v8439 = vpop.f32.mrf.mxu0
        %8440 = vmatprep.mubr.bf16.mxu0 %v7474
        %8441 = vmatmul.mubr.bf16.gmra.mxu0 %v7426
        %v8442 = vpop.f32.mrf.mxu0
        %v8443 = vadd.f32 0.0, %v8442
        %v8444 = vpop.f32.mrf.mxu0
        %v8445 = vpop.f32.mrf.mxu0
        %v8446 = vadd.f32 0.0, %v8445
        %v8447 = vpop.f32.mrf.mxu0
        %8448 = vmatprep.mubr.bf16.mxu0 %v7475
        %8449 = vmatmul.mubr.bf16.gmra.mxu0 %v7427
        %v8450 = vpop.f32.mrf.mxu0
        %v8451 = vadd.f32 0.0, %v8450
        %v8452 = vpop.f32.mrf.mxu0
        %v8453 = vpop.f32.mrf.mxu0
        %v8454 = vadd.f32 0.0, %v8453
        %v8455 = vpop.f32.mrf.mxu0
        %8456 = vmatprep.mubr.bf16.mxu0 %v7476
        %8457 = vmatmul.mubr.bf16.gmra.mxu0 %v7428
        %v8458 = vpop.f32.mrf.mxu0
        %v8459 = vadd.f32 0.0, %v8458
        %v8460 = vpop.f32.mrf.mxu0
        %v8461 = vpop.f32.mrf.mxu0
        %v8462 = vadd.f32 0.0, %v8461
        %v8463 = vpop.f32.mrf.mxu0
        %8464 = vmatprep.mubr.bf16.mxu0 %v7477
        %8465 = vmatmul.mubr.bf16.gmra.mxu0 %v7429
        %v8466 = vpop.f32.mrf.mxu0
        %v8467 = vadd.f32 0.0, %v8466
        %v8468 = vpop.f32.mrf.mxu0
        %v8469 = vpop.f32.mrf.mxu0
        %v8470 = vadd.f32 0.0, %v8469
        %v8471 = vpop.f32.mrf.mxu0
        %8472 = vmatprep.mubr.bf16.mxu0 %v7478
        %8473 = vmatmul.mubr.bf16.gmra.mxu0 %v7430
        %v8474 = vpop.f32.mrf.mxu0
        %v8475 = vadd.f32 0.0, %v8474
        %v8476 = vpop.f32.mrf.mxu0
        %v8477 = vpop.f32.mrf.mxu0
        %v8478 = vadd.f32 0.0, %v8477
        %v8479 = vpop.f32.mrf.mxu0
        %8480 = vmatprep.mubr.bf16.mxu0 %v7479
        %8481 = vmatmul.mubr.bf16.gmra.mxu0 %v7431
        %v8482 = vpop.f32.mrf.mxu0
        %v8483 = vadd.f32 0.0, %v8482
        %v8484 = vpop.f32.mrf.mxu0
        %v8485 = vpop.f32.mrf.mxu0
        %v8486 = vadd.f32 0.0, %v8485
        %v8487 = vpop.f32.mrf.mxu0
        %8488 = vmatprep.mubr.bf16.mxu0 %v7480
        %8489 = vmatmul.mubr.bf16.gmra.mxu0 %v7432
        %v8490 = vpop.f32.mrf.mxu0
        %v8491 = vadd.f32 0.0, %v8490
        %v8492 = vpop.f32.mrf.mxu0
        %v8493 = vpop.f32.mrf.mxu0
        %v8494 = vadd.f32 0.0, %v8493
        %v8495 = vpop.f32.mrf.mxu0
        %8496 = vmatprep.mubr.bf16.mxu0 %v7481
        %8497 = vmatmul.mubr.bf16.gmra.mxu0 %v7433
        %v8498 = vpop.f32.mrf.mxu0
        %v8499 = vadd.f32 0.0, %v8498
        %v8500 = vpop.f32.mrf.mxu0
        %v8501 = vpop.f32.mrf.mxu0
        %v8502 = vadd.f32 0.0, %v8501
        %v8503 = vpop.f32.mrf.mxu0
        %8504 = vdwg.mxu0
        %8505 = vmatprep.subr.bf16.mxu0 0
        %8506 = vmatpush1.bf16.msra.mxu0 %v8223
        %8507 = vmatprep.subr.bf16.mxu0 0
        %8508 = vmatpush1.bf16.msra.mxu0 %v8222
        %8509 = vmatprep.subr.bf16.mxu0 0
        %8510 = vmatpush1.bf16.msra.mxu0 %v8221
        %8511 = vmatprep.subr.bf16.mxu0 0
        %8512 = vmatpush1.bf16.msra.mxu0 %v8220
        %8513 = vmatprep.subr.bf16.mxu0 0
        %8514 = vmatpush1.bf16.msra.mxu0 %v8219
        %8515 = vmatprep.subr.bf16.mxu0 0
        %8516 = vmatpush1.bf16.msra.mxu0 %v8218
        %8517 = vmatprep.subr.bf16.mxu0 0
        %8518 = vmatpush1.bf16.msra.mxu0 %v8217
        %8519 = vmatprep.subr.bf16.mxu0 0
        %8520 = vmatpush1.bf16.msra.mxu0 %v8216
        %8521 = vmatprep.subr.bf16.mxu0 0
        %8522 = vmatpush2.bf16.msra.mxu0 %v8231
        %8523 = vmatprep.subr.bf16.mxu0 0
        %8524 = vmatpush2.bf16.msra.mxu0 %v8230
        %8525 = vmatprep.subr.bf16.mxu0 0
        %8526 = vmatpush2.bf16.msra.mxu0 %v8229
        %8527 = vmatprep.subr.bf16.mxu0 0
        %8528 = vmatpush2.bf16.msra.mxu0 %v8228
        %8529 = vmatprep.subr.bf16.mxu0 0
        %8530 = vmatpush2.bf16.msra.mxu0 %v8227
        %8531 = vmatprep.subr.bf16.mxu0 0
        %8532 = vmatpush2.bf16.msra.mxu0 %v8226
        %8533 = vmatprep.subr.bf16.mxu0 0
        %8534 = vmatpush2.bf16.msra.mxu0 %v8225
        %8535 = vmatprep.subr.bf16.mxu0 0
        %8536 = vmatpush2.bf16.msra.mxu0 %v8224
        %8537 = vmatprep.mubr.bf16.mxu0 %v7596
        %8538 = vmatmul.mubr.bf16.gmra.mxu0 %v7546
        %v8539 = vpop.f32.mrf.mxu0
        %v8540 = vadd.f32 %v8379, %v8539
        %v8541 = vpop.f32.mrf.mxu0
        %v8542 = vpop.f32.mrf.mxu0
        %v8543 = vadd.f32 %v8382, %v8542
        %v8544 = vpop.f32.mrf.mxu0
        %8545 = vmatprep.mubr.bf16.mxu0 %v7597
        %8546 = vmatmul.mubr.bf16.gmra.mxu0 %v7547
        %v8547 = vpop.f32.mrf.mxu0
        %v8548 = vadd.f32 %v8387, %v8547
        %v8549 = vpop.f32.mrf.mxu0
        %v8550 = vpop.f32.mrf.mxu0
        %v8551 = vadd.f32 %v8390, %v8550
        %v8552 = vpop.f32.mrf.mxu0
        %8553 = vmatprep.mubr.bf16.mxu0 %v7598
        %8554 = vmatmul.mubr.bf16.gmra.mxu0 %v7548
        %v8555 = vpop.f32.mrf.mxu0
        %v8556 = vadd.f32 %v8395, %v8555
        %v8557 = vpop.f32.mrf.mxu0
        %v8558 = vpop.f32.mrf.mxu0
        %v8559 = vadd.f32 %v8398, %v8558
        %v8560 = vpop.f32.mrf.mxu0
        %8561 = vmatprep.mubr.bf16.mxu0 %v7599
        %8562 = vmatmul.mubr.bf16.gmra.mxu0 %v7549
        %v8563 = vpop.f32.mrf.mxu0
        %v8564 = vadd.f32 %v8403, %v8563
        %v8565 = vpop.f32.mrf.mxu0
        %v8566 = vpop.f32.mrf.mxu0
        %v8567 = vadd.f32 %v8406, %v8566
        %v8568 = vpop.f32.mrf.mxu0
        %8569 = vmatprep.mubr.bf16.mxu0 %v7600
        %8570 = vmatmul.mubr.bf16.gmra.mxu0 %v7550
        %v8571 = vpop.f32.mrf.mxu0
        %v8572 = vadd.f32 %v8411, %v8571
        %v8573 = vpop.f32.mrf.mxu0
        %v8574 = vpop.f32.mrf.mxu0
        %v8575 = vadd.f32 %v8414, %v8574
        %v8576 = vpop.f32.mrf.mxu0
        %8577 = vmatprep.mubr.bf16.mxu0 %v7601
        %8578 = vmatmul.mubr.bf16.gmra.mxu0 %v7551
        %v8579 = vpop.f32.mrf.mxu0
        %v8580 = vadd.f32 %v8419, %v8579
        %v8581 = vpop.f32.mrf.mxu0
        %v8582 = vpop.f32.mrf.mxu0
        %v8583 = vadd.f32 %v8422, %v8582
        %v8584 = vpop.f32.mrf.mxu0
        %8585 = vmatprep.mubr.bf16.mxu0 %v7602
        %8586 = vmatmul.mubr.bf16.gmra.mxu0 %v7552
        %v8587 = vpop.f32.mrf.mxu0
        %v8588 = vadd.f32 %v8427, %v8587
        %v8589 = vpop.f32.mrf.mxu0
        %v8590 = vpop.f32.mrf.mxu0
        %v8591 = vadd.f32 %v8430, %v8590
        %v8592 = vpop.f32.mrf.mxu0
        %8593 = vmatprep.mubr.bf16.mxu0 %v7603
        %8594 = vmatmul.mubr.bf16.gmra.mxu0 %v7553
        %v8595 = vpop.f32.mrf.mxu0
        %v8596 = vadd.f32 %v8435, %v8595
        %v8597 = vpop.f32.mrf.mxu0
        %v8598 = vpop.f32.mrf.mxu0
        %v8599 = vadd.f32 %v8438, %v8598
        %v8600 = vpop.f32.mrf.mxu0
        %8601 = vmatprep.mubr.bf16.mxu0 %v7604
        %8602 = vmatmul.mubr.bf16.gmra.mxu0 %v7554
        %v8603 = vpop.f32.mrf.mxu0
        %v8604 = vadd.f32 %v8443, %v8603
        %v8605 = vpop.f32.mrf.mxu0
        %v8606 = vpop.f32.mrf.mxu0
        %v8607 = vadd.f32 %v8446, %v8606
        %v8608 = vpop.f32.mrf.mxu0
        %8609 = vmatprep.mubr.bf16.mxu0 %v7605
        %8610 = vmatmul.mubr.bf16.gmra.mxu0 %v7555
        %v8611 = vpop.f32.mrf.mxu0
        %v8612 = vadd.f32 %v8451, %v8611
        %v8613 = vpop.f32.mrf.mxu0
        %v8614 = vpop.f32.mrf.mxu0
        %v8615 = vadd.f32 %v8454, %v8614
        %v8616 = vpop.f32.mrf.mxu0
        %8617 = vmatprep.mubr.bf16.mxu0 %v7606
        %8618 = vmatmul.mubr.bf16.gmra.mxu0 %v7556
        %v8619 = vpop.f32.mrf.mxu0
        %v8620 = vadd.f32 %v8459, %v8619
        %v8621 = vpop.f32.mrf.mxu0
        %v8622 = vpop.f32.mrf.mxu0
        %v8623 = vadd.f32 %v8462, %v8622
        %v8624 = vpop.f32.mrf.mxu0
        %8625 = vmatprep.mubr.bf16.mxu0 %v7607
        %8626 = vmatmul.mubr.bf16.gmra.mxu0 %v7557
        %v8627 = vpop.f32.mrf.mxu0
        %v8628 = vadd.f32 %v8467, %v8627
        %v8629 = vpop.f32.mrf.mxu0
        %v8630 = vpop.f32.mrf.mxu0
        %v8631 = vadd.f32 %v8470, %v8630
        %v8632 = vpop.f32.mrf.mxu0
        %8633 = vmatprep.mubr.bf16.mxu0 %v7608
        %8634 = vmatmul.mubr.bf16.gmra.mxu0 %v7558
        %v8635 = vpop.f32.mrf.mxu0
        %v8636 = vadd.f32 %v8475, %v8635
        %v8637 = vpop.f32.mrf.mxu0
        %v8638 = vpop.f32.mrf.mxu0
        %v8639 = vadd.f32 %v8478, %v8638
        %v8640 = vpop.f32.mrf.mxu0
        %8641 = vmatprep.mubr.bf16.mxu0 %v7609
        %8642 = vmatmul.mubr.bf16.gmra.mxu0 %v7559
        %v8643 = vpop.f32.mrf.mxu0
        %v8644 = vadd.f32 %v8483, %v8643
        %v8645 = vpop.f32.mrf.mxu0
        %v8646 = vpop.f32.mrf.mxu0
        %v8647 = vadd.f32 %v8486, %v8646
        %v8648 = vpop.f32.mrf.mxu0
        %8649 = vmatprep.mubr.bf16.mxu0 %v7610
        %8650 = vmatmul.mubr.bf16.gmra.mxu0 %v7560
        %v8651 = vpop.f32.mrf.mxu0
        %v8652 = vadd.f32 %v8491, %v8651
        %v8653 = vpop.f32.mrf.mxu0
        %v8654 = vpop.f32.mrf.mxu0
        %v8655 = vadd.f32 %v8494, %v8654
        %v8656 = vpop.f32.mrf.mxu0
        %8657 = vmatprep.mubr.bf16.mxu0 %v7611
        %8658 = vmatmul.mubr.bf16.gmra.mxu0 %v7561
        %v8659 = vpop.f32.mrf.mxu0
        %v8660 = vadd.f32 %v8499, %v8659
        %v8661 = vpop.f32.mrf.mxu0
        %v8662 = vpop.f32.mrf.mxu0
        %v8663 = vadd.f32 %v8502, %v8662
        %v8664 = vpop.f32.mrf.mxu0
        %8665 = vdwg.mxu0
        %8666 = vmatprep.subr.bf16.mxu0 0
        %8667 = vmatpush1.bf16.msra.mxu0 %v8239
        %8668 = vmatprep.subr.bf16.mxu0 0
        %8669 = vmatpush1.bf16.msra.mxu0 %v8238
        %8670 = vmatprep.subr.bf16.mxu0 0
        %8671 = vmatpush1.bf16.msra.mxu0 %v8237
        %8672 = vmatprep.subr.bf16.mxu0 0
        %8673 = vmatpush1.bf16.msra.mxu0 %v8236
        %8674 = vmatprep.subr.bf16.mxu0 0
        %8675 = vmatpush1.bf16.msra.mxu0 %v8235
        %8676 = vmatprep.subr.bf16.mxu0 0
        %8677 = vmatpush1.bf16.msra.mxu0 %v8234
        %8678 = vmatprep.subr.bf16.mxu0 0
        %8679 = vmatpush1.bf16.msra.mxu0 %v8233
        %8680 = vmatprep.subr.bf16.mxu0 0
        %8681 = vmatpush1.bf16.msra.mxu0 %v8232
        %8682 = vmatprep.subr.bf16.mxu0 0
        %8683 = vmatpush2.bf16.msra.mxu0 %v8247
        %8684 = vmatprep.subr.bf16.mxu0 0
        %8685 = vmatpush2.bf16.msra.mxu0 %v8246
        %8686 = vmatprep.subr.bf16.mxu0 0
        %8687 = vmatpush2.bf16.msra.mxu0 %v8245
        %8688 = vmatprep.subr.bf16.mxu0 0
        %8689 = vmatpush2.bf16.msra.mxu0 %v8244
        %8690 = vmatprep.subr.bf16.mxu0 0
        %8691 = vmatpush2.bf16.msra.mxu0 %v8243
        %8692 = vmatprep.subr.bf16.mxu0 0
        %8693 = vmatpush2.bf16.msra.mxu0 %v8242
        %8694 = vmatprep.subr.bf16.mxu0 0
        %8695 = vmatpush2.bf16.msra.mxu0 %v8241
        %8696 = vmatprep.subr.bf16.mxu0 0
        %8697 = vmatpush2.bf16.msra.mxu0 %v8240
        %8698 = vmatprep.mubr.bf16.mxu0 %v7649
        %8699 = vmatmul.mubr.bf16.gmra.mxu0 %v7467
        %v8700 = vpop.f32.mrf.mxu0
        %v8701 = vadd.f32 %v8540, %v8700
        %v8702 = vpop.f32.mrf.mxu0
        %v8703 = vpop.f32.mrf.mxu0
        %v8704 = vadd.f32 %v8543, %v8703
        %v8705 = vpop.f32.mrf.mxu0
        %8706 = vmatprep.mubr.bf16.mxu0 %v7650
        %8707 = vmatmul.mubr.bf16.gmra.mxu0 %v7468
        %v8708 = vpop.f32.mrf.mxu0
        %v8709 = vadd.f32 %v8548, %v8708
        %v8710 = vpop.f32.mrf.mxu0
        %v8711 = vpop.f32.mrf.mxu0
        %v8712 = vadd.f32 %v8551, %v8711
        %v8713 = vpop.f32.mrf.mxu0
        %8714 = vmatprep.mubr.bf16.mxu0 %v7651
        %8715 = vmatmul.mubr.bf16.gmra.mxu0 %v7469
        %v8716 = vpop.f32.mrf.mxu0
        %v8717 = vadd.f32 %v8556, %v8716
        %v8718 = vpop.f32.mrf.mxu0
        %v8719 = vpop.f32.mrf.mxu0
        %v8720 = vadd.f32 %v8559, %v8719
        %v8721 = vpop.f32.mrf.mxu0
        %8722 = vmatprep.mubr.bf16.mxu0 %v7652
        %8723 = vmatmul.mubr.bf16.gmra.mxu0 %v7470
        %v8724 = vpop.f32.mrf.mxu0
        %v8725 = vadd.f32 %v8564, %v8724
        %v8726 = vpop.f32.mrf.mxu0
        %v8727 = vpop.f32.mrf.mxu0
        %v8728 = vadd.f32 %v8567, %v8727
        %v8729 = vpop.f32.mrf.mxu0
        %8730 = vmatprep.mubr.bf16.mxu0 %v7653
        %8731 = vmatmul.mubr.bf16.gmra.mxu0 %v7471
        %v8732 = vpop.f32.mrf.mxu0
        %v8733 = vadd.f32 %v8572, %v8732
        %v8734 = vpop.f32.mrf.mxu0
        %v8735 = vpop.f32.mrf.mxu0
        %v8736 = vadd.f32 %v8575, %v8735
        %v8737 = vpop.f32.mrf.mxu0
        %8738 = vmatprep.mubr.bf16.mxu0 %v7654
        %8739 = vmatmul.mubr.bf16.gmra.mxu0 %v7472
        %v8740 = vpop.f32.mrf.mxu0
        %v8741 = vadd.f32 %v8580, %v8740
        %v8742 = vpop.f32.mrf.mxu0
        %v8743 = vpop.f32.mrf.mxu0
        %v8744 = vadd.f32 %v8583, %v8743
        %v8745 = vpop.f32.mrf.mxu0
        %8746 = vmatprep.mubr.bf16.mxu0 %v7655
        %8747 = vmatmul.mubr.bf16.gmra.mxu0 %v7473
        %v8748 = vpop.f32.mrf.mxu0
        %v8749 = vadd.f32 %v8588, %v8748
        %v8750 = vpop.f32.mrf.mxu0
        %v8751 = vpop.f32.mrf.mxu0
        %v8752 = vadd.f32 %v8591, %v8751
        %v8753 = vpop.f32.mrf.mxu0
        %8754 = vmatprep.mubr.bf16.mxu0 %v7656
        %8755 = vmatmul.mubr.bf16.gmra.mxu0 %v7474
        %v8756 = vpop.f32.mrf.mxu0
        %v8757 = vadd.f32 %v8596, %v8756
        %v8758 = vpop.f32.mrf.mxu0
        %v8759 = vpop.f32.mrf.mxu0
        %v8760 = vadd.f32 %v8599, %v8759
        %v8761 = vpop.f32.mrf.mxu0
        %8762 = vmatprep.mubr.bf16.mxu0 %v7657
        %8763 = vmatmul.mubr.bf16.gmra.mxu0 %v7475
        %v8764 = vpop.f32.mrf.mxu0
        %v8765 = vadd.f32 %v8604, %v8764
        %v8766 = vpop.f32.mrf.mxu0
        %v8767 = vpop.f32.mrf.mxu0
        %v8768 = vadd.f32 %v8607, %v8767
        %v8769 = vpop.f32.mrf.mxu0
        %8770 = vmatprep.mubr.bf16.mxu0 %v7658
        %8771 = vmatmul.mubr.bf16.gmra.mxu0 %v7476
        %v8772 = vpop.f32.mrf.mxu0
        %v8773 = vadd.f32 %v8612, %v8772
        %v8774 = vpop.f32.mrf.mxu0
        %v8775 = vpop.f32.mrf.mxu0
        %v8776 = vadd.f32 %v8615, %v8775
        %v8777 = vpop.f32.mrf.mxu0
        %8778 = vmatprep.mubr.bf16.mxu0 %v7659
        %8779 = vmatmul.mubr.bf16.gmra.mxu0 %v7477
        %v8780 = vpop.f32.mrf.mxu0
        %v8781 = vadd.f32 %v8620, %v8780
        %v8782 = vpop.f32.mrf.mxu0
        %v8783 = vpop.f32.mrf.mxu0
        %v8784 = vadd.f32 %v8623, %v8783
        %v8785 = vpop.f32.mrf.mxu0
        %8786 = vmatprep.mubr.bf16.mxu0 %v7660
        %8787 = vmatmul.mubr.bf16.gmra.mxu0 %v7478
        %v8788 = vpop.f32.mrf.mxu0
        %v8789 = vadd.f32 %v8628, %v8788
        %v8790 = vpop.f32.mrf.mxu0
        %v8791 = vpop.f32.mrf.mxu0
        %v8792 = vadd.f32 %v8631, %v8791
        %v8793 = vpop.f32.mrf.mxu0
        %8794 = vmatprep.mubr.bf16.mxu0 %v7661
        %8795 = vmatmul.mubr.bf16.gmra.mxu0 %v7479
        %v8796 = vpop.f32.mrf.mxu0
        %v8797 = vadd.f32 %v8636, %v8796
        %v8798 = vpop.f32.mrf.mxu0
        %v8799 = vpop.f32.mrf.mxu0
        %v8800 = vadd.f32 %v8639, %v8799
        %v8801 = vpop.f32.mrf.mxu0
        %8802 = vmatprep.mubr.bf16.mxu0 %v7662
        %8803 = vmatmul.mubr.bf16.gmra.mxu0 %v7480
        %v8804 = vpop.f32.mrf.mxu0
        %v8805 = vadd.f32 %v8644, %v8804
        %v8806 = vpop.f32.mrf.mxu0
        %v8807 = vpop.f32.mrf.mxu0
        %v8808 = vadd.f32 %v8647, %v8807
        %v8809 = vpop.f32.mrf.mxu0
        %8810 = vmatprep.mubr.bf16.mxu0 %v7663
        %8811 = vmatmul.mubr.bf16.gmra.mxu0 %v7481
        %v8812 = vpop.f32.mrf.mxu0
        %v8813 = vadd.f32 %v8652, %v8812
        %v8814 = vpop.f32.mrf.mxu0
        %v8815 = vpop.f32.mrf.mxu0
        %v8816 = vadd.f32 %v8655, %v8815
        %v8817 = vpop.f32.mrf.mxu0
        %8818 = vmatprep.mubr.bf16.mxu0 %v7664
        %8819 = vmatmul.mubr.bf16.gmra.mxu0 %v7614
        %v8820 = vpop.f32.mrf.mxu0
        %v8821 = vadd.f32 %v8660, %v8820
        %v8822 = vpop.f32.mrf.mxu0
        %v8823 = vpop.f32.mrf.mxu0
        %v8824 = vadd.f32 %v8663, %v8823
        %v8825 = vpop.f32.mrf.mxu0
        %8826 = vdwg.mxu0
        %8827 = vmatprep.subr.bf16.mxu0 0
        %8828 = vmatpush1.bf16.msra.mxu0 %v8255
        %8829 = vmatprep.subr.bf16.mxu0 0
        %8830 = vmatpush1.bf16.msra.mxu0 %v8254
        %8831 = vmatprep.subr.bf16.mxu0 0
        %8832 = vmatpush1.bf16.msra.mxu0 %v8253
        %8833 = vmatprep.subr.bf16.mxu0 0
        %8834 = vmatpush1.bf16.msra.mxu0 %v8252
        %8835 = vmatprep.subr.bf16.mxu0 0
        %8836 = vmatpush1.bf16.msra.mxu0 %v8251
        %8837 = vmatprep.subr.bf16.mxu0 0
        %8838 = vmatpush1.bf16.msra.mxu0 %v8250
        %8839 = vmatprep.subr.bf16.mxu0 0
        %8840 = vmatpush1.bf16.msra.mxu0 %v8249
        %8841 = vmatprep.subr.bf16.mxu0 0
        %8842 = vmatpush1.bf16.msra.mxu0 %v8248
        %8843 = vmatprep.subr.bf16.mxu0 0
        %8844 = vmatpush2.bf16.msra.mxu0 %v8263
        %8845 = vmatprep.subr.bf16.mxu0 0
        %8846 = vmatpush2.bf16.msra.mxu0 %v8262
        %8847 = vmatprep.subr.bf16.mxu0 0
        %8848 = vmatpush2.bf16.msra.mxu0 %v8261
        %8849 = vmatprep.subr.bf16.mxu0 0
        %8850 = vmatpush2.bf16.msra.mxu0 %v8260
        %8851 = vmatprep.subr.bf16.mxu0 0
        %8852 = vmatpush2.bf16.msra.mxu0 %v8259
        %8853 = vmatprep.subr.bf16.mxu0 0
        %8854 = vmatpush2.bf16.msra.mxu0 %v8258
        %8855 = vmatprep.subr.bf16.mxu0 0
        %8856 = vmatpush2.bf16.msra.mxu0 %v8257
        %8857 = vmatprep.subr.bf16.mxu0 0
        %8858 = vmatpush2.bf16.msra.mxu0 %v8256
        %8859 = vmatprep.mubr.bf16.mxu0 %v7468
        %8860 = vmatmul.mubr.bf16.gmra.mxu0 %v7699
        %v8861 = vpop.f32.mrf.mxu0
        %v8862 = vadd.f32 %v8701, %v8861
        %v8863 = vpop.f32.mrf.mxu0
        %v8864 = vpop.f32.mrf.mxu0
        %v8865 = vadd.f32 %v8704, %v8864
        %v8866 = vpop.f32.mrf.mxu0
        %8867 = vmatprep.mubr.bf16.mxu0 %v7469
        %8868 = vmatmul.mubr.bf16.gmra.mxu0 %v7700
        %v8869 = vpop.f32.mrf.mxu0
        %v8870 = vadd.f32 %v8709, %v8869
        %v8871 = vpop.f32.mrf.mxu0
        %v8872 = vpop.f32.mrf.mxu0
        %v8873 = vadd.f32 %v8712, %v8872
        %v8874 = vpop.f32.mrf.mxu0
        %8875 = vmatprep.mubr.bf16.mxu0 %v7470
        %8876 = vmatmul.mubr.bf16.gmra.mxu0 %v7701
        %v8877 = vpop.f32.mrf.mxu0
        %v8878 = vadd.f32 %v8717, %v8877
        %v8879 = vpop.f32.mrf.mxu0
        %v8880 = vpop.f32.mrf.mxu0
        %v8881 = vadd.f32 %v8720, %v8880
        %v8882 = vpop.f32.mrf.mxu0
        %8883 = vmatprep.mubr.bf16.mxu0 %v7471
        %8884 = vmatmul.mubr.bf16.gmra.mxu0 %v7702
        %v8885 = vpop.f32.mrf.mxu0
        %v8886 = vadd.f32 %v8725, %v8885
        %v8887 = vpop.f32.mrf.mxu0
        %v8888 = vpop.f32.mrf.mxu0
        %v8889 = vadd.f32 %v8728, %v8888
        %v8890 = vpop.f32.mrf.mxu0
        %8891 = vmatprep.mubr.bf16.mxu0 %v7472
        %8892 = vmatmul.mubr.bf16.gmra.mxu0 %v7703
        %v8893 = vpop.f32.mrf.mxu0
        %v8894 = vadd.f32 %v8733, %v8893
        %v8895 = vpop.f32.mrf.mxu0
        %v8896 = vpop.f32.mrf.mxu0
        %v8897 = vadd.f32 %v8736, %v8896
        %v8898 = vpop.f32.mrf.mxu0
        %8899 = vmatprep.mubr.bf16.mxu0 %v7473
        %8900 = vmatmul.mubr.bf16.gmra.mxu0 %v7704
        %v8901 = vpop.f32.mrf.mxu0
        %v8902 = vadd.f32 %v8741, %v8901
        %v8903 = vpop.f32.mrf.mxu0
        %v8904 = vpop.f32.mrf.mxu0
        %v8905 = vadd.f32 %v8744, %v8904
        %v8906 = vpop.f32.mrf.mxu0
        %8907 = vmatprep.mubr.bf16.mxu0 %v7474
        %8908 = vmatmul.mubr.bf16.gmra.mxu0 %v7705
        %v8909 = vpop.f32.mrf.mxu0
        %v8910 = vadd.f32 %v8749, %v8909
        %v8911 = vpop.f32.mrf.mxu0
        %v8912 = vpop.f32.mrf.mxu0
        %v8913 = vadd.f32 %v8752, %v8912
        %v8914 = vpop.f32.mrf.mxu0
        %8915 = vmatprep.mubr.bf16.mxu0 %v7475
        %8916 = vmatmul.mubr.bf16.gmra.mxu0 %v7706
        %v8917 = vpop.f32.mrf.mxu0
        %v8918 = vadd.f32 %v8757, %v8917
        %v8919 = vpop.f32.mrf.mxu0
        %v8920 = vpop.f32.mrf.mxu0
        %v8921 = vadd.f32 %v8760, %v8920
        %v8922 = vpop.f32.mrf.mxu0
        %8923 = vmatprep.mubr.bf16.mxu0 %v7476
        %8924 = vmatmul.mubr.bf16.gmra.mxu0 %v7707
        %v8925 = vpop.f32.mrf.mxu0
        %v8926 = vadd.f32 %v8765, %v8925
        %v8927 = vpop.f32.mrf.mxu0
        %v8928 = vpop.f32.mrf.mxu0
        %v8929 = vadd.f32 %v8768, %v8928
        %v8930 = vpop.f32.mrf.mxu0
        %8931 = vmatprep.mubr.bf16.mxu0 %v7477
        %8932 = vmatmul.mubr.bf16.gmra.mxu0 %v7708
        %v8933 = vpop.f32.mrf.mxu0
        %v8934 = vadd.f32 %v8773, %v8933
        %v8935 = vpop.f32.mrf.mxu0
        %v8936 = vpop.f32.mrf.mxu0
        %v8937 = vadd.f32 %v8776, %v8936
        %v8938 = vpop.f32.mrf.mxu0
        %8939 = vmatprep.mubr.bf16.mxu0 %v7478
        %8940 = vmatmul.mubr.bf16.gmra.mxu0 %v7709
        %v8941 = vpop.f32.mrf.mxu0
        %v8942 = vadd.f32 %v8781, %v8941
        %v8943 = vpop.f32.mrf.mxu0
        %v8944 = vpop.f32.mrf.mxu0
        %v8945 = vadd.f32 %v8784, %v8944
        %v8946 = vpop.f32.mrf.mxu0
        %8947 = vmatprep.mubr.bf16.mxu0 %v7479
        %8948 = vmatmul.mubr.bf16.gmra.mxu0 %v7710
        %v8949 = vpop.f32.mrf.mxu0
        %v8950 = vadd.f32 %v8789, %v8949
        %v8951 = vpop.f32.mrf.mxu0
        %v8952 = vpop.f32.mrf.mxu0
        %v8953 = vadd.f32 %v8792, %v8952
        %v8954 = vpop.f32.mrf.mxu0
        %8955 = vmatprep.mubr.bf16.mxu0 %v7480
        %8956 = vmatmul.mubr.bf16.gmra.mxu0 %v7711
        %v8957 = vpop.f32.mrf.mxu0
        %v8958 = vadd.f32 %v8797, %v8957
        %v8959 = vpop.f32.mrf.mxu0
        %v8960 = vpop.f32.mrf.mxu0
        %v8961 = vadd.f32 %v8800, %v8960
        %v8962 = vpop.f32.mrf.mxu0
        %8963 = vmatprep.mubr.bf16.mxu0 %v7481
        %8964 = vmatmul.mubr.bf16.gmra.mxu0 %v7712
        %v8965 = vpop.f32.mrf.mxu0
        %v8966 = vadd.f32 %v8805, %v8965
        %v8967 = vpop.f32.mrf.mxu0
        %v8968 = vpop.f32.mrf.mxu0
        %v8969 = vadd.f32 %v8808, %v8968
        %v8970 = vpop.f32.mrf.mxu0
        %8971 = vmatprep.mubr.bf16.mxu0 %v7614
        %8972 = vmatmul.mubr.bf16.gmra.mxu0 %v7713
        %v8973 = vpop.f32.mrf.mxu0
        %v8974 = vadd.f32 %v8813, %v8973
        %v8975 = vpop.f32.mrf.mxu0
        %v8976 = vpop.f32.mrf.mxu0
        %v8977 = vadd.f32 %v8816, %v8976
        %v8978 = vpop.f32.mrf.mxu0
        %8979 = vmatprep.mubr.bf16.mxu0 %v7717
        %8980 = vmatmul.mubr.bf16.gmra.mxu0 %v7714
        %v8981 = vpop.f32.mrf.mxu0
        %v8982 = vadd.f32 %v8821, %v8981
        %v8983 = vpop.f32.mrf.mxu0
        %v8984 = vpop.f32.mrf.mxu0
        %v8985 = vadd.f32 %v8824, %v8984
        %v8986 = vpop.f32.mrf.mxu0
        %8987 = vdwg.mxu0
        %8988 = vmatprep.subr.bf16.mxu0 0
        %8989 = vmatpush1.bf16.msra.mxu0 %v8271
        %8990 = vmatprep.subr.bf16.mxu0 0
        %8991 = vmatpush1.bf16.msra.mxu0 %v8270
        %8992 = vmatprep.subr.bf16.mxu0 0
        %8993 = vmatpush1.bf16.msra.mxu0 %v8269
        %8994 = vmatprep.subr.bf16.mxu0 0
        %8995 = vmatpush1.bf16.msra.mxu0 %v8268
        %8996 = vmatprep.subr.bf16.mxu0 0
        %8997 = vmatpush1.bf16.msra.mxu0 %v8267
        %8998 = vmatprep.subr.bf16.mxu0 0
        %8999 = vmatpush1.bf16.msra.mxu0 %v8266
        %9000 = vmatprep.subr.bf16.mxu0 0
        %9001 = vmatpush1.bf16.msra.mxu0 %v8265
        %9002 = vmatprep.subr.bf16.mxu0 0
        %9003 = vmatpush1.bf16.msra.mxu0 %v8264
        %9004 = vmatprep.subr.bf16.mxu0 0
        %9005 = vmatpush2.bf16.msra.mxu0 0
        %9006 = vmatprep.subr.bf16.mxu0 0
        %9007 = vmatpush2.bf16.msra.mxu0 0
        %9008 = vmatprep.subr.bf16.mxu0 0
        %9009 = vmatpush2.bf16.msra.mxu0 0
        %9010 = vmatprep.subr.bf16.mxu0 0
        %9011 = vmatpush2.bf16.msra.mxu0 0
        %9012 = vmatprep.subr.bf16.mxu0 0
        %9013 = vmatpush2.bf16.msra.mxu0 0
        %9014 = vmatprep.subr.bf16.mxu0 0
        %9015 = vmatpush2.bf16.msra.mxu0 0
        %9016 = vmatprep.subr.bf16.mxu0 0
        %9017 = vmatpush2.bf16.msra.mxu0 0
        %9018 = vmatprep.subr.bf16.mxu0 0
        %9019 = vmatpush2.bf16.msra.mxu0 0
        %9020 = vmatprep.mubr.bf16.mxu0 0
        %9021 = vmatmul.mubr.bf16.gmra.mxu0 %v7752
        %v9022 = vpop.f32.mrf.mxu0
        %v9023 = vadd.f32 %v8862, %v9022
        %v9024 = vpop.f32.mrf.mxu0
        %v9025 = vpop.f32.mrf.mxu0
        %v9026 = vadd.f32 %v8865, %v9025
        %v9027 = vpop.f32.mrf.mxu0
        %9028 = vmatprep.mubr.bf16.mxu0 0
        %9029 = vmatmul.mubr.bf16.gmra.mxu0 %v7753
        %v9030 = vpop.f32.mrf.mxu0
        %v9031 = vadd.f32 %v8870, %v9030
        %v9032 = vpop.f32.mrf.mxu0
        %v9033 = vpop.f32.mrf.mxu0
        %v9034 = vadd.f32 %v8873, %v9033
        %v9035 = vpop.f32.mrf.mxu0
        %9036 = vmatprep.mubr.bf16.mxu0 0
        %9037 = vmatmul.mubr.bf16.gmra.mxu0 %v7754
        %v9038 = vpop.f32.mrf.mxu0
        %v9039 = vadd.f32 %v8878, %v9038
        %v9040 = vpop.f32.mrf.mxu0
        %v9041 = vpop.f32.mrf.mxu0
        %v9042 = vadd.f32 %v8881, %v9041
        %v9043 = vpop.f32.mrf.mxu0
        %9044 = vmatprep.mubr.bf16.mxu0 0
        %9045 = vmatmul.mubr.bf16.gmra.mxu0 %v7755
        %v9046 = vpop.f32.mrf.mxu0
        %v9047 = vadd.f32 %v8886, %v9046
        %v9048 = vpop.f32.mrf.mxu0
        %v9049 = vpop.f32.mrf.mxu0
        %v9050 = vadd.f32 %v8889, %v9049
        %v9051 = vpop.f32.mrf.mxu0
        %9052 = vmatprep.mubr.bf16.mxu0 0
        %9053 = vmatmul.mubr.bf16.gmra.mxu0 %v7756
        %v9054 = vpop.f32.mrf.mxu0
        %v9055 = vadd.f32 %v8894, %v9054
        %v9056 = vpop.f32.mrf.mxu0
        %v9057 = vpop.f32.mrf.mxu0
        %v9058 = vadd.f32 %v8897, %v9057
        %v9059 = vpop.f32.mrf.mxu0
        %9060 = vmatprep.mubr.bf16.mxu0 0
        %9061 = vmatmul.mubr.bf16.gmra.mxu0 %v7757
        %v9062 = vpop.f32.mrf.mxu0
        %v9063 = vadd.f32 %v8902, %v9062
        %v9064 = vpop.f32.mrf.mxu0
        %v9065 = vpop.f32.mrf.mxu0
        %v9066 = vadd.f32 %v8905, %v9065
        %v9067 = vpop.f32.mrf.mxu0
        %9068 = vmatprep.mubr.bf16.mxu0 0
        %9069 = vmatmul.mubr.bf16.gmra.mxu0 %v7758
        %v9070 = vpop.f32.mrf.mxu0
        %v9071 = vadd.f32 %v8910, %v9070
        %v9072 = vpop.f32.mrf.mxu0
        %v9073 = vpop.f32.mrf.mxu0
        %v9074 = vadd.f32 %v8913, %v9073
        %v9075 = vpop.f32.mrf.mxu0
        %9076 = vmatprep.mubr.bf16.mxu0 0
        %9077 = vmatmul.mubr.bf16.gmra.mxu0 %v7759
        %v9078 = vpop.f32.mrf.mxu0
        %v9079 = vadd.f32 %v8918, %v9078
        %v9080 = vpop.f32.mrf.mxu0
        %v9081 = vpop.f32.mrf.mxu0
        %v9082 = vadd.f32 %v8921, %v9081
        %v9083 = vpop.f32.mrf.mxu0
        %9084 = vmatprep.mubr.bf16.mxu0 0
        %9085 = vmatmul.mubr.bf16.gmra.mxu0 %v7760
        %v9086 = vpop.f32.mrf.mxu0
        %v9087 = vadd.f32 %v8926, %v9086
        %v9088 = vpop.f32.mrf.mxu0
        %v9089 = vpop.f32.mrf.mxu0
        %v9090 = vadd.f32 %v8929, %v9089
        %v9091 = vpop.f32.mrf.mxu0
        %9092 = vmatprep.mubr.bf16.mxu0 0
        %9093 = vmatmul.mubr.bf16.gmra.mxu0 %v7761
        %v9094 = vpop.f32.mrf.mxu0
        %v9095 = vadd.f32 %v8934, %v9094
        %v9096 = vpop.f32.mrf.mxu0
        %v9097 = vpop.f32.mrf.mxu0
        %v9098 = vadd.f32 %v8937, %v9097
        %v9099 = vpop.f32.mrf.mxu0
        %9100 = vmatprep.mubr.bf16.mxu0 0
        %9101 = vmatmul.mubr.bf16.gmra.mxu0 %v7762
        %v9102 = vpop.f32.mrf.mxu0
        %v9103 = vadd.f32 %v8942, %v9102
        %v9104 = vpop.f32.mrf.mxu0
        %v9105 = vpop.f32.mrf.mxu0
        %v9106 = vadd.f32 %v8945, %v9105
        %v9107 = vpop.f32.mrf.mxu0
        %9108 = vmatprep.mubr.bf16.mxu0 0
        %9109 = vmatmul.mubr.bf16.gmra.mxu0 %v7763
        %v9110 = vpop.f32.mrf.mxu0
        %v9111 = vadd.f32 %v8950, %v9110
        %v9112 = vpop.f32.mrf.mxu0
        %v9113 = vpop.f32.mrf.mxu0
        %v9114 = vadd.f32 %v8953, %v9113
        %v9115 = vpop.f32.mrf.mxu0
        %9116 = vmatprep.mubr.bf16.mxu0 0
        %9117 = vmatmul.mubr.bf16.gmra.mxu0 %v7764
        %v9118 = vpop.f32.mrf.mxu0
        %v9119 = vadd.f32 %v8958, %v9118
        %v9120 = vpop.f32.mrf.mxu0
        %v9121 = vpop.f32.mrf.mxu0
        %v9122 = vadd.f32 %v8961, %v9121
        %v9123 = vpop.f32.mrf.mxu0
        %9124 = vmatprep.mubr.bf16.mxu0 0
        %9125 = vmatmul.mubr.bf16.gmra.mxu0 %v7765
        %v9126 = vpop.f32.mrf.mxu0
        %v9127 = vadd.f32 %v8966, %v9126
        %v9128 = vpop.f32.mrf.mxu0
        %v9129 = vpop.f32.mrf.mxu0
        %v9130 = vadd.f32 %v8969, %v9129
        %v9131 = vpop.f32.mrf.mxu0
        %9132 = vmatprep.mubr.bf16.mxu0 0
        %9133 = vmatmul.mubr.bf16.gmra.mxu0 %v7766
        %v9134 = vpop.f32.mrf.mxu0
        %v9135 = vadd.f32 %v8974, %v9134
        %v9136 = vpop.f32.mrf.mxu0
        %v9137 = vpop.f32.mrf.mxu0
        %v9138 = vadd.f32 %v8977, %v9137
        %v9139 = vpop.f32.mrf.mxu0
        %9140 = vmatprep.mubr.bf16.mxu0 0
        %9141 = vmatmul.mubr.bf16.gmra.mxu0 %v7767
        %v9142 = vpop.f32.mrf.mxu0
        %v9143 = vadd.f32 %v8982, %v9142
        %v9144 = vpop.f32.mrf.mxu0
        %v9145 = vpop.f32.mrf.mxu0
        %v9146 = vadd.f32 %v8985, %v9145
        %v9147 = vpop.f32.mrf.mxu0
        %9148 = vdwg.mxu0
        %v9149 = vld [vmem:[#allocation5 + $0xa8] sm:$0x1]
        %v9150 = vlaneseq
        %v9151 = vshrl.u32 %v9150, 7
        %v9152 = vsub.s32 0, %v9151
        %v9153 = vrot.slane %v9149, %v9152
        %v9154 = vmul.f32 %v9023, %v9153
        %v9155 = vmul.f32 %v9026, %v9153
        %v9156 = vmul.f32 %v9031, %v9153
        %v9157 = vmul.f32 %v9034, %v9153
        %v9158 = vmul.f32 %v9039, %v9153
        %v9159 = vmul.f32 %v9042, %v9153
        %v9160 = vmul.f32 %v9047, %v9153
        %v9161 = vmul.f32 %v9050, %v9153
        %v9162 = vmul.f32 %v9055, %v9153
        %v9163 = vmul.f32 %v9058, %v9153
        %v9164 = vmul.f32 %v9063, %v9153
        %v9165 = vmul.f32 %v9066, %v9153
        %v9166 = vmul.f32 %v9071, %v9153
        %v9167 = vmul.f32 %v9074, %v9153
        %v9168 = vmul.f32 %v9079, %v9153
        %v9169 = vmul.f32 %v9082, %v9153
        %v9170 = vmul.f32 %v9087, %v9153
        %v9171 = vmul.f32 %v9090, %v9153
        %v9172 = vmul.f32 %v9095, %v9153
        %v9173 = vmul.f32 %v9098, %v9153
        %v9174 = vmul.f32 %v9103, %v9153
        %v9175 = vmul.f32 %v9106, %v9153
        %v9176 = vmul.f32 %v9111, %v9153
        %v9177 = vmul.f32 %v9114, %v9153
        %v9178 = vmul.f32 %v9119, %v9153
        %v9179 = vmul.f32 %v9122, %v9153
        %v9180 = vmul.f32 %v9127, %v9153
        %v9181 = vmul.f32 %v9130, %v9153
        %v9182 = vmul.f32 %v9135, %v9153
        %v9183 = vmul.f32 %v9138, %v9153
        %v9184 = vmul.f32 %v9143, %v9153
        %v9185 = vmul.f32 %v9146, %v9153
        %v9186 = vld [vmem:[#allocation5 + $0xb0] sm:$0x1]
        %v9187 = vlaneseq
        %v9188 = vshrl.u32 %v9187, 7
        %v9189 = vsub.s32 0, %v9188
        %v9190 = vrot.slane %v9186, %v9189
        %v9191 = vadd.f32 %v9154, %v9190
        %v9192 = vadd.f32 %v9155, %v9190
        %v9193 = vadd.f32 %v9156, %v9190
        %v9194 = vadd.f32 %v9157, %v9190
        %v9195 = vadd.f32 %v9158, %v9190
        %v9196 = vadd.f32 %v9159, %v9190
        %v9197 = vadd.f32 %v9160, %v9190
        %v9198 = vadd.f32 %v9161, %v9190
        %v9199 = vadd.f32 %v9162, %v9190
        %v9200 = vadd.f32 %v9163, %v9190
        %v9201 = vadd.f32 %v9164, %v9190
        %v9202 = vadd.f32 %v9165, %v9190
        %v9203 = vadd.f32 %v9166, %v9190
        %v9204 = vadd.f32 %v9167, %v9190
        %v9205 = vadd.f32 %v9168, %v9190
        %v9206 = vadd.f32 %v9169, %v9190
        %v9207 = vadd.f32 %v9170, %v9190
        %v9208 = vadd.f32 %v9171, %v9190
        %v9209 = vadd.f32 %v9172, %v9190
        %v9210 = vadd.f32 %v9173, %v9190
        %v9211 = vadd.f32 %v9174, %v9190
        %v9212 = vadd.f32 %v9175, %v9190
        %v9213 = vadd.f32 %v9176, %v9190
        %v9214 = vadd.f32 %v9177, %v9190
        %v9215 = vadd.f32 %v9178, %v9190
        %v9216 = vadd.f32 %v9179, %v9190
        %v9217 = vadd.f32 %v9180, %v9190
        %v9218 = vadd.f32 %v9181, %v9190
        %v9219 = vadd.f32 %v9182, %v9190
        %v9220 = vadd.f32 %v9183, %v9190
        %v9221 = vadd.f32 %v9184, %v9190
        %v9222 = vadd.f32 %v9185, %v9190
        %v9223 = vmax.f32 %v9191, 0.0
        %v9224 = vmax.f32 %v9192, 0.0
        %v9225 = vmax.f32 %v9193, 0.0
        %v9226 = vmax.f32 %v9194, 0.0
        %v9227 = vmax.f32 %v9195, 0.0
        %v9228 = vmax.f32 %v9196, 0.0
        %v9229 = vmax.f32 %v9197, 0.0
        %v9230 = vmax.f32 %v9198, 0.0
        %v9231 = vmax.f32 %v9199, 0.0
        %v9232 = vmax.f32 %v9200, 0.0
        %v9233 = vmax.f32 %v9201, 0.0
        %v9234 = vmax.f32 %v9202, 0.0
        %v9235 = vmax.f32 %v9203, 0.0
        %v9236 = vmax.f32 %v9204, 0.0
        %v9237 = vmax.f32 %v9205, 0.0
        %v9238 = vmax.f32 %v9206, 0.0
        %v9239 = vmax.f32 %v9207, 0.0
        %v9240 = vmax.f32 %v9208, 0.0
        %v9241 = vmax.f32 %v9209, 0.0
        %v9242 = vmax.f32 %v9210, 0.0
        %v9243 = vmax.f32 %v9211, 0.0
        %v9244 = vmax.f32 %v9212, 0.0
        %v9245 = vmax.f32 %v9213, 0.0
        %v9246 = vmax.f32 %v9214, 0.0
        %v9247 = vmax.f32 %v9215, 0.0
        %v9248 = vmax.f32 %v9216, 0.0
        %v9249 = vmax.f32 %v9217, 0.0
        %v9250 = vmax.f32 %v9218, 0.0
        %v9251 = vmax.f32 %v9219, 0.0
        %v9252 = vmax.f32 %v9220, 0.0
        %v9253 = vmax.f32 %v9221, 0.0
        %v9254 = vmax.f32 %v9222, 0.0
        %v9255 = vpack.c.bf16 %v9224, %v9223
        %v9256 = vpack.c.bf16 %v9226, %v9225
        %v9257 = vpack.c.bf16 %v9228, %v9227
        %v9258 = vpack.c.bf16 %v9230, %v9229
        %v9259 = vpack.c.bf16 %v9232, %v9231
        %v9260 = vpack.c.bf16 %v9234, %v9233
        %v9261 = vpack.c.bf16 %v9236, %v9235
        %v9262 = vpack.c.bf16 %v9238, %v9237
        %v9263 = vpack.c.bf16 %v9240, %v9239
        %v9264 = vpack.c.bf16 %v9242, %v9241
        %v9265 = vpack.c.bf16 %v9244, %v9243
        %v9266 = vpack.c.bf16 %v9246, %v9245
        %v9267 = vpack.c.bf16 %v9248, %v9247
        %v9268 = vpack.c.bf16 %v9250, %v9249
        %v9269 = vpack.c.bf16 %v9252, %v9251
        %v9270 = vpack.c.bf16 %v9254, %v9253
        %v9271 = vld [vmem:[#allocation3 + $0xc30] sm:$0xf]
        %v9272 = vld [vmem:[#allocation3 + $0xc34] sm:$0xf]
        %v9273 = vld [vmem:[#allocation3 + $0xc38] sm:$0xf]
        %v9274 = vld [vmem:[#allocation3 + $0xc3c] sm:$0xf]
        %v9275 = vld [vmem:[#allocation3 + $0xc40] sm:$0xf]
        %v9276 = vld [vmem:[#allocation3 + $0xc44] sm:$0xf]
        %v9277 = vld [vmem:[#allocation3 + $0xc48] sm:$0xf]
        %v9278 = vld [vmem:[#allocation3 + $0xc4c] sm:$0xf]
        %v9279 = vld [vmem:[#allocation3 + $0xc50] sm:$0xf]
        %v9280 = vld [vmem:[#allocation3 + $0xc54] sm:$0xf]
        %v9281 = vld [vmem:[#allocation3 + $0xc58] sm:$0xf]
        %v9282 = vld [vmem:[#allocation3 + $0xc5c] sm:$0xf]
        %v9283 = vld [vmem:[#allocation3 + $0xc60] sm:$0xf]
        %v9284 = vld [vmem:[#allocation3 + $0xc64] sm:$0xf]
        %v9285 = vld [vmem:[#allocation3 + $0xc68] sm:$0xf]
        %v9286 = vld [vmem:[#allocation3 + $0xc6c] sm:$0xf]
        %v9287 = vld [vmem:[#allocation5 + $0xb8] sm:$0x1]
        %v9288 = vlaneseq
        %v9289 = vshrl.u32 %v9288, 7
        %v9290 = vsub.s32 0, %v9289
        %v9291 = vrot.slane %v9287, %v9290
        %v9308 = vunpack.c.l.b16 %v9271
        %v9309 = vunpack.c.l.b16 %v9272
        %v9310 = vunpack.c.l.b16 %v9273
        %v9311 = vunpack.c.l.b16 %v9274
        %v9312 = vunpack.c.l.b16 %v9275
        %v9313 = vunpack.c.l.b16 %v9276
        %v9314 = vunpack.c.l.b16 %v9277
        %v9315 = vunpack.c.l.b16 %v9278
        %v9316 = vunpack.c.l.b16 %v9279
        %v9317 = vunpack.c.l.b16 %v9280
        %v9318 = vunpack.c.l.b16 %v9281
        %v9319 = vunpack.c.l.b16 %v9282
        %v9320 = vunpack.c.l.b16 %v9283
        %v9321 = vunpack.c.l.b16 %v9284
        %v9322 = vunpack.c.l.b16 %v9285
        %v9323 = vunpack.c.l.b16 %v9286
        %v9324 = vpack.c.b16 %v9309, %v9308
        %v9325 = vpack.c.b16 %v9311, %v9310
        %v9326 = vpack.c.b16 %v9313, %v9312
        %v9327 = vpack.c.b16 %v9315, %v9314
        %v9328 = vpack.c.b16 %v9317, %v9316
        %v9329 = vpack.c.b16 %v9319, %v9318
        %v9330 = vpack.c.b16 %v9321, %v9320
        %v9331 = vpack.c.b16 %v9323, %v9322
        %9340 = vmatprep.subr.bf16.mxu0 0
        %9341 = vmatpush1.bf16.msra.mxu0 %v9331
        %9342 = vmatprep.subr.bf16.mxu0 0
        %9343 = vmatpush1.bf16.msra.mxu0 %v9330
        %9344 = vmatprep.subr.bf16.mxu0 0
        %9345 = vmatpush1.bf16.msra.mxu0 %v9329
        %9346 = vmatprep.subr.bf16.mxu0 0
        %9347 = vmatpush1.bf16.msra.mxu0 %v9328
        %9348 = vmatprep.subr.bf16.mxu0 0
        %9349 = vmatpush1.bf16.msra.mxu0 %v9327
        %9350 = vmatprep.subr.bf16.mxu0 0
        %9351 = vmatpush1.bf16.msra.mxu0 %v9326
        %9352 = vmatprep.subr.bf16.mxu0 0
        %9353 = vmatpush1.bf16.msra.mxu0 %v9325
        %9354 = vmatprep.subr.bf16.mxu0 0
        %9355 = vmatpush1.bf16.msra.mxu0 %v9324
        %9356 = vmatprep.subr.bf16.mxu0 0
        %9357 = vmatpush2.bf16.msra.mxu0 0
        %9358 = vmatprep.subr.bf16.mxu0 0
        %9359 = vmatpush2.bf16.msra.mxu0 0
        %9360 = vmatprep.subr.bf16.mxu0 0
        %9361 = vmatpush2.bf16.msra.mxu0 0
        %9362 = vmatprep.subr.bf16.mxu0 0
        %9363 = vmatpush2.bf16.msra.mxu0 0
        %9364 = vmatprep.subr.bf16.mxu0 0
        %9365 = vmatpush2.bf16.msra.mxu0 0
        %9366 = vmatprep.subr.bf16.mxu0 0
        %9367 = vmatpush2.bf16.msra.mxu0 0
        %9368 = vmatprep.subr.bf16.mxu0 0
        %9369 = vmatpush2.bf16.msra.mxu0 0
        %9370 = vmatprep.subr.bf16.mxu0 0
        %9371 = vmatpush2.bf16.msra.mxu0 0
        %9372 = vmatprep.mubr.bf16.mxu0 0
        %9373 = vmatmul.mubr.bf16.gmra.mxu0 %v9255
        %v9374 = vpop.f32.mrf.mxu0
        %v9375 = vadd.f32 %v9291, %v9374
        %v9376 = vpop.f32.mrf.mxu0
        %v9377 = vpop.f32.mrf.mxu0
        %v9378 = vadd.f32 %v9291, %v9377
        %v9379 = vpop.f32.mrf.mxu0
        %9380 = vmatprep.mubr.bf16.mxu0 0
        %9381 = vmatmul.mubr.bf16.gmra.mxu0 %v9256
        %v9382 = vpop.f32.mrf.mxu0
        %v9383 = vadd.f32 %v9291, %v9382
        %v9384 = vpop.f32.mrf.mxu0
        %v9385 = vpop.f32.mrf.mxu0
        %v9386 = vadd.f32 %v9291, %v9385
        %v9387 = vpop.f32.mrf.mxu0
        %9388 = vmatprep.mubr.bf16.mxu0 0
        %9389 = vmatmul.mubr.bf16.gmra.mxu0 %v9257
        %v9390 = vpop.f32.mrf.mxu0
        %v9391 = vadd.f32 %v9291, %v9390
        %v9392 = vpop.f32.mrf.mxu0
        %v9393 = vpop.f32.mrf.mxu0
        %v9394 = vadd.f32 %v9291, %v9393
        %v9395 = vpop.f32.mrf.mxu0
        %9396 = vmatprep.mubr.bf16.mxu0 0
        %9397 = vmatmul.mubr.bf16.gmra.mxu0 %v9258
        %v9398 = vpop.f32.mrf.mxu0
        %v9399 = vadd.f32 %v9291, %v9398
        %v9400 = vpop.f32.mrf.mxu0
        %v9401 = vpop.f32.mrf.mxu0
        %v9402 = vadd.f32 %v9291, %v9401
        %v9403 = vpop.f32.mrf.mxu0
        %9404 = vmatprep.mubr.bf16.mxu0 0
        %9405 = vmatmul.mubr.bf16.gmra.mxu0 %v9259
        %v9406 = vpop.f32.mrf.mxu0
        %v9407 = vadd.f32 %v9291, %v9406
        %v9408 = vpop.f32.mrf.mxu0
        %v9409 = vpop.f32.mrf.mxu0
        %v9410 = vadd.f32 %v9291, %v9409
        %v9411 = vpop.f32.mrf.mxu0
        %9412 = vmatprep.mubr.bf16.mxu0 0
        %9413 = vmatmul.mubr.bf16.gmra.mxu0 %v9260
        %v9414 = vpop.f32.mrf.mxu0
        %v9415 = vadd.f32 %v9291, %v9414
        %v9416 = vpop.f32.mrf.mxu0
        %v9417 = vpop.f32.mrf.mxu0
        %v9418 = vadd.f32 %v9291, %v9417
        %v9419 = vpop.f32.mrf.mxu0
        %9420 = vmatprep.mubr.bf16.mxu0 0
        %9421 = vmatmul.mubr.bf16.gmra.mxu0 %v9261
        %v9422 = vpop.f32.mrf.mxu0
        %v9423 = vadd.f32 %v9291, %v9422
        %v9424 = vpop.f32.mrf.mxu0
        %v9425 = vpop.f32.mrf.mxu0
        %v9426 = vadd.f32 %v9291, %v9425
        %v9427 = vpop.f32.mrf.mxu0
        %9428 = vmatprep.mubr.bf16.mxu0 0
        %9429 = vmatmul.mubr.bf16.gmra.mxu0 %v9262
        %v9430 = vpop.f32.mrf.mxu0
        %v9431 = vadd.f32 %v9291, %v9430
        %v9432 = vpop.f32.mrf.mxu0
        %v9433 = vpop.f32.mrf.mxu0
        %v9434 = vadd.f32 %v9291, %v9433
        %v9435 = vpop.f32.mrf.mxu0
        %9436 = vmatprep.mubr.bf16.mxu0 0
        %9437 = vmatmul.mubr.bf16.gmra.mxu0 %v9263
        %v9438 = vpop.f32.mrf.mxu0
        %v9439 = vadd.f32 %v9291, %v9438
        %v9440 = vpop.f32.mrf.mxu0
        %v9441 = vpop.f32.mrf.mxu0
        %v9442 = vadd.f32 %v9291, %v9441
        %v9443 = vpop.f32.mrf.mxu0
        %9444 = vmatprep.mubr.bf16.mxu0 0
        %9445 = vmatmul.mubr.bf16.gmra.mxu0 %v9264
        %v9446 = vpop.f32.mrf.mxu0
        %v9447 = vadd.f32 %v9291, %v9446
        %v9448 = vpop.f32.mrf.mxu0
        %v9449 = vpop.f32.mrf.mxu0
        %v9450 = vadd.f32 %v9291, %v9449
        %v9451 = vpop.f32.mrf.mxu0
        %9452 = vmatprep.mubr.bf16.mxu0 0
        %9453 = vmatmul.mubr.bf16.gmra.mxu0 %v9265
        %v9454 = vpop.f32.mrf.mxu0
        %v9455 = vadd.f32 %v9291, %v9454
        %v9456 = vpop.f32.mrf.mxu0
        %v9457 = vpop.f32.mrf.mxu0
        %v9458 = vadd.f32 %v9291, %v9457
        %v9459 = vpop.f32.mrf.mxu0
        %9460 = vmatprep.mubr.bf16.mxu0 0
        %9461 = vmatmul.mubr.bf16.gmra.mxu0 %v9266
        %v9462 = vpop.f32.mrf.mxu0
        %v9463 = vadd.f32 %v9291, %v9462
        %v9464 = vpop.f32.mrf.mxu0
        %v9465 = vpop.f32.mrf.mxu0
        %v9466 = vadd.f32 %v9291, %v9465
        %v9467 = vpop.f32.mrf.mxu0
        %9468 = vmatprep.mubr.bf16.mxu0 0
        %9469 = vmatmul.mubr.bf16.gmra.mxu0 %v9267
        %v9470 = vpop.f32.mrf.mxu0
        %v9471 = vadd.f32 %v9291, %v9470
        %v9472 = vpop.f32.mrf.mxu0
        %v9473 = vpop.f32.mrf.mxu0
        %v9474 = vadd.f32 %v9291, %v9473
        %v9475 = vpop.f32.mrf.mxu0
        %9476 = vmatprep.mubr.bf16.mxu0 0
        %9477 = vmatmul.mubr.bf16.gmra.mxu0 %v9268
        %v9478 = vpop.f32.mrf.mxu0
        %v9479 = vadd.f32 %v9291, %v9478
        %v9480 = vpop.f32.mrf.mxu0
        %v9481 = vpop.f32.mrf.mxu0
        %v9482 = vadd.f32 %v9291, %v9481
        %v9483 = vpop.f32.mrf.mxu0
        %9484 = vmatprep.mubr.bf16.mxu0 0
        %9485 = vmatmul.mubr.bf16.gmra.mxu0 %v9269
        %v9486 = vpop.f32.mrf.mxu0
        %v9487 = vadd.f32 %v9291, %v9486
        %v9488 = vpop.f32.mrf.mxu0
        %v9489 = vpop.f32.mrf.mxu0
        %v9490 = vadd.f32 %v9291, %v9489
        %v9491 = vpop.f32.mrf.mxu0
        %9492 = vmatprep.mubr.bf16.mxu0 0
        %9493 = vmatmul.mubr.bf16.gmra.mxu0 %v9270
        %v9494 = vpop.f32.mrf.mxu0
        %v9495 = vadd.f32 %v9291, %v9494
        %v9496 = vpop.f32.mrf.mxu0
        %v9497 = vpop.f32.mrf.mxu0
        %v9498 = vadd.f32 %v9291, %v9497
        %v9499 = vpop.f32.mrf.mxu0
        %9500 = vdwg.mxu0
        %9501 = vst [vmem:[%s200] sm:$0xff] %v9375
        %9502 = vst [vmem:[%s200 + $0x8] sm:$0xff] %v9378
        %9503 = vst [vmem:[%s200 + $0x10] sm:$0xff] %v9383
        %9504 = vst [vmem:[%s200 + $0x18] sm:$0xff] %v9386
        %9505 = vst [vmem:[%s200 + $0x20] sm:$0xff] %v9391
        %9506 = vst [vmem:[%s200 + $0x28] sm:$0xff] %v9394
        %9507 = vst [vmem:[%s200 + $0x30] sm:$0xff] %v9399
        %9508 = vst [vmem:[%s200 + $0x38] sm:$0xff] %v9402
        %9509 = vst [vmem:[%s200 + $0x40] sm:$0xff] %v9407
        %9510 = vst [vmem:[%s200 + $0x48] sm:$0xff] %v9410
        %9511 = vst [vmem:[%s200 + $0x50] sm:$0xff] %v9415
        %9512 = vst [vmem:[%s200 + $0x58] sm:$0xff] %v9418
        %9513 = vst [vmem:[%s200 + $0x60] sm:$0xff] %v9423
        %9514 = vst [vmem:[%s200 + $0x68] sm:$0xff] %v9426
        %9515 = vst [vmem:[%s200 + $0x70] sm:$0xff] %v9431
        %9516 = vst [vmem:[%s200 + $0x78] sm:$0xff] %v9434
        %9517 = vst [vmem:[%s200 + $0x80] sm:$0xff] %v9439
        %9518 = vst [vmem:[%s200 + $0x88] sm:$0xff] %v9442
        %9519 = vst [vmem:[%s200 + $0x90] sm:$0xff] %v9447
        %9520 = vst [vmem:[%s200 + $0x98] sm:$0xff] %v9450
        %9521 = vst [vmem:[%s200 + $0xa0] sm:$0xff] %v9455
        %9522 = vst [vmem:[%s200 + $0xa8] sm:$0xff] %v9458
        %9523 = vst [vmem:[%s200 + $0xb0] sm:$0xff] %v9463
        %9524 = vst [vmem:[%s200 + $0xb8] sm:$0xff] %v9466
        %9525 = vst [vmem:[%s200 + $0xc0] sm:$0xff] %v9471
        %9526 = vst [vmem:[%s200 + $0xc8] sm:$0xff] %v9474
        %9527 = vst [vmem:[%s200 + $0xd0] sm:$0xff] %v9479
        %9528 = vst [vmem:[%s200 + $0xd8] sm:$0xff] %v9482
        %9529 = vst [vmem:[%s200 + $0xe0] sm:$0xff] %v9487
        %9530 = vst [vmem:[%s200 + $0xe8] sm:$0xff] %v9490
        %9531 = vst [vmem:[%s200 + $0xf0] sm:$0xff] %v9495
        %9532 = vst [vmem:[%s200 + $0xf8] sm:$0xff] %v9498
        %p9533 = scmp.lt.s32.totalorder %s16, 1
        %s9534 = scalar_select %p9533, %s16, 1
        %s9535 = smul.addr %s9534, 32
        %s9536 = smul.addr %s9535, 8
        %s9537 = scalar_lea.vmem %s3, %s9536
        // Predicated region
        $region45: #{sinet_forward.1} parent=31 // pred_check
          %p9538 = pneg %p102
        $region46: #{sinet_forward.1} parent=31 // pred_check_branch
          %9540 = sbr.rel (%p9538) target = $region48
        $region47: #{sinet_forward.1} parent=31 // pred_region
          _
        $region48: #{sinet_forward.1} parent=31 // pred_fallthru
          _
      $region32: #{sinet_forward.1} parent=5 // pred_fallthru
        _
      %p9541 = scmp.le.s32.totalorder 2, %s11
      // Predicated region
      $region49: #{sinet_forward.1} parent=5 // pred_check
        %p9542 = pneg %p9541
      $region50: #{sinet_forward.1} parent=5 // pred_check_branch
        %9544 = sbr.rel (%p9542) target = $region52
      $region51: #{sinet_forward.1} parent=5 // pred_region
        %s9545 = ssub.s32 %s11, 2
        // Predicated region
        $region53: #{sinet_forward.1} parent=51 // pred_check
          %p9546 = pneg %p108
        $region54: #{sinet_forward.1} parent=51 // pred_check_branch
          %9548 = sbr.rel (%p9546) target = $region56
        $region55: #{sinet_forward.1} parent=51 // pred_region
          %p9549 = scmp.lt.s32.totalorder %s17, 1
          %s9550 = scalar_select %p9549, %s17, 1
          %s9551 = smul.addr %s9550, 32
          %s9552 = smul.addr %s9551, 8
          %s9553 = scalar_lea.vmem %s3, %s9552
        $region56: #{sinet_forward.1} parent=51 // pred_fallthru
          _
      $region52: #{sinet_forward.1} parent=5 // pred_fallthru
        _
    $region6: #{sinet_forward.1} parent=1 // loop_footer
      %s15 = sadd.s32 1, %s11
    $region7: #{sinet_forward.1} parent=1 // loop_footer_branch
      %10 = sbr.rel target = $region3
    $region8: #{sinet_forward.1} parent=1 // loop_exit
      _
    %9554 = vsyncpa [#allocation4], 1
    %s9555 = scalar_lea.sflag [#allocation4], 1
    %9556 = vsyncpa %s9555, 1
    %9557 = vsyncpa [#allocation6], 1

</llo_original>
